<compile_context>
chip_gen: v6e
topology: v6e:2x2x1
jax: 0.10.0
libtpu: 0.0.40
codegen_flags: <defaults>
</compile_context>

<pallas_src>
import functools

import jax
import jax.numpy as jnp
from jax.experimental import pallas as pl
from jax.experimental.pallas import tpu as pltpu

TILE_N = 512  # rows (tokens) per grid step; >=512 amortizes D=32 masked stores


def _fused_embed_kernel(x_ids_ref, tt_ids_ref, y_ids_ref,
                        xt_table_ref, tgt_table_ref, gamma_ref, beta_ref,
                        x_out_ref, y_out_ref, *, eps, n_sym_vocab):
    """x_out = LayerNorm(sym_emb(x) + tt_emb(tt)); y_out = tgt_emb(y)."""
    x_ids = x_ids_ref[...]          # (TILE_N, 1) int32
    tt_ids = tt_ids_ref[...]        # (TILE_N, 1) int32
    y_ids = y_ids_ref[...]          # (TILE_N, 1) int32
    xt_table = xt_table_ref[...]    # (V + T, D) f32  (symbol ++ token_type)
    tgt_table = tgt_table_ref[...]  # (Vt, D) f32

    tile = x_ids.shape[0]
    vtot = xt_table.shape[0]
    vt = tgt_table.shape[0]
    d = xt_table.shape[1]

    # Fused symbol + token-type gather: single one-hot over concatenated vocab.
    # Ranges do not overlap (x_ids < V, tt_ids + V >= V), so OR is exact.
    col = jax.lax.broadcasted_iota(jnp.int32, (tile, vtot), 1)
    hit = (x_ids == col) | ((tt_ids + n_sym_vocab) == col)
    onehot = hit.astype(jnp.float32)
    emb = jnp.dot(onehot, xt_table,
                  preferred_element_type=jnp.float32,
                  precision=jax.lax.Precision.HIGHEST)   # (TILE_N, D) f32

    # LayerNorm over d_model (biased variance, eps inside sqrt — matches nn.LayerNorm).
    inv_d = 1.0 / d
    mean = jnp.sum(emb, axis=-1, keepdims=True) * inv_d
    centered = emb - mean
    var = jnp.sum(centered * centered, axis=-1, keepdims=True) * inv_d
    inv = jax.lax.rsqrt(var + eps)
    x_out_ref[...] = (centered * inv) * gamma_ref[...] + beta_ref[...]
    # TODO(synk): nn.Dropout is identity at inference; training-mode dropout
    # (pltpu.prng_* + mask) not applied here.

    # tgt_embeddings(y) — second output in the same tile loop.
    col_y = jax.lax.broadcasted_iota(jnp.int32, (tile, vt), 1)
    y_onehot = (y_ids == col_y).astype(jnp.float32)
    y_out_ref[...] = jnp.dot(y_onehot, tgt_table,
                             preferred_element_type=jnp.float32,
                             precision=jax.lax.Precision.HIGHEST)


def mahjong_embeddings_forward(x, token_type_ids, y, params, eps,
                               tile_n=TILE_N):
    """x, token_type_ids: (B, S) int; y: (B, Sy) int.
    Returns (x_emb (B, S, D), y_emb (B, Sy, D))."""
    B, S = x.shape
    By, Sy = y.shape
    assert B == By

    sym = params["symbol_emb"]          # (V, D)
    tte = params["token_type_emb"]      # (T, D)
    tgt = params["tgt_emb"]             # (Vt, D)
    gamma = params["ln_gamma"].reshape(1, -1)
    beta = params["ln_beta"].reshape(1, -1)
    V, D = sym.shape

    n_x = B * S
    n_y = B * Sy
    n_pad = tile_n * pl.cdiv(max(n_x, n_y), tile_n)

    def _pad_ids(ids, n_valid):
        flat = ids.reshape(-1, 1).astype(jnp.int32)
        return jnp.pad(flat, ((0, n_pad - n_valid), (0, 0)))  # pad id = 0

    x_flat = _pad_ids(x, n_x)
    tt_flat = _pad_ids(token_type_ids, n_x)
    y_flat = _pad_ids(y, n_y)

    # Stack the two encoder tables once: one matmul gathers both embeddings.
    xt_table = jnp.concatenate([sym, tte], axis=0)  # (V + T, D)

    grid = (n_pad // tile_n,)
    id_spec = pl.BlockSpec((tile_n, 1), lambda i: (i, 0))
    out_spec = pl.BlockSpec((tile_n, D), lambda i: (i, 0))

    def const_spec(shape):
        # Whole-array block, constant index -> stays VMEM-resident across tiles.
        return pl.BlockSpec(shape, lambda i: (0, 0))

    x_out, y_out = pl.pallas_call(
        functools.partial(_fused_embed_kernel, eps=eps, n_sym_vocab=V),
        out_shape=(jax.ShapeDtypeStruct((n_pad, D), jnp.float32),
                   jax.ShapeDtypeStruct((n_pad, D), jnp.float32)),
        grid=grid,
        in_specs=[
            id_spec, id_spec, id_spec,
            const_spec(xt_table.shape),
            const_spec(tgt.shape),
            const_spec(gamma.shape),
            const_spec(beta.shape),
        ],
        out_specs=(out_spec, out_spec),
        compiler_params=pltpu.CompilerParams(
            dimension_semantics=("parallel",),   # shards tiles across v7x's 2 TCs
            vmem_limit_bytes=32 * 1024 * 1024),  # fits v5e/v6e/v7x with headroom
    )(x_flat, tt_flat, y_flat, xt_table, tgt, gamma, beta)

    x_emb = x_out[:n_x].reshape(B, S, D)
    y_emb = y_out[:n_y].reshape(B, Sy, D)
    return x_emb, y_emb


def _reference_forward(x, token_type_ids, y, params, eps):
    """Pure-JAX reference (true table lookups)."""
    sym = params["symbol_emb"]
    tte = params["token_type_emb"]
    tgt = params["tgt_emb"]
    emb = sym[x] + tte[token_type_ids]
    mean = emb.mean(-1, keepdims=True)
    var = ((emb - mean) ** 2).mean(-1, keepdims=True)
    xn = (emb - mean) / jnp.sqrt(var + eps)
    xn = xn * params["ln_gamma"].reshape(-1) + params["ln_beta"].reshape(-1)
    return xn, tgt[y]


if __name__ == "__main__":
    config = {
        "vocab_size": 160,           # must cover token ids up to ~150 (offsets)
        "d_model": 32,
        "pad_token_id": 0,
        "layer_norm_eps": 1e-12,
        "hidden_dropout_prob": 0.1,  # identity at inference
    }
    n_token_type = 68
    decoder_vocab = 37 + 3          # = 40

    D = config["d_model"]
    pad = config["pad_token_id"]

    key = jax.random.PRNGKey(0)
    k1, k2, k3, k4, k5, k6 = jax.random.split(key, 6)

    # nn.Embedding ~ N(0,1); padding_idx row = 0; nn.LayerNorm weight=1, bias=0.
    symbol_emb = jax.random.normal(k1, (config["vocab_size"], D), jnp.float32)
    token_type_emb = jax.random.normal(k2, (n_token_type, D), jnp.float32)
    tgt_emb = jax.random.normal(k3, (decoder_vocab, D), jnp.float32)
    symbol_emb = symbol_emb.at[pad].set(0.0)
    token_type_emb = token_type_emb.at[pad].set(0.0)
    tgt_emb = tgt_emb.at[pad].set(0.0)

    params = {
        "symbol_emb": symbol_emb,
        "token_type_emb": token_type_emb,
        "tgt_emb": tgt_emb,
        "ln_gamma": jnp.ones((D,), jnp.float32),
        "ln_beta": jnp.zeros((D,), jnp.float32),
    }

    # Small example inputs consistent with forward(x, token_type_ids, y).
    B, S = 2, 8
    x = jax.random.randint(k4, (B, S), 0, config["vocab_size"], jnp.int32)
    token_type_ids = jax.random.randint(k5, (B, S), 0, n_token_type, jnp.int32)
    y = jax.random.randint(k6, (B, S), 0, decoder_vocab, jnp.int32)

    eps = config["layer_norm_eps"]
    x_emb, y_emb = mahjong_embeddings_forward(x, token_type_ids, y, params, eps)
    jax.block_until_ready((x_emb, y_emb))

    assert x_emb.shape == (B, S, D) and y_emb.shape == (B, S, D)

    # Correctness check against a true table-lookup reference.
    x_ref, y_ref = _reference_forward(x, token_type_ids, y, params, eps)
    assert jnp.allclose(x_emb, x_ref, rtol=0.0, atol=5e-2)
    assert jnp.allclose(y_emb, y_ref, rtol=0.0, atol=5e-2)

    print("KERNEL_OK")
</pallas_src>

<mosaic_0001>
module attributes {stable_mosaic.version = 11 : i64} {
  func.func @_fused_embed_kernel(%arg0: i32, %arg1: memref<512x1xi32, #tpu.memory_space<vmem>>, %arg2: memref<512x1xi32, #tpu.memory_space<vmem>>, %arg3: memref<512x1xi32, #tpu.memory_space<vmem>>, %arg4: memref<228x32xf32, #tpu.memory_space<vmem>>, %arg5: memref<40x32xf32, #tpu.memory_space<vmem>>, %arg6: memref<1x32xf32, #tpu.memory_space<vmem>>, %arg7: memref<1x32xf32, #tpu.memory_space<vmem>>, %arg8: memref<512x32xf32, #tpu.memory_space<vmem>>, %arg9: memref<512x32xf32, #tpu.memory_space<vmem>>) attributes {dimension_semantics = [#tpu.dimension_semantics<parallel>], iteration_bounds = array<i64: 1>, scalar_prefetch = 0 : i64, scratch_operands = 0 : i64, tpu.core_type = #tpu.core_type<tc>, window_params = [{transform_indices = @transform_0, window_bounds = array<i64: 512, 1>}, {transform_indices = @transform_1, window_bounds = array<i64: 512, 1>}, {transform_indices = @transform_2, window_bounds = array<i64: 512, 1>}, {pipeline_mode = #tpu.pipeline_mode<synchronous>, transform_indices = @transform_3, window_bounds = array<i64: 228, 32>}, {pipeline_mode = #tpu.pipeline_mode<synchronous>, transform_indices = @transform_4, window_bounds = array<i64: 40, 32>}, {pipeline_mode = #tpu.pipeline_mode<synchronous>, transform_indices = @transform_5, window_bounds = array<i64: 1, 32>}, {pipeline_mode = #tpu.pipeline_mode<synchronous>, transform_indices = @transform_6, window_bounds = array<i64: 1, 32>}, {transform_indices = @transform_7, window_bounds = array<i64: 512, 32>}, {transform_indices = @transform_8, window_bounds = array<i64: 512, 32>}]} {
    %c0 = arith.constant 0 : index
    %c0_0 = arith.constant 0 : index
    %0 = vector.load %arg1[%c0, %c0_0] : memref<512x1xi32, #tpu.memory_space<vmem>>, vector<512x1xi32>
    %c0_1 = arith.constant 0 : index
    %c0_2 = arith.constant 0 : index
    %1 = vector.load %arg2[%c0_1, %c0_2] : memref<512x1xi32, #tpu.memory_space<vmem>>, vector<512x1xi32>
    %c0_3 = arith.constant 0 : index
    %c0_4 = arith.constant 0 : index
    %2 = vector.load %arg3[%c0_3, %c0_4] : memref<512x1xi32, #tpu.memory_space<vmem>>, vector<512x1xi32>
    %c0_5 = arith.constant 0 : index
    %c0_6 = arith.constant 0 : index
    %3 = vector.load %arg4[%c0_5, %c0_6] : memref<228x32xf32, #tpu.memory_space<vmem>>, vector<228x32xf32>
    %c0_7 = arith.constant 0 : index
    %c0_8 = arith.constant 0 : index
    %4 = vector.load %arg5[%c0_7, %c0_8] : memref<40x32xf32, #tpu.memory_space<vmem>>, vector<40x32xf32>
    %5 = tpu.iota {dimensions = array<i32: 1>} : vector<512x228xi32>
    %6 = vector.broadcast %0 : vector<512x1xi32> to vector<512x228xi32>
    %7 = arith.cmpi eq, %6, %5 : vector<512x228xi32>
    %c160_i32 = arith.constant 160 : i32
    %8 = vector.broadcast %c160_i32 : i32 to vector<512x1xi32>
    %9 = arith.addi %1, %8 : vector<512x1xi32>
    %10 = vector.broadcast %9 : vector<512x1xi32> to vector<512x228xi32>
    %11 = arith.cmpi eq, %10, %5 : vector<512x228xi32>
    %12 = arith.ori %7, %11 : vector<512x228xi1>
    %13 = arith.extui %12 : vector<512x228xi1> to vector<512x228xi32>
    %14 = arith.sitofp %13 : vector<512x228xi32> to vector<512x228xf32>
    %cst = arith.constant dense<0.000000e+00> : vector<512x32xf32>
    %15 = tpu.matmul %14, %3, %cst {dimension_numbers = #tpu.dot_dimension_numbers<[1], [0], [0], [1], [0, 0, 1, 1], [], []>, precision = #tpu.contract_precision<fp32>} : vector<512x228xf32>, vector<228x32xf32>, vector<512x32xf32> -> vector<512x32xf32>
    %cst_9 = arith.constant dense<0.000000e+00> : vector<512xf32>
    %16 = vector.multi_reduction <add>, %15, %cst_9 [1] : vector<512x32xf32> to vector<512xf32>
    %17 = vector.shape_cast %16 : vector<512xf32> to vector<512x1xf32>
    %cst_10 = arith.constant 3.125000e-02 : f32
    %18 = vector.broadcast %cst_10 : f32 to vector<512x1xf32>
    %19 = arith.mulf %17, %18 : vector<512x1xf32>
    %20 = vector.broadcast %19 : vector<512x1xf32> to vector<512x32xf32>
    %21 = arith.subf %15, %20 : vector<512x32xf32>
    %22 = arith.mulf %21, %21 : vector<512x32xf32>
    %cst_11 = arith.constant dense<0.000000e+00> : vector<512xf32>
    %23 = vector.multi_reduction <add>, %22, %cst_11 [1] : vector<512x32xf32> to vector<512xf32>
    %24 = vector.shape_cast %23 : vector<512xf32> to vector<512x1xf32>
    %cst_12 = arith.constant 3.125000e-02 : f32
    %25 = vector.broadcast %cst_12 : f32 to vector<512x1xf32>
    %26 = arith.mulf %24, %25 : vector<512x1xf32>
    %cst_13 = arith.constant 9.99999996E-13 : f32
    %27 = vector.broadcast %cst_13 : f32 to vector<512x1xf32>
    %28 = arith.addf %26, %27 : vector<512x1xf32>
    %29 = math.rsqrt %28 : vector<512x1xf32>
    %30 = vector.broadcast %29 : vector<512x1xf32> to vector<512x32xf32>
    %31 = arith.mulf %21, %30 : vector<512x32xf32>
    %c0_14 = arith.constant 0 : index
    %c0_15 = arith.constant 0 : index
    %32 = vector.load %arg6[%c0_14, %c0_15] : memref<1x32xf32, #tpu.memory_space<vmem>>, vector<1x32xf32>
    %33 = vector.broadcast %32 : vector<1x32xf32> to vector<512x32xf32>
    %34 = arith.mulf %31, %33 : vector<512x32xf32>
    %c0_16 = arith.constant 0 : index
    %c0_17 = arith.constant 0 : index
    %35 = vector.load %arg7[%c0_16, %c0_17] : memref<1x32xf32, #tpu.memory_space<vmem>>, vector<1x32xf32>
    %36 = vector.broadcast %35 : vector<1x32xf32> to vector<512x32xf32>
    %37 = arith.addf %34, %36 : vector<512x32xf32>
    %c0_18 = arith.constant 0 : index
    %c0_19 = arith.constant 0 : index
    %38 = vector.load %arg8[%c0_18, %c0_19] : memref<512x32xf32, #tpu.memory_space<vmem>>, vector<512x32xf32>
    tpu.vector_store %arg8[%c0_18, %c0_19], %37 {strides = array<i32>} : memref<512x32xf32, #tpu.memory_space<vmem>>, vector<512x32xf32>,
    %39 = tpu.iota {dimensions = array<i32: 1>} : vector<512x40xi32>
    %40 = vector.broadcast %2 : vector<512x1xi32> to vector<512x40xi32>
    %41 = arith.cmpi eq, %40, %39 : vector<512x40xi32>
    %42 = arith.extui %41 : vector<512x40xi1> to vector<512x40xi32>
    %43 = arith.sitofp %42 : vector<512x40xi32> to vector<512x40xf32>
    %cst_20 = arith.constant dense<0.000000e+00> : vector<512x32xf32>
    %44 = tpu.matmul %43, %4, %cst_20 {dimension_numbers = #tpu.dot_dimension_numbers<[1], [0], [0], [1], [0, 0, 1, 1], [], []>, precision = #tpu.contract_precision<fp32>} : vector<512x40xf32>, vector<40x32xf32>, vector<512x32xf32> -> vector<512x32xf32>
    %c0_21 = arith.constant 0 : index
    %c0_22 = arith.constant 0 : index
    %45 = vector.load %arg9[%c0_21, %c0_22] : memref<512x32xf32, #tpu.memory_space<vmem>>, vector<512x32xf32>
    tpu.vector_store %arg9[%c0_21, %c0_22], %44 {strides = array<i32>} : memref<512x32xf32, #tpu.memory_space<vmem>>, vector<512x32xf32>,
    return
  }
  func.func @transform_0(%arg0: i32) -> (i32, i32) {
    %c0_i32 = arith.constant 0 : i32
    %c0_i32_0 = arith.constant 0 : i32
    return %arg0, %c0_i32 : i32, i32
  }
  func.func @transform_1(%arg0: i32) -> (i32, i32) {
    %c0_i32 = arith.constant 0 : i32
    %c0_i32_0 = arith.constant 0 : i32
    return %arg0, %c0_i32 : i32, i32
  }
  func.func @transform_2(%arg0: i32) -> (i32, i32) {
    %c0_i32 = arith.constant 0 : i32
    %c0_i32_0 = arith.constant 0 : i32
    return %arg0, %c0_i32 : i32, i32
  }
  func.func @transform_3(%arg0: i32) -> (i32, i32) {
    %c0_i32 = arith.constant 0 : i32
    %c0_i32_0 = arith.constant 0 : i32
    %c0_i32_1 = arith.constant 0 : i32
    return %c0_i32, %c0_i32_0 : i32, i32
  }
  func.func @transform_4(%arg0: i32) -> (i32, i32) {
    %c0_i32 = arith.constant 0 : i32
    %c0_i32_0 = arith.constant 0 : i32
    %c0_i32_1 = arith.constant 0 : i32
    return %c0_i32, %c0_i32_0 : i32, i32
  }
  func.func @transform_5(%arg0: i32) -> (i32, i32) {
    %c0_i32 = arith.constant 0 : i32
    %c0_i32_0 = arith.constant 0 : i32
    %c0_i32_1 = arith.constant 0 : i32
    return %c0_i32, %c0_i32_0 : i32, i32
  }
  func.func @transform_6(%arg0: i32) -> (i32, i32) {
    %c0_i32 = arith.constant 0 : i32
    %c0_i32_0 = arith.constant 0 : i32
    %c0_i32_1 = arith.constant 0 : i32
    return %c0_i32, %c0_i32_0 : i32, i32
  }
  func.func @transform_7(%arg0: i32) -> (i32, i32) {
    %c0_i32 = arith.constant 0 : i32
    %c0_i32_0 = arith.constant 0 : i32
    return %arg0, %c0_i32 : i32, i32
  }
  func.func @transform_8(%arg0: i32) -> (i32, i32) {
    %c0_i32 = arith.constant 0 : i32
    %c0_i32_0 = arith.constant 0 : i32
    return %arg0, %c0_i32 : i32, i32
  }
}

</mosaic_0001>

<llo_original>
// kernel: tpu_custom_call.1
$region0: #{tpu_custom_call.1}
  #allocation0 [shape = 'u32[]', space=smem, size = 0x4, offset = 0x4, fixed_abs, tag = 'smem constant byte address 0x4 - core index']
  #allocation1 [shape = 'u32[144,128]{1,0:T(1,128)}', space=vmem, size = 0x12000, scoped, tag = 'internal scratch']
  %s0 = inlined_call_operand.vmem [shape: s32[512,1], index: 0, kind: input, shape index: {}]
  %s1 = inlined_call_operand.vmem [shape: s32[512,1], index: 1, kind: input, shape index: {}]
  %s2 = inlined_call_operand.vmem [shape: s32[512,1], index: 2, kind: input, shape index: {}]
  %s3 = inlined_call_operand.vmem [shape: f32[228,32], index: 3, kind: input, shape index: {}]
  %s4 = inlined_call_operand.vmem [shape: f32[40,32], index: 4, kind: input, shape index: {}]
  %s5 = inlined_call_operand.vmem [shape: f32[1,32], index: 5, kind: input, shape index: {}]
  %s6 = inlined_call_operand.vmem [shape: f32[1,32], index: 6, kind: input, shape index: {}]
  %s7 = inlined_call_operand.vmem [shape: f32[512,32], index: 7, kind: output, shape index: {0}]
  %s8 = inlined_call_operand.vmem [shape: f32[512,32], index: 8, kind: output, shape index: {1}]
  %9 = xla_tuple %s7, %s8
  %s10 = sld [smem:[#allocation0]]
  $region46: #{tpu_custom_call.1} parent=0
    _
  %s12 = ssub.s32 1, %s10
  %s13 = scalar_select 0, %s12, %s10
  // Predicated region
  $region2: #{tpu_custom_call.1} parent=0 // pred_check
    _
  $region3: #{tpu_custom_call.1} parent=0 // pred_check_branch
    %15 = sbr.rel (0) target = $region5
  $region4: #{tpu_custom_call.1} parent=0 // pred_region
    _
  $region5: #{tpu_custom_call.1} parent=0 // pred_fallthru
    _
  // Predicated region
  $region6: #{tpu_custom_call.1} parent=0 // pred_check
    _
  $region7: #{tpu_custom_call.1} parent=0 // pred_check_branch
    %17 = sbr.rel (0) target = $region9
  $region8: #{tpu_custom_call.1} parent=0 // pred_region
    _
  $region9: #{tpu_custom_call.1} parent=0 // pred_fallthru
    _
  // Predicated region
  $region10: #{tpu_custom_call.1} parent=0 // pred_check
    _
  $region11: #{tpu_custom_call.1} parent=0 // pred_check_branch
    %19 = sbr.rel (0) target = $region13
  $region12: #{tpu_custom_call.1} parent=0 // pred_region
    _
  $region13: #{tpu_custom_call.1} parent=0 // pred_fallthru
    _
  // Predicated region
  $region14: #{tpu_custom_call.1} parent=0 // pred_check
    _
  $region15: #{tpu_custom_call.1} parent=0 // pred_check_branch
    %21 = sbr.rel (0) target = $region17
  $region16: #{tpu_custom_call.1} parent=0 // pred_region
    _
  $region17: #{tpu_custom_call.1} parent=0 // pred_fallthru
    _
  // Predicated region
  $region18: #{tpu_custom_call.1} parent=0 // pred_check
    _
  $region19: #{tpu_custom_call.1} parent=0 // pred_check_branch
    %23 = sbr.rel (0) target = $region21
  $region20: #{tpu_custom_call.1} parent=0 // pred_region
    _
  $region21: #{tpu_custom_call.1} parent=0 // pred_fallthru
    _
  // Predicated region
  $region22: #{tpu_custom_call.1} parent=0 // pred_check
    _
  $region23: #{tpu_custom_call.1} parent=0 // pred_check_branch
    %25 = sbr.rel (0) target = $region25
  $region24: #{tpu_custom_call.1} parent=0 // pred_region
    _
  $region25: #{tpu_custom_call.1} parent=0 // pred_fallthru
    _
  // Predicated region
  $region26: #{tpu_custom_call.1} parent=0 // pred_check
    _
  $region27: #{tpu_custom_call.1} parent=0 // pred_check_branch
    %27 = sbr.rel (0) target = $region29
  $region28: #{tpu_custom_call.1} parent=0 // pred_region
    _
  $region29: #{tpu_custom_call.1} parent=0 // pred_fallthru
    _
  %v28 = vld [vmem:[%s0] sm:$0xff]
  %v29 = vld [vmem:[%s0 + $0x8] sm:$0xff]
  %v30 = vld [vmem:[%s0 + $0x10] sm:$0xff]
  %v31 = vld [vmem:[%s0 + $0x18] sm:$0xff]
  %v32 = vld [vmem:[%s0 + $0x20] sm:$0xff]
  %v33 = vld [vmem:[%s0 + $0x28] sm:$0xff]
  %v34 = vld [vmem:[%s0 + $0x30] sm:$0xff]
  %v35 = vld [vmem:[%s0 + $0x38] sm:$0xff]
  %v36 = vld [vmem:[%s0 + $0x40] sm:$0xff]
  %v37 = vld [vmem:[%s0 + $0x48] sm:$0xff]
  %v38 = vld [vmem:[%s0 + $0x50] sm:$0xff]
  %v39 = vld [vmem:[%s0 + $0x58] sm:$0xff]
  %v40 = vld [vmem:[%s0 + $0x60] sm:$0xff]
  %v41 = vld [vmem:[%s0 + $0x68] sm:$0xff]
  %v42 = vld [vmem:[%s0 + $0x70] sm:$0xff]
  %v43 = vld [vmem:[%s0 + $0x78] sm:$0xff]
  %v44 = vld [vmem:[%s0 + $0x80] sm:$0xff]
  %v45 = vld [vmem:[%s0 + $0x88] sm:$0xff]
  %v46 = vld [vmem:[%s0 + $0x90] sm:$0xff]
  %v47 = vld [vmem:[%s0 + $0x98] sm:$0xff]
  %v48 = vld [vmem:[%s0 + $0xa0] sm:$0xff]
  %v49 = vld [vmem:[%s0 + $0xa8] sm:$0xff]
  %v50 = vld [vmem:[%s0 + $0xb0] sm:$0xff]
  %v51 = vld [vmem:[%s0 + $0xb8] sm:$0xff]
  %v52 = vld [vmem:[%s0 + $0xc0] sm:$0xff]
  %v53 = vld [vmem:[%s0 + $0xc8] sm:$0xff]
  %v54 = vld [vmem:[%s0 + $0xd0] sm:$0xff]
  %v55 = vld [vmem:[%s0 + $0xd8] sm:$0xff]
  %v56 = vld [vmem:[%s0 + $0xe0] sm:$0xff]
  %v57 = vld [vmem:[%s0 + $0xe8] sm:$0xff]
  %v58 = vld [vmem:[%s0 + $0xf0] sm:$0xff]
  %v59 = vld [vmem:[%s0 + $0xf8] sm:$0xff]
  %v60 = vld [vmem:[%s0 + $0x100] sm:$0xff]
  %v61 = vld [vmem:[%s0 + $0x108] sm:$0xff]
  %v62 = vld [vmem:[%s0 + $0x110] sm:$0xff]
  %v63 = vld [vmem:[%s0 + $0x118] sm:$0xff]
  %v64 = vld [vmem:[%s0 + $0x120] sm:$0xff]
  %v65 = vld [vmem:[%s0 + $0x128] sm:$0xff]
  %v66 = vld [vmem:[%s0 + $0x130] sm:$0xff]
  %v67 = vld [vmem:[%s0 + $0x138] sm:$0xff]
  %v68 = vld [vmem:[%s0 + $0x140] sm:$0xff]
  %v69 = vld [vmem:[%s0 + $0x148] sm:$0xff]
  %v70 = vld [vmem:[%s0 + $0x150] sm:$0xff]
  %v71 = vld [vmem:[%s0 + $0x158] sm:$0xff]
  %v72 = vld [vmem:[%s0 + $0x160] sm:$0xff]
  %v73 = vld [vmem:[%s0 + $0x168] sm:$0xff]
  %v74 = vld [vmem:[%s0 + $0x170] sm:$0xff]
  %v75 = vld [vmem:[%s0 + $0x178] sm:$0xff]
  %v76 = vld [vmem:[%s0 + $0x180] sm:$0xff]
  %v77 = vld [vmem:[%s0 + $0x188] sm:$0xff]
  %v78 = vld [vmem:[%s0 + $0x190] sm:$0xff]
  %v79 = vld [vmem:[%s0 + $0x198] sm:$0xff]
  %v80 = vld [vmem:[%s0 + $0x1a0] sm:$0xff]
  %v81 = vld [vmem:[%s0 + $0x1a8] sm:$0xff]
  %v82 = vld [vmem:[%s0 + $0x1b0] sm:$0xff]
  %v83 = vld [vmem:[%s0 + $0x1b8] sm:$0xff]
  %v84 = vld [vmem:[%s0 + $0x1c0] sm:$0xff]
  %v85 = vld [vmem:[%s0 + $0x1c8] sm:$0xff]
  %v86 = vld [vmem:[%s0 + $0x1d0] sm:$0xff]
  %v87 = vld [vmem:[%s0 + $0x1d8] sm:$0xff]
  %v88 = vld [vmem:[%s0 + $0x1e0] sm:$0xff]
  %v89 = vld [vmem:[%s0 + $0x1e8] sm:$0xff]
  %v90 = vld [vmem:[%s0 + $0x1f0] sm:$0xff]
  %v91 = vld [vmem:[%s0 + $0x1f8] sm:$0xff]
  %v92 = vld [vmem:[%s1] sm:$0xff]
  %v93 = vld [vmem:[%s1 + $0x8] sm:$0xff]
  %v94 = vld [vmem:[%s1 + $0x10] sm:$0xff]
  %v95 = vld [vmem:[%s1 + $0x18] sm:$0xff]
  %v96 = vld [vmem:[%s1 + $0x20] sm:$0xff]
  %v97 = vld [vmem:[%s1 + $0x28] sm:$0xff]
  %v98 = vld [vmem:[%s1 + $0x30] sm:$0xff]
  %v99 = vld [vmem:[%s1 + $0x38] sm:$0xff]
  %v100 = vld [vmem:[%s1 + $0x40] sm:$0xff]
  %v101 = vld [vmem:[%s1 + $0x48] sm:$0xff]
  %v102 = vld [vmem:[%s1 + $0x50] sm:$0xff]
  %v103 = vld [vmem:[%s1 + $0x58] sm:$0xff]
  %v104 = vld [vmem:[%s1 + $0x60] sm:$0xff]
  %v105 = vld [vmem:[%s1 + $0x68] sm:$0xff]
  %v106 = vld [vmem:[%s1 + $0x70] sm:$0xff]
  %v107 = vld [vmem:[%s1 + $0x78] sm:$0xff]
  %v108 = vld [vmem:[%s1 + $0x80] sm:$0xff]
  %v109 = vld [vmem:[%s1 + $0x88] sm:$0xff]
  %v110 = vld [vmem:[%s1 + $0x90] sm:$0xff]
  %v111 = vld [vmem:[%s1 + $0x98] sm:$0xff]
  %v112 = vld [vmem:[%s1 + $0xa0] sm:$0xff]
  %v113 = vld [vmem:[%s1 + $0xa8] sm:$0xff]
  %v114 = vld [vmem:[%s1 + $0xb0] sm:$0xff]
  %v115 = vld [vmem:[%s1 + $0xb8] sm:$0xff]
  %v116 = vld [vmem:[%s1 + $0xc0] sm:$0xff]
  %v117 = vld [vmem:[%s1 + $0xc8] sm:$0xff]
  %v118 = vld [vmem:[%s1 + $0xd0] sm:$0xff]
  %v119 = vld [vmem:[%s1 + $0xd8] sm:$0xff]
  %v120 = vld [vmem:[%s1 + $0xe0] sm:$0xff]
  %v121 = vld [vmem:[%s1 + $0xe8] sm:$0xff]
  %v122 = vld [vmem:[%s1 + $0xf0] sm:$0xff]
  %v123 = vld [vmem:[%s1 + $0xf8] sm:$0xff]
  %v124 = vld [vmem:[%s1 + $0x100] sm:$0xff]
  %v125 = vld [vmem:[%s1 + $0x108] sm:$0xff]
  %v126 = vld [vmem:[%s1 + $0x110] sm:$0xff]
  %v127 = vld [vmem:[%s1 + $0x118] sm:$0xff]
  %v128 = vld [vmem:[%s1 + $0x120] sm:$0xff]
  %v129 = vld [vmem:[%s1 + $0x128] sm:$0xff]
  %v130 = vld [vmem:[%s1 + $0x130] sm:$0xff]
  %v131 = vld [vmem:[%s1 + $0x138] sm:$0xff]
  %v132 = vld [vmem:[%s1 + $0x140] sm:$0xff]
  %v133 = vld [vmem:[%s1 + $0x148] sm:$0xff]
  %v134 = vld [vmem:[%s1 + $0x150] sm:$0xff]
  %v135 = vld [vmem:[%s1 + $0x158] sm:$0xff]
  %v136 = vld [vmem:[%s1 + $0x160] sm:$0xff]
  %v137 = vld [vmem:[%s1 + $0x168] sm:$0xff]
  %v138 = vld [vmem:[%s1 + $0x170] sm:$0xff]
  %v139 = vld [vmem:[%s1 + $0x178] sm:$0xff]
  %v140 = vld [vmem:[%s1 + $0x180] sm:$0xff]
  %v141 = vld [vmem:[%s1 + $0x188] sm:$0xff]
  %v142 = vld [vmem:[%s1 + $0x190] sm:$0xff]
  %v143 = vld [vmem:[%s1 + $0x198] sm:$0xff]
  %v144 = vld [vmem:[%s1 + $0x1a0] sm:$0xff]
  %v145 = vld [vmem:[%s1 + $0x1a8] sm:$0xff]
  %v146 = vld [vmem:[%s1 + $0x1b0] sm:$0xff]
  %v147 = vld [vmem:[%s1 + $0x1b8] sm:$0xff]
  %v148 = vld [vmem:[%s1 + $0x1c0] sm:$0xff]
  %v149 = vld [vmem:[%s1 + $0x1c8] sm:$0xff]
  %v150 = vld [vmem:[%s1 + $0x1d0] sm:$0xff]
  %v151 = vld [vmem:[%s1 + $0x1d8] sm:$0xff]
  %v152 = vld [vmem:[%s1 + $0x1e0] sm:$0xff]
  %v153 = vld [vmem:[%s1 + $0x1e8] sm:$0xff]
  %v154 = vld [vmem:[%s1 + $0x1f0] sm:$0xff]
  %v155 = vld [vmem:[%s1 + $0x1f8] sm:$0xff]
  %v156 = vld [vmem:[%s2] sm:$0xff]
  %v157 = vld [vmem:[%s2 + $0x8] sm:$0xff]
  %v158 = vld [vmem:[%s2 + $0x10] sm:$0xff]
  %v159 = vld [vmem:[%s2 + $0x18] sm:$0xff]
  %v160 = vld [vmem:[%s2 + $0x20] sm:$0xff]
  %v161 = vld [vmem:[%s2 + $0x28] sm:$0xff]
  %v162 = vld [vmem:[%s2 + $0x30] sm:$0xff]
  %v163 = vld [vmem:[%s2 + $0x38] sm:$0xff]
  %v164 = vld [vmem:[%s2 + $0x40] sm:$0xff]
  %v165 = vld [vmem:[%s2 + $0x48] sm:$0xff]
  %v166 = vld [vmem:[%s2 + $0x50] sm:$0xff]
  %v167 = vld [vmem:[%s2 + $0x58] sm:$0xff]
  %v168 = vld [vmem:[%s2 + $0x60] sm:$0xff]
  %v169 = vld [vmem:[%s2 + $0x68] sm:$0xff]
  %v170 = vld [vmem:[%s2 + $0x70] sm:$0xff]
  %v171 = vld [vmem:[%s2 + $0x78] sm:$0xff]
  %v172 = vld [vmem:[%s2 + $0x80] sm:$0xff]
  %v173 = vld [vmem:[%s2 + $0x88] sm:$0xff]
  %v174 = vld [vmem:[%s2 + $0x90] sm:$0xff]
  %v175 = vld [vmem:[%s2 + $0x98] sm:$0xff]
  %v176 = vld [vmem:[%s2 + $0xa0] sm:$0xff]
  %v177 = vld [vmem:[%s2 + $0xa8] sm:$0xff]
  %v178 = vld [vmem:[%s2 + $0xb0] sm:$0xff]
  %v179 = vld [vmem:[%s2 + $0xb8] sm:$0xff]
  %v180 = vld [vmem:[%s2 + $0xc0] sm:$0xff]
  %v181 = vld [vmem:[%s2 + $0xc8] sm:$0xff]
  %v182 = vld [vmem:[%s2 + $0xd0] sm:$0xff]
  %v183 = vld [vmem:[%s2 + $0xd8] sm:$0xff]
  %v184 = vld [vmem:[%s2 + $0xe0] sm:$0xff]
  %v185 = vld [vmem:[%s2 + $0xe8] sm:$0xff]
  %v186 = vld [vmem:[%s2 + $0xf0] sm:$0xff]
  %v187 = vld [vmem:[%s2 + $0xf8] sm:$0xff]
  %v188 = vld [vmem:[%s2 + $0x100] sm:$0xff]
  %v189 = vld [vmem:[%s2 + $0x108] sm:$0xff]
  %v190 = vld [vmem:[%s2 + $0x110] sm:$0xff]
  %v191 = vld [vmem:[%s2 + $0x118] sm:$0xff]
  %v192 = vld [vmem:[%s2 + $0x120] sm:$0xff]
  %v193 = vld [vmem:[%s2 + $0x128] sm:$0xff]
  %v194 = vld [vmem:[%s2 + $0x130] sm:$0xff]
  %v195 = vld [vmem:[%s2 + $0x138] sm:$0xff]
  %v196 = vld [vmem:[%s2 + $0x140] sm:$0xff]
  %v197 = vld [vmem:[%s2 + $0x148] sm:$0xff]
  %v198 = vld [vmem:[%s2 + $0x150] sm:$0xff]
  %v199 = vld [vmem:[%s2 + $0x158] sm:$0xff]
  %v200 = vld [vmem:[%s2 + $0x160] sm:$0xff]
  %v201 = vld [vmem:[%s2 + $0x168] sm:$0xff]
  %v202 = vld [vmem:[%s2 + $0x170] sm:$0xff]
  %v203 = vld [vmem:[%s2 + $0x178] sm:$0xff]
  %v204 = vld [vmem:[%s2 + $0x180] sm:$0xff]
  %v205 = vld [vmem:[%s2 + $0x188] sm:$0xff]
  %v206 = vld [vmem:[%s2 + $0x190] sm:$0xff]
  %v207 = vld [vmem:[%s2 + $0x198] sm:$0xff]
  %v208 = vld [vmem:[%s2 + $0x1a0] sm:$0xff]
  %v209 = vld [vmem:[%s2 + $0x1a8] sm:$0xff]
  %v210 = vld [vmem:[%s2 + $0x1b0] sm:$0xff]
  %v211 = vld [vmem:[%s2 + $0x1b8] sm:$0xff]
  %v212 = vld [vmem:[%s2 + $0x1c0] sm:$0xff]
  %v213 = vld [vmem:[%s2 + $0x1c8] sm:$0xff]
  %v214 = vld [vmem:[%s2 + $0x1d0] sm:$0xff]
  %v215 = vld [vmem:[%s2 + $0x1d8] sm:$0xff]
  %v216 = vld [vmem:[%s2 + $0x1e0] sm:$0xff]
  %v217 = vld [vmem:[%s2 + $0x1e8] sm:$0xff]
  %v218 = vld [vmem:[%s2 + $0x1f0] sm:$0xff]
  %v219 = vld [vmem:[%s2 + $0x1f8] sm:$0xff]
  %v220 = vld [vmem:[%s3] sm:$0xff]
  %v221 = vld [vmem:[%s3 + $0x8] sm:$0xff]
  %v222 = vld [vmem:[%s3 + $0x10] sm:$0xff]
  %v223 = vld [vmem:[%s3 + $0x18] sm:$0xff]
  %v224 = vld [vmem:[%s3 + $0x20] sm:$0xff]
  %v225 = vld [vmem:[%s3 + $0x28] sm:$0xff]
  %v226 = vld [vmem:[%s3 + $0x30] sm:$0xff]
  %v227 = vld [vmem:[%s3 + $0x38] sm:$0xff]
  %v228 = vld [vmem:[%s3 + $0x40] sm:$0xff]
  %v229 = vld [vmem:[%s3 + $0x48] sm:$0xff]
  %v230 = vld [vmem:[%s3 + $0x50] sm:$0xff]
  %v231 = vld [vmem:[%s3 + $0x58] sm:$0xff]
  %v232 = vld [vmem:[%s3 + $0x60] sm:$0xff]
  %v233 = vld [vmem:[%s3 + $0x68] sm:$0xff]
  %v234 = vld [vmem:[%s3 + $0x70] sm:$0xff]
  %v235 = vld [vmem:[%s3 + $0x78] sm:$0xff]
  %v236 = vld [vmem:[%s3 + $0x80] sm:$0xff]
  %v237 = vld [vmem:[%s3 + $0x88] sm:$0xff]
  %v238 = vld [vmem:[%s3 + $0x90] sm:$0xff]
  %v239 = vld [vmem:[%s3 + $0x98] sm:$0xff]
  %v240 = vld [vmem:[%s3 + $0xa0] sm:$0xff]
  %v241 = vld [vmem:[%s3 + $0xa8] sm:$0xff]
  %v242 = vld [vmem:[%s3 + $0xb0] sm:$0xff]
  %v243 = vld [vmem:[%s3 + $0xb8] sm:$0xff]
  %v244 = vld [vmem:[%s3 + $0xc0] sm:$0xff]
  %v245 = vld [vmem:[%s3 + $0xc8] sm:$0xff]
  %v246 = vld [vmem:[%s3 + $0xd0] sm:$0xff]
  %v247 = vld [vmem:[%s3 + $0xd8] sm:$0xff]
  %v248 = vld [vmem:[%s3 + $0xe0] sm:$0xf]
  %v249 = vld [vmem:[%s4] sm:$0xff]
  %v250 = vld [vmem:[%s4 + $0x8] sm:$0xff]
  %v251 = vld [vmem:[%s4 + $0x10] sm:$0xff]
  %v252 = vld [vmem:[%s4 + $0x18] sm:$0xff]
  %v253 = vld [vmem:[%s4 + $0x20] sm:$0xff]
  %v254 = vlaneseq
  %v255 = vand.u32 %v254, 127
  %v256 = vadd.s32 %v255, 128
  %257 = vset.pattern.permute.xlu0 0
  %258 = vperm.xlu0 %257, %v28
  %v259 = vpop.permute.xlu0 %258
  %260 = vset.pattern.permute.xlu0 0
  %261 = vperm.xlu0 %260, %v29
  %v262 = vpop.permute.xlu0 %261
  %263 = vset.pattern.permute.xlu0 0
  %264 = vperm.xlu0 %263, %v30
  %v265 = vpop.permute.xlu0 %264
  %266 = vset.pattern.permute.xlu0 0
  %267 = vperm.xlu0 %266, %v31
  %v268 = vpop.permute.xlu0 %267
  %269 = vset.pattern.permute.xlu0 0
  %270 = vperm.xlu0 %269, %v32
  %v271 = vpop.permute.xlu0 %270
  %272 = vset.pattern.permute.xlu0 0
  %273 = vperm.xlu0 %272, %v33
  %v274 = vpop.permute.xlu0 %273
  %275 = vset.pattern.permute.xlu0 0
  %276 = vperm.xlu0 %275, %v34
  %v277 = vpop.permute.xlu0 %276
  %278 = vset.pattern.permute.xlu0 0
  %279 = vperm.xlu0 %278, %v35
  %v280 = vpop.permute.xlu0 %279
  %281 = vset.pattern.permute.xlu0 0
  %282 = vperm.xlu0 %281, %v36
  %v283 = vpop.permute.xlu0 %282
  %284 = vset.pattern.permute.xlu0 0
  %285 = vperm.xlu0 %284, %v37
  %v286 = vpop.permute.xlu0 %285
  %287 = vset.pattern.permute.xlu0 0
  %288 = vperm.xlu0 %287, %v38
  %v289 = vpop.permute.xlu0 %288
  %290 = vset.pattern.permute.xlu0 0
  %291 = vperm.xlu0 %290, %v39
  %v292 = vpop.permute.xlu0 %291
  %293 = vset.pattern.permute.xlu0 0
  %294 = vperm.xlu0 %293, %v40
  %v295 = vpop.permute.xlu0 %294
  %296 = vset.pattern.permute.xlu0 0
  %297 = vperm.xlu0 %296, %v41
  %v298 = vpop.permute.xlu0 %297
  %299 = vset.pattern.permute.xlu0 0
  %300 = vperm.xlu0 %299, %v42
  %v301 = vpop.permute.xlu0 %300
  %302 = vset.pattern.permute.xlu0 0
  %303 = vperm.xlu0 %302, %v43
  %v304 = vpop.permute.xlu0 %303
  %305 = vset.pattern.permute.xlu0 0
  %306 = vperm.xlu0 %305, %v44
  %v307 = vpop.permute.xlu0 %306
  %308 = vset.pattern.permute.xlu0 0
  %309 = vperm.xlu0 %308, %v45
  %v310 = vpop.permute.xlu0 %309
  %311 = vset.pattern.permute.xlu0 0
  %312 = vperm.xlu0 %311, %v46
  %v313 = vpop.permute.xlu0 %312
  %314 = vset.pattern.permute.xlu0 0
  %315 = vperm.xlu0 %314, %v47
  %v316 = vpop.permute.xlu0 %315
  %317 = vset.pattern.permute.xlu0 0
  %318 = vperm.xlu0 %317, %v48
  %v319 = vpop.permute.xlu0 %318
  %320 = vset.pattern.permute.xlu0 0
  %321 = vperm.xlu0 %320, %v49
  %v322 = vpop.permute.xlu0 %321
  %323 = vset.pattern.permute.xlu0 0
  %324 = vperm.xlu0 %323, %v50
  %v325 = vpop.permute.xlu0 %324
  %326 = vset.pattern.permute.xlu0 0
  %327 = vperm.xlu0 %326, %v51
  %v328 = vpop.permute.xlu0 %327
  %329 = vset.pattern.permute.xlu0 0
  %330 = vperm.xlu0 %329, %v52
  %v331 = vpop.permute.xlu0 %330
  %332 = vset.pattern.permute.xlu0 0
  %333 = vperm.xlu0 %332, %v53
  %v334 = vpop.permute.xlu0 %333
  %335 = vset.pattern.permute.xlu0 0
  %336 = vperm.xlu0 %335, %v54
  %v337 = vpop.permute.xlu0 %336
  %338 = vset.pattern.permute.xlu0 0
  %339 = vperm.xlu0 %338, %v55
  %v340 = vpop.permute.xlu0 %339
  %341 = vset.pattern.permute.xlu0 0
  %342 = vperm.xlu0 %341, %v56
  %v343 = vpop.permute.xlu0 %342
  %344 = vset.pattern.permute.xlu0 0
  %345 = vperm.xlu0 %344, %v57
  %v346 = vpop.permute.xlu0 %345
  %347 = vset.pattern.permute.xlu0 0
  %348 = vperm.xlu0 %347, %v58
  %v349 = vpop.permute.xlu0 %348
  %350 = vset.pattern.permute.xlu0 0
  %351 = vperm.xlu0 %350, %v59
  %v352 = vpop.permute.xlu0 %351
  %353 = vset.pattern.permute.xlu0 0
  %354 = vperm.xlu0 %353, %v60
  %v355 = vpop.permute.xlu0 %354
  %356 = vset.pattern.permute.xlu0 0
  %357 = vperm.xlu0 %356, %v61
  %v358 = vpop.permute.xlu0 %357
  %359 = vset.pattern.permute.xlu0 0
  %360 = vperm.xlu0 %359, %v62
  %v361 = vpop.permute.xlu0 %360
  %362 = vset.pattern.permute.xlu0 0
  %363 = vperm.xlu0 %362, %v63
  %v364 = vpop.permute.xlu0 %363
  %365 = vset.pattern.permute.xlu0 0
  %366 = vperm.xlu0 %365, %v64
  %v367 = vpop.permute.xlu0 %366
  %368 = vset.pattern.permute.xlu0 0
  %369 = vperm.xlu0 %368, %v65
  %v370 = vpop.permute.xlu0 %369
  %371 = vset.pattern.permute.xlu0 0
  %372 = vperm.xlu0 %371, %v66
  %v373 = vpop.permute.xlu0 %372
  %374 = vset.pattern.permute.xlu0 0
  %375 = vperm.xlu0 %374, %v67
  %v376 = vpop.permute.xlu0 %375
  %377 = vset.pattern.permute.xlu0 0
  %378 = vperm.xlu0 %377, %v68
  %v379 = vpop.permute.xlu0 %378
  %380 = vset.pattern.permute.xlu0 0
  %381 = vperm.xlu0 %380, %v69
  %v382 = vpop.permute.xlu0 %381
  %383 = vset.pattern.permute.xlu0 0
  %384 = vperm.xlu0 %383, %v70
  %v385 = vpop.permute.xlu0 %384
  %386 = vset.pattern.permute.xlu0 0
  %387 = vperm.xlu0 %386, %v71
  %v388 = vpop.permute.xlu0 %387
  %389 = vset.pattern.permute.xlu0 0
  %390 = vperm.xlu0 %389, %v72
  %v391 = vpop.permute.xlu0 %390
  %392 = vset.pattern.permute.xlu0 0
  %393 = vperm.xlu0 %392, %v73
  %v394 = vpop.permute.xlu0 %393
  %395 = vset.pattern.permute.xlu0 0
  %396 = vperm.xlu0 %395, %v74
  %v397 = vpop.permute.xlu0 %396
  %398 = vset.pattern.permute.xlu0 0
  %399 = vperm.xlu0 %398, %v75
  %v400 = vpop.permute.xlu0 %399
  %401 = vset.pattern.permute.xlu0 0
  %402 = vperm.xlu0 %401, %v76
  %v403 = vpop.permute.xlu0 %402
  %404 = vset.pattern.permute.xlu0 0
  %405 = vperm.xlu0 %404, %v77
  %v406 = vpop.permute.xlu0 %405
  %407 = vset.pattern.permute.xlu0 0
  %408 = vperm.xlu0 %407, %v78
  %v409 = vpop.permute.xlu0 %408
  %410 = vset.pattern.permute.xlu0 0
  %411 = vperm.xlu0 %410, %v79
  %v412 = vpop.permute.xlu0 %411
  %413 = vset.pattern.permute.xlu0 0
  %414 = vperm.xlu0 %413, %v80
  %v415 = vpop.permute.xlu0 %414
  %416 = vset.pattern.permute.xlu0 0
  %417 = vperm.xlu0 %416, %v81
  %v418 = vpop.permute.xlu0 %417
  %419 = vset.pattern.permute.xlu0 0
  %420 = vperm.xlu0 %419, %v82
  %v421 = vpop.permute.xlu0 %420
  %422 = vset.pattern.permute.xlu0 0
  %423 = vperm.xlu0 %422, %v83
  %v424 = vpop.permute.xlu0 %423
  %425 = vset.pattern.permute.xlu0 0
  %426 = vperm.xlu0 %425, %v84
  %v427 = vpop.permute.xlu0 %426
  %428 = vset.pattern.permute.xlu0 0
  %429 = vperm.xlu0 %428, %v85
  %v430 = vpop.permute.xlu0 %429
  %431 = vset.pattern.permute.xlu0 0
  %432 = vperm.xlu0 %431, %v86
  %v433 = vpop.permute.xlu0 %432
  %434 = vset.pattern.permute.xlu0 0
  %435 = vperm.xlu0 %434, %v87
  %v436 = vpop.permute.xlu0 %435
  %437 = vset.pattern.permute.xlu0 0
  %438 = vperm.xlu0 %437, %v88
  %v439 = vpop.permute.xlu0 %438
  %440 = vset.pattern.permute.xlu0 0
  %441 = vperm.xlu0 %440, %v89
  %v442 = vpop.permute.xlu0 %441
  %443 = vset.pattern.permute.xlu0 0
  %444 = vperm.xlu0 %443, %v90
  %v445 = vpop.permute.xlu0 %444
  %446 = vset.pattern.permute.xlu0 0
  %447 = vperm.xlu0 %446, %v91
  %v448 = vpop.permute.xlu0 %447
  %vm449 = vcmp.eq.s32.totalorder %v259, %v255
  %vm450 = vcmp.eq.s32.totalorder %v259, %v256
  %vm451 = vcmp.eq.s32.totalorder %v262, %v255
  %vm452 = vcmp.eq.s32.totalorder %v262, %v256
  %vm453 = vcmp.eq.s32.totalorder %v265, %v255
  %vm454 = vcmp.eq.s32.totalorder %v265, %v256
  %vm455 = vcmp.eq.s32.totalorder %v268, %v255
  %vm456 = vcmp.eq.s32.totalorder %v268, %v256
  %vm457 = vcmp.eq.s32.totalorder %v271, %v255
  %vm458 = vcmp.eq.s32.totalorder %v271, %v256
  %vm459 = vcmp.eq.s32.totalorder %v274, %v255
  %vm460 = vcmp.eq.s32.totalorder %v274, %v256
  %vm461 = vcmp.eq.s32.totalorder %v277, %v255
  %vm462 = vcmp.eq.s32.totalorder %v277, %v256
  %vm463 = vcmp.eq.s32.totalorder %v280, %v255
  %vm464 = vcmp.eq.s32.totalorder %v280, %v256
  %vm465 = vcmp.eq.s32.totalorder %v283, %v255
  %vm466 = vcmp.eq.s32.totalorder %v283, %v256
  %vm467 = vcmp.eq.s32.totalorder %v286, %v255
  %vm468 = vcmp.eq.s32.totalorder %v286, %v256
  %vm469 = vcmp.eq.s32.totalorder %v289, %v255
  %vm470 = vcmp.eq.s32.totalorder %v289, %v256
  %vm471 = vcmp.eq.s32.totalorder %v292, %v255
  %vm472 = vcmp.eq.s32.totalorder %v292, %v256
  %vm473 = vcmp.eq.s32.totalorder %v295, %v255
  %vm474 = vcmp.eq.s32.totalorder %v295, %v256
  %vm475 = vcmp.eq.s32.totalorder %v298, %v255
  %vm476 = vcmp.eq.s32.totalorder %v298, %v256
  %vm477 = vcmp.eq.s32.totalorder %v301, %v255
  %vm478 = vcmp.eq.s32.totalorder %v301, %v256
  %vm479 = vcmp.eq.s32.totalorder %v304, %v255
  %vm480 = vcmp.eq.s32.totalorder %v304, %v256
  %vm481 = vcmp.eq.s32.totalorder %v307, %v255
  %vm482 = vcmp.eq.s32.totalorder %v307, %v256
  %vm483 = vcmp.eq.s32.totalorder %v310, %v255
  %vm484 = vcmp.eq.s32.totalorder %v310, %v256
  %vm485 = vcmp.eq.s32.totalorder %v313, %v255
  %vm486 = vcmp.eq.s32.totalorder %v313, %v256
  %vm487 = vcmp.eq.s32.totalorder %v316, %v255
  %vm488 = vcmp.eq.s32.totalorder %v316, %v256
  %vm489 = vcmp.eq.s32.totalorder %v319, %v255
  %vm490 = vcmp.eq.s32.totalorder %v319, %v256
  %vm491 = vcmp.eq.s32.totalorder %v322, %v255
  %vm492 = vcmp.eq.s32.totalorder %v322, %v256
  %vm493 = vcmp.eq.s32.totalorder %v325, %v255
  %vm494 = vcmp.eq.s32.totalorder %v325, %v256
  %vm495 = vcmp.eq.s32.totalorder %v328, %v255
  %vm496 = vcmp.eq.s32.totalorder %v328, %v256
  %vm497 = vcmp.eq.s32.totalorder %v331, %v255
  %vm498 = vcmp.eq.s32.totalorder %v331, %v256
  %vm499 = vcmp.eq.s32.totalorder %v334, %v255
  %vm500 = vcmp.eq.s32.totalorder %v334, %v256
  %vm501 = vcmp.eq.s32.totalorder %v337, %v255
  %vm502 = vcmp.eq.s32.totalorder %v337, %v256
  %vm503 = vcmp.eq.s32.totalorder %v340, %v255
  %vm504 = vcmp.eq.s32.totalorder %v340, %v256
  %vm505 = vcmp.eq.s32.totalorder %v343, %v255
  %vm506 = vcmp.eq.s32.totalorder %v343, %v256
  %vm507 = vcmp.eq.s32.totalorder %v346, %v255
  %vm508 = vcmp.eq.s32.totalorder %v346, %v256
  %vm509 = vcmp.eq.s32.totalorder %v349, %v255
  %vm510 = vcmp.eq.s32.totalorder %v349, %v256
  %vm511 = vcmp.eq.s32.totalorder %v352, %v255
  %vm512 = vcmp.eq.s32.totalorder %v352, %v256
  %vm513 = vcmp.eq.s32.totalorder %v355, %v255
  %vm514 = vcmp.eq.s32.totalorder %v355, %v256
  %vm515 = vcmp.eq.s32.totalorder %v358, %v255
  %vm516 = vcmp.eq.s32.totalorder %v358, %v256
  %vm517 = vcmp.eq.s32.totalorder %v361, %v255
  %vm518 = vcmp.eq.s32.totalorder %v361, %v256
  %vm519 = vcmp.eq.s32.totalorder %v364, %v255
  %vm520 = vcmp.eq.s32.totalorder %v364, %v256
  %vm521 = vcmp.eq.s32.totalorder %v367, %v255
  %vm522 = vcmp.eq.s32.totalorder %v367, %v256
  %vm523 = vcmp.eq.s32.totalorder %v370, %v255
  %vm524 = vcmp.eq.s32.totalorder %v370, %v256
  %vm525 = vcmp.eq.s32.totalorder %v373, %v255
  %vm526 = vcmp.eq.s32.totalorder %v373, %v256
  %vm527 = vcmp.eq.s32.totalorder %v376, %v255
  %vm528 = vcmp.eq.s32.totalorder %v376, %v256
  %vm529 = vcmp.eq.s32.totalorder %v379, %v255
  %vm530 = vcmp.eq.s32.totalorder %v379, %v256
  %vm531 = vcmp.eq.s32.totalorder %v382, %v255
  %vm532 = vcmp.eq.s32.totalorder %v382, %v256
  %vm533 = vcmp.eq.s32.totalorder %v385, %v255
  %vm534 = vcmp.eq.s32.totalorder %v385, %v256
  %vm535 = vcmp.eq.s32.totalorder %v388, %v255
  %vm536 = vcmp.eq.s32.totalorder %v388, %v256
  %vm537 = vcmp.eq.s32.totalorder %v391, %v255
  %vm538 = vcmp.eq.s32.totalorder %v391, %v256
  %vm539 = vcmp.eq.s32.totalorder %v394, %v255
  %vm540 = vcmp.eq.s32.totalorder %v394, %v256
  %vm541 = vcmp.eq.s32.totalorder %v397, %v255
  %vm542 = vcmp.eq.s32.totalorder %v397, %v256
  %vm543 = vcmp.eq.s32.totalorder %v400, %v255
  %vm544 = vcmp.eq.s32.totalorder %v400, %v256
  %vm545 = vcmp.eq.s32.totalorder %v403, %v255
  %vm546 = vcmp.eq.s32.totalorder %v403, %v256
  %vm547 = vcmp.eq.s32.totalorder %v406, %v255
  %vm548 = vcmp.eq.s32.totalorder %v406, %v256
  %vm549 = vcmp.eq.s32.totalorder %v409, %v255
  %vm550 = vcmp.eq.s32.totalorder %v409, %v256
  %vm551 = vcmp.eq.s32.totalorder %v412, %v255
  %vm552 = vcmp.eq.s32.totalorder %v412, %v256
  %vm553 = vcmp.eq.s32.totalorder %v415, %v255
  %vm554 = vcmp.eq.s32.totalorder %v415, %v256
  %vm555 = vcmp.eq.s32.totalorder %v418, %v255
  %vm556 = vcmp.eq.s32.totalorder %v418, %v256
  %vm557 = vcmp.eq.s32.totalorder %v421, %v255
  %vm558 = vcmp.eq.s32.totalorder %v421, %v256
  %vm559 = vcmp.eq.s32.totalorder %v424, %v255
  %vm560 = vcmp.eq.s32.totalorder %v424, %v256
  %vm561 = vcmp.eq.s32.totalorder %v427, %v255
  %vm562 = vcmp.eq.s32.totalorder %v427, %v256
  %vm563 = vcmp.eq.s32.totalorder %v430, %v255
  %vm564 = vcmp.eq.s32.totalorder %v430, %v256
  %vm565 = vcmp.eq.s32.totalorder %v433, %v255
  %vm566 = vcmp.eq.s32.totalorder %v433, %v256
  %vm567 = vcmp.eq.s32.totalorder %v436, %v255
  %vm568 = vcmp.eq.s32.totalorder %v436, %v256
  %vm569 = vcmp.eq.s32.totalorder %v439, %v255
  %vm570 = vcmp.eq.s32.totalorder %v439, %v256
  %vm571 = vcmp.eq.s32.totalorder %v442, %v255
  %vm572 = vcmp.eq.s32.totalorder %v442, %v256
  %vm573 = vcmp.eq.s32.totalorder %v445, %v255
  %vm574 = vcmp.eq.s32.totalorder %v445, %v256
  %vm575 = vcmp.eq.s32.totalorder %v448, %v255
  %vm576 = vcmp.eq.s32.totalorder %v448, %v256
  %v577 = vadd.s32 %v92, 160
  %v578 = vadd.s32 %v93, 160
  %v579 = vadd.s32 %v94, 160
  %v580 = vadd.s32 %v95, 160
  %v581 = vadd.s32 %v96, 160
  %v582 = vadd.s32 %v97, 160
  %v583 = vadd.s32 %v98, 160
  %v584 = vadd.s32 %v99, 160
  %v585 = vadd.s32 %v100, 160
  %v586 = vadd.s32 %v101, 160
  %v587 = vadd.s32 %v102, 160
  %v588 = vadd.s32 %v103, 160
  %v589 = vadd.s32 %v104, 160
  %v590 = vadd.s32 %v105, 160
  %v591 = vadd.s32 %v106, 160
  %v592 = vadd.s32 %v107, 160
  %v593 = vadd.s32 %v108, 160
  %v594 = vadd.s32 %v109, 160
  %v595 = vadd.s32 %v110, 160
  %v596 = vadd.s32 %v111, 160
  %v597 = vadd.s32 %v112, 160
  %v598 = vadd.s32 %v113, 160
  %v599 = vadd.s32 %v114, 160
  %v600 = vadd.s32 %v115, 160
  %v601 = vadd.s32 %v116, 160
  %v602 = vadd.s32 %v117, 160
  %v603 = vadd.s32 %v118, 160
  %v604 = vadd.s32 %v119, 160
  %v605 = vadd.s32 %v120, 160
  %v606 = vadd.s32 %v121, 160
  %v607 = vadd.s32 %v122, 160
  %v608 = vadd.s32 %v123, 160
  %v609 = vadd.s32 %v124, 160
  %v610 = vadd.s32 %v125, 160
  %v611 = vadd.s32 %v126, 160
  %v612 = vadd.s32 %v127, 160
  %v613 = vadd.s32 %v128, 160
  %v614 = vadd.s32 %v129, 160
  %v615 = vadd.s32 %v130, 160
  %v616 = vadd.s32 %v131, 160
  %v617 = vadd.s32 %v132, 160
  %v618 = vadd.s32 %v133, 160
  %v619 = vadd.s32 %v134, 160
  %v620 = vadd.s32 %v135, 160
  %v621 = vadd.s32 %v136, 160
  %v622 = vadd.s32 %v137, 160
  %v623 = vadd.s32 %v138, 160
  %v624 = vadd.s32 %v139, 160
  %v625 = vadd.s32 %v140, 160
  %v626 = vadd.s32 %v141, 160
  %v627 = vadd.s32 %v142, 160
  %v628 = vadd.s32 %v143, 160
  %v629 = vadd.s32 %v144, 160
  %v630 = vadd.s32 %v145, 160
  %v631 = vadd.s32 %v146, 160
  %v632 = vadd.s32 %v147, 160
  %v633 = vadd.s32 %v148, 160
  %v634 = vadd.s32 %v149, 160
  %v635 = vadd.s32 %v150, 160
  %v636 = vadd.s32 %v151, 160
  %v637 = vadd.s32 %v152, 160
  %v638 = vadd.s32 %v153, 160
  %v639 = vadd.s32 %v154, 160
  %v640 = vadd.s32 %v155, 160
  %641 = vset.pattern.permute.xlu0 0
  %642 = vperm.xlu0 %641, %v577
  %v643 = vpop.permute.xlu0 %642
  %644 = vset.pattern.permute.xlu0 0
  %645 = vperm.xlu0 %644, %v578
  %v646 = vpop.permute.xlu0 %645
  %647 = vset.pattern.permute.xlu0 0
  %648 = vperm.xlu0 %647, %v579
  %v649 = vpop.permute.xlu0 %648
  %650 = vset.pattern.permute.xlu0 0
  %651 = vperm.xlu0 %650, %v580
  %v652 = vpop.permute.xlu0 %651
  %653 = vset.pattern.permute.xlu0 0
  %654 = vperm.xlu0 %653, %v581
  %v655 = vpop.permute.xlu0 %654
  %656 = vset.pattern.permute.xlu0 0
  %657 = vperm.xlu0 %656, %v582
  %v658 = vpop.permute.xlu0 %657
  %659 = vset.pattern.permute.xlu0 0
  %660 = vperm.xlu0 %659, %v583
  %v661 = vpop.permute.xlu0 %660
  %662 = vset.pattern.permute.xlu0 0
  %663 = vperm.xlu0 %662, %v584
  %v664 = vpop.permute.xlu0 %663
  %665 = vset.pattern.permute.xlu0 0
  %666 = vperm.xlu0 %665, %v585
  %v667 = vpop.permute.xlu0 %666
  %668 = vset.pattern.permute.xlu0 0
  %669 = vperm.xlu0 %668, %v586
  %v670 = vpop.permute.xlu0 %669
  %671 = vset.pattern.permute.xlu0 0
  %672 = vperm.xlu0 %671, %v587
  %v673 = vpop.permute.xlu0 %672
  %674 = vset.pattern.permute.xlu0 0
  %675 = vperm.xlu0 %674, %v588
  %v676 = vpop.permute.xlu0 %675
  %677 = vset.pattern.permute.xlu0 0
  %678 = vperm.xlu0 %677, %v589
  %v679 = vpop.permute.xlu0 %678
  %680 = vset.pattern.permute.xlu0 0
  %681 = vperm.xlu0 %680, %v590
  %v682 = vpop.permute.xlu0 %681
  %683 = vset.pattern.permute.xlu0 0
  %684 = vperm.xlu0 %683, %v591
  %v685 = vpop.permute.xlu0 %684
  %686 = vset.pattern.permute.xlu0 0
  %687 = vperm.xlu0 %686, %v592
  %v688 = vpop.permute.xlu0 %687
  %689 = vset.pattern.permute.xlu0 0
  %690 = vperm.xlu0 %689, %v593
  %v691 = vpop.permute.xlu0 %690
  %692 = vset.pattern.permute.xlu0 0
  %693 = vperm.xlu0 %692, %v594
  %v694 = vpop.permute.xlu0 %693
  %695 = vset.pattern.permute.xlu0 0
  %696 = vperm.xlu0 %695, %v595
  %v697 = vpop.permute.xlu0 %696
  %698 = vset.pattern.permute.xlu0 0
  %699 = vperm.xlu0 %698, %v596
  %v700 = vpop.permute.xlu0 %699
  %701 = vset.pattern.permute.xlu0 0
  %702 = vperm.xlu0 %701, %v597
  %v703 = vpop.permute.xlu0 %702
  %704 = vset.pattern.permute.xlu0 0
  %705 = vperm.xlu0 %704, %v598
  %v706 = vpop.permute.xlu0 %705
  %707 = vset.pattern.permute.xlu0 0
  %708 = vperm.xlu0 %707, %v599
  %v709 = vpop.permute.xlu0 %708
  %710 = vset.pattern.permute.xlu0 0
  %711 = vperm.xlu0 %710, %v600
  %v712 = vpop.permute.xlu0 %711
  %713 = vset.pattern.permute.xlu0 0
  %714 = vperm.xlu0 %713, %v601
  %v715 = vpop.permute.xlu0 %714
  %716 = vset.pattern.permute.xlu0 0
  %717 = vperm.xlu0 %716, %v602
  %v718 = vpop.permute.xlu0 %717
  %719 = vset.pattern.permute.xlu0 0
  %720 = vperm.xlu0 %719, %v603
  %v721 = vpop.permute.xlu0 %720
  %722 = vset.pattern.permute.xlu0 0
  %723 = vperm.xlu0 %722, %v604
  %v724 = vpop.permute.xlu0 %723
  %725 = vset.pattern.permute.xlu0 0
  %726 = vperm.xlu0 %725, %v605
  %v727 = vpop.permute.xlu0 %726
  %728 = vset.pattern.permute.xlu0 0
  %729 = vperm.xlu0 %728, %v606
  %v730 = vpop.permute.xlu0 %729
  %731 = vset.pattern.permute.xlu0 0
  %732 = vperm.xlu0 %731, %v607
  %v733 = vpop.permute.xlu0 %732
  %734 = vset.pattern.permute.xlu0 0
  %735 = vperm.xlu0 %734, %v608
  %v736 = vpop.permute.xlu0 %735
  %737 = vset.pattern.permute.xlu0 0
  %738 = vperm.xlu0 %737, %v609
  %v739 = vpop.permute.xlu0 %738
  %740 = vset.pattern.permute.xlu0 0
  %741 = vperm.xlu0 %740, %v610
  %v742 = vpop.permute.xlu0 %741
  %743 = vset.pattern.permute.xlu0 0
  %744 = vperm.xlu0 %743, %v611
  %v745 = vpop.permute.xlu0 %744
  %746 = vset.pattern.permute.xlu0 0
  %747 = vperm.xlu0 %746, %v612
  %v748 = vpop.permute.xlu0 %747
  %749 = vset.pattern.permute.xlu0 0
  %750 = vperm.xlu0 %749, %v613
  %v751 = vpop.permute.xlu0 %750
  %752 = vset.pattern.permute.xlu0 0
  %753 = vperm.xlu0 %752, %v614
  %v754 = vpop.permute.xlu0 %753
  %755 = vset.pattern.permute.xlu0 0
  %756 = vperm.xlu0 %755, %v615
  %v757 = vpop.permute.xlu0 %756
  %758 = vset.pattern.permute.xlu0 0
  %759 = vperm.xlu0 %758, %v616
  %v760 = vpop.permute.xlu0 %759
  %761 = vset.pattern.permute.xlu0 0
  %762 = vperm.xlu0 %761, %v617
  %v763 = vpop.permute.xlu0 %762
  %764 = vset.pattern.permute.xlu0 0
  %765 = vperm.xlu0 %764, %v618
  %v766 = vpop.permute.xlu0 %765
  %767 = vset.pattern.permute.xlu0 0
  %768 = vperm.xlu0 %767, %v619
  %v769 = vpop.permute.xlu0 %768
  %770 = vset.pattern.permute.xlu0 0
  %771 = vperm.xlu0 %770, %v620
  %v772 = vpop.permute.xlu0 %771
  %773 = vset.pattern.permute.xlu0 0
  %774 = vperm.xlu0 %773, %v621
  %v775 = vpop.permute.xlu0 %774
  %776 = vset.pattern.permute.xlu0 0
  %777 = vperm.xlu0 %776, %v622
  %v778 = vpop.permute.xlu0 %777
  %779 = vset.pattern.permute.xlu0 0
  %780 = vperm.xlu0 %779, %v623
  %v781 = vpop.permute.xlu0 %780
  %782 = vset.pattern.permute.xlu0 0
  %783 = vperm.xlu0 %782, %v624
  %v784 = vpop.permute.xlu0 %783
  %785 = vset.pattern.permute.xlu0 0
  %786 = vperm.xlu0 %785, %v625
  %v787 = vpop.permute.xlu0 %786
  %788 = vset.pattern.permute.xlu0 0
  %789 = vperm.xlu0 %788, %v626
  %v790 = vpop.permute.xlu0 %789
  %791 = vset.pattern.permute.xlu0 0
  %792 = vperm.xlu0 %791, %v627
  %v793 = vpop.permute.xlu0 %792
  %794 = vset.pattern.permute.xlu0 0
  %795 = vperm.xlu0 %794, %v628
  %v796 = vpop.permute.xlu0 %795
  %797 = vset.pattern.permute.xlu0 0
  %798 = vperm.xlu0 %797, %v629
  %v799 = vpop.permute.xlu0 %798
  %800 = vset.pattern.permute.xlu0 0
  %801 = vperm.xlu0 %800, %v630
  %v802 = vpop.permute.xlu0 %801
  %803 = vset.pattern.permute.xlu0 0
  %804 = vperm.xlu0 %803, %v631
  %v805 = vpop.permute.xlu0 %804
  %806 = vset.pattern.permute.xlu0 0
  %807 = vperm.xlu0 %806, %v632
  %v808 = vpop.permute.xlu0 %807
  %809 = vset.pattern.permute.xlu0 0
  %810 = vperm.xlu0 %809, %v633
  %v811 = vpop.permute.xlu0 %810
  %812 = vset.pattern.permute.xlu0 0
  %813 = vperm.xlu0 %812, %v634
  %v814 = vpop.permute.xlu0 %813
  %815 = vset.pattern.permute.xlu0 0
  %816 = vperm.xlu0 %815, %v635
  %v817 = vpop.permute.xlu0 %816
  %818 = vset.pattern.permute.xlu0 0
  %819 = vperm.xlu0 %818, %v636
  %v820 = vpop.permute.xlu0 %819
  %821 = vset.pattern.permute.xlu0 0
  %822 = vperm.xlu0 %821, %v637
  %v823 = vpop.permute.xlu0 %822
  %824 = vset.pattern.permute.xlu0 0
  %825 = vperm.xlu0 %824, %v638
  %v826 = vpop.permute.xlu0 %825
  %827 = vset.pattern.permute.xlu0 0
  %828 = vperm.xlu0 %827, %v639
  %v829 = vpop.permute.xlu0 %828
  %830 = vset.pattern.permute.xlu0 0
  %831 = vperm.xlu0 %830, %v640
  %v832 = vpop.permute.xlu0 %831
  %vm833 = vcmp.eq.s32.totalorder %v643, %v255
  %vm834 = vcmp.eq.s32.totalorder %v643, %v256
  %vm835 = vcmp.eq.s32.totalorder %v646, %v255
  %vm836 = vcmp.eq.s32.totalorder %v646, %v256
  %vm837 = vcmp.eq.s32.totalorder %v649, %v255
  %vm838 = vcmp.eq.s32.totalorder %v649, %v256
  %vm839 = vcmp.eq.s32.totalorder %v652, %v255
  %vm840 = vcmp.eq.s32.totalorder %v652, %v256
  %vm841 = vcmp.eq.s32.totalorder %v655, %v255
  %vm842 = vcmp.eq.s32.totalorder %v655, %v256
  %vm843 = vcmp.eq.s32.totalorder %v658, %v255
  %vm844 = vcmp.eq.s32.totalorder %v658, %v256
  %vm845 = vcmp.eq.s32.totalorder %v661, %v255
  %vm846 = vcmp.eq.s32.totalorder %v661, %v256
  %vm847 = vcmp.eq.s32.totalorder %v664, %v255
  %vm848 = vcmp.eq.s32.totalorder %v664, %v256
  %vm849 = vcmp.eq.s32.totalorder %v667, %v255
  %vm850 = vcmp.eq.s32.totalorder %v667, %v256
  %vm851 = vcmp.eq.s32.totalorder %v670, %v255
  %vm852 = vcmp.eq.s32.totalorder %v670, %v256
  %vm853 = vcmp.eq.s32.totalorder %v673, %v255
  %vm854 = vcmp.eq.s32.totalorder %v673, %v256
  %vm855 = vcmp.eq.s32.totalorder %v676, %v255
  %vm856 = vcmp.eq.s32.totalorder %v676, %v256
  %vm857 = vcmp.eq.s32.totalorder %v679, %v255
  %vm858 = vcmp.eq.s32.totalorder %v679, %v256
  %vm859 = vcmp.eq.s32.totalorder %v682, %v255
  %vm860 = vcmp.eq.s32.totalorder %v682, %v256
  %vm861 = vcmp.eq.s32.totalorder %v685, %v255
  %vm862 = vcmp.eq.s32.totalorder %v685, %v256
  %vm863 = vcmp.eq.s32.totalorder %v688, %v255
  %vm864 = vcmp.eq.s32.totalorder %v688, %v256
  %vm865 = vcmp.eq.s32.totalorder %v691, %v255
  %vm866 = vcmp.eq.s32.totalorder %v691, %v256
  %vm867 = vcmp.eq.s32.totalorder %v694, %v255
  %vm868 = vcmp.eq.s32.totalorder %v694, %v256
  %vm869 = vcmp.eq.s32.totalorder %v697, %v255
  %vm870 = vcmp.eq.s32.totalorder %v697, %v256
  %vm871 = vcmp.eq.s32.totalorder %v700, %v255
  %vm872 = vcmp.eq.s32.totalorder %v700, %v256
  %vm873 = vcmp.eq.s32.totalorder %v703, %v255
  %vm874 = vcmp.eq.s32.totalorder %v703, %v256
  %vm875 = vcmp.eq.s32.totalorder %v706, %v255
  %vm876 = vcmp.eq.s32.totalorder %v706, %v256
  %vm877 = vcmp.eq.s32.totalorder %v709, %v255
  %vm878 = vcmp.eq.s32.totalorder %v709, %v256
  %vm879 = vcmp.eq.s32.totalorder %v712, %v255
  %vm880 = vcmp.eq.s32.totalorder %v712, %v256
  %vm881 = vcmp.eq.s32.totalorder %v715, %v255
  %vm882 = vcmp.eq.s32.totalorder %v715, %v256
  %vm883 = vcmp.eq.s32.totalorder %v718, %v255
  %vm884 = vcmp.eq.s32.totalorder %v718, %v256
  %vm885 = vcmp.eq.s32.totalorder %v721, %v255
  %vm886 = vcmp.eq.s32.totalorder %v721, %v256
  %vm887 = vcmp.eq.s32.totalorder %v724, %v255
  %vm888 = vcmp.eq.s32.totalorder %v724, %v256
  %vm889 = vcmp.eq.s32.totalorder %v727, %v255
  %vm890 = vcmp.eq.s32.totalorder %v727, %v256
  %vm891 = vcmp.eq.s32.totalorder %v730, %v255
  %vm892 = vcmp.eq.s32.totalorder %v730, %v256
  %vm893 = vcmp.eq.s32.totalorder %v733, %v255
  %vm894 = vcmp.eq.s32.totalorder %v733, %v256
  %vm895 = vcmp.eq.s32.totalorder %v736, %v255
  %vm896 = vcmp.eq.s32.totalorder %v736, %v256
  %vm897 = vcmp.eq.s32.totalorder %v739, %v255
  %vm898 = vcmp.eq.s32.totalorder %v739, %v256
  %vm899 = vcmp.eq.s32.totalorder %v742, %v255
  %vm900 = vcmp.eq.s32.totalorder %v742, %v256
  %vm901 = vcmp.eq.s32.totalorder %v745, %v255
  %vm902 = vcmp.eq.s32.totalorder %v745, %v256
  %vm903 = vcmp.eq.s32.totalorder %v748, %v255
  %vm904 = vcmp.eq.s32.totalorder %v748, %v256
  %vm905 = vcmp.eq.s32.totalorder %v751, %v255
  %vm906 = vcmp.eq.s32.totalorder %v751, %v256
  %vm907 = vcmp.eq.s32.totalorder %v754, %v255
  %vm908 = vcmp.eq.s32.totalorder %v754, %v256
  %vm909 = vcmp.eq.s32.totalorder %v757, %v255
  %vm910 = vcmp.eq.s32.totalorder %v757, %v256
  %vm911 = vcmp.eq.s32.totalorder %v760, %v255
  %vm912 = vcmp.eq.s32.totalorder %v760, %v256
  %vm913 = vcmp.eq.s32.totalorder %v763, %v255
  %vm914 = vcmp.eq.s32.totalorder %v763, %v256
  %vm915 = vcmp.eq.s32.totalorder %v766, %v255
  %vm916 = vcmp.eq.s32.totalorder %v766, %v256
  %vm917 = vcmp.eq.s32.totalorder %v769, %v255
  %vm918 = vcmp.eq.s32.totalorder %v769, %v256
  %vm919 = vcmp.eq.s32.totalorder %v772, %v255
  %vm920 = vcmp.eq.s32.totalorder %v772, %v256
  %vm921 = vcmp.eq.s32.totalorder %v775, %v255
  %vm922 = vcmp.eq.s32.totalorder %v775, %v256
  %vm923 = vcmp.eq.s32.totalorder %v778, %v255
  %vm924 = vcmp.eq.s32.totalorder %v778, %v256
  %vm925 = vcmp.eq.s32.totalorder %v781, %v255
  %vm926 = vcmp.eq.s32.totalorder %v781, %v256
  %vm927 = vcmp.eq.s32.totalorder %v784, %v255
  %vm928 = vcmp.eq.s32.totalorder %v784, %v256
  %vm929 = vcmp.eq.s32.totalorder %v787, %v255
  %vm930 = vcmp.eq.s32.totalorder %v787, %v256
  %vm931 = vcmp.eq.s32.totalorder %v790, %v255
  %vm932 = vcmp.eq.s32.totalorder %v790, %v256
  %vm933 = vcmp.eq.s32.totalorder %v793, %v255
  %vm934 = vcmp.eq.s32.totalorder %v793, %v256
  %vm935 = vcmp.eq.s32.totalorder %v796, %v255
  %vm936 = vcmp.eq.s32.totalorder %v796, %v256
  %vm937 = vcmp.eq.s32.totalorder %v799, %v255
  %vm938 = vcmp.eq.s32.totalorder %v799, %v256
  %vm939 = vcmp.eq.s32.totalorder %v802, %v255
  %vm940 = vcmp.eq.s32.totalorder %v802, %v256
  %vm941 = vcmp.eq.s32.totalorder %v805, %v255
  %vm942 = vcmp.eq.s32.totalorder %v805, %v256
  %vm943 = vcmp.eq.s32.totalorder %v808, %v255
  %vm944 = vcmp.eq.s32.totalorder %v808, %v256
  %vm945 = vcmp.eq.s32.totalorder %v811, %v255
  %vm946 = vcmp.eq.s32.totalorder %v811, %v256
  %vm947 = vcmp.eq.s32.totalorder %v814, %v255
  %vm948 = vcmp.eq.s32.totalorder %v814, %v256
  %vm949 = vcmp.eq.s32.totalorder %v817, %v255
  %vm950 = vcmp.eq.s32.totalorder %v817, %v256
  %vm951 = vcmp.eq.s32.totalorder %v820, %v255
  %vm952 = vcmp.eq.s32.totalorder %v820, %v256
  %vm953 = vcmp.eq.s32.totalorder %v823, %v255
  %vm954 = vcmp.eq.s32.totalorder %v823, %v256
  %vm955 = vcmp.eq.s32.totalorder %v826, %v255
  %vm956 = vcmp.eq.s32.totalorder %v826, %v256
  %vm957 = vcmp.eq.s32.totalorder %v829, %v255
  %vm958 = vcmp.eq.s32.totalorder %v829, %v256
  %vm959 = vcmp.eq.s32.totalorder %v832, %v255
  %vm960 = vcmp.eq.s32.totalorder %v832, %v256
  %vm961 = vmor %vm449, %vm833
  %vm962 = vmor %vm450, %vm834
  %vm963 = vmor %vm451, %vm835
  %vm964 = vmor %vm452, %vm836
  %vm965 = vmor %vm453, %vm837
  %vm966 = vmor %vm454, %vm838
  %vm967 = vmor %vm455, %vm839
  %vm968 = vmor %vm456, %vm840
  %vm969 = vmor %vm457, %vm841
  %vm970 = vmor %vm458, %vm842
  %vm971 = vmor %vm459, %vm843
  %vm972 = vmor %vm460, %vm844
  %vm973 = vmor %vm461, %vm845
  %vm974 = vmor %vm462, %vm846
  %vm975 = vmor %vm463, %vm847
  %vm976 = vmor %vm464, %vm848
  %vm977 = vmor %vm465, %vm849
  %vm978 = vmor %vm466, %vm850
  %vm979 = vmor %vm467, %vm851
  %vm980 = vmor %vm468, %vm852
  %vm981 = vmor %vm469, %vm853
  %vm982 = vmor %vm470, %vm854
  %vm983 = vmor %vm471, %vm855
  %vm984 = vmor %vm472, %vm856
  %vm985 = vmor %vm473, %vm857
  %vm986 = vmor %vm474, %vm858
  %vm987 = vmor %vm475, %vm859
  %vm988 = vmor %vm476, %vm860
  %vm989 = vmor %vm477, %vm861
  %vm990 = vmor %vm478, %vm862
  %vm991 = vmor %vm479, %vm863
  %vm992 = vmor %vm480, %vm864
  %vm993 = vmor %vm481, %vm865
  %vm994 = vmor %vm482, %vm866
  %vm995 = vmor %vm483, %vm867
  %vm996 = vmor %vm484, %vm868
  %vm997 = vmor %vm485, %vm869
  %vm998 = vmor %vm486, %vm870
  %vm999 = vmor %vm487, %vm871
  %vm1000 = vmor %vm488, %vm872
  %vm1001 = vmor %vm489, %vm873
  %vm1002 = vmor %vm490, %vm874
  %vm1003 = vmor %vm491, %vm875
  %vm1004 = vmor %vm492, %vm876
  %vm1005 = vmor %vm493, %vm877
  %vm1006 = vmor %vm494, %vm878
  %vm1007 = vmor %vm495, %vm879
  %vm1008 = vmor %vm496, %vm880
  %vm1009 = vmor %vm497, %vm881
  %vm1010 = vmor %vm498, %vm882
  %vm1011 = vmor %vm499, %vm883
  %vm1012 = vmor %vm500, %vm884
  %vm1013 = vmor %vm501, %vm885
  %vm1014 = vmor %vm502, %vm886
  %vm1015 = vmor %vm503, %vm887
  %vm1016 = vmor %vm504, %vm888
  %vm1017 = vmor %vm505, %vm889
  %vm1018 = vmor %vm506, %vm890
  %vm1019 = vmor %vm507, %vm891
  %vm1020 = vmor %vm508, %vm892
  %vm1021 = vmor %vm509, %vm893
  %vm1022 = vmor %vm510, %vm894
  %vm1023 = vmor %vm511, %vm895
  %vm1024 = vmor %vm512, %vm896
  %vm1025 = vmor %vm513, %vm897
  %vm1026 = vmor %vm514, %vm898
  %vm1027 = vmor %vm515, %vm899
  %vm1028 = vmor %vm516, %vm900
  %vm1029 = vmor %vm517, %vm901
  %vm1030 = vmor %vm518, %vm902
  %vm1031 = vmor %vm519, %vm903
  %vm1032 = vmor %vm520, %vm904
  %vm1033 = vmor %vm521, %vm905
  %vm1034 = vmor %vm522, %vm906
  %vm1035 = vmor %vm523, %vm907
  %vm1036 = vmor %vm524, %vm908
  %vm1037 = vmor %vm525, %vm909
  %vm1038 = vmor %vm526, %vm910
  %vm1039 = vmor %vm527, %vm911
  %vm1040 = vmor %vm528, %vm912
  %vm1041 = vmor %vm529, %vm913
  %vm1042 = vmor %vm530, %vm914
  %vm1043 = vmor %vm531, %vm915
  %vm1044 = vmor %vm532, %vm916
  %vm1045 = vmor %vm533, %vm917
  %vm1046 = vmor %vm534, %vm918
  %vm1047 = vmor %vm535, %vm919
  %vm1048 = vmor %vm536, %vm920
  %vm1049 = vmor %vm537, %vm921
  %vm1050 = vmor %vm538, %vm922
  %vm1051 = vmor %vm539, %vm923
  %vm1052 = vmor %vm540, %vm924
  %vm1053 = vmor %vm541, %vm925
  %vm1054 = vmor %vm542, %vm926
  %vm1055 = vmor %vm543, %vm927
  %vm1056 = vmor %vm544, %vm928
  %vm1057 = vmor %vm545, %vm929
  %vm1058 = vmor %vm546, %vm930
  %vm1059 = vmor %vm547, %vm931
  %vm1060 = vmor %vm548, %vm932
  %vm1061 = vmor %vm549, %vm933
  %vm1062 = vmor %vm550, %vm934
  %vm1063 = vmor %vm551, %vm935
  %vm1064 = vmor %vm552, %vm936
  %vm1065 = vmor %vm553, %vm937
  %vm1066 = vmor %vm554, %vm938
  %vm1067 = vmor %vm555, %vm939
  %vm1068 = vmor %vm556, %vm940
  %vm1069 = vmor %vm557, %vm941
  %vm1070 = vmor %vm558, %vm942
  %vm1071 = vmor %vm559, %vm943
  %vm1072 = vmor %vm560, %vm944
  %vm1073 = vmor %vm561, %vm945
  %vm1074 = vmor %vm562, %vm946
  %vm1075 = vmor %vm563, %vm947
  %vm1076 = vmor %vm564, %vm948
  %vm1077 = vmor %vm565, %vm949
  %vm1078 = vmor %vm566, %vm950
  %vm1079 = vmor %vm567, %vm951
  %vm1080 = vmor %vm568, %vm952
  %vm1081 = vmor %vm569, %vm953
  %vm1082 = vmor %vm570, %vm954
  %vm1083 = vmor %vm571, %vm955
  %vm1084 = vmor %vm572, %vm956
  %vm1085 = vmor %vm573, %vm957
  %vm1086 = vmor %vm574, %vm958
  %vm1087 = vmor %vm575, %vm959
  %vm1088 = vmor %vm576, %vm960
  %v1089 = vsel %vm961, 1, 0
  %v1090 = vsel %vm962, 1, 0
  %v1091 = vsel %vm963, 1, 0
  %v1092 = vsel %vm964, 1, 0
  %v1093 = vsel %vm965, 1, 0
  %v1094 = vsel %vm966, 1, 0
  %v1095 = vsel %vm967, 1, 0
  %v1096 = vsel %vm968, 1, 0
  %v1097 = vsel %vm969, 1, 0
  %v1098 = vsel %vm970, 1, 0
  %v1099 = vsel %vm971, 1, 0
  %v1100 = vsel %vm972, 1, 0
  %v1101 = vsel %vm973, 1, 0
  %v1102 = vsel %vm974, 1, 0
  %v1103 = vsel %vm975, 1, 0
  %v1104 = vsel %vm976, 1, 0
  %v1105 = vsel %vm977, 1, 0
  %v1106 = vsel %vm978, 1, 0
  %v1107 = vsel %vm979, 1, 0
  %v1108 = vsel %vm980, 1, 0
  %v1109 = vsel %vm981, 1, 0
  %v1110 = vsel %vm982, 1, 0
  %v1111 = vsel %vm983, 1, 0
  %v1112 = vsel %vm984, 1, 0
  %v1113 = vsel %vm985, 1, 0
  %v1114 = vsel %vm986, 1, 0
  %v1115 = vsel %vm987, 1, 0
  %v1116 = vsel %vm988, 1, 0
  %v1117 = vsel %vm989, 1, 0
  %v1118 = vsel %vm990, 1, 0
  %v1119 = vsel %vm991, 1, 0
  %v1120 = vsel %vm992, 1, 0
  %v1121 = vsel %vm993, 1, 0
  %v1122 = vsel %vm994, 1, 0
  %v1123 = vsel %vm995, 1, 0
  %v1124 = vsel %vm996, 1, 0
  %v1125 = vsel %vm997, 1, 0
  %v1126 = vsel %vm998, 1, 0
  %v1127 = vsel %vm999, 1, 0
  %v1128 = vsel %vm1000, 1, 0
  %v1129 = vsel %vm1001, 1, 0
  %v1130 = vsel %vm1002, 1, 0
  %v1131 = vsel %vm1003, 1, 0
  %v1132 = vsel %vm1004, 1, 0
  %v1133 = vsel %vm1005, 1, 0
  %v1134 = vsel %vm1006, 1, 0
  %v1135 = vsel %vm1007, 1, 0
  %v1136 = vsel %vm1008, 1, 0
  %v1137 = vsel %vm1009, 1, 0
  %v1138 = vsel %vm1010, 1, 0
  %v1139 = vsel %vm1011, 1, 0
  %v1140 = vsel %vm1012, 1, 0
  %v1141 = vsel %vm1013, 1, 0
  %v1142 = vsel %vm1014, 1, 0
  %v1143 = vsel %vm1015, 1, 0
  %v1144 = vsel %vm1016, 1, 0
  %v1145 = vsel %vm1017, 1, 0
  %v1146 = vsel %vm1018, 1, 0
  %v1147 = vsel %vm1019, 1, 0
  %v1148 = vsel %vm1020, 1, 0
  %v1149 = vsel %vm1021, 1, 0
  %v1150 = vsel %vm1022, 1, 0
  %v1151 = vsel %vm1023, 1, 0
  %v1152 = vsel %vm1024, 1, 0
  %v1153 = vsel %vm1025, 1, 0
  %v1154 = vsel %vm1026, 1, 0
  %v1155 = vsel %vm1027, 1, 0
  %v1156 = vsel %vm1028, 1, 0
  %v1157 = vsel %vm1029, 1, 0
  %v1158 = vsel %vm1030, 1, 0
  %v1159 = vsel %vm1031, 1, 0
  %v1160 = vsel %vm1032, 1, 0
  %v1161 = vsel %vm1033, 1, 0
  %v1162 = vsel %vm1034, 1, 0
  %v1163 = vsel %vm1035, 1, 0
  %v1164 = vsel %vm1036, 1, 0
  %v1165 = vsel %vm1037, 1, 0
  %v1166 = vsel %vm1038, 1, 0
  %v1167 = vsel %vm1039, 1, 0
  %v1168 = vsel %vm1040, 1, 0
  %v1169 = vsel %vm1041, 1, 0
  %v1170 = vsel %vm1042, 1, 0
  %v1171 = vsel %vm1043, 1, 0
  %v1172 = vsel %vm1044, 1, 0
  %v1173 = vsel %vm1045, 1, 0
  %v1174 = vsel %vm1046, 1, 0
  %v1175 = vsel %vm1047, 1, 0
  %v1176 = vsel %vm1048, 1, 0
  %v1177 = vsel %vm1049, 1, 0
  %v1178 = vsel %vm1050, 1, 0
  %v1179 = vsel %vm1051, 1, 0
  %v1180 = vsel %vm1052, 1, 0
  %v1181 = vsel %vm1053, 1, 0
  %v1182 = vsel %vm1054, 1, 0
  %v1183 = vsel %vm1055, 1, 0
  %v1184 = vsel %vm1056, 1, 0
  %v1185 = vsel %vm1057, 1, 0
  %v1186 = vsel %vm1058, 1, 0
  %v1187 = vsel %vm1059, 1, 0
  %v1188 = vsel %vm1060, 1, 0
  %v1189 = vsel %vm1061, 1, 0
  %v1190 = vsel %vm1062, 1, 0
  %v1191 = vsel %vm1063, 1, 0
  %v1192 = vsel %vm1064, 1, 0
  %v1193 = vsel %vm1065, 1, 0
  %v1194 = vsel %vm1066, 1, 0
  %v1195 = vsel %vm1067, 1, 0
  %v1196 = vsel %vm1068, 1, 0
  %v1197 = vsel %vm1069, 1, 0
  %v1198 = vsel %vm1070, 1, 0
  %v1199 = vsel %vm1071, 1, 0
  %v1200 = vsel %vm1072, 1, 0
  %v1201 = vsel %vm1073, 1, 0
  %v1202 = vsel %vm1074, 1, 0
  %v1203 = vsel %vm1075, 1, 0
  %v1204 = vsel %vm1076, 1, 0
  %v1205 = vsel %vm1077, 1, 0
  %v1206 = vsel %vm1078, 1, 0
  %v1207 = vsel %vm1079, 1, 0
  %v1208 = vsel %vm1080, 1, 0
  %v1209 = vsel %vm1081, 1, 0
  %v1210 = vsel %vm1082, 1, 0
  %v1211 = vsel %vm1083, 1, 0
  %v1212 = vsel %vm1084, 1, 0
  %v1213 = vsel %vm1085, 1, 0
  %v1214 = vsel %vm1086, 1, 0
  %v1215 = vsel %vm1087, 1, 0
  %v1216 = vsel %vm1088, 1, 0
  %v1217 = vcvt.s32.f32 %v1089
  %v1218 = vcvt.s32.f32 %v1090
  %v1219 = vcvt.s32.f32 %v1091
  %v1220 = vcvt.s32.f32 %v1092
  %v1221 = vcvt.s32.f32 %v1093
  %v1222 = vcvt.s32.f32 %v1094
  %v1223 = vcvt.s32.f32 %v1095
  %v1224 = vcvt.s32.f32 %v1096
  %v1225 = vcvt.s32.f32 %v1097
  %v1226 = vcvt.s32.f32 %v1098
  %v1227 = vcvt.s32.f32 %v1099
  %v1228 = vcvt.s32.f32 %v1100
  %v1229 = vcvt.s32.f32 %v1101
  %v1230 = vcvt.s32.f32 %v1102
  %v1231 = vcvt.s32.f32 %v1103
  %v1232 = vcvt.s32.f32 %v1104
  %v1233 = vcvt.s32.f32 %v1105
  %v1234 = vcvt.s32.f32 %v1106
  %v1235 = vcvt.s32.f32 %v1107
  %v1236 = vcvt.s32.f32 %v1108
  %v1237 = vcvt.s32.f32 %v1109
  %v1238 = vcvt.s32.f32 %v1110
  %v1239 = vcvt.s32.f32 %v1111
  %v1240 = vcvt.s32.f32 %v1112
  %v1241 = vcvt.s32.f32 %v1113
  %v1242 = vcvt.s32.f32 %v1114
  %v1243 = vcvt.s32.f32 %v1115
  %v1244 = vcvt.s32.f32 %v1116
  %v1245 = vcvt.s32.f32 %v1117
  %v1246 = vcvt.s32.f32 %v1118
  %v1247 = vcvt.s32.f32 %v1119
  %v1248 = vcvt.s32.f32 %v1120
  %v1249 = vcvt.s32.f32 %v1121
  %v1250 = vcvt.s32.f32 %v1122
  %v1251 = vcvt.s32.f32 %v1123
  %v1252 = vcvt.s32.f32 %v1124
  %v1253 = vcvt.s32.f32 %v1125
  %v1254 = vcvt.s32.f32 %v1126
  %v1255 = vcvt.s32.f32 %v1127
  %v1256 = vcvt.s32.f32 %v1128
  %v1257 = vcvt.s32.f32 %v1129
  %v1258 = vcvt.s32.f32 %v1130
  %v1259 = vcvt.s32.f32 %v1131
  %v1260 = vcvt.s32.f32 %v1132
  %v1261 = vcvt.s32.f32 %v1133
  %v1262 = vcvt.s32.f32 %v1134
  %v1263 = vcvt.s32.f32 %v1135
  %v1264 = vcvt.s32.f32 %v1136
  %v1265 = vcvt.s32.f32 %v1137
  %v1266 = vcvt.s32.f32 %v1138
  %v1267 = vcvt.s32.f32 %v1139
  %v1268 = vcvt.s32.f32 %v1140
  %v1269 = vcvt.s32.f32 %v1141
  %v1270 = vcvt.s32.f32 %v1142
  %v1271 = vcvt.s32.f32 %v1143
  %v1272 = vcvt.s32.f32 %v1144
  %v1273 = vcvt.s32.f32 %v1145
  %v1274 = vcvt.s32.f32 %v1146
  %v1275 = vcvt.s32.f32 %v1147
  %v1276 = vcvt.s32.f32 %v1148
  %v1277 = vcvt.s32.f32 %v1149
  %v1278 = vcvt.s32.f32 %v1150
  %v1279 = vcvt.s32.f32 %v1151
  %v1280 = vcvt.s32.f32 %v1152
  %v1281 = vcvt.s32.f32 %v1153
  %v1282 = vcvt.s32.f32 %v1154
  %v1283 = vcvt.s32.f32 %v1155
  %v1284 = vcvt.s32.f32 %v1156
  %v1285 = vcvt.s32.f32 %v1157
  %v1286 = vcvt.s32.f32 %v1158
  %v1287 = vcvt.s32.f32 %v1159
  %v1288 = vcvt.s32.f32 %v1160
  %v1289 = vcvt.s32.f32 %v1161
  %v1290 = vcvt.s32.f32 %v1162
  %v1291 = vcvt.s32.f32 %v1163
  %v1292 = vcvt.s32.f32 %v1164
  %v1293 = vcvt.s32.f32 %v1165
  %v1294 = vcvt.s32.f32 %v1166
  %v1295 = vcvt.s32.f32 %v1167
  %v1296 = vcvt.s32.f32 %v1168
  %v1297 = vcvt.s32.f32 %v1169
  %v1298 = vcvt.s32.f32 %v1170
  %v1299 = vcvt.s32.f32 %v1171
  %v1300 = vcvt.s32.f32 %v1172
  %v1301 = vcvt.s32.f32 %v1173
  %v1302 = vcvt.s32.f32 %v1174
  %v1303 = vcvt.s32.f32 %v1175
  %v1304 = vcvt.s32.f32 %v1176
  %v1305 = vcvt.s32.f32 %v1177
  %v1306 = vcvt.s32.f32 %v1178
  %v1307 = vcvt.s32.f32 %v1179
  %v1308 = vcvt.s32.f32 %v1180
  %v1309 = vcvt.s32.f32 %v1181
  %v1310 = vcvt.s32.f32 %v1182
  %v1311 = vcvt.s32.f32 %v1183
  %v1312 = vcvt.s32.f32 %v1184
  %v1313 = vcvt.s32.f32 %v1185
  %v1314 = vcvt.s32.f32 %v1186
  %v1315 = vcvt.s32.f32 %v1187
  %v1316 = vcvt.s32.f32 %v1188
  %v1317 = vcvt.s32.f32 %v1189
  %v1318 = vcvt.s32.f32 %v1190
  %v1319 = vcvt.s32.f32 %v1191
  %v1320 = vcvt.s32.f32 %v1192
  %v1321 = vcvt.s32.f32 %v1193
  %v1322 = vcvt.s32.f32 %v1194
  %v1323 = vcvt.s32.f32 %v1195
  %v1324 = vcvt.s32.f32 %v1196
  %v1325 = vcvt.s32.f32 %v1197
  %v1326 = vcvt.s32.f32 %v1198
  %v1327 = vcvt.s32.f32 %v1199
  %v1328 = vcvt.s32.f32 %v1200
  %v1329 = vcvt.s32.f32 %v1201
  %v1330 = vcvt.s32.f32 %v1202
  %v1331 = vcvt.s32.f32 %v1203
  %v1332 = vcvt.s32.f32 %v1204
  %v1333 = vcvt.s32.f32 %v1205
  %v1334 = vcvt.s32.f32 %v1206
  %v1335 = vcvt.s32.f32 %v1207
  %v1336 = vcvt.s32.f32 %v1208
  %v1337 = vcvt.s32.f32 %v1209
  %v1338 = vcvt.s32.f32 %v1210
  %v1339 = vcvt.s32.f32 %v1211
  %v1340 = vcvt.s32.f32 %v1212
  %v1341 = vcvt.s32.f32 %v1213
  %v1342 = vcvt.s32.f32 %v1214
  %v1343 = vcvt.s32.f32 %v1215
  %v1344 = vcvt.s32.f32 %v1216
  %vm1345 = vcmask 818176
  %v1347 = vsel %vm1345, %v1218, 0
  %v1350 = vsel %vm1345, %v1220, 0
  %v1353 = vsel %vm1345, %v1222, 0
  %v1356 = vsel %vm1345, %v1224, 0
  %v1359 = vsel %vm1345, %v1226, 0
  %v1362 = vsel %vm1345, %v1228, 0
  %v1365 = vsel %vm1345, %v1230, 0
  %v1368 = vsel %vm1345, %v1232, 0
  %v1371 = vsel %vm1345, %v1234, 0
  %v1374 = vsel %vm1345, %v1236, 0
  %v1377 = vsel %vm1345, %v1238, 0
  %v1380 = vsel %vm1345, %v1240, 0
  %v1383 = vsel %vm1345, %v1242, 0
  %v1386 = vsel %vm1345, %v1244, 0
  %v1389 = vsel %vm1345, %v1246, 0
  %v1392 = vsel %vm1345, %v1248, 0
  %v1395 = vsel %vm1345, %v1250, 0
  %v1398 = vsel %vm1345, %v1252, 0
  %v1401 = vsel %vm1345, %v1254, 0
  %v1404 = vsel %vm1345, %v1256, 0
  %v1407 = vsel %vm1345, %v1258, 0
  %v1410 = vsel %vm1345, %v1260, 0
  %v1413 = vsel %vm1345, %v1262, 0
  %v1416 = vsel %vm1345, %v1264, 0
  %v1419 = vsel %vm1345, %v1266, 0
  %v1422 = vsel %vm1345, %v1268, 0
  %v1425 = vsel %vm1345, %v1270, 0
  %v1428 = vsel %vm1345, %v1272, 0
  %v1431 = vsel %vm1345, %v1274, 0
  %v1434 = vsel %vm1345, %v1276, 0
  %v1437 = vsel %vm1345, %v1278, 0
  %v1440 = vsel %vm1345, %v1280, 0
  %v1443 = vsel %vm1345, %v1282, 0
  %v1446 = vsel %vm1345, %v1284, 0
  %v1449 = vsel %vm1345, %v1286, 0
  %v1452 = vsel %vm1345, %v1288, 0
  %v1455 = vsel %vm1345, %v1290, 0
  %v1458 = vsel %vm1345, %v1292, 0
  %v1461 = vsel %vm1345, %v1294, 0
  %v1464 = vsel %vm1345, %v1296, 0
  %v1467 = vsel %vm1345, %v1298, 0
  %v1470 = vsel %vm1345, %v1300, 0
  %v1473 = vsel %vm1345, %v1302, 0
  %v1476 = vsel %vm1345, %v1304, 0
  %v1479 = vsel %vm1345, %v1306, 0
  %v1482 = vsel %vm1345, %v1308, 0
  %v1485 = vsel %vm1345, %v1310, 0
  %v1488 = vsel %vm1345, %v1312, 0
  %v1491 = vsel %vm1345, %v1314, 0
  %v1494 = vsel %vm1345, %v1316, 0
  %v1497 = vsel %vm1345, %v1318, 0
  %v1500 = vsel %vm1345, %v1320, 0
  %v1503 = vsel %vm1345, %v1322, 0
  %v1506 = vsel %vm1345, %v1324, 0
  %v1509 = vsel %vm1345, %v1326, 0
  %v1512 = vsel %vm1345, %v1328, 0
  %v1515 = vsel %vm1345, %v1330, 0
  %v1518 = vsel %vm1345, %v1332, 0
  %v1521 = vsel %vm1345, %v1334, 0
  %v1524 = vsel %vm1345, %v1336, 0
  %v1527 = vsel %vm1345, %v1338, 0
  %v1530 = vsel %vm1345, %v1340, 0
  %v1533 = vsel %vm1345, %v1342, 0
  %v1536 = vsel %vm1345, %v1344, 0
  %vm1538 = vcmask 1043456
  %v1540 = vsel %vm1538, %v248, 0
  %1542 = vmatprep.subr.mxu0 0.0
  %v1543 = vand.u32 %v235, 4294901760
  %1544 = vmatpush1.msra.mxu0 %v1543
  %1545 = vmatprep.subr.mxu0 0.0
  %v1546 = vand.u32 %v234, 4294901760
  %1547 = vmatpush1.msra.mxu0 %v1546
  %1548 = vmatprep.subr.mxu0 0.0
  %v1549 = vand.u32 %v233, 4294901760
  %1550 = vmatpush1.msra.mxu0 %v1549
  %1551 = vmatprep.subr.mxu0 0.0
  %v1552 = vand.u32 %v232, 4294901760
  %1553 = vmatpush1.msra.mxu0 %v1552
  %1554 = vmatprep.subr.mxu0 0.0
  %v1555 = vand.u32 %v231, 4294901760
  %1556 = vmatpush1.msra.mxu0 %v1555
  %1557 = vmatprep.subr.mxu0 0.0
  %v1558 = vand.u32 %v230, 4294901760
  %1559 = vmatpush1.msra.mxu0 %v1558
  %1560 = vmatprep.subr.mxu0 0.0
  %v1561 = vand.u32 %v229, 4294901760
  %1562 = vmatpush1.msra.mxu0 %v1561
  %1563 = vmatprep.subr.mxu0 0.0
  %v1564 = vand.u32 %v228, 4294901760
  %1565 = vmatpush1.msra.mxu0 %v1564
  %1566 = vmatprep.subr.mxu0 0.0
  %v1567 = vand.u32 %v227, 4294901760
  %1568 = vmatpush1.msra.mxu0 %v1567
  %1569 = vmatprep.subr.mxu0 0.0
  %v1570 = vand.u32 %v226, 4294901760
  %1571 = vmatpush1.msra.mxu0 %v1570
  %1572 = vmatprep.subr.mxu0 0.0
  %v1573 = vand.u32 %v225, 4294901760
  %1574 = vmatpush1.msra.mxu0 %v1573
  %1575 = vmatprep.subr.mxu0 0.0
  %v1576 = vand.u32 %v224, 4294901760
  %1577 = vmatpush1.msra.mxu0 %v1576
  %1578 = vmatprep.subr.mxu0 0.0
  %v1579 = vand.u32 %v223, 4294901760
  %1580 = vmatpush1.msra.mxu0 %v1579
  %1581 = vmatprep.subr.mxu0 0.0
  %v1582 = vand.u32 %v222, 4294901760
  %1583 = vmatpush1.msra.mxu0 %v1582
  %1584 = vmatprep.subr.mxu0 0.0
  %v1585 = vand.u32 %v221, 4294901760
  %1586 = vmatpush1.msra.mxu0 %v1585
  %1587 = vmatprep.subr.mxu0 0.0
  %v1588 = vand.u32 %v220, 4294901760
  %1589 = vmatpush1.msra.mxu0 %v1588
  %1590 = vmatprep.subr.mxu0 0.0
  %1591 = vmatpush2.msra.mxu0 0.0
  %1592 = vmatprep.subr.mxu0 0.0
  %1593 = vmatpush2.msra.mxu0 0.0
  %1594 = vmatprep.subr.mxu0 0.0
  %1595 = vmatpush2.msra.mxu0 0.0
  %1596 = vmatprep.subr.mxu0 0.0
  %v1597 = vand.u32 %v1540, 4294901760
  %1598 = vmatpush2.msra.mxu0 %v1597
  %1599 = vmatprep.subr.mxu0 0.0
  %v1600 = vand.u32 %v247, 4294901760
  %1601 = vmatpush2.msra.mxu0 %v1600
  %1602 = vmatprep.subr.mxu0 0.0
  %v1603 = vand.u32 %v246, 4294901760
  %1604 = vmatpush2.msra.mxu0 %v1603
  %1605 = vmatprep.subr.mxu0 0.0
  %v1606 = vand.u32 %v245, 4294901760
  %1607 = vmatpush2.msra.mxu0 %v1606
  %1608 = vmatprep.subr.mxu0 0.0
  %v1609 = vand.u32 %v244, 4294901760
  %1610 = vmatpush2.msra.mxu0 %v1609
  %1611 = vmatprep.subr.mxu0 0.0
  %v1612 = vand.u32 %v243, 4294901760
  %1613 = vmatpush2.msra.mxu0 %v1612
  %1614 = vmatprep.subr.mxu0 0.0
  %v1615 = vand.u32 %v242, 4294901760
  %1616 = vmatpush2.msra.mxu0 %v1615
  %1617 = vmatprep.subr.mxu0 0.0
  %v1618 = vand.u32 %v241, 4294901760
  %1619 = vmatpush2.msra.mxu0 %v1618
  %1620 = vmatprep.subr.mxu0 0.0
  %v1621 = vand.u32 %v240, 4294901760
  %1622 = vmatpush2.msra.mxu0 %v1621
  %1623 = vmatprep.subr.mxu0 0.0
  %v1624 = vand.u32 %v239, 4294901760
  %1625 = vmatpush2.msra.mxu0 %v1624
  %1626 = vmatprep.subr.mxu0 0.0
  %v1627 = vand.u32 %v238, 4294901760
  %1628 = vmatpush2.msra.mxu0 %v1627
  %1629 = vmatprep.subr.mxu0 0.0
  %v1630 = vand.u32 %v237, 4294901760
  %1631 = vmatpush2.msra.mxu0 %v1630
  %1632 = vmatprep.subr.mxu0 0.0
  %v1633 = vand.u32 %v236, 4294901760
  %1634 = vmatpush2.msra.mxu0 %v1633
  %v1635 = vand.u32 %v1347, 4294901760
  %v1636 = vsub.f32 %v1347, %v1635
  %v1637 = vand.u32 %v1636, 4294901760
  %v1638 = vsub.f32 %v1636, %v1637
  %v1639 = vand.u32 %v1638, 4294901760
  %1640 = vmatprep.mubr.f32.mxu0 %v1639
  %v1641 = vand.u32 %v1217, 4294901760
  %v1642 = vsub.f32 %v1217, %v1641
  %v1643 = vand.u32 %v1642, 4294901760
  %v1644 = vsub.f32 %v1642, %v1643
  %v1645 = vand.u32 %v1644, 4294901760
  %1646 = vmatmul.mubr.f32.gmra.mxu0 %v1645
  %v1647 = vpop.f32.mrf.mxu0
  %v1648 = vadd.f32 0.0, %v1647
  %v1649 = vpop.f32.mrf.mxu0
  %v1650 = vand.u32 %v1350, 4294901760
  %v1651 = vsub.f32 %v1350, %v1650
  %v1652 = vand.u32 %v1651, 4294901760
  %v1653 = vsub.f32 %v1651, %v1652
  %v1654 = vand.u32 %v1653, 4294901760
  %1655 = vmatprep.mubr.f32.mxu0 %v1654
  %v1656 = vand.u32 %v1219, 4294901760
  %v1657 = vsub.f32 %v1219, %v1656
  %v1658 = vand.u32 %v1657, 4294901760
  %v1659 = vsub.f32 %v1657, %v1658
  %v1660 = vand.u32 %v1659, 4294901760
  %1661 = vmatmul.mubr.f32.gmra.mxu0 %v1660
  %v1662 = vpop.f32.mrf.mxu0
  %v1663 = vadd.f32 0.0, %v1662
  %v1664 = vpop.f32.mrf.mxu0
  %v1665 = vand.u32 %v1353, 4294901760
  %v1666 = vsub.f32 %v1353, %v1665
  %v1667 = vand.u32 %v1666, 4294901760
  %v1668 = vsub.f32 %v1666, %v1667
  %v1669 = vand.u32 %v1668, 4294901760
  %1670 = vmatprep.mubr.f32.mxu0 %v1669
  %v1671 = vand.u32 %v1221, 4294901760
  %v1672 = vsub.f32 %v1221, %v1671
  %v1673 = vand.u32 %v1672, 4294901760
  %v1674 = vsub.f32 %v1672, %v1673
  %v1675 = vand.u32 %v1674, 4294901760
  %1676 = vmatmul.mubr.f32.gmra.mxu0 %v1675
  %v1677 = vpop.f32.mrf.mxu0
  %v1678 = vadd.f32 0.0, %v1677
  %v1679 = vpop.f32.mrf.mxu0
  %v1680 = vand.u32 %v1356, 4294901760
  %v1681 = vsub.f32 %v1356, %v1680
  %v1682 = vand.u32 %v1681, 4294901760
  %v1683 = vsub.f32 %v1681, %v1682
  %v1684 = vand.u32 %v1683, 4294901760
  %1685 = vmatprep.mubr.f32.mxu0 %v1684
  %v1686 = vand.u32 %v1223, 4294901760
  %v1687 = vsub.f32 %v1223, %v1686
  %v1688 = vand.u32 %v1687, 4294901760
  %v1689 = vsub.f32 %v1687, %v1688
  %v1690 = vand.u32 %v1689, 4294901760
  %1691 = vmatmul.mubr.f32.gmra.mxu0 %v1690
  %v1692 = vpop.f32.mrf.mxu0
  %v1693 = vadd.f32 0.0, %v1692
  %v1694 = vpop.f32.mrf.mxu0
  %v1695 = vand.u32 %v1359, 4294901760
  %v1696 = vsub.f32 %v1359, %v1695
  %v1697 = vand.u32 %v1696, 4294901760
  %v1698 = vsub.f32 %v1696, %v1697
  %v1699 = vand.u32 %v1698, 4294901760
  %1700 = vmatprep.mubr.f32.mxu0 %v1699
  %v1701 = vand.u32 %v1225, 4294901760
  %v1702 = vsub.f32 %v1225, %v1701
  %v1703 = vand.u32 %v1702, 4294901760
  %v1704 = vsub.f32 %v1702, %v1703
  %v1705 = vand.u32 %v1704, 4294901760
  %1706 = vmatmul.mubr.f32.gmra.mxu0 %v1705
  %v1707 = vpop.f32.mrf.mxu0
  %v1708 = vadd.f32 0.0, %v1707
  %v1709 = vpop.f32.mrf.mxu0
  %v1710 = vand.u32 %v1362, 4294901760
  %v1711 = vsub.f32 %v1362, %v1710
  %v1712 = vand.u32 %v1711, 4294901760
  %v1713 = vsub.f32 %v1711, %v1712
  %v1714 = vand.u32 %v1713, 4294901760
  %1715 = vmatprep.mubr.f32.mxu0 %v1714
  %v1716 = vand.u32 %v1227, 4294901760
  %v1717 = vsub.f32 %v1227, %v1716
  %v1718 = vand.u32 %v1717, 4294901760
  %v1719 = vsub.f32 %v1717, %v1718
  %v1720 = vand.u32 %v1719, 4294901760
  %1721 = vmatmul.mubr.f32.gmra.mxu0 %v1720
  %v1722 = vpop.f32.mrf.mxu0
  %v1723 = vadd.f32 0.0, %v1722
  %v1724 = vpop.f32.mrf.mxu0
  %v1725 = vand.u32 %v1365, 4294901760
  %v1726 = vsub.f32 %v1365, %v1725
  %v1727 = vand.u32 %v1726, 4294901760
  %v1728 = vsub.f32 %v1726, %v1727
  %v1729 = vand.u32 %v1728, 4294901760
  %1730 = vmatprep.mubr.f32.mxu0 %v1729
  %v1731 = vand.u32 %v1229, 4294901760
  %v1732 = vsub.f32 %v1229, %v1731
  %v1733 = vand.u32 %v1732, 4294901760
  %v1734 = vsub.f32 %v1732, %v1733
  %v1735 = vand.u32 %v1734, 4294901760
  %1736 = vmatmul.mubr.f32.gmra.mxu0 %v1735
  %v1737 = vpop.f32.mrf.mxu0
  %v1738 = vadd.f32 0.0, %v1737
  %v1739 = vpop.f32.mrf.mxu0
  %v1740 = vand.u32 %v1368, 4294901760
  %v1741 = vsub.f32 %v1368, %v1740
  %v1742 = vand.u32 %v1741, 4294901760
  %v1743 = vsub.f32 %v1741, %v1742
  %v1744 = vand.u32 %v1743, 4294901760
  %1745 = vmatprep.mubr.f32.mxu0 %v1744
  %v1746 = vand.u32 %v1231, 4294901760
  %v1747 = vsub.f32 %v1231, %v1746
  %v1748 = vand.u32 %v1747, 4294901760
  %v1749 = vsub.f32 %v1747, %v1748
  %v1750 = vand.u32 %v1749, 4294901760
  %1751 = vmatmul.mubr.f32.gmra.mxu0 %v1750
  %v1752 = vpop.f32.mrf.mxu0
  %v1753 = vadd.f32 0.0, %v1752
  %v1754 = vpop.f32.mrf.mxu0
  %v1755 = vand.u32 %v1371, 4294901760
  %v1756 = vsub.f32 %v1371, %v1755
  %v1757 = vand.u32 %v1756, 4294901760
  %v1758 = vsub.f32 %v1756, %v1757
  %v1759 = vand.u32 %v1758, 4294901760
  %1760 = vmatprep.mubr.f32.mxu0 %v1759
  %v1761 = vand.u32 %v1233, 4294901760
  %v1762 = vsub.f32 %v1233, %v1761
  %v1763 = vand.u32 %v1762, 4294901760
  %v1764 = vsub.f32 %v1762, %v1763
  %v1765 = vand.u32 %v1764, 4294901760
  %1766 = vmatmul.mubr.f32.gmra.mxu0 %v1765
  %v1767 = vpop.f32.mrf.mxu0
  %v1768 = vadd.f32 0.0, %v1767
  %v1769 = vpop.f32.mrf.mxu0
  %v1770 = vand.u32 %v1374, 4294901760
  %v1771 = vsub.f32 %v1374, %v1770
  %v1772 = vand.u32 %v1771, 4294901760
  %v1773 = vsub.f32 %v1771, %v1772
  %v1774 = vand.u32 %v1773, 4294901760
  %1775 = vmatprep.mubr.f32.mxu0 %v1774
  %v1776 = vand.u32 %v1235, 4294901760
  %v1777 = vsub.f32 %v1235, %v1776
  %v1778 = vand.u32 %v1777, 4294901760
  %v1779 = vsub.f32 %v1777, %v1778
  %v1780 = vand.u32 %v1779, 4294901760
  %1781 = vmatmul.mubr.f32.gmra.mxu0 %v1780
  %v1782 = vpop.f32.mrf.mxu0
  %v1783 = vadd.f32 0.0, %v1782
  %v1784 = vpop.f32.mrf.mxu0
  %v1785 = vand.u32 %v1377, 4294901760
  %v1786 = vsub.f32 %v1377, %v1785
  %v1787 = vand.u32 %v1786, 4294901760
  %v1788 = vsub.f32 %v1786, %v1787
  %v1789 = vand.u32 %v1788, 4294901760
  %1790 = vmatprep.mubr.f32.mxu0 %v1789
  %v1791 = vand.u32 %v1237, 4294901760
  %v1792 = vsub.f32 %v1237, %v1791
  %v1793 = vand.u32 %v1792, 4294901760
  %v1794 = vsub.f32 %v1792, %v1793
  %v1795 = vand.u32 %v1794, 4294901760
  %1796 = vmatmul.mubr.f32.gmra.mxu0 %v1795
  %v1797 = vpop.f32.mrf.mxu0
  %v1798 = vadd.f32 0.0, %v1797
  %v1799 = vpop.f32.mrf.mxu0
  %v1800 = vand.u32 %v1380, 4294901760
  %v1801 = vsub.f32 %v1380, %v1800
  %v1802 = vand.u32 %v1801, 4294901760
  %v1803 = vsub.f32 %v1801, %v1802
  %v1804 = vand.u32 %v1803, 4294901760
  %1805 = vmatprep.mubr.f32.mxu0 %v1804
  %v1806 = vand.u32 %v1239, 4294901760
  %v1807 = vsub.f32 %v1239, %v1806
  %v1808 = vand.u32 %v1807, 4294901760
  %v1809 = vsub.f32 %v1807, %v1808
  %v1810 = vand.u32 %v1809, 4294901760
  %1811 = vmatmul.mubr.f32.gmra.mxu0 %v1810
  %v1812 = vpop.f32.mrf.mxu0
  %v1813 = vadd.f32 0.0, %v1812
  %v1814 = vpop.f32.mrf.mxu0
  %v1815 = vand.u32 %v1383, 4294901760
  %v1816 = vsub.f32 %v1383, %v1815
  %v1817 = vand.u32 %v1816, 4294901760
  %v1818 = vsub.f32 %v1816, %v1817
  %v1819 = vand.u32 %v1818, 4294901760
  %1820 = vmatprep.mubr.f32.mxu0 %v1819
  %v1821 = vand.u32 %v1241, 4294901760
  %v1822 = vsub.f32 %v1241, %v1821
  %v1823 = vand.u32 %v1822, 4294901760
  %v1824 = vsub.f32 %v1822, %v1823
  %v1825 = vand.u32 %v1824, 4294901760
  %1826 = vmatmul.mubr.f32.gmra.mxu0 %v1825
  %v1827 = vpop.f32.mrf.mxu0
  %v1828 = vadd.f32 0.0, %v1827
  %v1829 = vpop.f32.mrf.mxu0
  %v1830 = vand.u32 %v1386, 4294901760
  %v1831 = vsub.f32 %v1386, %v1830
  %v1832 = vand.u32 %v1831, 4294901760
  %v1833 = vsub.f32 %v1831, %v1832
  %v1834 = vand.u32 %v1833, 4294901760
  %1835 = vmatprep.mubr.f32.mxu0 %v1834
  %v1836 = vand.u32 %v1243, 4294901760
  %v1837 = vsub.f32 %v1243, %v1836
  %v1838 = vand.u32 %v1837, 4294901760
  %v1839 = vsub.f32 %v1837, %v1838
  %v1840 = vand.u32 %v1839, 4294901760
  %1841 = vmatmul.mubr.f32.gmra.mxu0 %v1840
  %v1842 = vpop.f32.mrf.mxu0
  %v1843 = vadd.f32 0.0, %v1842
  %v1844 = vpop.f32.mrf.mxu0
  %v1845 = vand.u32 %v1389, 4294901760
  %v1846 = vsub.f32 %v1389, %v1845
  %v1847 = vand.u32 %v1846, 4294901760
  %v1848 = vsub.f32 %v1846, %v1847
  %v1849 = vand.u32 %v1848, 4294901760
  %1850 = vmatprep.mubr.f32.mxu0 %v1849
  %v1851 = vand.u32 %v1245, 4294901760
  %v1852 = vsub.f32 %v1245, %v1851
  %v1853 = vand.u32 %v1852, 4294901760
  %v1854 = vsub.f32 %v1852, %v1853
  %v1855 = vand.u32 %v1854, 4294901760
  %1856 = vmatmul.mubr.f32.gmra.mxu0 %v1855
  %v1857 = vpop.f32.mrf.mxu0
  %v1858 = vadd.f32 0.0, %v1857
  %v1859 = vpop.f32.mrf.mxu0
  %v1860 = vand.u32 %v1392, 4294901760
  %v1861 = vsub.f32 %v1392, %v1860
  %v1862 = vand.u32 %v1861, 4294901760
  %v1863 = vsub.f32 %v1861, %v1862
  %v1864 = vand.u32 %v1863, 4294901760
  %1865 = vmatprep.mubr.f32.mxu0 %v1864
  %v1866 = vand.u32 %v1247, 4294901760
  %v1867 = vsub.f32 %v1247, %v1866
  %v1868 = vand.u32 %v1867, 4294901760
  %v1869 = vsub.f32 %v1867, %v1868
  %v1870 = vand.u32 %v1869, 4294901760
  %1871 = vmatmul.mubr.f32.gmra.mxu0 %v1870
  %v1872 = vpop.f32.mrf.mxu0
  %v1873 = vadd.f32 0.0, %v1872
  %v1874 = vpop.f32.mrf.mxu0
  %v1875 = vand.u32 %v1395, 4294901760
  %v1876 = vsub.f32 %v1395, %v1875
  %v1877 = vand.u32 %v1876, 4294901760
  %v1878 = vsub.f32 %v1876, %v1877
  %v1879 = vand.u32 %v1878, 4294901760
  %1880 = vmatprep.mubr.f32.mxu0 %v1879
  %v1881 = vand.u32 %v1249, 4294901760
  %v1882 = vsub.f32 %v1249, %v1881
  %v1883 = vand.u32 %v1882, 4294901760
  %v1884 = vsub.f32 %v1882, %v1883
  %v1885 = vand.u32 %v1884, 4294901760
  %1886 = vmatmul.mubr.f32.gmra.mxu0 %v1885
  %v1887 = vpop.f32.mrf.mxu0
  %v1888 = vadd.f32 0.0, %v1887
  %v1889 = vpop.f32.mrf.mxu0
  %v1890 = vand.u32 %v1398, 4294901760
  %v1891 = vsub.f32 %v1398, %v1890
  %v1892 = vand.u32 %v1891, 4294901760
  %v1893 = vsub.f32 %v1891, %v1892
  %v1894 = vand.u32 %v1893, 4294901760
  %1895 = vmatprep.mubr.f32.mxu0 %v1894
  %v1896 = vand.u32 %v1251, 4294901760
  %v1897 = vsub.f32 %v1251, %v1896
  %v1898 = vand.u32 %v1897, 4294901760
  %v1899 = vsub.f32 %v1897, %v1898
  %v1900 = vand.u32 %v1899, 4294901760
  %1901 = vmatmul.mubr.f32.gmra.mxu0 %v1900
  %v1902 = vpop.f32.mrf.mxu0
  %v1903 = vadd.f32 0.0, %v1902
  %v1904 = vpop.f32.mrf.mxu0
  %v1905 = vand.u32 %v1401, 4294901760
  %v1906 = vsub.f32 %v1401, %v1905
  %v1907 = vand.u32 %v1906, 4294901760
  %v1908 = vsub.f32 %v1906, %v1907
  %v1909 = vand.u32 %v1908, 4294901760
  %1910 = vmatprep.mubr.f32.mxu0 %v1909
  %v1911 = vand.u32 %v1253, 4294901760
  %v1912 = vsub.f32 %v1253, %v1911
  %v1913 = vand.u32 %v1912, 4294901760
  %v1914 = vsub.f32 %v1912, %v1913
  %v1915 = vand.u32 %v1914, 4294901760
  %1916 = vmatmul.mubr.f32.gmra.mxu0 %v1915
  %v1917 = vpop.f32.mrf.mxu0
  %v1918 = vadd.f32 0.0, %v1917
  %v1919 = vpop.f32.mrf.mxu0
  %v1920 = vand.u32 %v1404, 4294901760
  %v1921 = vsub.f32 %v1404, %v1920
  %v1922 = vand.u32 %v1921, 4294901760
  %v1923 = vsub.f32 %v1921, %v1922
  %v1924 = vand.u32 %v1923, 4294901760
  %1925 = vmatprep.mubr.f32.mxu0 %v1924
  %v1926 = vand.u32 %v1255, 4294901760
  %v1927 = vsub.f32 %v1255, %v1926
  %v1928 = vand.u32 %v1927, 4294901760
  %v1929 = vsub.f32 %v1927, %v1928
  %v1930 = vand.u32 %v1929, 4294901760
  %1931 = vmatmul.mubr.f32.gmra.mxu0 %v1930
  %v1932 = vpop.f32.mrf.mxu0
  %v1933 = vadd.f32 0.0, %v1932
  %v1934 = vpop.f32.mrf.mxu0
  %v1935 = vand.u32 %v1407, 4294901760
  %v1936 = vsub.f32 %v1407, %v1935
  %v1937 = vand.u32 %v1936, 4294901760
  %v1938 = vsub.f32 %v1936, %v1937
  %v1939 = vand.u32 %v1938, 4294901760
  %1940 = vmatprep.mubr.f32.mxu0 %v1939
  %v1941 = vand.u32 %v1257, 4294901760
  %v1942 = vsub.f32 %v1257, %v1941
  %v1943 = vand.u32 %v1942, 4294901760
  %v1944 = vsub.f32 %v1942, %v1943
  %v1945 = vand.u32 %v1944, 4294901760
  %1946 = vmatmul.mubr.f32.gmra.mxu0 %v1945
  %v1947 = vpop.f32.mrf.mxu0
  %v1948 = vadd.f32 0.0, %v1947
  %v1949 = vpop.f32.mrf.mxu0
  %v1950 = vand.u32 %v1410, 4294901760
  %v1951 = vsub.f32 %v1410, %v1950
  %v1952 = vand.u32 %v1951, 4294901760
  %v1953 = vsub.f32 %v1951, %v1952
  %v1954 = vand.u32 %v1953, 4294901760
  %1955 = vmatprep.mubr.f32.mxu0 %v1954
  %v1956 = vand.u32 %v1259, 4294901760
  %v1957 = vsub.f32 %v1259, %v1956
  %v1958 = vand.u32 %v1957, 4294901760
  %v1959 = vsub.f32 %v1957, %v1958
  %v1960 = vand.u32 %v1959, 4294901760
  %1961 = vmatmul.mubr.f32.gmra.mxu0 %v1960
  %v1962 = vpop.f32.mrf.mxu0
  %v1963 = vadd.f32 0.0, %v1962
  %v1964 = vpop.f32.mrf.mxu0
  %v1965 = vand.u32 %v1413, 4294901760
  %v1966 = vsub.f32 %v1413, %v1965
  %v1967 = vand.u32 %v1966, 4294901760
  %v1968 = vsub.f32 %v1966, %v1967
  %v1969 = vand.u32 %v1968, 4294901760
  %1970 = vmatprep.mubr.f32.mxu0 %v1969
  %v1971 = vand.u32 %v1261, 4294901760
  %v1972 = vsub.f32 %v1261, %v1971
  %v1973 = vand.u32 %v1972, 4294901760
  %v1974 = vsub.f32 %v1972, %v1973
  %v1975 = vand.u32 %v1974, 4294901760
  %1976 = vmatmul.mubr.f32.gmra.mxu0 %v1975
  %v1977 = vpop.f32.mrf.mxu0
  %v1978 = vadd.f32 0.0, %v1977
  %v1979 = vpop.f32.mrf.mxu0
  %v1980 = vand.u32 %v1416, 4294901760
  %v1981 = vsub.f32 %v1416, %v1980
  %v1982 = vand.u32 %v1981, 4294901760
  %v1983 = vsub.f32 %v1981, %v1982
  %v1984 = vand.u32 %v1983, 4294901760
  %1985 = vmatprep.mubr.f32.mxu0 %v1984
  %v1986 = vand.u32 %v1263, 4294901760
  %v1987 = vsub.f32 %v1263, %v1986
  %v1988 = vand.u32 %v1987, 4294901760
  %v1989 = vsub.f32 %v1987, %v1988
  %v1990 = vand.u32 %v1989, 4294901760
  %1991 = vmatmul.mubr.f32.gmra.mxu0 %v1990
  %v1992 = vpop.f32.mrf.mxu0
  %v1993 = vadd.f32 0.0, %v1992
  %v1994 = vpop.f32.mrf.mxu0
  %v1995 = vand.u32 %v1419, 4294901760
  %v1996 = vsub.f32 %v1419, %v1995
  %v1997 = vand.u32 %v1996, 4294901760
  %v1998 = vsub.f32 %v1996, %v1997
  %v1999 = vand.u32 %v1998, 4294901760
  %2000 = vmatprep.mubr.f32.mxu0 %v1999
  %v2001 = vand.u32 %v1265, 4294901760
  %v2002 = vsub.f32 %v1265, %v2001
  %v2003 = vand.u32 %v2002, 4294901760
  %v2004 = vsub.f32 %v2002, %v2003
  %v2005 = vand.u32 %v2004, 4294901760
  %2006 = vmatmul.mubr.f32.gmra.mxu0 %v2005
  %v2007 = vpop.f32.mrf.mxu0
  %v2008 = vadd.f32 0.0, %v2007
  %v2009 = vpop.f32.mrf.mxu0
  %v2010 = vand.u32 %v1422, 4294901760
  %v2011 = vsub.f32 %v1422, %v2010
  %v2012 = vand.u32 %v2011, 4294901760
  %v2013 = vsub.f32 %v2011, %v2012
  %v2014 = vand.u32 %v2013, 4294901760
  %2015 = vmatprep.mubr.f32.mxu0 %v2014
  %v2016 = vand.u32 %v1267, 4294901760
  %v2017 = vsub.f32 %v1267, %v2016
  %v2018 = vand.u32 %v2017, 4294901760
  %v2019 = vsub.f32 %v2017, %v2018
  %v2020 = vand.u32 %v2019, 4294901760
  %2021 = vmatmul.mubr.f32.gmra.mxu0 %v2020
  %v2022 = vpop.f32.mrf.mxu0
  %v2023 = vadd.f32 0.0, %v2022
  %v2024 = vpop.f32.mrf.mxu0
  %v2025 = vand.u32 %v1425, 4294901760
  %v2026 = vsub.f32 %v1425, %v2025
  %v2027 = vand.u32 %v2026, 4294901760
  %v2028 = vsub.f32 %v2026, %v2027
  %v2029 = vand.u32 %v2028, 4294901760
  %2030 = vmatprep.mubr.f32.mxu0 %v2029
  %v2031 = vand.u32 %v1269, 4294901760
  %v2032 = vsub.f32 %v1269, %v2031
  %v2033 = vand.u32 %v2032, 4294901760
  %v2034 = vsub.f32 %v2032, %v2033
  %v2035 = vand.u32 %v2034, 4294901760
  %2036 = vmatmul.mubr.f32.gmra.mxu0 %v2035
  %v2037 = vpop.f32.mrf.mxu0
  %v2038 = vadd.f32 0.0, %v2037
  %v2039 = vpop.f32.mrf.mxu0
  %v2040 = vand.u32 %v1428, 4294901760
  %v2041 = vsub.f32 %v1428, %v2040
  %v2042 = vand.u32 %v2041, 4294901760
  %v2043 = vsub.f32 %v2041, %v2042
  %v2044 = vand.u32 %v2043, 4294901760
  %2045 = vmatprep.mubr.f32.mxu0 %v2044
  %v2046 = vand.u32 %v1271, 4294901760
  %v2047 = vsub.f32 %v1271, %v2046
  %v2048 = vand.u32 %v2047, 4294901760
  %v2049 = vsub.f32 %v2047, %v2048
  %v2050 = vand.u32 %v2049, 4294901760
  %2051 = vmatmul.mubr.f32.gmra.mxu0 %v2050
  %v2052 = vpop.f32.mrf.mxu0
  %v2053 = vadd.f32 0.0, %v2052
  %v2054 = vpop.f32.mrf.mxu0
  %v2055 = vand.u32 %v1431, 4294901760
  %v2056 = vsub.f32 %v1431, %v2055
  %v2057 = vand.u32 %v2056, 4294901760
  %v2058 = vsub.f32 %v2056, %v2057
  %v2059 = vand.u32 %v2058, 4294901760
  %2060 = vmatprep.mubr.f32.mxu0 %v2059
  %v2061 = vand.u32 %v1273, 4294901760
  %v2062 = vsub.f32 %v1273, %v2061
  %v2063 = vand.u32 %v2062, 4294901760
  %v2064 = vsub.f32 %v2062, %v2063
  %v2065 = vand.u32 %v2064, 4294901760
  %2066 = vmatmul.mubr.f32.gmra.mxu0 %v2065
  %v2067 = vpop.f32.mrf.mxu0
  %v2068 = vadd.f32 0.0, %v2067
  %v2069 = vpop.f32.mrf.mxu0
  %v2070 = vand.u32 %v1434, 4294901760
  %v2071 = vsub.f32 %v1434, %v2070
  %v2072 = vand.u32 %v2071, 4294901760
  %v2073 = vsub.f32 %v2071, %v2072
  %v2074 = vand.u32 %v2073, 4294901760
  %2075 = vmatprep.mubr.f32.mxu0 %v2074
  %v2076 = vand.u32 %v1275, 4294901760
  %v2077 = vsub.f32 %v1275, %v2076
  %v2078 = vand.u32 %v2077, 4294901760
  %v2079 = vsub.f32 %v2077, %v2078
  %v2080 = vand.u32 %v2079, 4294901760
  %2081 = vmatmul.mubr.f32.gmra.mxu0 %v2080
  %v2082 = vpop.f32.mrf.mxu0
  %v2083 = vadd.f32 0.0, %v2082
  %v2084 = vpop.f32.mrf.mxu0
  %v2085 = vand.u32 %v1437, 4294901760
  %v2086 = vsub.f32 %v1437, %v2085
  %v2087 = vand.u32 %v2086, 4294901760
  %v2088 = vsub.f32 %v2086, %v2087
  %v2089 = vand.u32 %v2088, 4294901760
  %2090 = vmatprep.mubr.f32.mxu0 %v2089
  %v2091 = vand.u32 %v1277, 4294901760
  %v2092 = vsub.f32 %v1277, %v2091
  %v2093 = vand.u32 %v2092, 4294901760
  %v2094 = vsub.f32 %v2092, %v2093
  %v2095 = vand.u32 %v2094, 4294901760
  %2096 = vmatmul.mubr.f32.gmra.mxu0 %v2095
  %v2097 = vpop.f32.mrf.mxu0
  %v2098 = vadd.f32 0.0, %v2097
  %v2099 = vpop.f32.mrf.mxu0
  %v2100 = vand.u32 %v1440, 4294901760
  %v2101 = vsub.f32 %v1440, %v2100
  %v2102 = vand.u32 %v2101, 4294901760
  %v2103 = vsub.f32 %v2101, %v2102
  %v2104 = vand.u32 %v2103, 4294901760
  %2105 = vmatprep.mubr.f32.mxu0 %v2104
  %v2106 = vand.u32 %v1279, 4294901760
  %v2107 = vsub.f32 %v1279, %v2106
  %v2108 = vand.u32 %v2107, 4294901760
  %v2109 = vsub.f32 %v2107, %v2108
  %v2110 = vand.u32 %v2109, 4294901760
  %2111 = vmatmul.mubr.f32.gmra.mxu0 %v2110
  %v2112 = vpop.f32.mrf.mxu0
  %v2113 = vadd.f32 0.0, %v2112
  %v2114 = vpop.f32.mrf.mxu0
  %v2115 = vand.u32 %v1443, 4294901760
  %v2116 = vsub.f32 %v1443, %v2115
  %v2117 = vand.u32 %v2116, 4294901760
  %v2118 = vsub.f32 %v2116, %v2117
  %v2119 = vand.u32 %v2118, 4294901760
  %2120 = vmatprep.mubr.f32.mxu0 %v2119
  %v2121 = vand.u32 %v1281, 4294901760
  %v2122 = vsub.f32 %v1281, %v2121
  %v2123 = vand.u32 %v2122, 4294901760
  %v2124 = vsub.f32 %v2122, %v2123
  %v2125 = vand.u32 %v2124, 4294901760
  %2126 = vmatmul.mubr.f32.gmra.mxu0 %v2125
  %v2127 = vpop.f32.mrf.mxu0
  %v2128 = vadd.f32 0.0, %v2127
  %v2129 = vpop.f32.mrf.mxu0
  %v2130 = vand.u32 %v1446, 4294901760
  %v2131 = vsub.f32 %v1446, %v2130
  %v2132 = vand.u32 %v2131, 4294901760
  %v2133 = vsub.f32 %v2131, %v2132
  %v2134 = vand.u32 %v2133, 4294901760
  %2135 = vmatprep.mubr.f32.mxu0 %v2134
  %v2136 = vand.u32 %v1283, 4294901760
  %v2137 = vsub.f32 %v1283, %v2136
  %v2138 = vand.u32 %v2137, 4294901760
  %v2139 = vsub.f32 %v2137, %v2138
  %v2140 = vand.u32 %v2139, 4294901760
  %2141 = vmatmul.mubr.f32.gmra.mxu0 %v2140
  %v2142 = vpop.f32.mrf.mxu0
  %v2143 = vadd.f32 0.0, %v2142
  %v2144 = vpop.f32.mrf.mxu0
  %v2145 = vand.u32 %v1449, 4294901760
  %v2146 = vsub.f32 %v1449, %v2145
  %v2147 = vand.u32 %v2146, 4294901760
  %v2148 = vsub.f32 %v2146, %v2147
  %v2149 = vand.u32 %v2148, 4294901760
  %2150 = vmatprep.mubr.f32.mxu0 %v2149
  %v2151 = vand.u32 %v1285, 4294901760
  %v2152 = vsub.f32 %v1285, %v2151
  %v2153 = vand.u32 %v2152, 4294901760
  %v2154 = vsub.f32 %v2152, %v2153
  %v2155 = vand.u32 %v2154, 4294901760
  %2156 = vmatmul.mubr.f32.gmra.mxu0 %v2155
  %v2157 = vpop.f32.mrf.mxu0
  %v2158 = vadd.f32 0.0, %v2157
  %v2159 = vpop.f32.mrf.mxu0
  %v2160 = vand.u32 %v1452, 4294901760
  %v2161 = vsub.f32 %v1452, %v2160
  %v2162 = vand.u32 %v2161, 4294901760
  %v2163 = vsub.f32 %v2161, %v2162
  %v2164 = vand.u32 %v2163, 4294901760
  %2165 = vmatprep.mubr.f32.mxu0 %v2164
  %v2166 = vand.u32 %v1287, 4294901760
  %v2167 = vsub.f32 %v1287, %v2166
  %v2168 = vand.u32 %v2167, 4294901760
  %v2169 = vsub.f32 %v2167, %v2168
  %v2170 = vand.u32 %v2169, 4294901760
  %2171 = vmatmul.mubr.f32.gmra.mxu0 %v2170
  %v2172 = vpop.f32.mrf.mxu0
  %v2173 = vadd.f32 0.0, %v2172
  %v2174 = vpop.f32.mrf.mxu0
  %v2175 = vand.u32 %v1455, 4294901760
  %v2176 = vsub.f32 %v1455, %v2175
  %v2177 = vand.u32 %v2176, 4294901760
  %v2178 = vsub.f32 %v2176, %v2177
  %v2179 = vand.u32 %v2178, 4294901760
  %2180 = vmatprep.mubr.f32.mxu0 %v2179
  %v2181 = vand.u32 %v1289, 4294901760
  %v2182 = vsub.f32 %v1289, %v2181
  %v2183 = vand.u32 %v2182, 4294901760
  %v2184 = vsub.f32 %v2182, %v2183
  %v2185 = vand.u32 %v2184, 4294901760
  %2186 = vmatmul.mubr.f32.gmra.mxu0 %v2185
  %v2187 = vpop.f32.mrf.mxu0
  %v2188 = vadd.f32 0.0, %v2187
  %v2189 = vpop.f32.mrf.mxu0
  %v2190 = vand.u32 %v1458, 4294901760
  %v2191 = vsub.f32 %v1458, %v2190
  %v2192 = vand.u32 %v2191, 4294901760
  %v2193 = vsub.f32 %v2191, %v2192
  %v2194 = vand.u32 %v2193, 4294901760
  %2195 = vmatprep.mubr.f32.mxu0 %v2194
  %v2196 = vand.u32 %v1291, 4294901760
  %v2197 = vsub.f32 %v1291, %v2196
  %v2198 = vand.u32 %v2197, 4294901760
  %v2199 = vsub.f32 %v2197, %v2198
  %v2200 = vand.u32 %v2199, 4294901760
  %2201 = vmatmul.mubr.f32.gmra.mxu0 %v2200
  %v2202 = vpop.f32.mrf.mxu0
  %v2203 = vadd.f32 0.0, %v2202
  %v2204 = vpop.f32.mrf.mxu0
  %v2205 = vand.u32 %v1461, 4294901760
  %v2206 = vsub.f32 %v1461, %v2205
  %v2207 = vand.u32 %v2206, 4294901760
  %v2208 = vsub.f32 %v2206, %v2207
  %v2209 = vand.u32 %v2208, 4294901760
  %2210 = vmatprep.mubr.f32.mxu0 %v2209
  %v2211 = vand.u32 %v1293, 4294901760
  %v2212 = vsub.f32 %v1293, %v2211
  %v2213 = vand.u32 %v2212, 4294901760
  %v2214 = vsub.f32 %v2212, %v2213
  %v2215 = vand.u32 %v2214, 4294901760
  %2216 = vmatmul.mubr.f32.gmra.mxu0 %v2215
  %v2217 = vpop.f32.mrf.mxu0
  %v2218 = vadd.f32 0.0, %v2217
  %v2219 = vpop.f32.mrf.mxu0
  %v2220 = vand.u32 %v1464, 4294901760
  %v2221 = vsub.f32 %v1464, %v2220
  %v2222 = vand.u32 %v2221, 4294901760
  %v2223 = vsub.f32 %v2221, %v2222
  %v2224 = vand.u32 %v2223, 4294901760
  %2225 = vmatprep.mubr.f32.mxu0 %v2224
  %v2226 = vand.u32 %v1295, 4294901760
  %v2227 = vsub.f32 %v1295, %v2226
  %v2228 = vand.u32 %v2227, 4294901760
  %v2229 = vsub.f32 %v2227, %v2228
  %v2230 = vand.u32 %v2229, 4294901760
  %2231 = vmatmul.mubr.f32.gmra.mxu0 %v2230
  %v2232 = vpop.f32.mrf.mxu0
  %v2233 = vadd.f32 0.0, %v2232
  %v2234 = vpop.f32.mrf.mxu0
  %v2235 = vand.u32 %v1467, 4294901760
  %v2236 = vsub.f32 %v1467, %v2235
  %v2237 = vand.u32 %v2236, 4294901760
  %v2238 = vsub.f32 %v2236, %v2237
  %v2239 = vand.u32 %v2238, 4294901760
  %2240 = vmatprep.mubr.f32.mxu0 %v2239
  %v2241 = vand.u32 %v1297, 4294901760
  %v2242 = vsub.f32 %v1297, %v2241
  %v2243 = vand.u32 %v2242, 4294901760
  %v2244 = vsub.f32 %v2242, %v2243
  %v2245 = vand.u32 %v2244, 4294901760
  %2246 = vmatmul.mubr.f32.gmra.mxu0 %v2245
  %v2247 = vpop.f32.mrf.mxu0
  %v2248 = vadd.f32 0.0, %v2247
  %v2249 = vpop.f32.mrf.mxu0
  %v2250 = vand.u32 %v1470, 4294901760
  %v2251 = vsub.f32 %v1470, %v2250
  %v2252 = vand.u32 %v2251, 4294901760
  %v2253 = vsub.f32 %v2251, %v2252
  %v2254 = vand.u32 %v2253, 4294901760
  %2255 = vmatprep.mubr.f32.mxu0 %v2254
  %v2256 = vand.u32 %v1299, 4294901760
  %v2257 = vsub.f32 %v1299, %v2256
  %v2258 = vand.u32 %v2257, 4294901760
  %v2259 = vsub.f32 %v2257, %v2258
  %v2260 = vand.u32 %v2259, 4294901760
  %2261 = vmatmul.mubr.f32.gmra.mxu0 %v2260
  %v2262 = vpop.f32.mrf.mxu0
  %v2263 = vadd.f32 0.0, %v2262
  %v2264 = vpop.f32.mrf.mxu0
  %v2265 = vand.u32 %v1473, 4294901760
  %v2266 = vsub.f32 %v1473, %v2265
  %v2267 = vand.u32 %v2266, 4294901760
  %v2268 = vsub.f32 %v2266, %v2267
  %v2269 = vand.u32 %v2268, 4294901760
  %2270 = vmatprep.mubr.f32.mxu0 %v2269
  %v2271 = vand.u32 %v1301, 4294901760
  %v2272 = vsub.f32 %v1301, %v2271
  %v2273 = vand.u32 %v2272, 4294901760
  %v2274 = vsub.f32 %v2272, %v2273
  %v2275 = vand.u32 %v2274, 4294901760
  %2276 = vmatmul.mubr.f32.gmra.mxu0 %v2275
  %v2277 = vpop.f32.mrf.mxu0
  %v2278 = vadd.f32 0.0, %v2277
  %v2279 = vpop.f32.mrf.mxu0
  %v2280 = vand.u32 %v1476, 4294901760
  %v2281 = vsub.f32 %v1476, %v2280
  %v2282 = vand.u32 %v2281, 4294901760
  %v2283 = vsub.f32 %v2281, %v2282
  %v2284 = vand.u32 %v2283, 4294901760
  %2285 = vmatprep.mubr.f32.mxu0 %v2284
  %v2286 = vand.u32 %v1303, 4294901760
  %v2287 = vsub.f32 %v1303, %v2286
  %v2288 = vand.u32 %v2287, 4294901760
  %v2289 = vsub.f32 %v2287, %v2288
  %v2290 = vand.u32 %v2289, 4294901760
  %2291 = vmatmul.mubr.f32.gmra.mxu0 %v2290
  %v2292 = vpop.f32.mrf.mxu0
  %v2293 = vadd.f32 0.0, %v2292
  %v2294 = vpop.f32.mrf.mxu0
  %v2295 = vand.u32 %v1479, 4294901760
  %v2296 = vsub.f32 %v1479, %v2295
  %v2297 = vand.u32 %v2296, 4294901760
  %v2298 = vsub.f32 %v2296, %v2297
  %v2299 = vand.u32 %v2298, 4294901760
  %2300 = vmatprep.mubr.f32.mxu0 %v2299
  %v2301 = vand.u32 %v1305, 4294901760
  %v2302 = vsub.f32 %v1305, %v2301
  %v2303 = vand.u32 %v2302, 4294901760
  %v2304 = vsub.f32 %v2302, %v2303
  %v2305 = vand.u32 %v2304, 4294901760
  %2306 = vmatmul.mubr.f32.gmra.mxu0 %v2305
  %v2307 = vpop.f32.mrf.mxu0
  %v2308 = vadd.f32 0.0, %v2307
  %v2309 = vpop.f32.mrf.mxu0
  %v2310 = vand.u32 %v1482, 4294901760
  %v2311 = vsub.f32 %v1482, %v2310
  %v2312 = vand.u32 %v2311, 4294901760
  %v2313 = vsub.f32 %v2311, %v2312
  %v2314 = vand.u32 %v2313, 4294901760
  %2315 = vmatprep.mubr.f32.mxu0 %v2314
  %v2316 = vand.u32 %v1307, 4294901760
  %v2317 = vsub.f32 %v1307, %v2316
  %v2318 = vand.u32 %v2317, 4294901760
  %v2319 = vsub.f32 %v2317, %v2318
  %v2320 = vand.u32 %v2319, 4294901760
  %2321 = vmatmul.mubr.f32.gmra.mxu0 %v2320
  %v2322 = vpop.f32.mrf.mxu0
  %v2323 = vadd.f32 0.0, %v2322
  %v2324 = vpop.f32.mrf.mxu0
  %v2325 = vand.u32 %v1485, 4294901760
  %v2326 = vsub.f32 %v1485, %v2325
  %v2327 = vand.u32 %v2326, 4294901760
  %v2328 = vsub.f32 %v2326, %v2327
  %v2329 = vand.u32 %v2328, 4294901760
  %2330 = vmatprep.mubr.f32.mxu0 %v2329
  %v2331 = vand.u32 %v1309, 4294901760
  %v2332 = vsub.f32 %v1309, %v2331
  %v2333 = vand.u32 %v2332, 4294901760
  %v2334 = vsub.f32 %v2332, %v2333
  %v2335 = vand.u32 %v2334, 4294901760
  %2336 = vmatmul.mubr.f32.gmra.mxu0 %v2335
  %v2337 = vpop.f32.mrf.mxu0
  %v2338 = vadd.f32 0.0, %v2337
  %v2339 = vpop.f32.mrf.mxu0
  %v2340 = vand.u32 %v1488, 4294901760
  %v2341 = vsub.f32 %v1488, %v2340
  %v2342 = vand.u32 %v2341, 4294901760
  %v2343 = vsub.f32 %v2341, %v2342
  %v2344 = vand.u32 %v2343, 4294901760
  %2345 = vmatprep.mubr.f32.mxu0 %v2344
  %v2346 = vand.u32 %v1311, 4294901760
  %v2347 = vsub.f32 %v1311, %v2346
  %v2348 = vand.u32 %v2347, 4294901760
  %v2349 = vsub.f32 %v2347, %v2348
  %v2350 = vand.u32 %v2349, 4294901760
  %2351 = vmatmul.mubr.f32.gmra.mxu0 %v2350
  %v2352 = vpop.f32.mrf.mxu0
  %v2353 = vadd.f32 0.0, %v2352
  %v2354 = vpop.f32.mrf.mxu0
  %v2355 = vand.u32 %v1491, 4294901760
  %v2356 = vsub.f32 %v1491, %v2355
  %v2357 = vand.u32 %v2356, 4294901760
  %v2358 = vsub.f32 %v2356, %v2357
  %v2359 = vand.u32 %v2358, 4294901760
  %2360 = vmatprep.mubr.f32.mxu0 %v2359
  %v2361 = vand.u32 %v1313, 4294901760
  %v2362 = vsub.f32 %v1313, %v2361
  %v2363 = vand.u32 %v2362, 4294901760
  %v2364 = vsub.f32 %v2362, %v2363
  %v2365 = vand.u32 %v2364, 4294901760
  %2366 = vmatmul.mubr.f32.gmra.mxu0 %v2365
  %v2367 = vpop.f32.mrf.mxu0
  %v2368 = vadd.f32 0.0, %v2367
  %v2369 = vpop.f32.mrf.mxu0
  %v2370 = vand.u32 %v1494, 4294901760
  %v2371 = vsub.f32 %v1494, %v2370
  %v2372 = vand.u32 %v2371, 4294901760
  %v2373 = vsub.f32 %v2371, %v2372
  %v2374 = vand.u32 %v2373, 4294901760
  %2375 = vmatprep.mubr.f32.mxu0 %v2374
  %v2376 = vand.u32 %v1315, 4294901760
  %v2377 = vsub.f32 %v1315, %v2376
  %v2378 = vand.u32 %v2377, 4294901760
  %v2379 = vsub.f32 %v2377, %v2378
  %v2380 = vand.u32 %v2379, 4294901760
  %2381 = vmatmul.mubr.f32.gmra.mxu0 %v2380
  %v2382 = vpop.f32.mrf.mxu0
  %v2383 = vadd.f32 0.0, %v2382
  %v2384 = vpop.f32.mrf.mxu0
  %v2385 = vand.u32 %v1497, 4294901760
  %v2386 = vsub.f32 %v1497, %v2385
  %v2387 = vand.u32 %v2386, 4294901760
  %v2388 = vsub.f32 %v2386, %v2387
  %v2389 = vand.u32 %v2388, 4294901760
  %2390 = vmatprep.mubr.f32.mxu0 %v2389
  %v2391 = vand.u32 %v1317, 4294901760
  %v2392 = vsub.f32 %v1317, %v2391
  %v2393 = vand.u32 %v2392, 4294901760
  %v2394 = vsub.f32 %v2392, %v2393
  %v2395 = vand.u32 %v2394, 4294901760
  %2396 = vmatmul.mubr.f32.gmra.mxu0 %v2395
  %v2397 = vpop.f32.mrf.mxu0
  %v2398 = vadd.f32 0.0, %v2397
  %v2399 = vpop.f32.mrf.mxu0
  %v2400 = vand.u32 %v1500, 4294901760
  %v2401 = vsub.f32 %v1500, %v2400
  %v2402 = vand.u32 %v2401, 4294901760
  %v2403 = vsub.f32 %v2401, %v2402
  %v2404 = vand.u32 %v2403, 4294901760
  %2405 = vmatprep.mubr.f32.mxu0 %v2404
  %v2406 = vand.u32 %v1319, 4294901760
  %v2407 = vsub.f32 %v1319, %v2406
  %v2408 = vand.u32 %v2407, 4294901760
  %v2409 = vsub.f32 %v2407, %v2408
  %v2410 = vand.u32 %v2409, 4294901760
  %2411 = vmatmul.mubr.f32.gmra.mxu0 %v2410
  %v2412 = vpop.f32.mrf.mxu0
  %v2413 = vadd.f32 0.0, %v2412
  %v2414 = vpop.f32.mrf.mxu0
  %v2415 = vand.u32 %v1503, 4294901760
  %v2416 = vsub.f32 %v1503, %v2415
  %v2417 = vand.u32 %v2416, 4294901760
  %v2418 = vsub.f32 %v2416, %v2417
  %v2419 = vand.u32 %v2418, 4294901760
  %2420 = vmatprep.mubr.f32.mxu0 %v2419
  %v2421 = vand.u32 %v1321, 4294901760
  %v2422 = vsub.f32 %v1321, %v2421
  %v2423 = vand.u32 %v2422, 4294901760
  %v2424 = vsub.f32 %v2422, %v2423
  %v2425 = vand.u32 %v2424, 4294901760
  %2426 = vmatmul.mubr.f32.gmra.mxu0 %v2425
  %v2427 = vpop.f32.mrf.mxu0
  %v2428 = vadd.f32 0.0, %v2427
  %v2429 = vpop.f32.mrf.mxu0
  %v2430 = vand.u32 %v1506, 4294901760
  %v2431 = vsub.f32 %v1506, %v2430
  %v2432 = vand.u32 %v2431, 4294901760
  %v2433 = vsub.f32 %v2431, %v2432
  %v2434 = vand.u32 %v2433, 4294901760
  %2435 = vmatprep.mubr.f32.mxu0 %v2434
  %v2436 = vand.u32 %v1323, 4294901760
  %v2437 = vsub.f32 %v1323, %v2436
  %v2438 = vand.u32 %v2437, 4294901760
  %v2439 = vsub.f32 %v2437, %v2438
  %v2440 = vand.u32 %v2439, 4294901760
  %2441 = vmatmul.mubr.f32.gmra.mxu0 %v2440
  %v2442 = vpop.f32.mrf.mxu0
  %v2443 = vadd.f32 0.0, %v2442
  %v2444 = vpop.f32.mrf.mxu0
  %v2445 = vand.u32 %v1509, 4294901760
  %v2446 = vsub.f32 %v1509, %v2445
  %v2447 = vand.u32 %v2446, 4294901760
  %v2448 = vsub.f32 %v2446, %v2447
  %v2449 = vand.u32 %v2448, 4294901760
  %2450 = vmatprep.mubr.f32.mxu0 %v2449
  %v2451 = vand.u32 %v1325, 4294901760
  %v2452 = vsub.f32 %v1325, %v2451
  %v2453 = vand.u32 %v2452, 4294901760
  %v2454 = vsub.f32 %v2452, %v2453
  %v2455 = vand.u32 %v2454, 4294901760
  %2456 = vmatmul.mubr.f32.gmra.mxu0 %v2455
  %v2457 = vpop.f32.mrf.mxu0
  %v2458 = vadd.f32 0.0, %v2457
  %v2459 = vpop.f32.mrf.mxu0
  %v2460 = vand.u32 %v1512, 4294901760
  %v2461 = vsub.f32 %v1512, %v2460
  %v2462 = vand.u32 %v2461, 4294901760
  %v2463 = vsub.f32 %v2461, %v2462
  %v2464 = vand.u32 %v2463, 4294901760
  %2465 = vmatprep.mubr.f32.mxu0 %v2464
  %v2466 = vand.u32 %v1327, 4294901760
  %v2467 = vsub.f32 %v1327, %v2466
  %v2468 = vand.u32 %v2467, 4294901760
  %v2469 = vsub.f32 %v2467, %v2468
  %v2470 = vand.u32 %v2469, 4294901760
  %2471 = vmatmul.mubr.f32.gmra.mxu0 %v2470
  %v2472 = vpop.f32.mrf.mxu0
  %v2473 = vadd.f32 0.0, %v2472
  %v2474 = vpop.f32.mrf.mxu0
  %v2475 = vand.u32 %v1515, 4294901760
  %v2476 = vsub.f32 %v1515, %v2475
  %v2477 = vand.u32 %v2476, 4294901760
  %v2478 = vsub.f32 %v2476, %v2477
  %v2479 = vand.u32 %v2478, 4294901760
  %2480 = vmatprep.mubr.f32.mxu0 %v2479
  %v2481 = vand.u32 %v1329, 4294901760
  %v2482 = vsub.f32 %v1329, %v2481
  %v2483 = vand.u32 %v2482, 4294901760
  %v2484 = vsub.f32 %v2482, %v2483
  %v2485 = vand.u32 %v2484, 4294901760
  %2486 = vmatmul.mubr.f32.gmra.mxu0 %v2485
  %v2487 = vpop.f32.mrf.mxu0
  %v2488 = vadd.f32 0.0, %v2487
  %v2489 = vpop.f32.mrf.mxu0
  %v2490 = vand.u32 %v1518, 4294901760
  %v2491 = vsub.f32 %v1518, %v2490
  %v2492 = vand.u32 %v2491, 4294901760
  %v2493 = vsub.f32 %v2491, %v2492
  %v2494 = vand.u32 %v2493, 4294901760
  %2495 = vmatprep.mubr.f32.mxu0 %v2494
  %v2496 = vand.u32 %v1331, 4294901760
  %v2497 = vsub.f32 %v1331, %v2496
  %v2498 = vand.u32 %v2497, 4294901760
  %v2499 = vsub.f32 %v2497, %v2498
  %v2500 = vand.u32 %v2499, 4294901760
  %2501 = vmatmul.mubr.f32.gmra.mxu0 %v2500
  %v2502 = vpop.f32.mrf.mxu0
  %v2503 = vadd.f32 0.0, %v2502
  %v2504 = vpop.f32.mrf.mxu0
  %v2505 = vand.u32 %v1521, 4294901760
  %v2506 = vsub.f32 %v1521, %v2505
  %v2507 = vand.u32 %v2506, 4294901760
  %v2508 = vsub.f32 %v2506, %v2507
  %v2509 = vand.u32 %v2508, 4294901760
  %2510 = vmatprep.mubr.f32.mxu0 %v2509
  %v2511 = vand.u32 %v1333, 4294901760
  %v2512 = vsub.f32 %v1333, %v2511
  %v2513 = vand.u32 %v2512, 4294901760
  %v2514 = vsub.f32 %v2512, %v2513
  %v2515 = vand.u32 %v2514, 4294901760
  %2516 = vmatmul.mubr.f32.gmra.mxu0 %v2515
  %v2517 = vpop.f32.mrf.mxu0
  %v2518 = vadd.f32 0.0, %v2517
  %v2519 = vpop.f32.mrf.mxu0
  %v2520 = vand.u32 %v1524, 4294901760
  %v2521 = vsub.f32 %v1524, %v2520
  %v2522 = vand.u32 %v2521, 4294901760
  %v2523 = vsub.f32 %v2521, %v2522
  %v2524 = vand.u32 %v2523, 4294901760
  %2525 = vmatprep.mubr.f32.mxu0 %v2524
  %v2526 = vand.u32 %v1335, 4294901760
  %v2527 = vsub.f32 %v1335, %v2526
  %v2528 = vand.u32 %v2527, 4294901760
  %v2529 = vsub.f32 %v2527, %v2528
  %v2530 = vand.u32 %v2529, 4294901760
  %2531 = vmatmul.mubr.f32.gmra.mxu0 %v2530
  %v2532 = vpop.f32.mrf.mxu0
  %v2533 = vadd.f32 0.0, %v2532
  %v2534 = vpop.f32.mrf.mxu0
  %v2535 = vand.u32 %v1527, 4294901760
  %v2536 = vsub.f32 %v1527, %v2535
  %v2537 = vand.u32 %v2536, 4294901760
  %v2538 = vsub.f32 %v2536, %v2537
  %v2539 = vand.u32 %v2538, 4294901760
  %2540 = vmatprep.mubr.f32.mxu0 %v2539
  %v2541 = vand.u32 %v1337, 4294901760
  %v2542 = vsub.f32 %v1337, %v2541
  %v2543 = vand.u32 %v2542, 4294901760
  %v2544 = vsub.f32 %v2542, %v2543
  %v2545 = vand.u32 %v2544, 4294901760
  %2546 = vmatmul.mubr.f32.gmra.mxu0 %v2545
  %v2547 = vpop.f32.mrf.mxu0
  %v2548 = vadd.f32 0.0, %v2547
  %v2549 = vpop.f32.mrf.mxu0
  %v2550 = vand.u32 %v1530, 4294901760
  %v2551 = vsub.f32 %v1530, %v2550
  %v2552 = vand.u32 %v2551, 4294901760
  %v2553 = vsub.f32 %v2551, %v2552
  %v2554 = vand.u32 %v2553, 4294901760
  %2555 = vmatprep.mubr.f32.mxu0 %v2554
  %v2556 = vand.u32 %v1339, 4294901760
  %v2557 = vsub.f32 %v1339, %v2556
  %v2558 = vand.u32 %v2557, 4294901760
  %v2559 = vsub.f32 %v2557, %v2558
  %v2560 = vand.u32 %v2559, 4294901760
  %2561 = vmatmul.mubr.f32.gmra.mxu0 %v2560
  %v2562 = vpop.f32.mrf.mxu0
  %v2563 = vadd.f32 0.0, %v2562
  %v2564 = vpop.f32.mrf.mxu0
  %v2565 = vand.u32 %v1533, 4294901760
  %v2566 = vsub.f32 %v1533, %v2565
  %v2567 = vand.u32 %v2566, 4294901760
  %v2568 = vsub.f32 %v2566, %v2567
  %v2569 = vand.u32 %v2568, 4294901760
  %2570 = vmatprep.mubr.f32.mxu0 %v2569
  %v2571 = vand.u32 %v1341, 4294901760
  %v2572 = vsub.f32 %v1341, %v2571
  %v2573 = vand.u32 %v2572, 4294901760
  %v2574 = vsub.f32 %v2572, %v2573
  %v2575 = vand.u32 %v2574, 4294901760
  %2576 = vmatmul.mubr.f32.gmra.mxu0 %v2575
  %v2577 = vpop.f32.mrf.mxu0
  %v2578 = vadd.f32 0.0, %v2577
  %v2579 = vpop.f32.mrf.mxu0
  %v2580 = vand.u32 %v1536, 4294901760
  %v2581 = vsub.f32 %v1536, %v2580
  %v2582 = vand.u32 %v2581, 4294901760
  %v2583 = vsub.f32 %v2581, %v2582
  %v2584 = vand.u32 %v2583, 4294901760
  %2585 = vmatprep.mubr.f32.mxu0 %v2584
  %v2586 = vand.u32 %v1343, 4294901760
  %v2587 = vsub.f32 %v1343, %v2586
  %v2588 = vand.u32 %v2587, 4294901760
  %v2589 = vsub.f32 %v2587, %v2588
  %v2590 = vand.u32 %v2589, 4294901760
  %2591 = vmatmul.mubr.f32.gmra.mxu0 %v2590
  %v2592 = vpop.f32.mrf.mxu0
  %v2593 = vadd.f32 0.0, %v2592
  %v2594 = vpop.f32.mrf.mxu0
  %2595 = vdwg.mxu0
  %2596 = vmatprep.subr.mxu0 0.0
  %v2597 = vand.u32 %v235, 4294901760
  %v2598 = vsub.f32 %v235, %v2597
  %v2599 = vand.u32 %v2598, 4294901760
  %v2600 = vsub.f32 %v2598, %v2599
  %v2601 = vand.u32 %v2600, 4294901760
  %2602 = vmatpush1.msra.mxu0 %v2601
  %2603 = vmatprep.subr.mxu0 0.0
  %v2604 = vand.u32 %v234, 4294901760
  %v2605 = vsub.f32 %v234, %v2604
  %v2606 = vand.u32 %v2605, 4294901760
  %v2607 = vsub.f32 %v2605, %v2606
  %v2608 = vand.u32 %v2607, 4294901760
  %2609 = vmatpush1.msra.mxu0 %v2608
  %2610 = vmatprep.subr.mxu0 0.0
  %v2611 = vand.u32 %v233, 4294901760
  %v2612 = vsub.f32 %v233, %v2611
  %v2613 = vand.u32 %v2612, 4294901760
  %v2614 = vsub.f32 %v2612, %v2613
  %v2615 = vand.u32 %v2614, 4294901760
  %2616 = vmatpush1.msra.mxu0 %v2615
  %2617 = vmatprep.subr.mxu0 0.0
  %v2618 = vand.u32 %v232, 4294901760
  %v2619 = vsub.f32 %v232, %v2618
  %v2620 = vand.u32 %v2619, 4294901760
  %v2621 = vsub.f32 %v2619, %v2620
  %v2622 = vand.u32 %v2621, 4294901760
  %2623 = vmatpush1.msra.mxu0 %v2622
  %2624 = vmatprep.subr.mxu0 0.0
  %v2625 = vand.u32 %v231, 4294901760
  %v2626 = vsub.f32 %v231, %v2625
  %v2627 = vand.u32 %v2626, 4294901760
  %v2628 = vsub.f32 %v2626, %v2627
  %v2629 = vand.u32 %v2628, 4294901760
  %2630 = vmatpush1.msra.mxu0 %v2629
  %2631 = vmatprep.subr.mxu0 0.0
  %v2632 = vand.u32 %v230, 4294901760
  %v2633 = vsub.f32 %v230, %v2632
  %v2634 = vand.u32 %v2633, 4294901760
  %v2635 = vsub.f32 %v2633, %v2634
  %v2636 = vand.u32 %v2635, 4294901760
  %2637 = vmatpush1.msra.mxu0 %v2636
  %2638 = vmatprep.subr.mxu0 0.0
  %v2639 = vand.u32 %v229, 4294901760
  %v2640 = vsub.f32 %v229, %v2639
  %v2641 = vand.u32 %v2640, 4294901760
  %v2642 = vsub.f32 %v2640, %v2641
  %v2643 = vand.u32 %v2642, 4294901760
  %2644 = vmatpush1.msra.mxu0 %v2643
  %2645 = vmatprep.subr.mxu0 0.0
  %v2646 = vand.u32 %v228, 4294901760
  %v2647 = vsub.f32 %v228, %v2646
  %v2648 = vand.u32 %v2647, 4294901760
  %v2649 = vsub.f32 %v2647, %v2648
  %v2650 = vand.u32 %v2649, 4294901760
  %2651 = vmatpush1.msra.mxu0 %v2650
  %2652 = vmatprep.subr.mxu0 0.0
  %v2653 = vand.u32 %v227, 4294901760
  %v2654 = vsub.f32 %v227, %v2653
  %v2655 = vand.u32 %v2654, 4294901760
  %v2656 = vsub.f32 %v2654, %v2655
  %v2657 = vand.u32 %v2656, 4294901760
  %2658 = vmatpush1.msra.mxu0 %v2657
  %2659 = vmatprep.subr.mxu0 0.0
  %v2660 = vand.u32 %v226, 4294901760
  %v2661 = vsub.f32 %v226, %v2660
  %v2662 = vand.u32 %v2661, 4294901760
  %v2663 = vsub.f32 %v2661, %v2662
  %v2664 = vand.u32 %v2663, 4294901760
  %2665 = vmatpush1.msra.mxu0 %v2664
  %2666 = vmatprep.subr.mxu0 0.0
  %v2667 = vand.u32 %v225, 4294901760
  %v2668 = vsub.f32 %v225, %v2667
  %v2669 = vand.u32 %v2668, 4294901760
  %v2670 = vsub.f32 %v2668, %v2669
  %v2671 = vand.u32 %v2670, 4294901760
  %2672 = vmatpush1.msra.mxu0 %v2671
  %2673 = vmatprep.subr.mxu0 0.0
  %v2674 = vand.u32 %v224, 4294901760
  %v2675 = vsub.f32 %v224, %v2674
  %v2676 = vand.u32 %v2675, 4294901760
  %v2677 = vsub.f32 %v2675, %v2676
  %v2678 = vand.u32 %v2677, 4294901760
  %2679 = vmatpush1.msra.mxu0 %v2678
  %2680 = vmatprep.subr.mxu0 0.0
  %v2681 = vand.u32 %v223, 4294901760
  %v2682 = vsub.f32 %v223, %v2681
  %v2683 = vand.u32 %v2682, 4294901760
  %v2684 = vsub.f32 %v2682, %v2683
  %v2685 = vand.u32 %v2684, 4294901760
  %2686 = vmatpush1.msra.mxu0 %v2685
  %2687 = vmatprep.subr.mxu0 0.0
  %v2688 = vand.u32 %v222, 4294901760
  %v2689 = vsub.f32 %v222, %v2688
  %v2690 = vand.u32 %v2689, 4294901760
  %v2691 = vsub.f32 %v2689, %v2690
  %v2692 = vand.u32 %v2691, 4294901760
  %2693 = vmatpush1.msra.mxu0 %v2692
  %2694 = vmatprep.subr.mxu0 0.0
  %v2695 = vand.u32 %v221, 4294901760
  %v2696 = vsub.f32 %v221, %v2695
  %v2697 = vand.u32 %v2696, 4294901760
  %v2698 = vsub.f32 %v2696, %v2697
  %v2699 = vand.u32 %v2698, 4294901760
  %2700 = vmatpush1.msra.mxu0 %v2699
  %2701 = vmatprep.subr.mxu0 0.0
  %v2702 = vand.u32 %v220, 4294901760
  %v2703 = vsub.f32 %v220, %v2702
  %v2704 = vand.u32 %v2703, 4294901760
  %v2705 = vsub.f32 %v2703, %v2704
  %v2706 = vand.u32 %v2705, 4294901760
  %2707 = vmatpush1.msra.mxu0 %v2706
  %2708 = vmatprep.subr.mxu0 0.0
  %2709 = vmatpush2.msra.mxu0 0.0
  %2710 = vmatprep.subr.mxu0 0.0
  %2711 = vmatpush2.msra.mxu0 0.0
  %2712 = vmatprep.subr.mxu0 0.0
  %2713 = vmatpush2.msra.mxu0 0.0
  %2714 = vmatprep.subr.mxu0 0.0
  %v2715 = vand.u32 %v1540, 4294901760
  %v2716 = vsub.f32 %v1540, %v2715
  %v2717 = vand.u32 %v2716, 4294901760
  %v2718 = vsub.f32 %v2716, %v2717
  %v2719 = vand.u32 %v2718, 4294901760
  %2720 = vmatpush2.msra.mxu0 %v2719
  %2721 = vmatprep.subr.mxu0 0.0
  %v2722 = vand.u32 %v247, 4294901760
  %v2723 = vsub.f32 %v247, %v2722
  %v2724 = vand.u32 %v2723, 4294901760
  %v2725 = vsub.f32 %v2723, %v2724
  %v2726 = vand.u32 %v2725, 4294901760
  %2727 = vmatpush2.msra.mxu0 %v2726
  %2728 = vmatprep.subr.mxu0 0.0
  %v2729 = vand.u32 %v246, 4294901760
  %v2730 = vsub.f32 %v246, %v2729
  %v2731 = vand.u32 %v2730, 4294901760
  %v2732 = vsub.f32 %v2730, %v2731
  %v2733 = vand.u32 %v2732, 4294901760
  %2734 = vmatpush2.msra.mxu0 %v2733
  %2735 = vmatprep.subr.mxu0 0.0
  %v2736 = vand.u32 %v245, 4294901760
  %v2737 = vsub.f32 %v245, %v2736
  %v2738 = vand.u32 %v2737, 4294901760
  %v2739 = vsub.f32 %v2737, %v2738
  %v2740 = vand.u32 %v2739, 4294901760
  %2741 = vmatpush2.msra.mxu0 %v2740
  %2742 = vmatprep.subr.mxu0 0.0
  %v2743 = vand.u32 %v244, 4294901760
  %v2744 = vsub.f32 %v244, %v2743
  %v2745 = vand.u32 %v2744, 4294901760
  %v2746 = vsub.f32 %v2744, %v2745
  %v2747 = vand.u32 %v2746, 4294901760
  %2748 = vmatpush2.msra.mxu0 %v2747
  %2749 = vmatprep.subr.mxu0 0.0
  %v2750 = vand.u32 %v243, 4294901760
  %v2751 = vsub.f32 %v243, %v2750
  %v2752 = vand.u32 %v2751, 4294901760
  %v2753 = vsub.f32 %v2751, %v2752
  %v2754 = vand.u32 %v2753, 4294901760
  %2755 = vmatpush2.msra.mxu0 %v2754
  %2756 = vmatprep.subr.mxu0 0.0
  %v2757 = vand.u32 %v242, 4294901760
  %v2758 = vsub.f32 %v242, %v2757
  %v2759 = vand.u32 %v2758, 4294901760
  %v2760 = vsub.f32 %v2758, %v2759
  %v2761 = vand.u32 %v2760, 4294901760
  %2762 = vmatpush2.msra.mxu0 %v2761
  %2763 = vmatprep.subr.mxu0 0.0
  %v2764 = vand.u32 %v241, 4294901760
  %v2765 = vsub.f32 %v241, %v2764
  %v2766 = vand.u32 %v2765, 4294901760
  %v2767 = vsub.f32 %v2765, %v2766
  %v2768 = vand.u32 %v2767, 4294901760
  %2769 = vmatpush2.msra.mxu0 %v2768
  %2770 = vmatprep.subr.mxu0 0.0
  %v2771 = vand.u32 %v240, 4294901760
  %v2772 = vsub.f32 %v240, %v2771
  %v2773 = vand.u32 %v2772, 4294901760
  %v2774 = vsub.f32 %v2772, %v2773
  %v2775 = vand.u32 %v2774, 4294901760
  %2776 = vmatpush2.msra.mxu0 %v2775
  %2777 = vmatprep.subr.mxu0 0.0
  %v2778 = vand.u32 %v239, 4294901760
  %v2779 = vsub.f32 %v239, %v2778
  %v2780 = vand.u32 %v2779, 4294901760
  %v2781 = vsub.f32 %v2779, %v2780
  %v2782 = vand.u32 %v2781, 4294901760
  %2783 = vmatpush2.msra.mxu0 %v2782
  %2784 = vmatprep.subr.mxu0 0.0
  %v2785 = vand.u32 %v238, 4294901760
  %v2786 = vsub.f32 %v238, %v2785
  %v2787 = vand.u32 %v2786, 4294901760
  %v2788 = vsub.f32 %v2786, %v2787
  %v2789 = vand.u32 %v2788, 4294901760
  %2790 = vmatpush2.msra.mxu0 %v2789
  %2791 = vmatprep.subr.mxu0 0.0
  %v2792 = vand.u32 %v237, 4294901760
  %v2793 = vsub.f32 %v237, %v2792
  %v2794 = vand.u32 %v2793, 4294901760
  %v2795 = vsub.f32 %v2793, %v2794
  %v2796 = vand.u32 %v2795, 4294901760
  %2797 = vmatpush2.msra.mxu0 %v2796
  %2798 = vmatprep.subr.mxu0 0.0
  %v2799 = vand.u32 %v236, 4294901760
  %v2800 = vsub.f32 %v236, %v2799
  %v2801 = vand.u32 %v2800, 4294901760
  %v2802 = vsub.f32 %v2800, %v2801
  %v2803 = vand.u32 %v2802, 4294901760
  %2804 = vmatpush2.msra.mxu0 %v2803
  %v2805 = vand.u32 %v1347, 4294901760
  %2806 = vmatprep.mubr.f32.mxu0 %v2805
  %v2807 = vand.u32 %v1217, 4294901760
  %2808 = vmatmul.mubr.f32.gmra.mxu0 %v2807
  %v2809 = vpop.f32.mrf.mxu0
  %v2810 = vadd.f32 %v1648, %v2809
  %v2811 = vpop.f32.mrf.mxu0
  %v2812 = vand.u32 %v1350, 4294901760
  %2813 = vmatprep.mubr.f32.mxu0 %v2812
  %v2814 = vand.u32 %v1219, 4294901760
  %2815 = vmatmul.mubr.f32.gmra.mxu0 %v2814
  %v2816 = vpop.f32.mrf.mxu0
  %v2817 = vadd.f32 %v1663, %v2816
  %v2818 = vpop.f32.mrf.mxu0
  %v2819 = vand.u32 %v1353, 4294901760
  %2820 = vmatprep.mubr.f32.mxu0 %v2819
  %v2821 = vand.u32 %v1221, 4294901760
  %2822 = vmatmul.mubr.f32.gmra.mxu0 %v2821
  %v2823 = vpop.f32.mrf.mxu0
  %v2824 = vadd.f32 %v1678, %v2823
  %v2825 = vpop.f32.mrf.mxu0
  %v2826 = vand.u32 %v1356, 4294901760
  %2827 = vmatprep.mubr.f32.mxu0 %v2826
  %v2828 = vand.u32 %v1223, 4294901760
  %2829 = vmatmul.mubr.f32.gmra.mxu0 %v2828
  %v2830 = vpop.f32.mrf.mxu0
  %v2831 = vadd.f32 %v1693, %v2830
  %v2832 = vpop.f32.mrf.mxu0
  %v2833 = vand.u32 %v1359, 4294901760
  %2834 = vmatprep.mubr.f32.mxu0 %v2833
  %v2835 = vand.u32 %v1225, 4294901760
  %2836 = vmatmul.mubr.f32.gmra.mxu0 %v2835
  %v2837 = vpop.f32.mrf.mxu0
  %v2838 = vadd.f32 %v1708, %v2837
  %v2839 = vpop.f32.mrf.mxu0
  %v2840 = vand.u32 %v1362, 4294901760
  %2841 = vmatprep.mubr.f32.mxu0 %v2840
  %v2842 = vand.u32 %v1227, 4294901760
  %2843 = vmatmul.mubr.f32.gmra.mxu0 %v2842
  %v2844 = vpop.f32.mrf.mxu0
  %v2845 = vadd.f32 %v1723, %v2844
  %v2846 = vpop.f32.mrf.mxu0
  %v2847 = vand.u32 %v1365, 4294901760
  %2848 = vmatprep.mubr.f32.mxu0 %v2847
  %v2849 = vand.u32 %v1229, 4294901760
  %2850 = vmatmul.mubr.f32.gmra.mxu0 %v2849
  %v2851 = vpop.f32.mrf.mxu0
  %v2852 = vadd.f32 %v1738, %v2851
  %v2853 = vpop.f32.mrf.mxu0
  %v2854 = vand.u32 %v1368, 4294901760
  %2855 = vmatprep.mubr.f32.mxu0 %v2854
  %v2856 = vand.u32 %v1231, 4294901760
  %2857 = vmatmul.mubr.f32.gmra.mxu0 %v2856
  %v2858 = vpop.f32.mrf.mxu0
  %v2859 = vadd.f32 %v1753, %v2858
  %v2860 = vpop.f32.mrf.mxu0
  %v2861 = vand.u32 %v1371, 4294901760
  %2862 = vmatprep.mubr.f32.mxu0 %v2861
  %v2863 = vand.u32 %v1233, 4294901760
  %2864 = vmatmul.mubr.f32.gmra.mxu0 %v2863
  %v2865 = vpop.f32.mrf.mxu0
  %v2866 = vadd.f32 %v1768, %v2865
  %v2867 = vpop.f32.mrf.mxu0
  %v2868 = vand.u32 %v1374, 4294901760
  %2869 = vmatprep.mubr.f32.mxu0 %v2868
  %v2870 = vand.u32 %v1235, 4294901760
  %2871 = vmatmul.mubr.f32.gmra.mxu0 %v2870
  %v2872 = vpop.f32.mrf.mxu0
  %v2873 = vadd.f32 %v1783, %v2872
  %v2874 = vpop.f32.mrf.mxu0
  %v2875 = vand.u32 %v1377, 4294901760
  %2876 = vmatprep.mubr.f32.mxu0 %v2875
  %v2877 = vand.u32 %v1237, 4294901760
  %2878 = vmatmul.mubr.f32.gmra.mxu0 %v2877
  %v2879 = vpop.f32.mrf.mxu0
  %v2880 = vadd.f32 %v1798, %v2879
  %v2881 = vpop.f32.mrf.mxu0
  %v2882 = vand.u32 %v1380, 4294901760
  %2883 = vmatprep.mubr.f32.mxu0 %v2882
  %v2884 = vand.u32 %v1239, 4294901760
  %2885 = vmatmul.mubr.f32.gmra.mxu0 %v2884
  %v2886 = vpop.f32.mrf.mxu0
  %v2887 = vadd.f32 %v1813, %v2886
  %v2888 = vpop.f32.mrf.mxu0
  %v2889 = vand.u32 %v1383, 4294901760
  %2890 = vmatprep.mubr.f32.mxu0 %v2889
  %v2891 = vand.u32 %v1241, 4294901760
  %2892 = vmatmul.mubr.f32.gmra.mxu0 %v2891
  %v2893 = vpop.f32.mrf.mxu0
  %v2894 = vadd.f32 %v1828, %v2893
  %v2895 = vpop.f32.mrf.mxu0
  %v2896 = vand.u32 %v1386, 4294901760
  %2897 = vmatprep.mubr.f32.mxu0 %v2896
  %v2898 = vand.u32 %v1243, 4294901760
  %2899 = vmatmul.mubr.f32.gmra.mxu0 %v2898
  %v2900 = vpop.f32.mrf.mxu0
  %v2901 = vadd.f32 %v1843, %v2900
  %v2902 = vpop.f32.mrf.mxu0
  %v2903 = vand.u32 %v1389, 4294901760
  %2904 = vmatprep.mubr.f32.mxu0 %v2903
  %v2905 = vand.u32 %v1245, 4294901760
  %2906 = vmatmul.mubr.f32.gmra.mxu0 %v2905
  %v2907 = vpop.f32.mrf.mxu0
  %v2908 = vadd.f32 %v1858, %v2907
  %v2909 = vpop.f32.mrf.mxu0
  %v2910 = vand.u32 %v1392, 4294901760
  %2911 = vmatprep.mubr.f32.mxu0 %v2910
  %v2912 = vand.u32 %v1247, 4294901760
  %2913 = vmatmul.mubr.f32.gmra.mxu0 %v2912
  %v2914 = vpop.f32.mrf.mxu0
  %v2915 = vadd.f32 %v1873, %v2914
  %v2916 = vpop.f32.mrf.mxu0
  %v2917 = vand.u32 %v1395, 4294901760
  %2918 = vmatprep.mubr.f32.mxu0 %v2917
  %v2919 = vand.u32 %v1249, 4294901760
  %2920 = vmatmul.mubr.f32.gmra.mxu0 %v2919
  %v2921 = vpop.f32.mrf.mxu0
  %v2922 = vadd.f32 %v1888, %v2921
  %v2923 = vpop.f32.mrf.mxu0
  %v2924 = vand.u32 %v1398, 4294901760
  %2925 = vmatprep.mubr.f32.mxu0 %v2924
  %v2926 = vand.u32 %v1251, 4294901760
  %2927 = vmatmul.mubr.f32.gmra.mxu0 %v2926
  %v2928 = vpop.f32.mrf.mxu0
  %v2929 = vadd.f32 %v1903, %v2928
  %v2930 = vpop.f32.mrf.mxu0
  %v2931 = vand.u32 %v1401, 4294901760
  %2932 = vmatprep.mubr.f32.mxu0 %v2931
  %v2933 = vand.u32 %v1253, 4294901760
  %2934 = vmatmul.mubr.f32.gmra.mxu0 %v2933
  %v2935 = vpop.f32.mrf.mxu0
  %v2936 = vadd.f32 %v1918, %v2935
  %v2937 = vpop.f32.mrf.mxu0
  %v2938 = vand.u32 %v1404, 4294901760
  %2939 = vmatprep.mubr.f32.mxu0 %v2938
  %v2940 = vand.u32 %v1255, 4294901760
  %2941 = vmatmul.mubr.f32.gmra.mxu0 %v2940
  %v2942 = vpop.f32.mrf.mxu0
  %v2943 = vadd.f32 %v1933, %v2942
  %v2944 = vpop.f32.mrf.mxu0
  %v2945 = vand.u32 %v1407, 4294901760
  %2946 = vmatprep.mubr.f32.mxu0 %v2945
  %v2947 = vand.u32 %v1257, 4294901760
  %2948 = vmatmul.mubr.f32.gmra.mxu0 %v2947
  %v2949 = vpop.f32.mrf.mxu0
  %v2950 = vadd.f32 %v1948, %v2949
  %v2951 = vpop.f32.mrf.mxu0
  %v2952 = vand.u32 %v1410, 4294901760
  %2953 = vmatprep.mubr.f32.mxu0 %v2952
  %v2954 = vand.u32 %v1259, 4294901760
  %2955 = vmatmul.mubr.f32.gmra.mxu0 %v2954
  %v2956 = vpop.f32.mrf.mxu0
  %v2957 = vadd.f32 %v1963, %v2956
  %v2958 = vpop.f32.mrf.mxu0
  %v2959 = vand.u32 %v1413, 4294901760
  %2960 = vmatprep.mubr.f32.mxu0 %v2959
  %v2961 = vand.u32 %v1261, 4294901760
  %2962 = vmatmul.mubr.f32.gmra.mxu0 %v2961
  %v2963 = vpop.f32.mrf.mxu0
  %v2964 = vadd.f32 %v1978, %v2963
  %v2965 = vpop.f32.mrf.mxu0
  %v2966 = vand.u32 %v1416, 4294901760
  %2967 = vmatprep.mubr.f32.mxu0 %v2966
  %v2968 = vand.u32 %v1263, 4294901760
  %2969 = vmatmul.mubr.f32.gmra.mxu0 %v2968
  %v2970 = vpop.f32.mrf.mxu0
  %v2971 = vadd.f32 %v1993, %v2970
  %v2972 = vpop.f32.mrf.mxu0
  %v2973 = vand.u32 %v1419, 4294901760
  %2974 = vmatprep.mubr.f32.mxu0 %v2973
  %v2975 = vand.u32 %v1265, 4294901760
  %2976 = vmatmul.mubr.f32.gmra.mxu0 %v2975
  %v2977 = vpop.f32.mrf.mxu0
  %v2978 = vadd.f32 %v2008, %v2977
  %v2979 = vpop.f32.mrf.mxu0
  %v2980 = vand.u32 %v1422, 4294901760
  %2981 = vmatprep.mubr.f32.mxu0 %v2980
  %v2982 = vand.u32 %v1267, 4294901760
  %2983 = vmatmul.mubr.f32.gmra.mxu0 %v2982
  %v2984 = vpop.f32.mrf.mxu0
  %v2985 = vadd.f32 %v2023, %v2984
  %v2986 = vpop.f32.mrf.mxu0
  %v2987 = vand.u32 %v1425, 4294901760
  %2988 = vmatprep.mubr.f32.mxu0 %v2987
  %v2989 = vand.u32 %v1269, 4294901760
  %2990 = vmatmul.mubr.f32.gmra.mxu0 %v2989
  %v2991 = vpop.f32.mrf.mxu0
  %v2992 = vadd.f32 %v2038, %v2991
  %v2993 = vpop.f32.mrf.mxu0
  %v2994 = vand.u32 %v1428, 4294901760
  %2995 = vmatprep.mubr.f32.mxu0 %v2994
  %v2996 = vand.u32 %v1271, 4294901760
  %2997 = vmatmul.mubr.f32.gmra.mxu0 %v2996
  %v2998 = vpop.f32.mrf.mxu0
  %v2999 = vadd.f32 %v2053, %v2998
  %v3000 = vpop.f32.mrf.mxu0
  %v3001 = vand.u32 %v1431, 4294901760
  %3002 = vmatprep.mubr.f32.mxu0 %v3001
  %v3003 = vand.u32 %v1273, 4294901760
  %3004 = vmatmul.mubr.f32.gmra.mxu0 %v3003
  %v3005 = vpop.f32.mrf.mxu0
  %v3006 = vadd.f32 %v2068, %v3005
  %v3007 = vpop.f32.mrf.mxu0
  %v3008 = vand.u32 %v1434, 4294901760
  %3009 = vmatprep.mubr.f32.mxu0 %v3008
  %v3010 = vand.u32 %v1275, 4294901760
  %3011 = vmatmul.mubr.f32.gmra.mxu0 %v3010
  %v3012 = vpop.f32.mrf.mxu0
  %v3013 = vadd.f32 %v2083, %v3012
  %v3014 = vpop.f32.mrf.mxu0
  %v3015 = vand.u32 %v1437, 4294901760
  %3016 = vmatprep.mubr.f32.mxu0 %v3015
  %v3017 = vand.u32 %v1277, 4294901760
  %3018 = vmatmul.mubr.f32.gmra.mxu0 %v3017
  %v3019 = vpop.f32.mrf.mxu0
  %v3020 = vadd.f32 %v2098, %v3019
  %v3021 = vpop.f32.mrf.mxu0
  %v3022 = vand.u32 %v1440, 4294901760
  %3023 = vmatprep.mubr.f32.mxu0 %v3022
  %v3024 = vand.u32 %v1279, 4294901760
  %3025 = vmatmul.mubr.f32.gmra.mxu0 %v3024
  %v3026 = vpop.f32.mrf.mxu0
  %v3027 = vadd.f32 %v2113, %v3026
  %v3028 = vpop.f32.mrf.mxu0
  %v3029 = vand.u32 %v1443, 4294901760
  %3030 = vmatprep.mubr.f32.mxu0 %v3029
  %v3031 = vand.u32 %v1281, 4294901760
  %3032 = vmatmul.mubr.f32.gmra.mxu0 %v3031
  %v3033 = vpop.f32.mrf.mxu0
  %v3034 = vadd.f32 %v2128, %v3033
  %v3035 = vpop.f32.mrf.mxu0
  %v3036 = vand.u32 %v1446, 4294901760
  %3037 = vmatprep.mubr.f32.mxu0 %v3036
  %v3038 = vand.u32 %v1283, 4294901760
  %3039 = vmatmul.mubr.f32.gmra.mxu0 %v3038
  %v3040 = vpop.f32.mrf.mxu0
  %v3041 = vadd.f32 %v2143, %v3040
  %v3042 = vpop.f32.mrf.mxu0
  %v3043 = vand.u32 %v1449, 4294901760
  %3044 = vmatprep.mubr.f32.mxu0 %v3043
  %v3045 = vand.u32 %v1285, 4294901760
  %3046 = vmatmul.mubr.f32.gmra.mxu0 %v3045
  %v3047 = vpop.f32.mrf.mxu0
  %v3048 = vadd.f32 %v2158, %v3047
  %v3049 = vpop.f32.mrf.mxu0
  %v3050 = vand.u32 %v1452, 4294901760
  %3051 = vmatprep.mubr.f32.mxu0 %v3050
  %v3052 = vand.u32 %v1287, 4294901760
  %3053 = vmatmul.mubr.f32.gmra.mxu0 %v3052
  %v3054 = vpop.f32.mrf.mxu0
  %v3055 = vadd.f32 %v2173, %v3054
  %v3056 = vpop.f32.mrf.mxu0
  %v3057 = vand.u32 %v1455, 4294901760
  %3058 = vmatprep.mubr.f32.mxu0 %v3057
  %v3059 = vand.u32 %v1289, 4294901760
  %3060 = vmatmul.mubr.f32.gmra.mxu0 %v3059
  %v3061 = vpop.f32.mrf.mxu0
  %v3062 = vadd.f32 %v2188, %v3061
  %v3063 = vpop.f32.mrf.mxu0
  %v3064 = vand.u32 %v1458, 4294901760
  %3065 = vmatprep.mubr.f32.mxu0 %v3064
  %v3066 = vand.u32 %v1291, 4294901760
  %3067 = vmatmul.mubr.f32.gmra.mxu0 %v3066
  %v3068 = vpop.f32.mrf.mxu0
  %v3069 = vadd.f32 %v2203, %v3068
  %v3070 = vpop.f32.mrf.mxu0
  %v3071 = vand.u32 %v1461, 4294901760
  %3072 = vmatprep.mubr.f32.mxu0 %v3071
  %v3073 = vand.u32 %v1293, 4294901760
  %3074 = vmatmul.mubr.f32.gmra.mxu0 %v3073
  %v3075 = vpop.f32.mrf.mxu0
  %v3076 = vadd.f32 %v2218, %v3075
  %v3077 = vpop.f32.mrf.mxu0
  %v3078 = vand.u32 %v1464, 4294901760
  %3079 = vmatprep.mubr.f32.mxu0 %v3078
  %v3080 = vand.u32 %v1295, 4294901760
  %3081 = vmatmul.mubr.f32.gmra.mxu0 %v3080
  %v3082 = vpop.f32.mrf.mxu0
  %v3083 = vadd.f32 %v2233, %v3082
  %v3084 = vpop.f32.mrf.mxu0
  %v3085 = vand.u32 %v1467, 4294901760
  %3086 = vmatprep.mubr.f32.mxu0 %v3085
  %v3087 = vand.u32 %v1297, 4294901760
  %3088 = vmatmul.mubr.f32.gmra.mxu0 %v3087
  %v3089 = vpop.f32.mrf.mxu0
  %v3090 = vadd.f32 %v2248, %v3089
  %v3091 = vpop.f32.mrf.mxu0
  %v3092 = vand.u32 %v1470, 4294901760
  %3093 = vmatprep.mubr.f32.mxu0 %v3092
  %v3094 = vand.u32 %v1299, 4294901760
  %3095 = vmatmul.mubr.f32.gmra.mxu0 %v3094
  %v3096 = vpop.f32.mrf.mxu0
  %v3097 = vadd.f32 %v2263, %v3096
  %v3098 = vpop.f32.mrf.mxu0
  %v3099 = vand.u32 %v1473, 4294901760
  %3100 = vmatprep.mubr.f32.mxu0 %v3099
  %v3101 = vand.u32 %v1301, 4294901760
  %3102 = vmatmul.mubr.f32.gmra.mxu0 %v3101
  %v3103 = vpop.f32.mrf.mxu0
  %v3104 = vadd.f32 %v2278, %v3103
  %v3105 = vpop.f32.mrf.mxu0
  %v3106 = vand.u32 %v1476, 4294901760
  %3107 = vmatprep.mubr.f32.mxu0 %v3106
  %v3108 = vand.u32 %v1303, 4294901760
  %3109 = vmatmul.mubr.f32.gmra.mxu0 %v3108
  %v3110 = vpop.f32.mrf.mxu0
  %v3111 = vadd.f32 %v2293, %v3110
  %v3112 = vpop.f32.mrf.mxu0
  %v3113 = vand.u32 %v1479, 4294901760
  %3114 = vmatprep.mubr.f32.mxu0 %v3113
  %v3115 = vand.u32 %v1305, 4294901760
  %3116 = vmatmul.mubr.f32.gmra.mxu0 %v3115
  %v3117 = vpop.f32.mrf.mxu0
  %v3118 = vadd.f32 %v2308, %v3117
  %v3119 = vpop.f32.mrf.mxu0
  %v3120 = vand.u32 %v1482, 4294901760
  %3121 = vmatprep.mubr.f32.mxu0 %v3120
  %v3122 = vand.u32 %v1307, 4294901760
  %3123 = vmatmul.mubr.f32.gmra.mxu0 %v3122
  %v3124 = vpop.f32.mrf.mxu0
  %v3125 = vadd.f32 %v2323, %v3124
  %v3126 = vpop.f32.mrf.mxu0
  %v3127 = vand.u32 %v1485, 4294901760
  %3128 = vmatprep.mubr.f32.mxu0 %v3127
  %v3129 = vand.u32 %v1309, 4294901760
  %3130 = vmatmul.mubr.f32.gmra.mxu0 %v3129
  %v3131 = vpop.f32.mrf.mxu0
  %v3132 = vadd.f32 %v2338, %v3131
  %v3133 = vpop.f32.mrf.mxu0
  %v3134 = vand.u32 %v1488, 4294901760
  %3135 = vmatprep.mubr.f32.mxu0 %v3134
  %v3136 = vand.u32 %v1311, 4294901760
  %3137 = vmatmul.mubr.f32.gmra.mxu0 %v3136
  %v3138 = vpop.f32.mrf.mxu0
  %v3139 = vadd.f32 %v2353, %v3138
  %v3140 = vpop.f32.mrf.mxu0
  %v3141 = vand.u32 %v1491, 4294901760
  %3142 = vmatprep.mubr.f32.mxu0 %v3141
  %v3143 = vand.u32 %v1313, 4294901760
  %3144 = vmatmul.mubr.f32.gmra.mxu0 %v3143
  %v3145 = vpop.f32.mrf.mxu0
  %v3146 = vadd.f32 %v2368, %v3145
  %v3147 = vpop.f32.mrf.mxu0
  %v3148 = vand.u32 %v1494, 4294901760
  %3149 = vmatprep.mubr.f32.mxu0 %v3148
  %v3150 = vand.u32 %v1315, 4294901760
  %3151 = vmatmul.mubr.f32.gmra.mxu0 %v3150
  %v3152 = vpop.f32.mrf.mxu0
  %v3153 = vadd.f32 %v2383, %v3152
  %v3154 = vpop.f32.mrf.mxu0
  %v3155 = vand.u32 %v1497, 4294901760
  %3156 = vmatprep.mubr.f32.mxu0 %v3155
  %v3157 = vand.u32 %v1317, 4294901760
  %3158 = vmatmul.mubr.f32.gmra.mxu0 %v3157
  %v3159 = vpop.f32.mrf.mxu0
  %v3160 = vadd.f32 %v2398, %v3159
  %v3161 = vpop.f32.mrf.mxu0
  %v3162 = vand.u32 %v1500, 4294901760
  %3163 = vmatprep.mubr.f32.mxu0 %v3162
  %v3164 = vand.u32 %v1319, 4294901760
  %3165 = vmatmul.mubr.f32.gmra.mxu0 %v3164
  %v3166 = vpop.f32.mrf.mxu0
  %v3167 = vadd.f32 %v2413, %v3166
  %v3168 = vpop.f32.mrf.mxu0
  %v3169 = vand.u32 %v1503, 4294901760
  %3170 = vmatprep.mubr.f32.mxu0 %v3169
  %v3171 = vand.u32 %v1321, 4294901760
  %3172 = vmatmul.mubr.f32.gmra.mxu0 %v3171
  %v3173 = vpop.f32.mrf.mxu0
  %v3174 = vadd.f32 %v2428, %v3173
  %v3175 = vpop.f32.mrf.mxu0
  %v3176 = vand.u32 %v1506, 4294901760
  %3177 = vmatprep.mubr.f32.mxu0 %v3176
  %v3178 = vand.u32 %v1323, 4294901760
  %3179 = vmatmul.mubr.f32.gmra.mxu0 %v3178
  %v3180 = vpop.f32.mrf.mxu0
  %v3181 = vadd.f32 %v2443, %v3180
  %v3182 = vpop.f32.mrf.mxu0
  %v3183 = vand.u32 %v1509, 4294901760
  %3184 = vmatprep.mubr.f32.mxu0 %v3183
  %v3185 = vand.u32 %v1325, 4294901760
  %3186 = vmatmul.mubr.f32.gmra.mxu0 %v3185
  %v3187 = vpop.f32.mrf.mxu0
  %v3188 = vadd.f32 %v2458, %v3187
  %v3189 = vpop.f32.mrf.mxu0
  %v3190 = vand.u32 %v1512, 4294901760
  %3191 = vmatprep.mubr.f32.mxu0 %v3190
  %v3192 = vand.u32 %v1327, 4294901760
  %3193 = vmatmul.mubr.f32.gmra.mxu0 %v3192
  %v3194 = vpop.f32.mrf.mxu0
  %v3195 = vadd.f32 %v2473, %v3194
  %v3196 = vpop.f32.mrf.mxu0
  %v3197 = vand.u32 %v1515, 4294901760
  %3198 = vmatprep.mubr.f32.mxu0 %v3197
  %v3199 = vand.u32 %v1329, 4294901760
  %3200 = vmatmul.mubr.f32.gmra.mxu0 %v3199
  %v3201 = vpop.f32.mrf.mxu0
  %v3202 = vadd.f32 %v2488, %v3201
  %v3203 = vpop.f32.mrf.mxu0
  %v3204 = vand.u32 %v1518, 4294901760
  %3205 = vmatprep.mubr.f32.mxu0 %v3204
  %v3206 = vand.u32 %v1331, 4294901760
  %3207 = vmatmul.mubr.f32.gmra.mxu0 %v3206
  %v3208 = vpop.f32.mrf.mxu0
  %v3209 = vadd.f32 %v2503, %v3208
  %v3210 = vpop.f32.mrf.mxu0
  %v3211 = vand.u32 %v1521, 4294901760
  %3212 = vmatprep.mubr.f32.mxu0 %v3211
  %v3213 = vand.u32 %v1333, 4294901760
  %3214 = vmatmul.mubr.f32.gmra.mxu0 %v3213
  %v3215 = vpop.f32.mrf.mxu0
  %v3216 = vadd.f32 %v2518, %v3215
  %v3217 = vpop.f32.mrf.mxu0
  %v3218 = vand.u32 %v1524, 4294901760
  %3219 = vmatprep.mubr.f32.mxu0 %v3218
  %v3220 = vand.u32 %v1335, 4294901760
  %3221 = vmatmul.mubr.f32.gmra.mxu0 %v3220
  %v3222 = vpop.f32.mrf.mxu0
  %v3223 = vadd.f32 %v2533, %v3222
  %v3224 = vpop.f32.mrf.mxu0
  %v3225 = vand.u32 %v1527, 4294901760
  %3226 = vmatprep.mubr.f32.mxu0 %v3225
  %v3227 = vand.u32 %v1337, 4294901760
  %3228 = vmatmul.mubr.f32.gmra.mxu0 %v3227
  %v3229 = vpop.f32.mrf.mxu0
  %v3230 = vadd.f32 %v2548, %v3229
  %v3231 = vpop.f32.mrf.mxu0
  %v3232 = vand.u32 %v1530, 4294901760
  %3233 = vmatprep.mubr.f32.mxu0 %v3232
  %v3234 = vand.u32 %v1339, 4294901760
  %3235 = vmatmul.mubr.f32.gmra.mxu0 %v3234
  %v3236 = vpop.f32.mrf.mxu0
  %v3237 = vadd.f32 %v2563, %v3236
  %v3238 = vpop.f32.mrf.mxu0
  %v3239 = vand.u32 %v1533, 4294901760
  %3240 = vmatprep.mubr.f32.mxu0 %v3239
  %v3241 = vand.u32 %v1341, 4294901760
  %3242 = vmatmul.mubr.f32.gmra.mxu0 %v3241
  %v3243 = vpop.f32.mrf.mxu0
  %v3244 = vadd.f32 %v2578, %v3243
  %v3245 = vpop.f32.mrf.mxu0
  %v3246 = vand.u32 %v1536, 4294901760
  %3247 = vmatprep.mubr.f32.mxu0 %v3246
  %v3248 = vand.u32 %v1343, 4294901760
  %3249 = vmatmul.mubr.f32.gmra.mxu0 %v3248
  %v3250 = vpop.f32.mrf.mxu0
  %v3251 = vadd.f32 %v2593, %v3250
  %v3252 = vpop.f32.mrf.mxu0
  %3253 = vdwg.mxu0
  %3254 = vmatprep.subr.mxu0 0.0
  %v3255 = vand.u32 %v235, 4294901760
  %v3256 = vsub.f32 %v235, %v3255
  %3257 = vmatpush1.msra.mxu0 %v3256
  %3258 = vmatprep.subr.mxu0 0.0
  %v3259 = vand.u32 %v234, 4294901760
  %v3260 = vsub.f32 %v234, %v3259
  %3261 = vmatpush1.msra.mxu0 %v3260
  %3262 = vmatprep.subr.mxu0 0.0
  %v3263 = vand.u32 %v233, 4294901760
  %v3264 = vsub.f32 %v233, %v3263
  %3265 = vmatpush1.msra.mxu0 %v3264
  %3266 = vmatprep.subr.mxu0 0.0
  %v3267 = vand.u32 %v232, 4294901760
  %v3268 = vsub.f32 %v232, %v3267
  %3269 = vmatpush1.msra.mxu0 %v3268
  %3270 = vmatprep.subr.mxu0 0.0
  %v3271 = vand.u32 %v231, 4294901760
  %v3272 = vsub.f32 %v231, %v3271
  %3273 = vmatpush1.msra.mxu0 %v3272
  %3274 = vmatprep.subr.mxu0 0.0
  %v3275 = vand.u32 %v230, 4294901760
  %v3276 = vsub.f32 %v230, %v3275
  %3277 = vmatpush1.msra.mxu0 %v3276
  %3278 = vmatprep.subr.mxu0 0.0
  %v3279 = vand.u32 %v229, 4294901760
  %v3280 = vsub.f32 %v229, %v3279
  %3281 = vmatpush1.msra.mxu0 %v3280
  %3282 = vmatprep.subr.mxu0 0.0
  %v3283 = vand.u32 %v228, 4294901760
  %v3284 = vsub.f32 %v228, %v3283
  %3285 = vmatpush1.msra.mxu0 %v3284
  %3286 = vmatprep.subr.mxu0 0.0
  %v3287 = vand.u32 %v227, 4294901760
  %v3288 = vsub.f32 %v227, %v3287
  %3289 = vmatpush1.msra.mxu0 %v3288
  %3290 = vmatprep.subr.mxu0 0.0
  %v3291 = vand.u32 %v226, 4294901760
  %v3292 = vsub.f32 %v226, %v3291
  %3293 = vmatpush1.msra.mxu0 %v3292
  %3294 = vmatprep.subr.mxu0 0.0
  %v3295 = vand.u32 %v225, 4294901760
  %v3296 = vsub.f32 %v225, %v3295
  %3297 = vmatpush1.msra.mxu0 %v3296
  %3298 = vmatprep.subr.mxu0 0.0
  %v3299 = vand.u32 %v224, 4294901760
  %v3300 = vsub.f32 %v224, %v3299
  %3301 = vmatpush1.msra.mxu0 %v3300
  %3302 = vmatprep.subr.mxu0 0.0
  %v3303 = vand.u32 %v223, 4294901760
  %v3304 = vsub.f32 %v223, %v3303
  %3305 = vmatpush1.msra.mxu0 %v3304
  %3306 = vmatprep.subr.mxu0 0.0
  %v3307 = vand.u32 %v222, 4294901760
  %v3308 = vsub.f32 %v222, %v3307
  %3309 = vmatpush1.msra.mxu0 %v3308
  %3310 = vmatprep.subr.mxu0 0.0
  %v3311 = vand.u32 %v221, 4294901760
  %v3312 = vsub.f32 %v221, %v3311
  %3313 = vmatpush1.msra.mxu0 %v3312
  %3314 = vmatprep.subr.mxu0 0.0
  %v3315 = vand.u32 %v220, 4294901760
  %v3316 = vsub.f32 %v220, %v3315
  %3317 = vmatpush1.msra.mxu0 %v3316
  %3318 = vmatprep.subr.mxu0 0.0
  %3319 = vmatpush2.msra.mxu0 0.0
  %3320 = vmatprep.subr.mxu0 0.0
  %3321 = vmatpush2.msra.mxu0 0.0
  %3322 = vmatprep.subr.mxu0 0.0
  %3323 = vmatpush2.msra.mxu0 0.0
  %3324 = vmatprep.subr.mxu0 0.0
  %v3325 = vand.u32 %v1540, 4294901760
  %v3326 = vsub.f32 %v1540, %v3325
  %3327 = vmatpush2.msra.mxu0 %v3326
  %3328 = vmatprep.subr.mxu0 0.0
  %v3329 = vand.u32 %v247, 4294901760
  %v3330 = vsub.f32 %v247, %v3329
  %3331 = vmatpush2.msra.mxu0 %v3330
  %3332 = vmatprep.subr.mxu0 0.0
  %v3333 = vand.u32 %v246, 4294901760
  %v3334 = vsub.f32 %v246, %v3333
  %3335 = vmatpush2.msra.mxu0 %v3334
  %3336 = vmatprep.subr.mxu0 0.0
  %v3337 = vand.u32 %v245, 4294901760
  %v3338 = vsub.f32 %v245, %v3337
  %3339 = vmatpush2.msra.mxu0 %v3338
  %3340 = vmatprep.subr.mxu0 0.0
  %v3341 = vand.u32 %v244, 4294901760
  %v3342 = vsub.f32 %v244, %v3341
  %3343 = vmatpush2.msra.mxu0 %v3342
  %3344 = vmatprep.subr.mxu0 0.0
  %v3345 = vand.u32 %v243, 4294901760
  %v3346 = vsub.f32 %v243, %v3345
  %3347 = vmatpush2.msra.mxu0 %v3346
  %3348 = vmatprep.subr.mxu0 0.0
  %v3349 = vand.u32 %v242, 4294901760
  %v3350 = vsub.f32 %v242, %v3349
  %3351 = vmatpush2.msra.mxu0 %v3350
  %3352 = vmatprep.subr.mxu0 0.0
  %v3353 = vand.u32 %v241, 4294901760
  %v3354 = vsub.f32 %v241, %v3353
  %3355 = vmatpush2.msra.mxu0 %v3354
  %3356 = vmatprep.subr.mxu0 0.0
  %v3357 = vand.u32 %v240, 4294901760
  %v3358 = vsub.f32 %v240, %v3357
  %3359 = vmatpush2.msra.mxu0 %v3358
  %3360 = vmatprep.subr.mxu0 0.0
  %v3361 = vand.u32 %v239, 4294901760
  %v3362 = vsub.f32 %v239, %v3361
  %3363 = vmatpush2.msra.mxu0 %v3362
  %3364 = vmatprep.subr.mxu0 0.0
  %v3365 = vand.u32 %v238, 4294901760
  %v3366 = vsub.f32 %v238, %v3365
  %3367 = vmatpush2.msra.mxu0 %v3366
  %3368 = vmatprep.subr.mxu0 0.0
  %v3369 = vand.u32 %v237, 4294901760
  %v3370 = vsub.f32 %v237, %v3369
  %3371 = vmatpush2.msra.mxu0 %v3370
  %3372 = vmatprep.subr.mxu0 0.0
  %v3373 = vand.u32 %v236, 4294901760
  %v3374 = vsub.f32 %v236, %v3373
  %3375 = vmatpush2.msra.mxu0 %v3374
  %v3376 = vand.u32 %v1347, 4294901760
  %v3377 = vsub.f32 %v1347, %v3376
  %3378 = vmatprep.mubr.f32.mxu0 %v3377
  %v3379 = vand.u32 %v1217, 4294901760
  %v3380 = vsub.f32 %v1217, %v3379
  %3381 = vmatmul.mubr.f32.gmra.mxu0 %v3380
  %v3382 = vpop.f32.mrf.mxu0
  %v3383 = vadd.f32 %v2810, %v3382
  %v3384 = vpop.f32.mrf.mxu0
  %v3385 = vand.u32 %v1350, 4294901760
  %v3386 = vsub.f32 %v1350, %v3385
  %3387 = vmatprep.mubr.f32.mxu0 %v3386
  %v3388 = vand.u32 %v1219, 4294901760
  %v3389 = vsub.f32 %v1219, %v3388
  %3390 = vmatmul.mubr.f32.gmra.mxu0 %v3389
  %v3391 = vpop.f32.mrf.mxu0
  %v3392 = vadd.f32 %v2817, %v3391
  %v3393 = vpop.f32.mrf.mxu0
  %v3394 = vand.u32 %v1353, 4294901760
  %v3395 = vsub.f32 %v1353, %v3394
  %3396 = vmatprep.mubr.f32.mxu0 %v3395
  %v3397 = vand.u32 %v1221, 4294901760
  %v3398 = vsub.f32 %v1221, %v3397
  %3399 = vmatmul.mubr.f32.gmra.mxu0 %v3398
  %v3400 = vpop.f32.mrf.mxu0
  %v3401 = vadd.f32 %v2824, %v3400
  %v3402 = vpop.f32.mrf.mxu0
  %v3403 = vand.u32 %v1356, 4294901760
  %v3404 = vsub.f32 %v1356, %v3403
  %3405 = vmatprep.mubr.f32.mxu0 %v3404
  %v3406 = vand.u32 %v1223, 4294901760
  %v3407 = vsub.f32 %v1223, %v3406
  %3408 = vmatmul.mubr.f32.gmra.mxu0 %v3407
  %v3409 = vpop.f32.mrf.mxu0
  %v3410 = vadd.f32 %v2831, %v3409
  %v3411 = vpop.f32.mrf.mxu0
  %v3412 = vand.u32 %v1359, 4294901760
  %v3413 = vsub.f32 %v1359, %v3412
  %3414 = vmatprep.mubr.f32.mxu0 %v3413
  %v3415 = vand.u32 %v1225, 4294901760
  %v3416 = vsub.f32 %v1225, %v3415
  %3417 = vmatmul.mubr.f32.gmra.mxu0 %v3416
  %v3418 = vpop.f32.mrf.mxu0
  %v3419 = vadd.f32 %v2838, %v3418
  %v3420 = vpop.f32.mrf.mxu0
  %v3421 = vand.u32 %v1362, 4294901760
  %v3422 = vsub.f32 %v1362, %v3421
  %3423 = vmatprep.mubr.f32.mxu0 %v3422
  %v3424 = vand.u32 %v1227, 4294901760
  %v3425 = vsub.f32 %v1227, %v3424
  %3426 = vmatmul.mubr.f32.gmra.mxu0 %v3425
  %v3427 = vpop.f32.mrf.mxu0
  %v3428 = vadd.f32 %v2845, %v3427
  %v3429 = vpop.f32.mrf.mxu0
  %v3430 = vand.u32 %v1365, 4294901760
  %v3431 = vsub.f32 %v1365, %v3430
  %3432 = vmatprep.mubr.f32.mxu0 %v3431
  %v3433 = vand.u32 %v1229, 4294901760
  %v3434 = vsub.f32 %v1229, %v3433
  %3435 = vmatmul.mubr.f32.gmra.mxu0 %v3434
  %v3436 = vpop.f32.mrf.mxu0
  %v3437 = vadd.f32 %v2852, %v3436
  %v3438 = vpop.f32.mrf.mxu0
  %v3439 = vand.u32 %v1368, 4294901760
  %v3440 = vsub.f32 %v1368, %v3439
  %3441 = vmatprep.mubr.f32.mxu0 %v3440
  %v3442 = vand.u32 %v1231, 4294901760
  %v3443 = vsub.f32 %v1231, %v3442
  %3444 = vmatmul.mubr.f32.gmra.mxu0 %v3443
  %v3445 = vpop.f32.mrf.mxu0
  %v3446 = vadd.f32 %v2859, %v3445
  %v3447 = vpop.f32.mrf.mxu0
  %v3448 = vand.u32 %v1371, 4294901760
  %v3449 = vsub.f32 %v1371, %v3448
  %3450 = vmatprep.mubr.f32.mxu0 %v3449
  %v3451 = vand.u32 %v1233, 4294901760
  %v3452 = vsub.f32 %v1233, %v3451
  %3453 = vmatmul.mubr.f32.gmra.mxu0 %v3452
  %v3454 = vpop.f32.mrf.mxu0
  %v3455 = vadd.f32 %v2866, %v3454
  %v3456 = vpop.f32.mrf.mxu0
  %v3457 = vand.u32 %v1374, 4294901760
  %v3458 = vsub.f32 %v1374, %v3457
  %3459 = vmatprep.mubr.f32.mxu0 %v3458
  %v3460 = vand.u32 %v1235, 4294901760
  %v3461 = vsub.f32 %v1235, %v3460
  %3462 = vmatmul.mubr.f32.gmra.mxu0 %v3461
  %v3463 = vpop.f32.mrf.mxu0
  %v3464 = vadd.f32 %v2873, %v3463
  %v3465 = vpop.f32.mrf.mxu0
  %v3466 = vand.u32 %v1377, 4294901760
  %v3467 = vsub.f32 %v1377, %v3466
  %3468 = vmatprep.mubr.f32.mxu0 %v3467
  %v3469 = vand.u32 %v1237, 4294901760
  %v3470 = vsub.f32 %v1237, %v3469
  %3471 = vmatmul.mubr.f32.gmra.mxu0 %v3470
  %v3472 = vpop.f32.mrf.mxu0
  %v3473 = vadd.f32 %v2880, %v3472
  %v3474 = vpop.f32.mrf.mxu0
  %v3475 = vand.u32 %v1380, 4294901760
  %v3476 = vsub.f32 %v1380, %v3475
  %3477 = vmatprep.mubr.f32.mxu0 %v3476
  %v3478 = vand.u32 %v1239, 4294901760
  %v3479 = vsub.f32 %v1239, %v3478
  %3480 = vmatmul.mubr.f32.gmra.mxu0 %v3479
  %v3481 = vpop.f32.mrf.mxu0
  %v3482 = vadd.f32 %v2887, %v3481
  %v3483 = vpop.f32.mrf.mxu0
  %v3484 = vand.u32 %v1383, 4294901760
  %v3485 = vsub.f32 %v1383, %v3484
  %3486 = vmatprep.mubr.f32.mxu0 %v3485
  %v3487 = vand.u32 %v1241, 4294901760
  %v3488 = vsub.f32 %v1241, %v3487
  %3489 = vmatmul.mubr.f32.gmra.mxu0 %v3488
  %v3490 = vpop.f32.mrf.mxu0
  %v3491 = vadd.f32 %v2894, %v3490
  %v3492 = vpop.f32.mrf.mxu0
  %v3493 = vand.u32 %v1386, 4294901760
  %v3494 = vsub.f32 %v1386, %v3493
  %3495 = vmatprep.mubr.f32.mxu0 %v3494
  %v3496 = vand.u32 %v1243, 4294901760
  %v3497 = vsub.f32 %v1243, %v3496
  %3498 = vmatmul.mubr.f32.gmra.mxu0 %v3497
  %v3499 = vpop.f32.mrf.mxu0
  %v3500 = vadd.f32 %v2901, %v3499
  %v3501 = vpop.f32.mrf.mxu0
  %v3502 = vand.u32 %v1389, 4294901760
  %v3503 = vsub.f32 %v1389, %v3502
  %3504 = vmatprep.mubr.f32.mxu0 %v3503
  %v3505 = vand.u32 %v1245, 4294901760
  %v3506 = vsub.f32 %v1245, %v3505
  %3507 = vmatmul.mubr.f32.gmra.mxu0 %v3506
  %v3508 = vpop.f32.mrf.mxu0
  %v3509 = vadd.f32 %v2908, %v3508
  %v3510 = vpop.f32.mrf.mxu0
  %v3511 = vand.u32 %v1392, 4294901760
  %v3512 = vsub.f32 %v1392, %v3511
  %3513 = vmatprep.mubr.f32.mxu0 %v3512
  %v3514 = vand.u32 %v1247, 4294901760
  %v3515 = vsub.f32 %v1247, %v3514
  %3516 = vmatmul.mubr.f32.gmra.mxu0 %v3515
  %v3517 = vpop.f32.mrf.mxu0
  %v3518 = vadd.f32 %v2915, %v3517
  %v3519 = vpop.f32.mrf.mxu0
  %v3520 = vand.u32 %v1395, 4294901760
  %v3521 = vsub.f32 %v1395, %v3520
  %3522 = vmatprep.mubr.f32.mxu0 %v3521
  %v3523 = vand.u32 %v1249, 4294901760
  %v3524 = vsub.f32 %v1249, %v3523
  %3525 = vmatmul.mubr.f32.gmra.mxu0 %v3524
  %v3526 = vpop.f32.mrf.mxu0
  %v3527 = vadd.f32 %v2922, %v3526
  %v3528 = vpop.f32.mrf.mxu0
  %v3529 = vand.u32 %v1398, 4294901760
  %v3530 = vsub.f32 %v1398, %v3529
  %3531 = vmatprep.mubr.f32.mxu0 %v3530
  %v3532 = vand.u32 %v1251, 4294901760
  %v3533 = vsub.f32 %v1251, %v3532
  %3534 = vmatmul.mubr.f32.gmra.mxu0 %v3533
  %v3535 = vpop.f32.mrf.mxu0
  %v3536 = vadd.f32 %v2929, %v3535
  %v3537 = vpop.f32.mrf.mxu0
  %v3538 = vand.u32 %v1401, 4294901760
  %v3539 = vsub.f32 %v1401, %v3538
  %3540 = vmatprep.mubr.f32.mxu0 %v3539
  %v3541 = vand.u32 %v1253, 4294901760
  %v3542 = vsub.f32 %v1253, %v3541
  %3543 = vmatmul.mubr.f32.gmra.mxu0 %v3542
  %v3544 = vpop.f32.mrf.mxu0
  %v3545 = vadd.f32 %v2936, %v3544
  %v3546 = vpop.f32.mrf.mxu0
  %v3547 = vand.u32 %v1404, 4294901760
  %v3548 = vsub.f32 %v1404, %v3547
  %3549 = vmatprep.mubr.f32.mxu0 %v3548
  %v3550 = vand.u32 %v1255, 4294901760
  %v3551 = vsub.f32 %v1255, %v3550
  %3552 = vmatmul.mubr.f32.gmra.mxu0 %v3551
  %v3553 = vpop.f32.mrf.mxu0
  %v3554 = vadd.f32 %v2943, %v3553
  %v3555 = vpop.f32.mrf.mxu0
  %v3556 = vand.u32 %v1407, 4294901760
  %v3557 = vsub.f32 %v1407, %v3556
  %3558 = vmatprep.mubr.f32.mxu0 %v3557
  %v3559 = vand.u32 %v1257, 4294901760
  %v3560 = vsub.f32 %v1257, %v3559
  %3561 = vmatmul.mubr.f32.gmra.mxu0 %v3560
  %v3562 = vpop.f32.mrf.mxu0
  %v3563 = vadd.f32 %v2950, %v3562
  %v3564 = vpop.f32.mrf.mxu0
  %v3565 = vand.u32 %v1410, 4294901760
  %v3566 = vsub.f32 %v1410, %v3565
  %3567 = vmatprep.mubr.f32.mxu0 %v3566
  %v3568 = vand.u32 %v1259, 4294901760
  %v3569 = vsub.f32 %v1259, %v3568
  %3570 = vmatmul.mubr.f32.gmra.mxu0 %v3569
  %v3571 = vpop.f32.mrf.mxu0
  %v3572 = vadd.f32 %v2957, %v3571
  %v3573 = vpop.f32.mrf.mxu0
  %v3574 = vand.u32 %v1413, 4294901760
  %v3575 = vsub.f32 %v1413, %v3574
  %3576 = vmatprep.mubr.f32.mxu0 %v3575
  %v3577 = vand.u32 %v1261, 4294901760
  %v3578 = vsub.f32 %v1261, %v3577
  %3579 = vmatmul.mubr.f32.gmra.mxu0 %v3578
  %v3580 = vpop.f32.mrf.mxu0
  %v3581 = vadd.f32 %v2964, %v3580
  %v3582 = vpop.f32.mrf.mxu0
  %v3583 = vand.u32 %v1416, 4294901760
  %v3584 = vsub.f32 %v1416, %v3583
  %3585 = vmatprep.mubr.f32.mxu0 %v3584
  %v3586 = vand.u32 %v1263, 4294901760
  %v3587 = vsub.f32 %v1263, %v3586
  %3588 = vmatmul.mubr.f32.gmra.mxu0 %v3587
  %v3589 = vpop.f32.mrf.mxu0
  %v3590 = vadd.f32 %v2971, %v3589
  %v3591 = vpop.f32.mrf.mxu0
  %v3592 = vand.u32 %v1419, 4294901760
  %v3593 = vsub.f32 %v1419, %v3592
  %3594 = vmatprep.mubr.f32.mxu0 %v3593
  %v3595 = vand.u32 %v1265, 4294901760
  %v3596 = vsub.f32 %v1265, %v3595
  %3597 = vmatmul.mubr.f32.gmra.mxu0 %v3596
  %v3598 = vpop.f32.mrf.mxu0
  %v3599 = vadd.f32 %v2978, %v3598
  %v3600 = vpop.f32.mrf.mxu0
  %v3601 = vand.u32 %v1422, 4294901760
  %v3602 = vsub.f32 %v1422, %v3601
  %3603 = vmatprep.mubr.f32.mxu0 %v3602
  %v3604 = vand.u32 %v1267, 4294901760
  %v3605 = vsub.f32 %v1267, %v3604
  %3606 = vmatmul.mubr.f32.gmra.mxu0 %v3605
  %v3607 = vpop.f32.mrf.mxu0
  %v3608 = vadd.f32 %v2985, %v3607
  %v3609 = vpop.f32.mrf.mxu0
  %v3610 = vand.u32 %v1425, 4294901760
  %v3611 = vsub.f32 %v1425, %v3610
  %3612 = vmatprep.mubr.f32.mxu0 %v3611
  %v3613 = vand.u32 %v1269, 4294901760
  %v3614 = vsub.f32 %v1269, %v3613
  %3615 = vmatmul.mubr.f32.gmra.mxu0 %v3614
  %v3616 = vpop.f32.mrf.mxu0
  %v3617 = vadd.f32 %v2992, %v3616
  %v3618 = vpop.f32.mrf.mxu0
  %v3619 = vand.u32 %v1428, 4294901760
  %v3620 = vsub.f32 %v1428, %v3619
  %3621 = vmatprep.mubr.f32.mxu0 %v3620
  %v3622 = vand.u32 %v1271, 4294901760
  %v3623 = vsub.f32 %v1271, %v3622
  %3624 = vmatmul.mubr.f32.gmra.mxu0 %v3623
  %v3625 = vpop.f32.mrf.mxu0
  %v3626 = vadd.f32 %v2999, %v3625
  %v3627 = vpop.f32.mrf.mxu0
  %v3628 = vand.u32 %v1431, 4294901760
  %v3629 = vsub.f32 %v1431, %v3628
  %3630 = vmatprep.mubr.f32.mxu0 %v3629
  %v3631 = vand.u32 %v1273, 4294901760
  %v3632 = vsub.f32 %v1273, %v3631
  %3633 = vmatmul.mubr.f32.gmra.mxu0 %v3632
  %v3634 = vpop.f32.mrf.mxu0
  %v3635 = vadd.f32 %v3006, %v3634
  %v3636 = vpop.f32.mrf.mxu0
  %v3637 = vand.u32 %v1434, 4294901760
  %v3638 = vsub.f32 %v1434, %v3637
  %3639 = vmatprep.mubr.f32.mxu0 %v3638
  %v3640 = vand.u32 %v1275, 4294901760
  %v3641 = vsub.f32 %v1275, %v3640
  %3642 = vmatmul.mubr.f32.gmra.mxu0 %v3641
  %v3643 = vpop.f32.mrf.mxu0
  %v3644 = vadd.f32 %v3013, %v3643
  %v3645 = vpop.f32.mrf.mxu0
  %v3646 = vand.u32 %v1437, 4294901760
  %v3647 = vsub.f32 %v1437, %v3646
  %3648 = vmatprep.mubr.f32.mxu0 %v3647
  %v3649 = vand.u32 %v1277, 4294901760
  %v3650 = vsub.f32 %v1277, %v3649
  %3651 = vmatmul.mubr.f32.gmra.mxu0 %v3650
  %v3652 = vpop.f32.mrf.mxu0
  %v3653 = vadd.f32 %v3020, %v3652
  %v3654 = vpop.f32.mrf.mxu0
  %v3655 = vand.u32 %v1440, 4294901760
  %v3656 = vsub.f32 %v1440, %v3655
  %3657 = vmatprep.mubr.f32.mxu0 %v3656
  %v3658 = vand.u32 %v1279, 4294901760
  %v3659 = vsub.f32 %v1279, %v3658
  %3660 = vmatmul.mubr.f32.gmra.mxu0 %v3659
  %v3661 = vpop.f32.mrf.mxu0
  %v3662 = vadd.f32 %v3027, %v3661
  %v3663 = vpop.f32.mrf.mxu0
  %v3664 = vand.u32 %v1443, 4294901760
  %v3665 = vsub.f32 %v1443, %v3664
  %3666 = vmatprep.mubr.f32.mxu0 %v3665
  %v3667 = vand.u32 %v1281, 4294901760
  %v3668 = vsub.f32 %v1281, %v3667
  %3669 = vmatmul.mubr.f32.gmra.mxu0 %v3668
  %v3670 = vpop.f32.mrf.mxu0
  %v3671 = vadd.f32 %v3034, %v3670
  %v3672 = vpop.f32.mrf.mxu0
  %v3673 = vand.u32 %v1446, 4294901760
  %v3674 = vsub.f32 %v1446, %v3673
  %3675 = vmatprep.mubr.f32.mxu0 %v3674
  %v3676 = vand.u32 %v1283, 4294901760
  %v3677 = vsub.f32 %v1283, %v3676
  %3678 = vmatmul.mubr.f32.gmra.mxu0 %v3677
  %v3679 = vpop.f32.mrf.mxu0
  %v3680 = vadd.f32 %v3041, %v3679
  %v3681 = vpop.f32.mrf.mxu0
  %v3682 = vand.u32 %v1449, 4294901760
  %v3683 = vsub.f32 %v1449, %v3682
  %3684 = vmatprep.mubr.f32.mxu0 %v3683
  %v3685 = vand.u32 %v1285, 4294901760
  %v3686 = vsub.f32 %v1285, %v3685
  %3687 = vmatmul.mubr.f32.gmra.mxu0 %v3686
  %v3688 = vpop.f32.mrf.mxu0
  %v3689 = vadd.f32 %v3048, %v3688
  %v3690 = vpop.f32.mrf.mxu0
  %v3691 = vand.u32 %v1452, 4294901760
  %v3692 = vsub.f32 %v1452, %v3691
  %3693 = vmatprep.mubr.f32.mxu0 %v3692
  %v3694 = vand.u32 %v1287, 4294901760
  %v3695 = vsub.f32 %v1287, %v3694
  %3696 = vmatmul.mubr.f32.gmra.mxu0 %v3695
  %v3697 = vpop.f32.mrf.mxu0
  %v3698 = vadd.f32 %v3055, %v3697
  %v3699 = vpop.f32.mrf.mxu0
  %v3700 = vand.u32 %v1455, 4294901760
  %v3701 = vsub.f32 %v1455, %v3700
  %3702 = vmatprep.mubr.f32.mxu0 %v3701
  %v3703 = vand.u32 %v1289, 4294901760
  %v3704 = vsub.f32 %v1289, %v3703
  %3705 = vmatmul.mubr.f32.gmra.mxu0 %v3704
  %v3706 = vpop.f32.mrf.mxu0
  %v3707 = vadd.f32 %v3062, %v3706
  %v3708 = vpop.f32.mrf.mxu0
  %v3709 = vand.u32 %v1458, 4294901760
  %v3710 = vsub.f32 %v1458, %v3709
  %3711 = vmatprep.mubr.f32.mxu0 %v3710
  %v3712 = vand.u32 %v1291, 4294901760
  %v3713 = vsub.f32 %v1291, %v3712
  %3714 = vmatmul.mubr.f32.gmra.mxu0 %v3713
  %v3715 = vpop.f32.mrf.mxu0
  %v3716 = vadd.f32 %v3069, %v3715
  %v3717 = vpop.f32.mrf.mxu0
  %v3718 = vand.u32 %v1461, 4294901760
  %v3719 = vsub.f32 %v1461, %v3718
  %3720 = vmatprep.mubr.f32.mxu0 %v3719
  %v3721 = vand.u32 %v1293, 4294901760
  %v3722 = vsub.f32 %v1293, %v3721
  %3723 = vmatmul.mubr.f32.gmra.mxu0 %v3722
  %v3724 = vpop.f32.mrf.mxu0
  %v3725 = vadd.f32 %v3076, %v3724
  %v3726 = vpop.f32.mrf.mxu0
  %v3727 = vand.u32 %v1464, 4294901760
  %v3728 = vsub.f32 %v1464, %v3727
  %3729 = vmatprep.mubr.f32.mxu0 %v3728
  %v3730 = vand.u32 %v1295, 4294901760
  %v3731 = vsub.f32 %v1295, %v3730
  %3732 = vmatmul.mubr.f32.gmra.mxu0 %v3731
  %v3733 = vpop.f32.mrf.mxu0
  %v3734 = vadd.f32 %v3083, %v3733
  %v3735 = vpop.f32.mrf.mxu0
  %v3736 = vand.u32 %v1467, 4294901760
  %v3737 = vsub.f32 %v1467, %v3736
  %3738 = vmatprep.mubr.f32.mxu0 %v3737
  %v3739 = vand.u32 %v1297, 4294901760
  %v3740 = vsub.f32 %v1297, %v3739
  %3741 = vmatmul.mubr.f32.gmra.mxu0 %v3740
  %v3742 = vpop.f32.mrf.mxu0
  %v3743 = vadd.f32 %v3090, %v3742
  %v3744 = vpop.f32.mrf.mxu0
  %v3745 = vand.u32 %v1470, 4294901760
  %v3746 = vsub.f32 %v1470, %v3745
  %3747 = vmatprep.mubr.f32.mxu0 %v3746
  %v3748 = vand.u32 %v1299, 4294901760
  %v3749 = vsub.f32 %v1299, %v3748
  %3750 = vmatmul.mubr.f32.gmra.mxu0 %v3749
  %v3751 = vpop.f32.mrf.mxu0
  %v3752 = vadd.f32 %v3097, %v3751
  %v3753 = vpop.f32.mrf.mxu0
  %v3754 = vand.u32 %v1473, 4294901760
  %v3755 = vsub.f32 %v1473, %v3754
  %3756 = vmatprep.mubr.f32.mxu0 %v3755
  %v3757 = vand.u32 %v1301, 4294901760
  %v3758 = vsub.f32 %v1301, %v3757
  %3759 = vmatmul.mubr.f32.gmra.mxu0 %v3758
  %v3760 = vpop.f32.mrf.mxu0
  %v3761 = vadd.f32 %v3104, %v3760
  %v3762 = vpop.f32.mrf.mxu0
  %v3763 = vand.u32 %v1476, 4294901760
  %v3764 = vsub.f32 %v1476, %v3763
  %3765 = vmatprep.mubr.f32.mxu0 %v3764
  %v3766 = vand.u32 %v1303, 4294901760
  %v3767 = vsub.f32 %v1303, %v3766
  %3768 = vmatmul.mubr.f32.gmra.mxu0 %v3767
  %v3769 = vpop.f32.mrf.mxu0
  %v3770 = vadd.f32 %v3111, %v3769
  %v3771 = vpop.f32.mrf.mxu0
  %v3772 = vand.u32 %v1479, 4294901760
  %v3773 = vsub.f32 %v1479, %v3772
  %3774 = vmatprep.mubr.f32.mxu0 %v3773
  %v3775 = vand.u32 %v1305, 4294901760
  %v3776 = vsub.f32 %v1305, %v3775
  %3777 = vmatmul.mubr.f32.gmra.mxu0 %v3776
  %v3778 = vpop.f32.mrf.mxu0
  %v3779 = vadd.f32 %v3118, %v3778
  %v3780 = vpop.f32.mrf.mxu0
  %v3781 = vand.u32 %v1482, 4294901760
  %v3782 = vsub.f32 %v1482, %v3781
  %3783 = vmatprep.mubr.f32.mxu0 %v3782
  %v3784 = vand.u32 %v1307, 4294901760
  %v3785 = vsub.f32 %v1307, %v3784
  %3786 = vmatmul.mubr.f32.gmra.mxu0 %v3785
  %v3787 = vpop.f32.mrf.mxu0
  %v3788 = vadd.f32 %v3125, %v3787
  %v3789 = vpop.f32.mrf.mxu0
  %v3790 = vand.u32 %v1485, 4294901760
  %v3791 = vsub.f32 %v1485, %v3790
  %3792 = vmatprep.mubr.f32.mxu0 %v3791
  %v3793 = vand.u32 %v1309, 4294901760
  %v3794 = vsub.f32 %v1309, %v3793
  %3795 = vmatmul.mubr.f32.gmra.mxu0 %v3794
  %v3796 = vpop.f32.mrf.mxu0
  %v3797 = vadd.f32 %v3132, %v3796
  %v3798 = vpop.f32.mrf.mxu0
  %v3799 = vand.u32 %v1488, 4294901760
  %v3800 = vsub.f32 %v1488, %v3799
  %3801 = vmatprep.mubr.f32.mxu0 %v3800
  %v3802 = vand.u32 %v1311, 4294901760
  %v3803 = vsub.f32 %v1311, %v3802
  %3804 = vmatmul.mubr.f32.gmra.mxu0 %v3803
  %v3805 = vpop.f32.mrf.mxu0
  %v3806 = vadd.f32 %v3139, %v3805
  %v3807 = vpop.f32.mrf.mxu0
  %v3808 = vand.u32 %v1491, 4294901760
  %v3809 = vsub.f32 %v1491, %v3808
  %3810 = vmatprep.mubr.f32.mxu0 %v3809
  %v3811 = vand.u32 %v1313, 4294901760
  %v3812 = vsub.f32 %v1313, %v3811
  %3813 = vmatmul.mubr.f32.gmra.mxu0 %v3812
  %v3814 = vpop.f32.mrf.mxu0
  %v3815 = vadd.f32 %v3146, %v3814
  %v3816 = vpop.f32.mrf.mxu0
  %v3817 = vand.u32 %v1494, 4294901760
  %v3818 = vsub.f32 %v1494, %v3817
  %3819 = vmatprep.mubr.f32.mxu0 %v3818
  %v3820 = vand.u32 %v1315, 4294901760
  %v3821 = vsub.f32 %v1315, %v3820
  %3822 = vmatmul.mubr.f32.gmra.mxu0 %v3821
  %v3823 = vpop.f32.mrf.mxu0
  %v3824 = vadd.f32 %v3153, %v3823
  %v3825 = vpop.f32.mrf.mxu0
  %v3826 = vand.u32 %v1497, 4294901760
  %v3827 = vsub.f32 %v1497, %v3826
  %3828 = vmatprep.mubr.f32.mxu0 %v3827
  %v3829 = vand.u32 %v1317, 4294901760
  %v3830 = vsub.f32 %v1317, %v3829
  %3831 = vmatmul.mubr.f32.gmra.mxu0 %v3830
  %v3832 = vpop.f32.mrf.mxu0
  %v3833 = vadd.f32 %v3160, %v3832
  %v3834 = vpop.f32.mrf.mxu0
  %v3835 = vand.u32 %v1500, 4294901760
  %v3836 = vsub.f32 %v1500, %v3835
  %3837 = vmatprep.mubr.f32.mxu0 %v3836
  %v3838 = vand.u32 %v1319, 4294901760
  %v3839 = vsub.f32 %v1319, %v3838
  %3840 = vmatmul.mubr.f32.gmra.mxu0 %v3839
  %v3841 = vpop.f32.mrf.mxu0
  %v3842 = vadd.f32 %v3167, %v3841
  %v3843 = vpop.f32.mrf.mxu0
  %v3844 = vand.u32 %v1503, 4294901760
  %v3845 = vsub.f32 %v1503, %v3844
  %3846 = vmatprep.mubr.f32.mxu0 %v3845
  %v3847 = vand.u32 %v1321, 4294901760
  %v3848 = vsub.f32 %v1321, %v3847
  %3849 = vmatmul.mubr.f32.gmra.mxu0 %v3848
  %v3850 = vpop.f32.mrf.mxu0
  %v3851 = vadd.f32 %v3174, %v3850
  %v3852 = vpop.f32.mrf.mxu0
  %v3853 = vand.u32 %v1506, 4294901760
  %v3854 = vsub.f32 %v1506, %v3853
  %3855 = vmatprep.mubr.f32.mxu0 %v3854
  %v3856 = vand.u32 %v1323, 4294901760
  %v3857 = vsub.f32 %v1323, %v3856
  %3858 = vmatmul.mubr.f32.gmra.mxu0 %v3857
  %v3859 = vpop.f32.mrf.mxu0
  %v3860 = vadd.f32 %v3181, %v3859
  %v3861 = vpop.f32.mrf.mxu0
  %v3862 = vand.u32 %v1509, 4294901760
  %v3863 = vsub.f32 %v1509, %v3862
  %3864 = vmatprep.mubr.f32.mxu0 %v3863
  %v3865 = vand.u32 %v1325, 4294901760
  %v3866 = vsub.f32 %v1325, %v3865
  %3867 = vmatmul.mubr.f32.gmra.mxu0 %v3866
  %v3868 = vpop.f32.mrf.mxu0
  %v3869 = vadd.f32 %v3188, %v3868
  %v3870 = vpop.f32.mrf.mxu0
  %v3871 = vand.u32 %v1512, 4294901760
  %v3872 = vsub.f32 %v1512, %v3871
  %3873 = vmatprep.mubr.f32.mxu0 %v3872
  %v3874 = vand.u32 %v1327, 4294901760
  %v3875 = vsub.f32 %v1327, %v3874
  %3876 = vmatmul.mubr.f32.gmra.mxu0 %v3875
  %v3877 = vpop.f32.mrf.mxu0
  %v3878 = vadd.f32 %v3195, %v3877
  %v3879 = vpop.f32.mrf.mxu0
  %v3880 = vand.u32 %v1515, 4294901760
  %v3881 = vsub.f32 %v1515, %v3880
  %3882 = vmatprep.mubr.f32.mxu0 %v3881
  %v3883 = vand.u32 %v1329, 4294901760
  %v3884 = vsub.f32 %v1329, %v3883
  %3885 = vmatmul.mubr.f32.gmra.mxu0 %v3884
  %v3886 = vpop.f32.mrf.mxu0
  %v3887 = vadd.f32 %v3202, %v3886
  %v3888 = vpop.f32.mrf.mxu0
  %v3889 = vand.u32 %v1518, 4294901760
  %v3890 = vsub.f32 %v1518, %v3889
  %3891 = vmatprep.mubr.f32.mxu0 %v3890
  %v3892 = vand.u32 %v1331, 4294901760
  %v3893 = vsub.f32 %v1331, %v3892
  %3894 = vmatmul.mubr.f32.gmra.mxu0 %v3893
  %v3895 = vpop.f32.mrf.mxu0
  %v3896 = vadd.f32 %v3209, %v3895
  %v3897 = vpop.f32.mrf.mxu0
  %v3898 = vand.u32 %v1521, 4294901760
  %v3899 = vsub.f32 %v1521, %v3898
  %3900 = vmatprep.mubr.f32.mxu0 %v3899
  %v3901 = vand.u32 %v1333, 4294901760
  %v3902 = vsub.f32 %v1333, %v3901
  %3903 = vmatmul.mubr.f32.gmra.mxu0 %v3902
  %v3904 = vpop.f32.mrf.mxu0
  %v3905 = vadd.f32 %v3216, %v3904
  %v3906 = vpop.f32.mrf.mxu0
  %v3907 = vand.u32 %v1524, 4294901760
  %v3908 = vsub.f32 %v1524, %v3907
  %3909 = vmatprep.mubr.f32.mxu0 %v3908
  %v3910 = vand.u32 %v1335, 4294901760
  %v3911 = vsub.f32 %v1335, %v3910
  %3912 = vmatmul.mubr.f32.gmra.mxu0 %v3911
  %v3913 = vpop.f32.mrf.mxu0
  %v3914 = vadd.f32 %v3223, %v3913
  %v3915 = vpop.f32.mrf.mxu0
  %v3916 = vand.u32 %v1527, 4294901760
  %v3917 = vsub.f32 %v1527, %v3916
  %3918 = vmatprep.mubr.f32.mxu0 %v3917
  %v3919 = vand.u32 %v1337, 4294901760
  %v3920 = vsub.f32 %v1337, %v3919
  %3921 = vmatmul.mubr.f32.gmra.mxu0 %v3920
  %v3922 = vpop.f32.mrf.mxu0
  %v3923 = vadd.f32 %v3230, %v3922
  %v3924 = vpop.f32.mrf.mxu0
  %v3925 = vand.u32 %v1530, 4294901760
  %v3926 = vsub.f32 %v1530, %v3925
  %3927 = vmatprep.mubr.f32.mxu0 %v3926
  %v3928 = vand.u32 %v1339, 4294901760
  %v3929 = vsub.f32 %v1339, %v3928
  %3930 = vmatmul.mubr.f32.gmra.mxu0 %v3929
  %v3931 = vpop.f32.mrf.mxu0
  %v3932 = vadd.f32 %v3237, %v3931
  %v3933 = vpop.f32.mrf.mxu0
  %v3934 = vand.u32 %v1533, 4294901760
  %v3935 = vsub.f32 %v1533, %v3934
  %3936 = vmatprep.mubr.f32.mxu0 %v3935
  %v3937 = vand.u32 %v1341, 4294901760
  %v3938 = vsub.f32 %v1341, %v3937
  %3939 = vmatmul.mubr.f32.gmra.mxu0 %v3938
  %v3940 = vpop.f32.mrf.mxu0
  %v3941 = vadd.f32 %v3244, %v3940
  %v3942 = vpop.f32.mrf.mxu0
  %v3943 = vand.u32 %v1536, 4294901760
  %v3944 = vsub.f32 %v1536, %v3943
  %3945 = vmatprep.mubr.f32.mxu0 %v3944
  %v3946 = vand.u32 %v1343, 4294901760
  %v3947 = vsub.f32 %v1343, %v3946
  %3948 = vmatmul.mubr.f32.gmra.mxu0 %v3947
  %v3949 = vpop.f32.mrf.mxu0
  %v3950 = vadd.f32 %v3251, %v3949
  %v3951 = vpop.f32.mrf.mxu0
  %3952 = vdwg.mxu0
  %3953 = vmatprep.subr.mxu0 0.0
  %v3954 = vand.u32 %v235, 4294901760
  %3955 = vmatpush1.msra.mxu0 %v3954
  %3956 = vmatprep.subr.mxu0 0.0
  %v3957 = vand.u32 %v234, 4294901760
  %3958 = vmatpush1.msra.mxu0 %v3957
  %3959 = vmatprep.subr.mxu0 0.0
  %v3960 = vand.u32 %v233, 4294901760
  %3961 = vmatpush1.msra.mxu0 %v3960
  %3962 = vmatprep.subr.mxu0 0.0
  %v3963 = vand.u32 %v232, 4294901760
  %3964 = vmatpush1.msra.mxu0 %v3963
  %3965 = vmatprep.subr.mxu0 0.0
  %v3966 = vand.u32 %v231, 4294901760
  %3967 = vmatpush1.msra.mxu0 %v3966
  %3968 = vmatprep.subr.mxu0 0.0
  %v3969 = vand.u32 %v230, 4294901760
  %3970 = vmatpush1.msra.mxu0 %v3969
  %3971 = vmatprep.subr.mxu0 0.0
  %v3972 = vand.u32 %v229, 4294901760
  %3973 = vmatpush1.msra.mxu0 %v3972
  %3974 = vmatprep.subr.mxu0 0.0
  %v3975 = vand.u32 %v228, 4294901760
  %3976 = vmatpush1.msra.mxu0 %v3975
  %3977 = vmatprep.subr.mxu0 0.0
  %v3978 = vand.u32 %v227, 4294901760
  %3979 = vmatpush1.msra.mxu0 %v3978
  %3980 = vmatprep.subr.mxu0 0.0
  %v3981 = vand.u32 %v226, 4294901760
  %3982 = vmatpush1.msra.mxu0 %v3981
  %3983 = vmatprep.subr.mxu0 0.0
  %v3984 = vand.u32 %v225, 4294901760
  %3985 = vmatpush1.msra.mxu0 %v3984
  %3986 = vmatprep.subr.mxu0 0.0
  %v3987 = vand.u32 %v224, 4294901760
  %3988 = vmatpush1.msra.mxu0 %v3987
  %3989 = vmatprep.subr.mxu0 0.0
  %v3990 = vand.u32 %v223, 4294901760
  %3991 = vmatpush1.msra.mxu0 %v3990
  %3992 = vmatprep.subr.mxu0 0.0
  %v3993 = vand.u32 %v222, 4294901760
  %3994 = vmatpush1.msra.mxu0 %v3993
  %3995 = vmatprep.subr.mxu0 0.0
  %v3996 = vand.u32 %v221, 4294901760
  %3997 = vmatpush1.msra.mxu0 %v3996
  %3998 = vmatprep.subr.mxu0 0.0
  %v3999 = vand.u32 %v220, 4294901760
  %4000 = vmatpush1.msra.mxu0 %v3999
  %4001 = vmatprep.subr.mxu0 0.0
  %4002 = vmatpush2.msra.mxu0 0.0
  %4003 = vmatprep.subr.mxu0 0.0
  %4004 = vmatpush2.msra.mxu0 0.0
  %4005 = vmatprep.subr.mxu0 0.0
  %4006 = vmatpush2.msra.mxu0 0.0
  %4007 = vmatprep.subr.mxu0 0.0
  %v4008 = vand.u32 %v1540, 4294901760
  %4009 = vmatpush2.msra.mxu0 %v4008
  %4010 = vmatprep.subr.mxu0 0.0
  %v4011 = vand.u32 %v247, 4294901760
  %4012 = vmatpush2.msra.mxu0 %v4011
  %4013 = vmatprep.subr.mxu0 0.0
  %v4014 = vand.u32 %v246, 4294901760
  %4015 = vmatpush2.msra.mxu0 %v4014
  %4016 = vmatprep.subr.mxu0 0.0
  %v4017 = vand.u32 %v245, 4294901760
  %4018 = vmatpush2.msra.mxu0 %v4017
  %4019 = vmatprep.subr.mxu0 0.0
  %v4020 = vand.u32 %v244, 4294901760
  %4021 = vmatpush2.msra.mxu0 %v4020
  %4022 = vmatprep.subr.mxu0 0.0
  %v4023 = vand.u32 %v243, 4294901760
  %4024 = vmatpush2.msra.mxu0 %v4023
  %4025 = vmatprep.subr.mxu0 0.0
  %v4026 = vand.u32 %v242, 4294901760
  %4027 = vmatpush2.msra.mxu0 %v4026
  %4028 = vmatprep.subr.mxu0 0.0
  %v4029 = vand.u32 %v241, 4294901760
  %4030 = vmatpush2.msra.mxu0 %v4029
  %4031 = vmatprep.subr.mxu0 0.0
  %v4032 = vand.u32 %v240, 4294901760
  %4033 = vmatpush2.msra.mxu0 %v4032
  %4034 = vmatprep.subr.mxu0 0.0
  %v4035 = vand.u32 %v239, 4294901760
  %4036 = vmatpush2.msra.mxu0 %v4035
  %4037 = vmatprep.subr.mxu0 0.0
  %v4038 = vand.u32 %v238, 4294901760
  %4039 = vmatpush2.msra.mxu0 %v4038
  %4040 = vmatprep.subr.mxu0 0.0
  %v4041 = vand.u32 %v237, 4294901760
  %4042 = vmatpush2.msra.mxu0 %v4041
  %4043 = vmatprep.subr.mxu0 0.0
  %v4044 = vand.u32 %v236, 4294901760
  %4045 = vmatpush2.msra.mxu0 %v4044
  %v4046 = vand.u32 %v1347, 4294901760
  %v4047 = vsub.f32 %v1347, %v4046
  %v4048 = vand.u32 %v4047, 4294901760
  %4049 = vmatprep.mubr.f32.mxu0 %v4048
  %v4050 = vand.u32 %v1217, 4294901760
  %v4051 = vsub.f32 %v1217, %v4050
  %v4052 = vand.u32 %v4051, 4294901760
  %4053 = vmatmul.mubr.f32.gmra.mxu0 %v4052
  %v4054 = vpop.f32.mrf.mxu0
  %v4055 = vadd.f32 %v3383, %v4054
  %v4056 = vpop.f32.mrf.mxu0
  %v4057 = vand.u32 %v1350, 4294901760
  %v4058 = vsub.f32 %v1350, %v4057
  %v4059 = vand.u32 %v4058, 4294901760
  %4060 = vmatprep.mubr.f32.mxu0 %v4059
  %v4061 = vand.u32 %v1219, 4294901760
  %v4062 = vsub.f32 %v1219, %v4061
  %v4063 = vand.u32 %v4062, 4294901760
  %4064 = vmatmul.mubr.f32.gmra.mxu0 %v4063
  %v4065 = vpop.f32.mrf.mxu0
  %v4066 = vadd.f32 %v3392, %v4065
  %v4067 = vpop.f32.mrf.mxu0
  %v4068 = vand.u32 %v1353, 4294901760
  %v4069 = vsub.f32 %v1353, %v4068
  %v4070 = vand.u32 %v4069, 4294901760
  %4071 = vmatprep.mubr.f32.mxu0 %v4070
  %v4072 = vand.u32 %v1221, 4294901760
  %v4073 = vsub.f32 %v1221, %v4072
  %v4074 = vand.u32 %v4073, 4294901760
  %4075 = vmatmul.mubr.f32.gmra.mxu0 %v4074
  %v4076 = vpop.f32.mrf.mxu0
  %v4077 = vadd.f32 %v3401, %v4076
  %v4078 = vpop.f32.mrf.mxu0
  %v4079 = vand.u32 %v1356, 4294901760
  %v4080 = vsub.f32 %v1356, %v4079
  %v4081 = vand.u32 %v4080, 4294901760
  %4082 = vmatprep.mubr.f32.mxu0 %v4081
  %v4083 = vand.u32 %v1223, 4294901760
  %v4084 = vsub.f32 %v1223, %v4083
  %v4085 = vand.u32 %v4084, 4294901760
  %4086 = vmatmul.mubr.f32.gmra.mxu0 %v4085
  %v4087 = vpop.f32.mrf.mxu0
  %v4088 = vadd.f32 %v3410, %v4087
  %v4089 = vpop.f32.mrf.mxu0
  %v4090 = vand.u32 %v1359, 4294901760
  %v4091 = vsub.f32 %v1359, %v4090
  %v4092 = vand.u32 %v4091, 4294901760
  %4093 = vmatprep.mubr.f32.mxu0 %v4092
  %v4094 = vand.u32 %v1225, 4294901760
  %v4095 = vsub.f32 %v1225, %v4094
  %v4096 = vand.u32 %v4095, 4294901760
  %4097 = vmatmul.mubr.f32.gmra.mxu0 %v4096
  %v4098 = vpop.f32.mrf.mxu0
  %v4099 = vadd.f32 %v3419, %v4098
  %v4100 = vpop.f32.mrf.mxu0
  %v4101 = vand.u32 %v1362, 4294901760
  %v4102 = vsub.f32 %v1362, %v4101
  %v4103 = vand.u32 %v4102, 4294901760
  %4104 = vmatprep.mubr.f32.mxu0 %v4103
  %v4105 = vand.u32 %v1227, 4294901760
  %v4106 = vsub.f32 %v1227, %v4105
  %v4107 = vand.u32 %v4106, 4294901760
  %4108 = vmatmul.mubr.f32.gmra.mxu0 %v4107
  %v4109 = vpop.f32.mrf.mxu0
  %v4110 = vadd.f32 %v3428, %v4109
  %v4111 = vpop.f32.mrf.mxu0
  %v4112 = vand.u32 %v1365, 4294901760
  %v4113 = vsub.f32 %v1365, %v4112
  %v4114 = vand.u32 %v4113, 4294901760
  %4115 = vmatprep.mubr.f32.mxu0 %v4114
  %v4116 = vand.u32 %v1229, 4294901760
  %v4117 = vsub.f32 %v1229, %v4116
  %v4118 = vand.u32 %v4117, 4294901760
  %4119 = vmatmul.mubr.f32.gmra.mxu0 %v4118
  %v4120 = vpop.f32.mrf.mxu0
  %v4121 = vadd.f32 %v3437, %v4120
  %v4122 = vpop.f32.mrf.mxu0
  %v4123 = vand.u32 %v1368, 4294901760
  %v4124 = vsub.f32 %v1368, %v4123
  %v4125 = vand.u32 %v4124, 4294901760
  %4126 = vmatprep.mubr.f32.mxu0 %v4125
  %v4127 = vand.u32 %v1231, 4294901760
  %v4128 = vsub.f32 %v1231, %v4127
  %v4129 = vand.u32 %v4128, 4294901760
  %4130 = vmatmul.mubr.f32.gmra.mxu0 %v4129
  %v4131 = vpop.f32.mrf.mxu0
  %v4132 = vadd.f32 %v3446, %v4131
  %v4133 = vpop.f32.mrf.mxu0
  %v4134 = vand.u32 %v1371, 4294901760
  %v4135 = vsub.f32 %v1371, %v4134
  %v4136 = vand.u32 %v4135, 4294901760
  %4137 = vmatprep.mubr.f32.mxu0 %v4136
  %v4138 = vand.u32 %v1233, 4294901760
  %v4139 = vsub.f32 %v1233, %v4138
  %v4140 = vand.u32 %v4139, 4294901760
  %4141 = vmatmul.mubr.f32.gmra.mxu0 %v4140
  %v4142 = vpop.f32.mrf.mxu0
  %v4143 = vadd.f32 %v3455, %v4142
  %v4144 = vpop.f32.mrf.mxu0
  %v4145 = vand.u32 %v1374, 4294901760
  %v4146 = vsub.f32 %v1374, %v4145
  %v4147 = vand.u32 %v4146, 4294901760
  %4148 = vmatprep.mubr.f32.mxu0 %v4147
  %v4149 = vand.u32 %v1235, 4294901760
  %v4150 = vsub.f32 %v1235, %v4149
  %v4151 = vand.u32 %v4150, 4294901760
  %4152 = vmatmul.mubr.f32.gmra.mxu0 %v4151
  %v4153 = vpop.f32.mrf.mxu0
  %v4154 = vadd.f32 %v3464, %v4153
  %v4155 = vpop.f32.mrf.mxu0
  %v4156 = vand.u32 %v1377, 4294901760
  %v4157 = vsub.f32 %v1377, %v4156
  %v4158 = vand.u32 %v4157, 4294901760
  %4159 = vmatprep.mubr.f32.mxu0 %v4158
  %v4160 = vand.u32 %v1237, 4294901760
  %v4161 = vsub.f32 %v1237, %v4160
  %v4162 = vand.u32 %v4161, 4294901760
  %4163 = vmatmul.mubr.f32.gmra.mxu0 %v4162
  %v4164 = vpop.f32.mrf.mxu0
  %v4165 = vadd.f32 %v3473, %v4164
  %v4166 = vpop.f32.mrf.mxu0
  %v4167 = vand.u32 %v1380, 4294901760
  %v4168 = vsub.f32 %v1380, %v4167
  %v4169 = vand.u32 %v4168, 4294901760
  %4170 = vmatprep.mubr.f32.mxu0 %v4169
  %v4171 = vand.u32 %v1239, 4294901760
  %v4172 = vsub.f32 %v1239, %v4171
  %v4173 = vand.u32 %v4172, 4294901760
  %4174 = vmatmul.mubr.f32.gmra.mxu0 %v4173
  %v4175 = vpop.f32.mrf.mxu0
  %v4176 = vadd.f32 %v3482, %v4175
  %v4177 = vpop.f32.mrf.mxu0
  %v4178 = vand.u32 %v1383, 4294901760
  %v4179 = vsub.f32 %v1383, %v4178
  %v4180 = vand.u32 %v4179, 4294901760
  %4181 = vmatprep.mubr.f32.mxu0 %v4180
  %v4182 = vand.u32 %v1241, 4294901760
  %v4183 = vsub.f32 %v1241, %v4182
  %v4184 = vand.u32 %v4183, 4294901760
  %4185 = vmatmul.mubr.f32.gmra.mxu0 %v4184
  %v4186 = vpop.f32.mrf.mxu0
  %v4187 = vadd.f32 %v3491, %v4186
  %v4188 = vpop.f32.mrf.mxu0
  %v4189 = vand.u32 %v1386, 4294901760
  %v4190 = vsub.f32 %v1386, %v4189
  %v4191 = vand.u32 %v4190, 4294901760
  %4192 = vmatprep.mubr.f32.mxu0 %v4191
  %v4193 = vand.u32 %v1243, 4294901760
  %v4194 = vsub.f32 %v1243, %v4193
  %v4195 = vand.u32 %v4194, 4294901760
  %4196 = vmatmul.mubr.f32.gmra.mxu0 %v4195
  %v4197 = vpop.f32.mrf.mxu0
  %v4198 = vadd.f32 %v3500, %v4197
  %v4199 = vpop.f32.mrf.mxu0
  %v4200 = vand.u32 %v1389, 4294901760
  %v4201 = vsub.f32 %v1389, %v4200
  %v4202 = vand.u32 %v4201, 4294901760
  %4203 = vmatprep.mubr.f32.mxu0 %v4202
  %v4204 = vand.u32 %v1245, 4294901760
  %v4205 = vsub.f32 %v1245, %v4204
  %v4206 = vand.u32 %v4205, 4294901760
  %4207 = vmatmul.mubr.f32.gmra.mxu0 %v4206
  %v4208 = vpop.f32.mrf.mxu0
  %v4209 = vadd.f32 %v3509, %v4208
  %v4210 = vpop.f32.mrf.mxu0
  %v4211 = vand.u32 %v1392, 4294901760
  %v4212 = vsub.f32 %v1392, %v4211
  %v4213 = vand.u32 %v4212, 4294901760
  %4214 = vmatprep.mubr.f32.mxu0 %v4213
  %v4215 = vand.u32 %v1247, 4294901760
  %v4216 = vsub.f32 %v1247, %v4215
  %v4217 = vand.u32 %v4216, 4294901760
  %4218 = vmatmul.mubr.f32.gmra.mxu0 %v4217
  %v4219 = vpop.f32.mrf.mxu0
  %v4220 = vadd.f32 %v3518, %v4219
  %v4221 = vpop.f32.mrf.mxu0
  %v4222 = vand.u32 %v1395, 4294901760
  %v4223 = vsub.f32 %v1395, %v4222
  %v4224 = vand.u32 %v4223, 4294901760
  %4225 = vmatprep.mubr.f32.mxu0 %v4224
  %v4226 = vand.u32 %v1249, 4294901760
  %v4227 = vsub.f32 %v1249, %v4226
  %v4228 = vand.u32 %v4227, 4294901760
  %4229 = vmatmul.mubr.f32.gmra.mxu0 %v4228
  %v4230 = vpop.f32.mrf.mxu0
  %v4231 = vadd.f32 %v3527, %v4230
  %v4232 = vpop.f32.mrf.mxu0
  %v4233 = vand.u32 %v1398, 4294901760
  %v4234 = vsub.f32 %v1398, %v4233
  %v4235 = vand.u32 %v4234, 4294901760
  %4236 = vmatprep.mubr.f32.mxu0 %v4235
  %v4237 = vand.u32 %v1251, 4294901760
  %v4238 = vsub.f32 %v1251, %v4237
  %v4239 = vand.u32 %v4238, 4294901760
  %4240 = vmatmul.mubr.f32.gmra.mxu0 %v4239
  %v4241 = vpop.f32.mrf.mxu0
  %v4242 = vadd.f32 %v3536, %v4241
  %v4243 = vpop.f32.mrf.mxu0
  %v4244 = vand.u32 %v1401, 4294901760
  %v4245 = vsub.f32 %v1401, %v4244
  %v4246 = vand.u32 %v4245, 4294901760
  %4247 = vmatprep.mubr.f32.mxu0 %v4246
  %v4248 = vand.u32 %v1253, 4294901760
  %v4249 = vsub.f32 %v1253, %v4248
  %v4250 = vand.u32 %v4249, 4294901760
  %4251 = vmatmul.mubr.f32.gmra.mxu0 %v4250
  %v4252 = vpop.f32.mrf.mxu0
  %v4253 = vadd.f32 %v3545, %v4252
  %v4254 = vpop.f32.mrf.mxu0
  %v4255 = vand.u32 %v1404, 4294901760
  %v4256 = vsub.f32 %v1404, %v4255
  %v4257 = vand.u32 %v4256, 4294901760
  %4258 = vmatprep.mubr.f32.mxu0 %v4257
  %v4259 = vand.u32 %v1255, 4294901760
  %v4260 = vsub.f32 %v1255, %v4259
  %v4261 = vand.u32 %v4260, 4294901760
  %4262 = vmatmul.mubr.f32.gmra.mxu0 %v4261
  %v4263 = vpop.f32.mrf.mxu0
  %v4264 = vadd.f32 %v3554, %v4263
  %v4265 = vpop.f32.mrf.mxu0
  %v4266 = vand.u32 %v1407, 4294901760
  %v4267 = vsub.f32 %v1407, %v4266
  %v4268 = vand.u32 %v4267, 4294901760
  %4269 = vmatprep.mubr.f32.mxu0 %v4268
  %v4270 = vand.u32 %v1257, 4294901760
  %v4271 = vsub.f32 %v1257, %v4270
  %v4272 = vand.u32 %v4271, 4294901760
  %4273 = vmatmul.mubr.f32.gmra.mxu0 %v4272
  %v4274 = vpop.f32.mrf.mxu0
  %v4275 = vadd.f32 %v3563, %v4274
  %v4276 = vpop.f32.mrf.mxu0
  %v4277 = vand.u32 %v1410, 4294901760
  %v4278 = vsub.f32 %v1410, %v4277
  %v4279 = vand.u32 %v4278, 4294901760
  %4280 = vmatprep.mubr.f32.mxu0 %v4279
  %v4281 = vand.u32 %v1259, 4294901760
  %v4282 = vsub.f32 %v1259, %v4281
  %v4283 = vand.u32 %v4282, 4294901760
  %4284 = vmatmul.mubr.f32.gmra.mxu0 %v4283
  %v4285 = vpop.f32.mrf.mxu0
  %v4286 = vadd.f32 %v3572, %v4285
  %v4287 = vpop.f32.mrf.mxu0
  %v4288 = vand.u32 %v1413, 4294901760
  %v4289 = vsub.f32 %v1413, %v4288
  %v4290 = vand.u32 %v4289, 4294901760
  %4291 = vmatprep.mubr.f32.mxu0 %v4290
  %v4292 = vand.u32 %v1261, 4294901760
  %v4293 = vsub.f32 %v1261, %v4292
  %v4294 = vand.u32 %v4293, 4294901760
  %4295 = vmatmul.mubr.f32.gmra.mxu0 %v4294
  %v4296 = vpop.f32.mrf.mxu0
  %v4297 = vadd.f32 %v3581, %v4296
  %v4298 = vpop.f32.mrf.mxu0
  %v4299 = vand.u32 %v1416, 4294901760
  %v4300 = vsub.f32 %v1416, %v4299
  %v4301 = vand.u32 %v4300, 4294901760
  %4302 = vmatprep.mubr.f32.mxu0 %v4301
  %v4303 = vand.u32 %v1263, 4294901760
  %v4304 = vsub.f32 %v1263, %v4303
  %v4305 = vand.u32 %v4304, 4294901760
  %4306 = vmatmul.mubr.f32.gmra.mxu0 %v4305
  %v4307 = vpop.f32.mrf.mxu0
  %v4308 = vadd.f32 %v3590, %v4307
  %v4309 = vpop.f32.mrf.mxu0
  %v4310 = vand.u32 %v1419, 4294901760
  %v4311 = vsub.f32 %v1419, %v4310
  %v4312 = vand.u32 %v4311, 4294901760
  %4313 = vmatprep.mubr.f32.mxu0 %v4312
  %v4314 = vand.u32 %v1265, 4294901760
  %v4315 = vsub.f32 %v1265, %v4314
  %v4316 = vand.u32 %v4315, 4294901760
  %4317 = vmatmul.mubr.f32.gmra.mxu0 %v4316
  %v4318 = vpop.f32.mrf.mxu0
  %v4319 = vadd.f32 %v3599, %v4318
  %v4320 = vpop.f32.mrf.mxu0
  %v4321 = vand.u32 %v1422, 4294901760
  %v4322 = vsub.f32 %v1422, %v4321
  %v4323 = vand.u32 %v4322, 4294901760
  %4324 = vmatprep.mubr.f32.mxu0 %v4323
  %v4325 = vand.u32 %v1267, 4294901760
  %v4326 = vsub.f32 %v1267, %v4325
  %v4327 = vand.u32 %v4326, 4294901760
  %4328 = vmatmul.mubr.f32.gmra.mxu0 %v4327
  %v4329 = vpop.f32.mrf.mxu0
  %v4330 = vadd.f32 %v3608, %v4329
  %v4331 = vpop.f32.mrf.mxu0
  %v4332 = vand.u32 %v1425, 4294901760
  %v4333 = vsub.f32 %v1425, %v4332
  %v4334 = vand.u32 %v4333, 4294901760
  %4335 = vmatprep.mubr.f32.mxu0 %v4334
  %v4336 = vand.u32 %v1269, 4294901760
  %v4337 = vsub.f32 %v1269, %v4336
  %v4338 = vand.u32 %v4337, 4294901760
  %4339 = vmatmul.mubr.f32.gmra.mxu0 %v4338
  %v4340 = vpop.f32.mrf.mxu0
  %v4341 = vadd.f32 %v3617, %v4340
  %v4342 = vpop.f32.mrf.mxu0
  %v4343 = vand.u32 %v1428, 4294901760
  %v4344 = vsub.f32 %v1428, %v4343
  %v4345 = vand.u32 %v4344, 4294901760
  %4346 = vmatprep.mubr.f32.mxu0 %v4345
  %v4347 = vand.u32 %v1271, 4294901760
  %v4348 = vsub.f32 %v1271, %v4347
  %v4349 = vand.u32 %v4348, 4294901760
  %4350 = vmatmul.mubr.f32.gmra.mxu0 %v4349
  %v4351 = vpop.f32.mrf.mxu0
  %v4352 = vadd.f32 %v3626, %v4351
  %v4353 = vpop.f32.mrf.mxu0
  %v4354 = vand.u32 %v1431, 4294901760
  %v4355 = vsub.f32 %v1431, %v4354
  %v4356 = vand.u32 %v4355, 4294901760
  %4357 = vmatprep.mubr.f32.mxu0 %v4356
  %v4358 = vand.u32 %v1273, 4294901760
  %v4359 = vsub.f32 %v1273, %v4358
  %v4360 = vand.u32 %v4359, 4294901760
  %4361 = vmatmul.mubr.f32.gmra.mxu0 %v4360
  %v4362 = vpop.f32.mrf.mxu0
  %v4363 = vadd.f32 %v3635, %v4362
  %v4364 = vpop.f32.mrf.mxu0
  %v4365 = vand.u32 %v1434, 4294901760
  %v4366 = vsub.f32 %v1434, %v4365
  %v4367 = vand.u32 %v4366, 4294901760
  %4368 = vmatprep.mubr.f32.mxu0 %v4367
  %v4369 = vand.u32 %v1275, 4294901760
  %v4370 = vsub.f32 %v1275, %v4369
  %v4371 = vand.u32 %v4370, 4294901760
  %4372 = vmatmul.mubr.f32.gmra.mxu0 %v4371
  %v4373 = vpop.f32.mrf.mxu0
  %v4374 = vadd.f32 %v3644, %v4373
  %v4375 = vpop.f32.mrf.mxu0
  %v4376 = vand.u32 %v1437, 4294901760
  %v4377 = vsub.f32 %v1437, %v4376
  %v4378 = vand.u32 %v4377, 4294901760
  %4379 = vmatprep.mubr.f32.mxu0 %v4378
  %v4380 = vand.u32 %v1277, 4294901760
  %v4381 = vsub.f32 %v1277, %v4380
  %v4382 = vand.u32 %v4381, 4294901760
  %4383 = vmatmul.mubr.f32.gmra.mxu0 %v4382
  %v4384 = vpop.f32.mrf.mxu0
  %v4385 = vadd.f32 %v3653, %v4384
  %v4386 = vpop.f32.mrf.mxu0
  %v4387 = vand.u32 %v1440, 4294901760
  %v4388 = vsub.f32 %v1440, %v4387
  %v4389 = vand.u32 %v4388, 4294901760
  %4390 = vmatprep.mubr.f32.mxu0 %v4389
  %v4391 = vand.u32 %v1279, 4294901760
  %v4392 = vsub.f32 %v1279, %v4391
  %v4393 = vand.u32 %v4392, 4294901760
  %4394 = vmatmul.mubr.f32.gmra.mxu0 %v4393
  %v4395 = vpop.f32.mrf.mxu0
  %v4396 = vadd.f32 %v3662, %v4395
  %v4397 = vpop.f32.mrf.mxu0
  %v4398 = vand.u32 %v1443, 4294901760
  %v4399 = vsub.f32 %v1443, %v4398
  %v4400 = vand.u32 %v4399, 4294901760
  %4401 = vmatprep.mubr.f32.mxu0 %v4400
  %v4402 = vand.u32 %v1281, 4294901760
  %v4403 = vsub.f32 %v1281, %v4402
  %v4404 = vand.u32 %v4403, 4294901760
  %4405 = vmatmul.mubr.f32.gmra.mxu0 %v4404
  %v4406 = vpop.f32.mrf.mxu0
  %v4407 = vadd.f32 %v3671, %v4406
  %v4408 = vpop.f32.mrf.mxu0
  %v4409 = vand.u32 %v1446, 4294901760
  %v4410 = vsub.f32 %v1446, %v4409
  %v4411 = vand.u32 %v4410, 4294901760
  %4412 = vmatprep.mubr.f32.mxu0 %v4411
  %v4413 = vand.u32 %v1283, 4294901760
  %v4414 = vsub.f32 %v1283, %v4413
  %v4415 = vand.u32 %v4414, 4294901760
  %4416 = vmatmul.mubr.f32.gmra.mxu0 %v4415
  %v4417 = vpop.f32.mrf.mxu0
  %v4418 = vadd.f32 %v3680, %v4417
  %v4419 = vpop.f32.mrf.mxu0
  %v4420 = vand.u32 %v1449, 4294901760
  %v4421 = vsub.f32 %v1449, %v4420
  %v4422 = vand.u32 %v4421, 4294901760
  %4423 = vmatprep.mubr.f32.mxu0 %v4422
  %v4424 = vand.u32 %v1285, 4294901760
  %v4425 = vsub.f32 %v1285, %v4424
  %v4426 = vand.u32 %v4425, 4294901760
  %4427 = vmatmul.mubr.f32.gmra.mxu0 %v4426
  %v4428 = vpop.f32.mrf.mxu0
  %v4429 = vadd.f32 %v3689, %v4428
  %v4430 = vpop.f32.mrf.mxu0
  %v4431 = vand.u32 %v1452, 4294901760
  %v4432 = vsub.f32 %v1452, %v4431
  %v4433 = vand.u32 %v4432, 4294901760
  %4434 = vmatprep.mubr.f32.mxu0 %v4433
  %v4435 = vand.u32 %v1287, 4294901760
  %v4436 = vsub.f32 %v1287, %v4435
  %v4437 = vand.u32 %v4436, 4294901760
  %4438 = vmatmul.mubr.f32.gmra.mxu0 %v4437
  %v4439 = vpop.f32.mrf.mxu0
  %v4440 = vadd.f32 %v3698, %v4439
  %v4441 = vpop.f32.mrf.mxu0
  %v4442 = vand.u32 %v1455, 4294901760
  %v4443 = vsub.f32 %v1455, %v4442
  %v4444 = vand.u32 %v4443, 4294901760
  %4445 = vmatprep.mubr.f32.mxu0 %v4444
  %v4446 = vand.u32 %v1289, 4294901760
  %v4447 = vsub.f32 %v1289, %v4446
  %v4448 = vand.u32 %v4447, 4294901760
  %4449 = vmatmul.mubr.f32.gmra.mxu0 %v4448
  %v4450 = vpop.f32.mrf.mxu0
  %v4451 = vadd.f32 %v3707, %v4450
  %v4452 = vpop.f32.mrf.mxu0
  %v4453 = vand.u32 %v1458, 4294901760
  %v4454 = vsub.f32 %v1458, %v4453
  %v4455 = vand.u32 %v4454, 4294901760
  %4456 = vmatprep.mubr.f32.mxu0 %v4455
  %v4457 = vand.u32 %v1291, 4294901760
  %v4458 = vsub.f32 %v1291, %v4457
  %v4459 = vand.u32 %v4458, 4294901760
  %4460 = vmatmul.mubr.f32.gmra.mxu0 %v4459
  %v4461 = vpop.f32.mrf.mxu0
  %v4462 = vadd.f32 %v3716, %v4461
  %v4463 = vpop.f32.mrf.mxu0
  %v4464 = vand.u32 %v1461, 4294901760
  %v4465 = vsub.f32 %v1461, %v4464
  %v4466 = vand.u32 %v4465, 4294901760
  %4467 = vmatprep.mubr.f32.mxu0 %v4466
  %v4468 = vand.u32 %v1293, 4294901760
  %v4469 = vsub.f32 %v1293, %v4468
  %v4470 = vand.u32 %v4469, 4294901760
  %4471 = vmatmul.mubr.f32.gmra.mxu0 %v4470
  %v4472 = vpop.f32.mrf.mxu0
  %v4473 = vadd.f32 %v3725, %v4472
  %v4474 = vpop.f32.mrf.mxu0
  %v4475 = vand.u32 %v1464, 4294901760
  %v4476 = vsub.f32 %v1464, %v4475
  %v4477 = vand.u32 %v4476, 4294901760
  %4478 = vmatprep.mubr.f32.mxu0 %v4477
  %v4479 = vand.u32 %v1295, 4294901760
  %v4480 = vsub.f32 %v1295, %v4479
  %v4481 = vand.u32 %v4480, 4294901760
  %4482 = vmatmul.mubr.f32.gmra.mxu0 %v4481
  %v4483 = vpop.f32.mrf.mxu0
  %v4484 = vadd.f32 %v3734, %v4483
  %v4485 = vpop.f32.mrf.mxu0
  %v4486 = vand.u32 %v1467, 4294901760
  %v4487 = vsub.f32 %v1467, %v4486
  %v4488 = vand.u32 %v4487, 4294901760
  %4489 = vmatprep.mubr.f32.mxu0 %v4488
  %v4490 = vand.u32 %v1297, 4294901760
  %v4491 = vsub.f32 %v1297, %v4490
  %v4492 = vand.u32 %v4491, 4294901760
  %4493 = vmatmul.mubr.f32.gmra.mxu0 %v4492
  %v4494 = vpop.f32.mrf.mxu0
  %v4495 = vadd.f32 %v3743, %v4494
  %v4496 = vpop.f32.mrf.mxu0
  %v4497 = vand.u32 %v1470, 4294901760
  %v4498 = vsub.f32 %v1470, %v4497
  %v4499 = vand.u32 %v4498, 4294901760
  %4500 = vmatprep.mubr.f32.mxu0 %v4499
  %v4501 = vand.u32 %v1299, 4294901760
  %v4502 = vsub.f32 %v1299, %v4501
  %v4503 = vand.u32 %v4502, 4294901760
  %4504 = vmatmul.mubr.f32.gmra.mxu0 %v4503
  %v4505 = vpop.f32.mrf.mxu0
  %v4506 = vadd.f32 %v3752, %v4505
  %v4507 = vpop.f32.mrf.mxu0
  %v4508 = vand.u32 %v1473, 4294901760
  %v4509 = vsub.f32 %v1473, %v4508
  %v4510 = vand.u32 %v4509, 4294901760
  %4511 = vmatprep.mubr.f32.mxu0 %v4510
  %v4512 = vand.u32 %v1301, 4294901760
  %v4513 = vsub.f32 %v1301, %v4512
  %v4514 = vand.u32 %v4513, 4294901760
  %4515 = vmatmul.mubr.f32.gmra.mxu0 %v4514
  %v4516 = vpop.f32.mrf.mxu0
  %v4517 = vadd.f32 %v3761, %v4516
  %v4518 = vpop.f32.mrf.mxu0
  %v4519 = vand.u32 %v1476, 4294901760
  %v4520 = vsub.f32 %v1476, %v4519
  %v4521 = vand.u32 %v4520, 4294901760
  %4522 = vmatprep.mubr.f32.mxu0 %v4521
  %v4523 = vand.u32 %v1303, 4294901760
  %v4524 = vsub.f32 %v1303, %v4523
  %v4525 = vand.u32 %v4524, 4294901760
  %4526 = vmatmul.mubr.f32.gmra.mxu0 %v4525
  %v4527 = vpop.f32.mrf.mxu0
  %v4528 = vadd.f32 %v3770, %v4527
  %v4529 = vpop.f32.mrf.mxu0
  %v4530 = vand.u32 %v1479, 4294901760
  %v4531 = vsub.f32 %v1479, %v4530
  %v4532 = vand.u32 %v4531, 4294901760
  %4533 = vmatprep.mubr.f32.mxu0 %v4532
  %v4534 = vand.u32 %v1305, 4294901760
  %v4535 = vsub.f32 %v1305, %v4534
  %v4536 = vand.u32 %v4535, 4294901760
  %4537 = vmatmul.mubr.f32.gmra.mxu0 %v4536
  %v4538 = vpop.f32.mrf.mxu0
  %v4539 = vadd.f32 %v3779, %v4538
  %v4540 = vpop.f32.mrf.mxu0
  %v4541 = vand.u32 %v1482, 4294901760
  %v4542 = vsub.f32 %v1482, %v4541
  %v4543 = vand.u32 %v4542, 4294901760
  %4544 = vmatprep.mubr.f32.mxu0 %v4543
  %v4545 = vand.u32 %v1307, 4294901760
  %v4546 = vsub.f32 %v1307, %v4545
  %v4547 = vand.u32 %v4546, 4294901760
  %4548 = vmatmul.mubr.f32.gmra.mxu0 %v4547
  %v4549 = vpop.f32.mrf.mxu0
  %v4550 = vadd.f32 %v3788, %v4549
  %v4551 = vpop.f32.mrf.mxu0
  %v4552 = vand.u32 %v1485, 4294901760
  %v4553 = vsub.f32 %v1485, %v4552
  %v4554 = vand.u32 %v4553, 4294901760
  %4555 = vmatprep.mubr.f32.mxu0 %v4554
  %v4556 = vand.u32 %v1309, 4294901760
  %v4557 = vsub.f32 %v1309, %v4556
  %v4558 = vand.u32 %v4557, 4294901760
  %4559 = vmatmul.mubr.f32.gmra.mxu0 %v4558
  %v4560 = vpop.f32.mrf.mxu0
  %v4561 = vadd.f32 %v3797, %v4560
  %v4562 = vpop.f32.mrf.mxu0
  %v4563 = vand.u32 %v1488, 4294901760
  %v4564 = vsub.f32 %v1488, %v4563
  %v4565 = vand.u32 %v4564, 4294901760
  %4566 = vmatprep.mubr.f32.mxu0 %v4565
  %v4567 = vand.u32 %v1311, 4294901760
  %v4568 = vsub.f32 %v1311, %v4567
  %v4569 = vand.u32 %v4568, 4294901760
  %4570 = vmatmul.mubr.f32.gmra.mxu0 %v4569
  %v4571 = vpop.f32.mrf.mxu0
  %v4572 = vadd.f32 %v3806, %v4571
  %v4573 = vpop.f32.mrf.mxu0
  %v4574 = vand.u32 %v1491, 4294901760
  %v4575 = vsub.f32 %v1491, %v4574
  %v4576 = vand.u32 %v4575, 4294901760
  %4577 = vmatprep.mubr.f32.mxu0 %v4576
  %v4578 = vand.u32 %v1313, 4294901760
  %v4579 = vsub.f32 %v1313, %v4578
  %v4580 = vand.u32 %v4579, 4294901760
  %4581 = vmatmul.mubr.f32.gmra.mxu0 %v4580
  %v4582 = vpop.f32.mrf.mxu0
  %v4583 = vadd.f32 %v3815, %v4582
  %v4584 = vpop.f32.mrf.mxu0
  %v4585 = vand.u32 %v1494, 4294901760
  %v4586 = vsub.f32 %v1494, %v4585
  %v4587 = vand.u32 %v4586, 4294901760
  %4588 = vmatprep.mubr.f32.mxu0 %v4587
  %v4589 = vand.u32 %v1315, 4294901760
  %v4590 = vsub.f32 %v1315, %v4589
  %v4591 = vand.u32 %v4590, 4294901760
  %4592 = vmatmul.mubr.f32.gmra.mxu0 %v4591
  %v4593 = vpop.f32.mrf.mxu0
  %v4594 = vadd.f32 %v3824, %v4593
  %v4595 = vpop.f32.mrf.mxu0
  %v4596 = vand.u32 %v1497, 4294901760
  %v4597 = vsub.f32 %v1497, %v4596
  %v4598 = vand.u32 %v4597, 4294901760
  %4599 = vmatprep.mubr.f32.mxu0 %v4598
  %v4600 = vand.u32 %v1317, 4294901760
  %v4601 = vsub.f32 %v1317, %v4600
  %v4602 = vand.u32 %v4601, 4294901760
  %4603 = vmatmul.mubr.f32.gmra.mxu0 %v4602
  %v4604 = vpop.f32.mrf.mxu0
  %v4605 = vadd.f32 %v3833, %v4604
  %v4606 = vpop.f32.mrf.mxu0
  %v4607 = vand.u32 %v1500, 4294901760
  %v4608 = vsub.f32 %v1500, %v4607
  %v4609 = vand.u32 %v4608, 4294901760
  %4610 = vmatprep.mubr.f32.mxu0 %v4609
  %v4611 = vand.u32 %v1319, 4294901760
  %v4612 = vsub.f32 %v1319, %v4611
  %v4613 = vand.u32 %v4612, 4294901760
  %4614 = vmatmul.mubr.f32.gmra.mxu0 %v4613
  %v4615 = vpop.f32.mrf.mxu0
  %v4616 = vadd.f32 %v3842, %v4615
  %v4617 = vpop.f32.mrf.mxu0
  %v4618 = vand.u32 %v1503, 4294901760
  %v4619 = vsub.f32 %v1503, %v4618
  %v4620 = vand.u32 %v4619, 4294901760
  %4621 = vmatprep.mubr.f32.mxu0 %v4620
  %v4622 = vand.u32 %v1321, 4294901760
  %v4623 = vsub.f32 %v1321, %v4622
  %v4624 = vand.u32 %v4623, 4294901760
  %4625 = vmatmul.mubr.f32.gmra.mxu0 %v4624
  %v4626 = vpop.f32.mrf.mxu0
  %v4627 = vadd.f32 %v3851, %v4626
  %v4628 = vpop.f32.mrf.mxu0
  %v4629 = vand.u32 %v1506, 4294901760
  %v4630 = vsub.f32 %v1506, %v4629
  %v4631 = vand.u32 %v4630, 4294901760
  %4632 = vmatprep.mubr.f32.mxu0 %v4631
  %v4633 = vand.u32 %v1323, 4294901760
  %v4634 = vsub.f32 %v1323, %v4633
  %v4635 = vand.u32 %v4634, 4294901760
  %4636 = vmatmul.mubr.f32.gmra.mxu0 %v4635
  %v4637 = vpop.f32.mrf.mxu0
  %v4638 = vadd.f32 %v3860, %v4637
  %v4639 = vpop.f32.mrf.mxu0
  %v4640 = vand.u32 %v1509, 4294901760
  %v4641 = vsub.f32 %v1509, %v4640
  %v4642 = vand.u32 %v4641, 4294901760
  %4643 = vmatprep.mubr.f32.mxu0 %v4642
  %v4644 = vand.u32 %v1325, 4294901760
  %v4645 = vsub.f32 %v1325, %v4644
  %v4646 = vand.u32 %v4645, 4294901760
  %4647 = vmatmul.mubr.f32.gmra.mxu0 %v4646
  %v4648 = vpop.f32.mrf.mxu0
  %v4649 = vadd.f32 %v3869, %v4648
  %v4650 = vpop.f32.mrf.mxu0
  %v4651 = vand.u32 %v1512, 4294901760
  %v4652 = vsub.f32 %v1512, %v4651
  %v4653 = vand.u32 %v4652, 4294901760
  %4654 = vmatprep.mubr.f32.mxu0 %v4653
  %v4655 = vand.u32 %v1327, 4294901760
  %v4656 = vsub.f32 %v1327, %v4655
  %v4657 = vand.u32 %v4656, 4294901760
  %4658 = vmatmul.mubr.f32.gmra.mxu0 %v4657
  %v4659 = vpop.f32.mrf.mxu0
  %v4660 = vadd.f32 %v3878, %v4659
  %v4661 = vpop.f32.mrf.mxu0
  %v4662 = vand.u32 %v1515, 4294901760
  %v4663 = vsub.f32 %v1515, %v4662
  %v4664 = vand.u32 %v4663, 4294901760
  %4665 = vmatprep.mubr.f32.mxu0 %v4664
  %v4666 = vand.u32 %v1329, 4294901760
  %v4667 = vsub.f32 %v1329, %v4666
  %v4668 = vand.u32 %v4667, 4294901760
  %4669 = vmatmul.mubr.f32.gmra.mxu0 %v4668
  %v4670 = vpop.f32.mrf.mxu0
  %v4671 = vadd.f32 %v3887, %v4670
  %v4672 = vpop.f32.mrf.mxu0
  %v4673 = vand.u32 %v1518, 4294901760
  %v4674 = vsub.f32 %v1518, %v4673
  %v4675 = vand.u32 %v4674, 4294901760
  %4676 = vmatprep.mubr.f32.mxu0 %v4675
  %v4677 = vand.u32 %v1331, 4294901760
  %v4678 = vsub.f32 %v1331, %v4677
  %v4679 = vand.u32 %v4678, 4294901760
  %4680 = vmatmul.mubr.f32.gmra.mxu0 %v4679
  %v4681 = vpop.f32.mrf.mxu0
  %v4682 = vadd.f32 %v3896, %v4681
  %v4683 = vpop.f32.mrf.mxu0
  %v4684 = vand.u32 %v1521, 4294901760
  %v4685 = vsub.f32 %v1521, %v4684
  %v4686 = vand.u32 %v4685, 4294901760
  %4687 = vmatprep.mubr.f32.mxu0 %v4686
  %v4688 = vand.u32 %v1333, 4294901760
  %v4689 = vsub.f32 %v1333, %v4688
  %v4690 = vand.u32 %v4689, 4294901760
  %4691 = vmatmul.mubr.f32.gmra.mxu0 %v4690
  %v4692 = vpop.f32.mrf.mxu0
  %v4693 = vadd.f32 %v3905, %v4692
  %v4694 = vpop.f32.mrf.mxu0
  %v4695 = vand.u32 %v1524, 4294901760
  %v4696 = vsub.f32 %v1524, %v4695
  %v4697 = vand.u32 %v4696, 4294901760
  %4698 = vmatprep.mubr.f32.mxu0 %v4697
  %v4699 = vand.u32 %v1335, 4294901760
  %v4700 = vsub.f32 %v1335, %v4699
  %v4701 = vand.u32 %v4700, 4294901760
  %4702 = vmatmul.mubr.f32.gmra.mxu0 %v4701
  %v4703 = vpop.f32.mrf.mxu0
  %v4704 = vadd.f32 %v3914, %v4703
  %v4705 = vpop.f32.mrf.mxu0
  %v4706 = vand.u32 %v1527, 4294901760
  %v4707 = vsub.f32 %v1527, %v4706
  %v4708 = vand.u32 %v4707, 4294901760
  %4709 = vmatprep.mubr.f32.mxu0 %v4708
  %v4710 = vand.u32 %v1337, 4294901760
  %v4711 = vsub.f32 %v1337, %v4710
  %v4712 = vand.u32 %v4711, 4294901760
  %4713 = vmatmul.mubr.f32.gmra.mxu0 %v4712
  %v4714 = vpop.f32.mrf.mxu0
  %v4715 = vadd.f32 %v3923, %v4714
  %v4716 = vpop.f32.mrf.mxu0
  %v4717 = vand.u32 %v1530, 4294901760
  %v4718 = vsub.f32 %v1530, %v4717
  %v4719 = vand.u32 %v4718, 4294901760
  %4720 = vmatprep.mubr.f32.mxu0 %v4719
  %v4721 = vand.u32 %v1339, 4294901760
  %v4722 = vsub.f32 %v1339, %v4721
  %v4723 = vand.u32 %v4722, 4294901760
  %4724 = vmatmul.mubr.f32.gmra.mxu0 %v4723
  %v4725 = vpop.f32.mrf.mxu0
  %v4726 = vadd.f32 %v3932, %v4725
  %v4727 = vpop.f32.mrf.mxu0
  %v4728 = vand.u32 %v1533, 4294901760
  %v4729 = vsub.f32 %v1533, %v4728
  %v4730 = vand.u32 %v4729, 4294901760
  %4731 = vmatprep.mubr.f32.mxu0 %v4730
  %v4732 = vand.u32 %v1341, 4294901760
  %v4733 = vsub.f32 %v1341, %v4732
  %v4734 = vand.u32 %v4733, 4294901760
  %4735 = vmatmul.mubr.f32.gmra.mxu0 %v4734
  %v4736 = vpop.f32.mrf.mxu0
  %v4737 = vadd.f32 %v3941, %v4736
  %v4738 = vpop.f32.mrf.mxu0
  %v4739 = vand.u32 %v1536, 4294901760
  %v4740 = vsub.f32 %v1536, %v4739
  %v4741 = vand.u32 %v4740, 4294901760
  %4742 = vmatprep.mubr.f32.mxu0 %v4741
  %v4743 = vand.u32 %v1343, 4294901760
  %v4744 = vsub.f32 %v1343, %v4743
  %v4745 = vand.u32 %v4744, 4294901760
  %4746 = vmatmul.mubr.f32.gmra.mxu0 %v4745
  %v4747 = vpop.f32.mrf.mxu0
  %v4748 = vadd.f32 %v3950, %v4747
  %v4749 = vpop.f32.mrf.mxu0
  %4750 = vdwg.mxu0
  %4751 = vmatprep.subr.mxu0 0.0
  %v4752 = vand.u32 %v235, 4294901760
  %v4753 = vsub.f32 %v235, %v4752
  %v4754 = vand.u32 %v4753, 4294901760
  %4755 = vmatpush1.msra.mxu0 %v4754
  %4756 = vmatprep.subr.mxu0 0.0
  %v4757 = vand.u32 %v234, 4294901760
  %v4758 = vsub.f32 %v234, %v4757
  %v4759 = vand.u32 %v4758, 4294901760
  %4760 = vmatpush1.msra.mxu0 %v4759
  %4761 = vmatprep.subr.mxu0 0.0
  %v4762 = vand.u32 %v233, 4294901760
  %v4763 = vsub.f32 %v233, %v4762
  %v4764 = vand.u32 %v4763, 4294901760
  %4765 = vmatpush1.msra.mxu0 %v4764
  %4766 = vmatprep.subr.mxu0 0.0
  %v4767 = vand.u32 %v232, 4294901760
  %v4768 = vsub.f32 %v232, %v4767
  %v4769 = vand.u32 %v4768, 4294901760
  %4770 = vmatpush1.msra.mxu0 %v4769
  %4771 = vmatprep.subr.mxu0 0.0
  %v4772 = vand.u32 %v231, 4294901760
  %v4773 = vsub.f32 %v231, %v4772
  %v4774 = vand.u32 %v4773, 4294901760
  %4775 = vmatpush1.msra.mxu0 %v4774
  %4776 = vmatprep.subr.mxu0 0.0
  %v4777 = vand.u32 %v230, 4294901760
  %v4778 = vsub.f32 %v230, %v4777
  %v4779 = vand.u32 %v4778, 4294901760
  %4780 = vmatpush1.msra.mxu0 %v4779
  %4781 = vmatprep.subr.mxu0 0.0
  %v4782 = vand.u32 %v229, 4294901760
  %v4783 = vsub.f32 %v229, %v4782
  %v4784 = vand.u32 %v4783, 4294901760
  %4785 = vmatpush1.msra.mxu0 %v4784
  %4786 = vmatprep.subr.mxu0 0.0
  %v4787 = vand.u32 %v228, 4294901760
  %v4788 = vsub.f32 %v228, %v4787
  %v4789 = vand.u32 %v4788, 4294901760
  %4790 = vmatpush1.msra.mxu0 %v4789
  %4791 = vmatprep.subr.mxu0 0.0
  %v4792 = vand.u32 %v227, 4294901760
  %v4793 = vsub.f32 %v227, %v4792
  %v4794 = vand.u32 %v4793, 4294901760
  %4795 = vmatpush1.msra.mxu0 %v4794
  %4796 = vmatprep.subr.mxu0 0.0
  %v4797 = vand.u32 %v226, 4294901760
  %v4798 = vsub.f32 %v226, %v4797
  %v4799 = vand.u32 %v4798, 4294901760
  %4800 = vmatpush1.msra.mxu0 %v4799
  %4801 = vmatprep.subr.mxu0 0.0
  %v4802 = vand.u32 %v225, 4294901760
  %v4803 = vsub.f32 %v225, %v4802
  %v4804 = vand.u32 %v4803, 4294901760
  %4805 = vmatpush1.msra.mxu0 %v4804
  %4806 = vmatprep.subr.mxu0 0.0
  %v4807 = vand.u32 %v224, 4294901760
  %v4808 = vsub.f32 %v224, %v4807
  %v4809 = vand.u32 %v4808, 4294901760
  %4810 = vmatpush1.msra.mxu0 %v4809
  %4811 = vmatprep.subr.mxu0 0.0
  %v4812 = vand.u32 %v223, 4294901760
  %v4813 = vsub.f32 %v223, %v4812
  %v4814 = vand.u32 %v4813, 4294901760
  %4815 = vmatpush1.msra.mxu0 %v4814
  %4816 = vmatprep.subr.mxu0 0.0
  %v4817 = vand.u32 %v222, 4294901760
  %v4818 = vsub.f32 %v222, %v4817
  %v4819 = vand.u32 %v4818, 4294901760
  %4820 = vmatpush1.msra.mxu0 %v4819
  %4821 = vmatprep.subr.mxu0 0.0
  %v4822 = vand.u32 %v221, 4294901760
  %v4823 = vsub.f32 %v221, %v4822
  %v4824 = vand.u32 %v4823, 4294901760
  %4825 = vmatpush1.msra.mxu0 %v4824
  %4826 = vmatprep.subr.mxu0 0.0
  %v4827 = vand.u32 %v220, 4294901760
  %v4828 = vsub.f32 %v220, %v4827
  %v4829 = vand.u32 %v4828, 4294901760
  %4830 = vmatpush1.msra.mxu0 %v4829
  %4831 = vmatprep.subr.mxu0 0.0
  %4832 = vmatpush2.msra.mxu0 0.0
  %4833 = vmatprep.subr.mxu0 0.0
  %4834 = vmatpush2.msra.mxu0 0.0
  %4835 = vmatprep.subr.mxu0 0.0
  %4836 = vmatpush2.msra.mxu0 0.0
  %4837 = vmatprep.subr.mxu0 0.0
  %v4838 = vand.u32 %v1540, 4294901760
  %v4839 = vsub.f32 %v1540, %v4838
  %v4840 = vand.u32 %v4839, 4294901760
  %4841 = vmatpush2.msra.mxu0 %v4840
  %4842 = vmatprep.subr.mxu0 0.0
  %v4843 = vand.u32 %v247, 4294901760
  %v4844 = vsub.f32 %v247, %v4843
  %v4845 = vand.u32 %v4844, 4294901760
  %4846 = vmatpush2.msra.mxu0 %v4845
  %4847 = vmatprep.subr.mxu0 0.0
  %v4848 = vand.u32 %v246, 4294901760
  %v4849 = vsub.f32 %v246, %v4848
  %v4850 = vand.u32 %v4849, 4294901760
  %4851 = vmatpush2.msra.mxu0 %v4850
  %4852 = vmatprep.subr.mxu0 0.0
  %v4853 = vand.u32 %v245, 4294901760
  %v4854 = vsub.f32 %v245, %v4853
  %v4855 = vand.u32 %v4854, 4294901760
  %4856 = vmatpush2.msra.mxu0 %v4855
  %4857 = vmatprep.subr.mxu0 0.0
  %v4858 = vand.u32 %v244, 4294901760
  %v4859 = vsub.f32 %v244, %v4858
  %v4860 = vand.u32 %v4859, 4294901760
  %4861 = vmatpush2.msra.mxu0 %v4860
  %4862 = vmatprep.subr.mxu0 0.0
  %v4863 = vand.u32 %v243, 4294901760
  %v4864 = vsub.f32 %v243, %v4863
  %v4865 = vand.u32 %v4864, 4294901760
  %4866 = vmatpush2.msra.mxu0 %v4865
  %4867 = vmatprep.subr.mxu0 0.0
  %v4868 = vand.u32 %v242, 4294901760
  %v4869 = vsub.f32 %v242, %v4868
  %v4870 = vand.u32 %v4869, 4294901760
  %4871 = vmatpush2.msra.mxu0 %v4870
  %4872 = vmatprep.subr.mxu0 0.0
  %v4873 = vand.u32 %v241, 4294901760
  %v4874 = vsub.f32 %v241, %v4873
  %v4875 = vand.u32 %v4874, 4294901760
  %4876 = vmatpush2.msra.mxu0 %v4875
  %4877 = vmatprep.subr.mxu0 0.0
  %v4878 = vand.u32 %v240, 4294901760
  %v4879 = vsub.f32 %v240, %v4878
  %v4880 = vand.u32 %v4879, 4294901760
  %4881 = vmatpush2.msra.mxu0 %v4880
  %4882 = vmatprep.subr.mxu0 0.0
  %v4883 = vand.u32 %v239, 4294901760
  %v4884 = vsub.f32 %v239, %v4883
  %v4885 = vand.u32 %v4884, 4294901760
  %4886 = vmatpush2.msra.mxu0 %v4885
  %4887 = vmatprep.subr.mxu0 0.0
  %v4888 = vand.u32 %v238, 4294901760
  %v4889 = vsub.f32 %v238, %v4888
  %v4890 = vand.u32 %v4889, 4294901760
  %4891 = vmatpush2.msra.mxu0 %v4890
  %4892 = vmatprep.subr.mxu0 0.0
  %v4893 = vand.u32 %v237, 4294901760
  %v4894 = vsub.f32 %v237, %v4893
  %v4895 = vand.u32 %v4894, 4294901760
  %4896 = vmatpush2.msra.mxu0 %v4895
  %4897 = vmatprep.subr.mxu0 0.0
  %v4898 = vand.u32 %v236, 4294901760
  %v4899 = vsub.f32 %v236, %v4898
  %v4900 = vand.u32 %v4899, 4294901760
  %4901 = vmatpush2.msra.mxu0 %v4900
  %v4902 = vand.u32 %v1347, 4294901760
  %4903 = vmatprep.mubr.f32.mxu0 %v4902
  %v4904 = vand.u32 %v1217, 4294901760
  %4905 = vmatmul.mubr.f32.gmra.mxu0 %v4904
  %v4906 = vpop.f32.mrf.mxu0
  %v4907 = vadd.f32 %v4055, %v4906
  %v4908 = vpop.f32.mrf.mxu0
  %v4909 = vand.u32 %v1350, 4294901760
  %4910 = vmatprep.mubr.f32.mxu0 %v4909
  %v4911 = vand.u32 %v1219, 4294901760
  %4912 = vmatmul.mubr.f32.gmra.mxu0 %v4911
  %v4913 = vpop.f32.mrf.mxu0
  %v4914 = vadd.f32 %v4066, %v4913
  %v4915 = vpop.f32.mrf.mxu0
  %v4916 = vand.u32 %v1353, 4294901760
  %4917 = vmatprep.mubr.f32.mxu0 %v4916
  %v4918 = vand.u32 %v1221, 4294901760
  %4919 = vmatmul.mubr.f32.gmra.mxu0 %v4918
  %v4920 = vpop.f32.mrf.mxu0
  %v4921 = vadd.f32 %v4077, %v4920
  %v4922 = vpop.f32.mrf.mxu0
  %v4923 = vand.u32 %v1356, 4294901760
  %4924 = vmatprep.mubr.f32.mxu0 %v4923
  %v4925 = vand.u32 %v1223, 4294901760
  %4926 = vmatmul.mubr.f32.gmra.mxu0 %v4925
  %v4927 = vpop.f32.mrf.mxu0
  %v4928 = vadd.f32 %v4088, %v4927
  %v4929 = vpop.f32.mrf.mxu0
  %v4930 = vand.u32 %v1359, 4294901760
  %4931 = vmatprep.mubr.f32.mxu0 %v4930
  %v4932 = vand.u32 %v1225, 4294901760
  %4933 = vmatmul.mubr.f32.gmra.mxu0 %v4932
  %v4934 = vpop.f32.mrf.mxu0
  %v4935 = vadd.f32 %v4099, %v4934
  %v4936 = vpop.f32.mrf.mxu0
  %v4937 = vand.u32 %v1362, 4294901760
  %4938 = vmatprep.mubr.f32.mxu0 %v4937
  %v4939 = vand.u32 %v1227, 4294901760
  %4940 = vmatmul.mubr.f32.gmra.mxu0 %v4939
  %v4941 = vpop.f32.mrf.mxu0
  %v4942 = vadd.f32 %v4110, %v4941
  %v4943 = vpop.f32.mrf.mxu0
  %v4944 = vand.u32 %v1365, 4294901760
  %4945 = vmatprep.mubr.f32.mxu0 %v4944
  %v4946 = vand.u32 %v1229, 4294901760
  %4947 = vmatmul.mubr.f32.gmra.mxu0 %v4946
  %v4948 = vpop.f32.mrf.mxu0
  %v4949 = vadd.f32 %v4121, %v4948
  %v4950 = vpop.f32.mrf.mxu0
  %v4951 = vand.u32 %v1368, 4294901760
  %4952 = vmatprep.mubr.f32.mxu0 %v4951
  %v4953 = vand.u32 %v1231, 4294901760
  %4954 = vmatmul.mubr.f32.gmra.mxu0 %v4953
  %v4955 = vpop.f32.mrf.mxu0
  %v4956 = vadd.f32 %v4132, %v4955
  %v4957 = vpop.f32.mrf.mxu0
  %v4958 = vand.u32 %v1371, 4294901760
  %4959 = vmatprep.mubr.f32.mxu0 %v4958
  %v4960 = vand.u32 %v1233, 4294901760
  %4961 = vmatmul.mubr.f32.gmra.mxu0 %v4960
  %v4962 = vpop.f32.mrf.mxu0
  %v4963 = vadd.f32 %v4143, %v4962
  %v4964 = vpop.f32.mrf.mxu0
  %v4965 = vand.u32 %v1374, 4294901760
  %4966 = vmatprep.mubr.f32.mxu0 %v4965
  %v4967 = vand.u32 %v1235, 4294901760
  %4968 = vmatmul.mubr.f32.gmra.mxu0 %v4967
  %v4969 = vpop.f32.mrf.mxu0
  %v4970 = vadd.f32 %v4154, %v4969
  %v4971 = vpop.f32.mrf.mxu0
  %v4972 = vand.u32 %v1377, 4294901760
  %4973 = vmatprep.mubr.f32.mxu0 %v4972
  %v4974 = vand.u32 %v1237, 4294901760
  %4975 = vmatmul.mubr.f32.gmra.mxu0 %v4974
  %v4976 = vpop.f32.mrf.mxu0
  %v4977 = vadd.f32 %v4165, %v4976
  %v4978 = vpop.f32.mrf.mxu0
  %v4979 = vand.u32 %v1380, 4294901760
  %4980 = vmatprep.mubr.f32.mxu0 %v4979
  %v4981 = vand.u32 %v1239, 4294901760
  %4982 = vmatmul.mubr.f32.gmra.mxu0 %v4981
  %v4983 = vpop.f32.mrf.mxu0
  %v4984 = vadd.f32 %v4176, %v4983
  %v4985 = vpop.f32.mrf.mxu0
  %v4986 = vand.u32 %v1383, 4294901760
  %4987 = vmatprep.mubr.f32.mxu0 %v4986
  %v4988 = vand.u32 %v1241, 4294901760
  %4989 = vmatmul.mubr.f32.gmra.mxu0 %v4988
  %v4990 = vpop.f32.mrf.mxu0
  %v4991 = vadd.f32 %v4187, %v4990
  %v4992 = vpop.f32.mrf.mxu0
  %v4993 = vand.u32 %v1386, 4294901760
  %4994 = vmatprep.mubr.f32.mxu0 %v4993
  %v4995 = vand.u32 %v1243, 4294901760
  %4996 = vmatmul.mubr.f32.gmra.mxu0 %v4995
  %v4997 = vpop.f32.mrf.mxu0
  %v4998 = vadd.f32 %v4198, %v4997
  %v4999 = vpop.f32.mrf.mxu0
  %v5000 = vand.u32 %v1389, 4294901760
  %5001 = vmatprep.mubr.f32.mxu0 %v5000
  %v5002 = vand.u32 %v1245, 4294901760
  %5003 = vmatmul.mubr.f32.gmra.mxu0 %v5002
  %v5004 = vpop.f32.mrf.mxu0
  %v5005 = vadd.f32 %v4209, %v5004
  %v5006 = vpop.f32.mrf.mxu0
  %v5007 = vand.u32 %v1392, 4294901760
  %5008 = vmatprep.mubr.f32.mxu0 %v5007
  %v5009 = vand.u32 %v1247, 4294901760
  %5010 = vmatmul.mubr.f32.gmra.mxu0 %v5009
  %v5011 = vpop.f32.mrf.mxu0
  %v5012 = vadd.f32 %v4220, %v5011
  %v5013 = vpop.f32.mrf.mxu0
  %v5014 = vand.u32 %v1395, 4294901760
  %5015 = vmatprep.mubr.f32.mxu0 %v5014
  %v5016 = vand.u32 %v1249, 4294901760
  %5017 = vmatmul.mubr.f32.gmra.mxu0 %v5016
  %v5018 = vpop.f32.mrf.mxu0
  %v5019 = vadd.f32 %v4231, %v5018
  %v5020 = vpop.f32.mrf.mxu0
  %v5021 = vand.u32 %v1398, 4294901760
  %5022 = vmatprep.mubr.f32.mxu0 %v5021
  %v5023 = vand.u32 %v1251, 4294901760
  %5024 = vmatmul.mubr.f32.gmra.mxu0 %v5023
  %v5025 = vpop.f32.mrf.mxu0
  %v5026 = vadd.f32 %v4242, %v5025
  %v5027 = vpop.f32.mrf.mxu0
  %v5028 = vand.u32 %v1401, 4294901760
  %5029 = vmatprep.mubr.f32.mxu0 %v5028
  %v5030 = vand.u32 %v1253, 4294901760
  %5031 = vmatmul.mubr.f32.gmra.mxu0 %v5030
  %v5032 = vpop.f32.mrf.mxu0
  %v5033 = vadd.f32 %v4253, %v5032
  %v5034 = vpop.f32.mrf.mxu0
  %v5035 = vand.u32 %v1404, 4294901760
  %5036 = vmatprep.mubr.f32.mxu0 %v5035
  %v5037 = vand.u32 %v1255, 4294901760
  %5038 = vmatmul.mubr.f32.gmra.mxu0 %v5037
  %v5039 = vpop.f32.mrf.mxu0
  %v5040 = vadd.f32 %v4264, %v5039
  %v5041 = vpop.f32.mrf.mxu0
  %v5042 = vand.u32 %v1407, 4294901760
  %5043 = vmatprep.mubr.f32.mxu0 %v5042
  %v5044 = vand.u32 %v1257, 4294901760
  %5045 = vmatmul.mubr.f32.gmra.mxu0 %v5044
  %v5046 = vpop.f32.mrf.mxu0
  %v5047 = vadd.f32 %v4275, %v5046
  %v5048 = vpop.f32.mrf.mxu0
  %v5049 = vand.u32 %v1410, 4294901760
  %5050 = vmatprep.mubr.f32.mxu0 %v5049
  %v5051 = vand.u32 %v1259, 4294901760
  %5052 = vmatmul.mubr.f32.gmra.mxu0 %v5051
  %v5053 = vpop.f32.mrf.mxu0
  %v5054 = vadd.f32 %v4286, %v5053
  %v5055 = vpop.f32.mrf.mxu0
  %v5056 = vand.u32 %v1413, 4294901760
  %5057 = vmatprep.mubr.f32.mxu0 %v5056
  %v5058 = vand.u32 %v1261, 4294901760
  %5059 = vmatmul.mubr.f32.gmra.mxu0 %v5058
  %v5060 = vpop.f32.mrf.mxu0
  %v5061 = vadd.f32 %v4297, %v5060
  %v5062 = vpop.f32.mrf.mxu0
  %v5063 = vand.u32 %v1416, 4294901760
  %5064 = vmatprep.mubr.f32.mxu0 %v5063
  %v5065 = vand.u32 %v1263, 4294901760
  %5066 = vmatmul.mubr.f32.gmra.mxu0 %v5065
  %v5067 = vpop.f32.mrf.mxu0
  %v5068 = vadd.f32 %v4308, %v5067
  %v5069 = vpop.f32.mrf.mxu0
  %v5070 = vand.u32 %v1419, 4294901760
  %5071 = vmatprep.mubr.f32.mxu0 %v5070
  %v5072 = vand.u32 %v1265, 4294901760
  %5073 = vmatmul.mubr.f32.gmra.mxu0 %v5072
  %v5074 = vpop.f32.mrf.mxu0
  %v5075 = vadd.f32 %v4319, %v5074
  %v5076 = vpop.f32.mrf.mxu0
  %v5077 = vand.u32 %v1422, 4294901760
  %5078 = vmatprep.mubr.f32.mxu0 %v5077
  %v5079 = vand.u32 %v1267, 4294901760
  %5080 = vmatmul.mubr.f32.gmra.mxu0 %v5079
  %v5081 = vpop.f32.mrf.mxu0
  %v5082 = vadd.f32 %v4330, %v5081
  %v5083 = vpop.f32.mrf.mxu0
  %v5084 = vand.u32 %v1425, 4294901760
  %5085 = vmatprep.mubr.f32.mxu0 %v5084
  %v5086 = vand.u32 %v1269, 4294901760
  %5087 = vmatmul.mubr.f32.gmra.mxu0 %v5086
  %v5088 = vpop.f32.mrf.mxu0
  %v5089 = vadd.f32 %v4341, %v5088
  %v5090 = vpop.f32.mrf.mxu0
  %v5091 = vand.u32 %v1428, 4294901760
  %5092 = vmatprep.mubr.f32.mxu0 %v5091
  %v5093 = vand.u32 %v1271, 4294901760
  %5094 = vmatmul.mubr.f32.gmra.mxu0 %v5093
  %v5095 = vpop.f32.mrf.mxu0
  %v5096 = vadd.f32 %v4352, %v5095
  %v5097 = vpop.f32.mrf.mxu0
  %v5098 = vand.u32 %v1431, 4294901760
  %5099 = vmatprep.mubr.f32.mxu0 %v5098
  %v5100 = vand.u32 %v1273, 4294901760
  %5101 = vmatmul.mubr.f32.gmra.mxu0 %v5100
  %v5102 = vpop.f32.mrf.mxu0
  %v5103 = vadd.f32 %v4363, %v5102
  %v5104 = vpop.f32.mrf.mxu0
  %v5105 = vand.u32 %v1434, 4294901760
  %5106 = vmatprep.mubr.f32.mxu0 %v5105
  %v5107 = vand.u32 %v1275, 4294901760
  %5108 = vmatmul.mubr.f32.gmra.mxu0 %v5107
  %v5109 = vpop.f32.mrf.mxu0
  %v5110 = vadd.f32 %v4374, %v5109
  %v5111 = vpop.f32.mrf.mxu0
  %v5112 = vand.u32 %v1437, 4294901760
  %5113 = vmatprep.mubr.f32.mxu0 %v5112
  %v5114 = vand.u32 %v1277, 4294901760
  %5115 = vmatmul.mubr.f32.gmra.mxu0 %v5114
  %v5116 = vpop.f32.mrf.mxu0
  %v5117 = vadd.f32 %v4385, %v5116
  %v5118 = vpop.f32.mrf.mxu0
  %v5119 = vand.u32 %v1440, 4294901760
  %5120 = vmatprep.mubr.f32.mxu0 %v5119
  %v5121 = vand.u32 %v1279, 4294901760
  %5122 = vmatmul.mubr.f32.gmra.mxu0 %v5121
  %v5123 = vpop.f32.mrf.mxu0
  %v5124 = vadd.f32 %v4396, %v5123
  %v5125 = vpop.f32.mrf.mxu0
  %v5126 = vand.u32 %v1443, 4294901760
  %5127 = vmatprep.mubr.f32.mxu0 %v5126
  %v5128 = vand.u32 %v1281, 4294901760
  %5129 = vmatmul.mubr.f32.gmra.mxu0 %v5128
  %v5130 = vpop.f32.mrf.mxu0
  %v5131 = vadd.f32 %v4407, %v5130
  %v5132 = vpop.f32.mrf.mxu0
  %v5133 = vand.u32 %v1446, 4294901760
  %5134 = vmatprep.mubr.f32.mxu0 %v5133
  %v5135 = vand.u32 %v1283, 4294901760
  %5136 = vmatmul.mubr.f32.gmra.mxu0 %v5135
  %v5137 = vpop.f32.mrf.mxu0
  %v5138 = vadd.f32 %v4418, %v5137
  %v5139 = vpop.f32.mrf.mxu0
  %v5140 = vand.u32 %v1449, 4294901760
  %5141 = vmatprep.mubr.f32.mxu0 %v5140
  %v5142 = vand.u32 %v1285, 4294901760
  %5143 = vmatmul.mubr.f32.gmra.mxu0 %v5142
  %v5144 = vpop.f32.mrf.mxu0
  %v5145 = vadd.f32 %v4429, %v5144
  %v5146 = vpop.f32.mrf.mxu0
  %v5147 = vand.u32 %v1452, 4294901760
  %5148 = vmatprep.mubr.f32.mxu0 %v5147
  %v5149 = vand.u32 %v1287, 4294901760
  %5150 = vmatmul.mubr.f32.gmra.mxu0 %v5149
  %v5151 = vpop.f32.mrf.mxu0
  %v5152 = vadd.f32 %v4440, %v5151
  %v5153 = vpop.f32.mrf.mxu0
  %v5154 = vand.u32 %v1455, 4294901760
  %5155 = vmatprep.mubr.f32.mxu0 %v5154
  %v5156 = vand.u32 %v1289, 4294901760
  %5157 = vmatmul.mubr.f32.gmra.mxu0 %v5156
  %v5158 = vpop.f32.mrf.mxu0
  %v5159 = vadd.f32 %v4451, %v5158
  %v5160 = vpop.f32.mrf.mxu0
  %v5161 = vand.u32 %v1458, 4294901760
  %5162 = vmatprep.mubr.f32.mxu0 %v5161
  %v5163 = vand.u32 %v1291, 4294901760
  %5164 = vmatmul.mubr.f32.gmra.mxu0 %v5163
  %v5165 = vpop.f32.mrf.mxu0
  %v5166 = vadd.f32 %v4462, %v5165
  %v5167 = vpop.f32.mrf.mxu0
  %v5168 = vand.u32 %v1461, 4294901760
  %5169 = vmatprep.mubr.f32.mxu0 %v5168
  %v5170 = vand.u32 %v1293, 4294901760
  %5171 = vmatmul.mubr.f32.gmra.mxu0 %v5170
  %v5172 = vpop.f32.mrf.mxu0
  %v5173 = vadd.f32 %v4473, %v5172
  %v5174 = vpop.f32.mrf.mxu0
  %v5175 = vand.u32 %v1464, 4294901760
  %5176 = vmatprep.mubr.f32.mxu0 %v5175
  %v5177 = vand.u32 %v1295, 4294901760
  %5178 = vmatmul.mubr.f32.gmra.mxu0 %v5177
  %v5179 = vpop.f32.mrf.mxu0
  %v5180 = vadd.f32 %v4484, %v5179
  %v5181 = vpop.f32.mrf.mxu0
  %v5182 = vand.u32 %v1467, 4294901760
  %5183 = vmatprep.mubr.f32.mxu0 %v5182
  %v5184 = vand.u32 %v1297, 4294901760
  %5185 = vmatmul.mubr.f32.gmra.mxu0 %v5184
  %v5186 = vpop.f32.mrf.mxu0
  %v5187 = vadd.f32 %v4495, %v5186
  %v5188 = vpop.f32.mrf.mxu0
  %v5189 = vand.u32 %v1470, 4294901760
  %5190 = vmatprep.mubr.f32.mxu0 %v5189
  %v5191 = vand.u32 %v1299, 4294901760
  %5192 = vmatmul.mubr.f32.gmra.mxu0 %v5191
  %v5193 = vpop.f32.mrf.mxu0
  %v5194 = vadd.f32 %v4506, %v5193
  %v5195 = vpop.f32.mrf.mxu0
  %v5196 = vand.u32 %v1473, 4294901760
  %5197 = vmatprep.mubr.f32.mxu0 %v5196
  %v5198 = vand.u32 %v1301, 4294901760
  %5199 = vmatmul.mubr.f32.gmra.mxu0 %v5198
  %v5200 = vpop.f32.mrf.mxu0
  %v5201 = vadd.f32 %v4517, %v5200
  %v5202 = vpop.f32.mrf.mxu0
  %v5203 = vand.u32 %v1476, 4294901760
  %5204 = vmatprep.mubr.f32.mxu0 %v5203
  %v5205 = vand.u32 %v1303, 4294901760
  %5206 = vmatmul.mubr.f32.gmra.mxu0 %v5205
  %v5207 = vpop.f32.mrf.mxu0
  %v5208 = vadd.f32 %v4528, %v5207
  %v5209 = vpop.f32.mrf.mxu0
  %v5210 = vand.u32 %v1479, 4294901760
  %5211 = vmatprep.mubr.f32.mxu0 %v5210
  %v5212 = vand.u32 %v1305, 4294901760
  %5213 = vmatmul.mubr.f32.gmra.mxu0 %v5212
  %v5214 = vpop.f32.mrf.mxu0
  %v5215 = vadd.f32 %v4539, %v5214
  %v5216 = vpop.f32.mrf.mxu0
  %v5217 = vand.u32 %v1482, 4294901760
  %5218 = vmatprep.mubr.f32.mxu0 %v5217
  %v5219 = vand.u32 %v1307, 4294901760
  %5220 = vmatmul.mubr.f32.gmra.mxu0 %v5219
  %v5221 = vpop.f32.mrf.mxu0
  %v5222 = vadd.f32 %v4550, %v5221
  %v5223 = vpop.f32.mrf.mxu0
  %v5224 = vand.u32 %v1485, 4294901760
  %5225 = vmatprep.mubr.f32.mxu0 %v5224
  %v5226 = vand.u32 %v1309, 4294901760
  %5227 = vmatmul.mubr.f32.gmra.mxu0 %v5226
  %v5228 = vpop.f32.mrf.mxu0
  %v5229 = vadd.f32 %v4561, %v5228
  %v5230 = vpop.f32.mrf.mxu0
  %v5231 = vand.u32 %v1488, 4294901760
  %5232 = vmatprep.mubr.f32.mxu0 %v5231
  %v5233 = vand.u32 %v1311, 4294901760
  %5234 = vmatmul.mubr.f32.gmra.mxu0 %v5233
  %v5235 = vpop.f32.mrf.mxu0
  %v5236 = vadd.f32 %v4572, %v5235
  %v5237 = vpop.f32.mrf.mxu0
  %v5238 = vand.u32 %v1491, 4294901760
  %5239 = vmatprep.mubr.f32.mxu0 %v5238
  %v5240 = vand.u32 %v1313, 4294901760
  %5241 = vmatmul.mubr.f32.gmra.mxu0 %v5240
  %v5242 = vpop.f32.mrf.mxu0
  %v5243 = vadd.f32 %v4583, %v5242
  %v5244 = vpop.f32.mrf.mxu0
  %v5245 = vand.u32 %v1494, 4294901760
  %5246 = vmatprep.mubr.f32.mxu0 %v5245
  %v5247 = vand.u32 %v1315, 4294901760
  %5248 = vmatmul.mubr.f32.gmra.mxu0 %v5247
  %v5249 = vpop.f32.mrf.mxu0
  %v5250 = vadd.f32 %v4594, %v5249
  %v5251 = vpop.f32.mrf.mxu0
  %v5252 = vand.u32 %v1497, 4294901760
  %5253 = vmatprep.mubr.f32.mxu0 %v5252
  %v5254 = vand.u32 %v1317, 4294901760
  %5255 = vmatmul.mubr.f32.gmra.mxu0 %v5254
  %v5256 = vpop.f32.mrf.mxu0
  %v5257 = vadd.f32 %v4605, %v5256
  %v5258 = vpop.f32.mrf.mxu0
  %v5259 = vand.u32 %v1500, 4294901760
  %5260 = vmatprep.mubr.f32.mxu0 %v5259
  %v5261 = vand.u32 %v1319, 4294901760
  %5262 = vmatmul.mubr.f32.gmra.mxu0 %v5261
  %v5263 = vpop.f32.mrf.mxu0
  %v5264 = vadd.f32 %v4616, %v5263
  %v5265 = vpop.f32.mrf.mxu0
  %v5266 = vand.u32 %v1503, 4294901760
  %5267 = vmatprep.mubr.f32.mxu0 %v5266
  %v5268 = vand.u32 %v1321, 4294901760
  %5269 = vmatmul.mubr.f32.gmra.mxu0 %v5268
  %v5270 = vpop.f32.mrf.mxu0
  %v5271 = vadd.f32 %v4627, %v5270
  %v5272 = vpop.f32.mrf.mxu0
  %v5273 = vand.u32 %v1506, 4294901760
  %5274 = vmatprep.mubr.f32.mxu0 %v5273
  %v5275 = vand.u32 %v1323, 4294901760
  %5276 = vmatmul.mubr.f32.gmra.mxu0 %v5275
  %v5277 = vpop.f32.mrf.mxu0
  %v5278 = vadd.f32 %v4638, %v5277
  %v5279 = vpop.f32.mrf.mxu0
  %v5280 = vand.u32 %v1509, 4294901760
  %5281 = vmatprep.mubr.f32.mxu0 %v5280
  %v5282 = vand.u32 %v1325, 4294901760
  %5283 = vmatmul.mubr.f32.gmra.mxu0 %v5282
  %v5284 = vpop.f32.mrf.mxu0
  %v5285 = vadd.f32 %v4649, %v5284
  %v5286 = vpop.f32.mrf.mxu0
  %v5287 = vand.u32 %v1512, 4294901760
  %5288 = vmatprep.mubr.f32.mxu0 %v5287
  %v5289 = vand.u32 %v1327, 4294901760
  %5290 = vmatmul.mubr.f32.gmra.mxu0 %v5289
  %v5291 = vpop.f32.mrf.mxu0
  %v5292 = vadd.f32 %v4660, %v5291
  %v5293 = vpop.f32.mrf.mxu0
  %v5294 = vand.u32 %v1515, 4294901760
  %5295 = vmatprep.mubr.f32.mxu0 %v5294
  %v5296 = vand.u32 %v1329, 4294901760
  %5297 = vmatmul.mubr.f32.gmra.mxu0 %v5296
  %v5298 = vpop.f32.mrf.mxu0
  %v5299 = vadd.f32 %v4671, %v5298
  %v5300 = vpop.f32.mrf.mxu0
  %v5301 = vand.u32 %v1518, 4294901760
  %5302 = vmatprep.mubr.f32.mxu0 %v5301
  %v5303 = vand.u32 %v1331, 4294901760
  %5304 = vmatmul.mubr.f32.gmra.mxu0 %v5303
  %v5305 = vpop.f32.mrf.mxu0
  %v5306 = vadd.f32 %v4682, %v5305
  %v5307 = vpop.f32.mrf.mxu0
  %v5308 = vand.u32 %v1521, 4294901760
  %5309 = vmatprep.mubr.f32.mxu0 %v5308
  %v5310 = vand.u32 %v1333, 4294901760
  %5311 = vmatmul.mubr.f32.gmra.mxu0 %v5310
  %v5312 = vpop.f32.mrf.mxu0
  %v5313 = vadd.f32 %v4693, %v5312
  %v5314 = vpop.f32.mrf.mxu0
  %v5315 = vand.u32 %v1524, 4294901760
  %5316 = vmatprep.mubr.f32.mxu0 %v5315
  %v5317 = vand.u32 %v1335, 4294901760
  %5318 = vmatmul.mubr.f32.gmra.mxu0 %v5317
  %v5319 = vpop.f32.mrf.mxu0
  %v5320 = vadd.f32 %v4704, %v5319
  %v5321 = vpop.f32.mrf.mxu0
  %v5322 = vand.u32 %v1527, 4294901760
  %5323 = vmatprep.mubr.f32.mxu0 %v5322
  %v5324 = vand.u32 %v1337, 4294901760
  %5325 = vmatmul.mubr.f32.gmra.mxu0 %v5324
  %v5326 = vpop.f32.mrf.mxu0
  %v5327 = vadd.f32 %v4715, %v5326
  %v5328 = vpop.f32.mrf.mxu0
  %v5329 = vand.u32 %v1530, 4294901760
  %5330 = vmatprep.mubr.f32.mxu0 %v5329
  %v5331 = vand.u32 %v1339, 4294901760
  %5332 = vmatmul.mubr.f32.gmra.mxu0 %v5331
  %v5333 = vpop.f32.mrf.mxu0
  %v5334 = vadd.f32 %v4726, %v5333
  %v5335 = vpop.f32.mrf.mxu0
  %v5336 = vand.u32 %v1533, 4294901760
  %5337 = vmatprep.mubr.f32.mxu0 %v5336
  %v5338 = vand.u32 %v1341, 4294901760
  %5339 = vmatmul.mubr.f32.gmra.mxu0 %v5338
  %v5340 = vpop.f32.mrf.mxu0
  %v5341 = vadd.f32 %v4737, %v5340
  %v5342 = vpop.f32.mrf.mxu0
  %v5343 = vand.u32 %v1536, 4294901760
  %5344 = vmatprep.mubr.f32.mxu0 %v5343
  %v5345 = vand.u32 %v1343, 4294901760
  %5346 = vmatmul.mubr.f32.gmra.mxu0 %v5345
  %v5347 = vpop.f32.mrf.mxu0
  %v5348 = vadd.f32 %v4748, %v5347
  %v5349 = vpop.f32.mrf.mxu0
  %5350 = vdwg.mxu0
  %5351 = vmatprep.subr.mxu0 0.0
  %v5352 = vand.u32 %v235, 4294901760
  %5353 = vmatpush1.msra.mxu0 %v5352
  %5354 = vmatprep.subr.mxu0 0.0
  %v5355 = vand.u32 %v234, 4294901760
  %5356 = vmatpush1.msra.mxu0 %v5355
  %5357 = vmatprep.subr.mxu0 0.0
  %v5358 = vand.u32 %v233, 4294901760
  %5359 = vmatpush1.msra.mxu0 %v5358
  %5360 = vmatprep.subr.mxu0 0.0
  %v5361 = vand.u32 %v232, 4294901760
  %5362 = vmatpush1.msra.mxu0 %v5361
  %5363 = vmatprep.subr.mxu0 0.0
  %v5364 = vand.u32 %v231, 4294901760
  %5365 = vmatpush1.msra.mxu0 %v5364
  %5366 = vmatprep.subr.mxu0 0.0
  %v5367 = vand.u32 %v230, 4294901760
  %5368 = vmatpush1.msra.mxu0 %v5367
  %5369 = vmatprep.subr.mxu0 0.0
  %v5370 = vand.u32 %v229, 4294901760
  %5371 = vmatpush1.msra.mxu0 %v5370
  %5372 = vmatprep.subr.mxu0 0.0
  %v5373 = vand.u32 %v228, 4294901760
  %5374 = vmatpush1.msra.mxu0 %v5373
  %5375 = vmatprep.subr.mxu0 0.0
  %v5376 = vand.u32 %v227, 4294901760
  %5377 = vmatpush1.msra.mxu0 %v5376
  %5378 = vmatprep.subr.mxu0 0.0
  %v5379 = vand.u32 %v226, 4294901760
  %5380 = vmatpush1.msra.mxu0 %v5379
  %5381 = vmatprep.subr.mxu0 0.0
  %v5382 = vand.u32 %v225, 4294901760
  %5383 = vmatpush1.msra.mxu0 %v5382
  %5384 = vmatprep.subr.mxu0 0.0
  %v5385 = vand.u32 %v224, 4294901760
  %5386 = vmatpush1.msra.mxu0 %v5385
  %5387 = vmatprep.subr.mxu0 0.0
  %v5388 = vand.u32 %v223, 4294901760
  %5389 = vmatpush1.msra.mxu0 %v5388
  %5390 = vmatprep.subr.mxu0 0.0
  %v5391 = vand.u32 %v222, 4294901760
  %5392 = vmatpush1.msra.mxu0 %v5391
  %5393 = vmatprep.subr.mxu0 0.0
  %v5394 = vand.u32 %v221, 4294901760
  %5395 = vmatpush1.msra.mxu0 %v5394
  %5396 = vmatprep.subr.mxu0 0.0
  %v5397 = vand.u32 %v220, 4294901760
  %5398 = vmatpush1.msra.mxu0 %v5397
  %5399 = vmatprep.subr.mxu0 0.0
  %5400 = vmatpush2.msra.mxu0 0.0
  %5401 = vmatprep.subr.mxu0 0.0
  %5402 = vmatpush2.msra.mxu0 0.0
  %5403 = vmatprep.subr.mxu0 0.0
  %5404 = vmatpush2.msra.mxu0 0.0
  %5405 = vmatprep.subr.mxu0 0.0
  %v5406 = vand.u32 %v1540, 4294901760
  %5407 = vmatpush2.msra.mxu0 %v5406
  %5408 = vmatprep.subr.mxu0 0.0
  %v5409 = vand.u32 %v247, 4294901760
  %5410 = vmatpush2.msra.mxu0 %v5409
  %5411 = vmatprep.subr.mxu0 0.0
  %v5412 = vand.u32 %v246, 4294901760
  %5413 = vmatpush2.msra.mxu0 %v5412
  %5414 = vmatprep.subr.mxu0 0.0
  %v5415 = vand.u32 %v245, 4294901760
  %5416 = vmatpush2.msra.mxu0 %v5415
  %5417 = vmatprep.subr.mxu0 0.0
  %v5418 = vand.u32 %v244, 4294901760
  %5419 = vmatpush2.msra.mxu0 %v5418
  %5420 = vmatprep.subr.mxu0 0.0
  %v5421 = vand.u32 %v243, 4294901760
  %5422 = vmatpush2.msra.mxu0 %v5421
  %5423 = vmatprep.subr.mxu0 0.0
  %v5424 = vand.u32 %v242, 4294901760
  %5425 = vmatpush2.msra.mxu0 %v5424
  %5426 = vmatprep.subr.mxu0 0.0
  %v5427 = vand.u32 %v241, 4294901760
  %5428 = vmatpush2.msra.mxu0 %v5427
  %5429 = vmatprep.subr.mxu0 0.0
  %v5430 = vand.u32 %v240, 4294901760
  %5431 = vmatpush2.msra.mxu0 %v5430
  %5432 = vmatprep.subr.mxu0 0.0
  %v5433 = vand.u32 %v239, 4294901760
  %5434 = vmatpush2.msra.mxu0 %v5433
  %5435 = vmatprep.subr.mxu0 0.0
  %v5436 = vand.u32 %v238, 4294901760
  %5437 = vmatpush2.msra.mxu0 %v5436
  %5438 = vmatprep.subr.mxu0 0.0
  %v5439 = vand.u32 %v237, 4294901760
  %5440 = vmatpush2.msra.mxu0 %v5439
  %5441 = vmatprep.subr.mxu0 0.0
  %v5442 = vand.u32 %v236, 4294901760
  %5443 = vmatpush2.msra.mxu0 %v5442
  %v5444 = vand.u32 %v1347, 4294901760
  %5445 = vmatprep.mubr.f32.mxu0 %v5444
  %v5446 = vand.u32 %v1217, 4294901760
  %5447 = vmatmul.mubr.f32.gmra.mxu0 %v5446
  %v5448 = vpop.f32.mrf.mxu0
  %v5449 = vadd.f32 %v4907, %v5448
  %v5450 = vpop.f32.mrf.mxu0
  %v5451 = vand.u32 %v1350, 4294901760
  %5452 = vmatprep.mubr.f32.mxu0 %v5451
  %v5453 = vand.u32 %v1219, 4294901760
  %5454 = vmatmul.mubr.f32.gmra.mxu0 %v5453
  %v5455 = vpop.f32.mrf.mxu0
  %v5456 = vadd.f32 %v4914, %v5455
  %v5457 = vpop.f32.mrf.mxu0
  %v5458 = vand.u32 %v1353, 4294901760
  %5459 = vmatprep.mubr.f32.mxu0 %v5458
  %v5460 = vand.u32 %v1221, 4294901760
  %5461 = vmatmul.mubr.f32.gmra.mxu0 %v5460
  %v5462 = vpop.f32.mrf.mxu0
  %v5463 = vadd.f32 %v4921, %v5462
  %v5464 = vpop.f32.mrf.mxu0
  %v5465 = vand.u32 %v1356, 4294901760
  %5466 = vmatprep.mubr.f32.mxu0 %v5465
  %v5467 = vand.u32 %v1223, 4294901760
  %5468 = vmatmul.mubr.f32.gmra.mxu0 %v5467
  %v5469 = vpop.f32.mrf.mxu0
  %v5470 = vadd.f32 %v4928, %v5469
  %v5471 = vpop.f32.mrf.mxu0
  %v5472 = vand.u32 %v1359, 4294901760
  %5473 = vmatprep.mubr.f32.mxu0 %v5472
  %v5474 = vand.u32 %v1225, 4294901760
  %5475 = vmatmul.mubr.f32.gmra.mxu0 %v5474
  %v5476 = vpop.f32.mrf.mxu0
  %v5477 = vadd.f32 %v4935, %v5476
  %v5478 = vpop.f32.mrf.mxu0
  %v5479 = vand.u32 %v1362, 4294901760
  %5480 = vmatprep.mubr.f32.mxu0 %v5479
  %v5481 = vand.u32 %v1227, 4294901760
  %5482 = vmatmul.mubr.f32.gmra.mxu0 %v5481
  %v5483 = vpop.f32.mrf.mxu0
  %v5484 = vadd.f32 %v4942, %v5483
  %v5485 = vpop.f32.mrf.mxu0
  %v5486 = vand.u32 %v1365, 4294901760
  %5487 = vmatprep.mubr.f32.mxu0 %v5486
  %v5488 = vand.u32 %v1229, 4294901760
  %5489 = vmatmul.mubr.f32.gmra.mxu0 %v5488
  %v5490 = vpop.f32.mrf.mxu0
  %v5491 = vadd.f32 %v4949, %v5490
  %v5492 = vpop.f32.mrf.mxu0
  %v5493 = vand.u32 %v1368, 4294901760
  %5494 = vmatprep.mubr.f32.mxu0 %v5493
  %v5495 = vand.u32 %v1231, 4294901760
  %5496 = vmatmul.mubr.f32.gmra.mxu0 %v5495
  %v5497 = vpop.f32.mrf.mxu0
  %v5498 = vadd.f32 %v4956, %v5497
  %v5499 = vpop.f32.mrf.mxu0
  %v5500 = vand.u32 %v1371, 4294901760
  %5501 = vmatprep.mubr.f32.mxu0 %v5500
  %v5502 = vand.u32 %v1233, 4294901760
  %5503 = vmatmul.mubr.f32.gmra.mxu0 %v5502
  %v5504 = vpop.f32.mrf.mxu0
  %v5505 = vadd.f32 %v4963, %v5504
  %v5506 = vpop.f32.mrf.mxu0
  %v5507 = vand.u32 %v1374, 4294901760
  %5508 = vmatprep.mubr.f32.mxu0 %v5507
  %v5509 = vand.u32 %v1235, 4294901760
  %5510 = vmatmul.mubr.f32.gmra.mxu0 %v5509
  %v5511 = vpop.f32.mrf.mxu0
  %v5512 = vadd.f32 %v4970, %v5511
  %v5513 = vpop.f32.mrf.mxu0
  %v5514 = vand.u32 %v1377, 4294901760
  %5515 = vmatprep.mubr.f32.mxu0 %v5514
  %v5516 = vand.u32 %v1237, 4294901760
  %5517 = vmatmul.mubr.f32.gmra.mxu0 %v5516
  %v5518 = vpop.f32.mrf.mxu0
  %v5519 = vadd.f32 %v4977, %v5518
  %v5520 = vpop.f32.mrf.mxu0
  %v5521 = vand.u32 %v1380, 4294901760
  %5522 = vmatprep.mubr.f32.mxu0 %v5521
  %v5523 = vand.u32 %v1239, 4294901760
  %5524 = vmatmul.mubr.f32.gmra.mxu0 %v5523
  %v5525 = vpop.f32.mrf.mxu0
  %v5526 = vadd.f32 %v4984, %v5525
  %v5527 = vpop.f32.mrf.mxu0
  %v5528 = vand.u32 %v1383, 4294901760
  %5529 = vmatprep.mubr.f32.mxu0 %v5528
  %v5530 = vand.u32 %v1241, 4294901760
  %5531 = vmatmul.mubr.f32.gmra.mxu0 %v5530
  %v5532 = vpop.f32.mrf.mxu0
  %v5533 = vadd.f32 %v4991, %v5532
  %v5534 = vpop.f32.mrf.mxu0
  %v5535 = vand.u32 %v1386, 4294901760
  %5536 = vmatprep.mubr.f32.mxu0 %v5535
  %v5537 = vand.u32 %v1243, 4294901760
  %5538 = vmatmul.mubr.f32.gmra.mxu0 %v5537
  %v5539 = vpop.f32.mrf.mxu0
  %v5540 = vadd.f32 %v4998, %v5539
  %v5541 = vpop.f32.mrf.mxu0
  %v5542 = vand.u32 %v1389, 4294901760
  %5543 = vmatprep.mubr.f32.mxu0 %v5542
  %v5544 = vand.u32 %v1245, 4294901760
  %5545 = vmatmul.mubr.f32.gmra.mxu0 %v5544
  %v5546 = vpop.f32.mrf.mxu0
  %v5547 = vadd.f32 %v5005, %v5546
  %v5548 = vpop.f32.mrf.mxu0
  %v5549 = vand.u32 %v1392, 4294901760
  %5550 = vmatprep.mubr.f32.mxu0 %v5549
  %v5551 = vand.u32 %v1247, 4294901760
  %5552 = vmatmul.mubr.f32.gmra.mxu0 %v5551
  %v5553 = vpop.f32.mrf.mxu0
  %v5554 = vadd.f32 %v5012, %v5553
  %v5555 = vpop.f32.mrf.mxu0
  %v5556 = vand.u32 %v1395, 4294901760
  %5557 = vmatprep.mubr.f32.mxu0 %v5556
  %v5558 = vand.u32 %v1249, 4294901760
  %5559 = vmatmul.mubr.f32.gmra.mxu0 %v5558
  %v5560 = vpop.f32.mrf.mxu0
  %v5561 = vadd.f32 %v5019, %v5560
  %v5562 = vpop.f32.mrf.mxu0
  %v5563 = vand.u32 %v1398, 4294901760
  %5564 = vmatprep.mubr.f32.mxu0 %v5563
  %v5565 = vand.u32 %v1251, 4294901760
  %5566 = vmatmul.mubr.f32.gmra.mxu0 %v5565
  %v5567 = vpop.f32.mrf.mxu0
  %v5568 = vadd.f32 %v5026, %v5567
  %v5569 = vpop.f32.mrf.mxu0
  %v5570 = vand.u32 %v1401, 4294901760
  %5571 = vmatprep.mubr.f32.mxu0 %v5570
  %v5572 = vand.u32 %v1253, 4294901760
  %5573 = vmatmul.mubr.f32.gmra.mxu0 %v5572
  %v5574 = vpop.f32.mrf.mxu0
  %v5575 = vadd.f32 %v5033, %v5574
  %v5576 = vpop.f32.mrf.mxu0
  %v5577 = vand.u32 %v1404, 4294901760
  %5578 = vmatprep.mubr.f32.mxu0 %v5577
  %v5579 = vand.u32 %v1255, 4294901760
  %5580 = vmatmul.mubr.f32.gmra.mxu0 %v5579
  %v5581 = vpop.f32.mrf.mxu0
  %v5582 = vadd.f32 %v5040, %v5581
  %v5583 = vpop.f32.mrf.mxu0
  %v5584 = vand.u32 %v1407, 4294901760
  %5585 = vmatprep.mubr.f32.mxu0 %v5584
  %v5586 = vand.u32 %v1257, 4294901760
  %5587 = vmatmul.mubr.f32.gmra.mxu0 %v5586
  %v5588 = vpop.f32.mrf.mxu0
  %v5589 = vadd.f32 %v5047, %v5588
  %v5590 = vpop.f32.mrf.mxu0
  %v5591 = vand.u32 %v1410, 4294901760
  %5592 = vmatprep.mubr.f32.mxu0 %v5591
  %v5593 = vand.u32 %v1259, 4294901760
  %5594 = vmatmul.mubr.f32.gmra.mxu0 %v5593
  %v5595 = vpop.f32.mrf.mxu0
  %v5596 = vadd.f32 %v5054, %v5595
  %v5597 = vpop.f32.mrf.mxu0
  %v5598 = vand.u32 %v1413, 4294901760
  %5599 = vmatprep.mubr.f32.mxu0 %v5598
  %v5600 = vand.u32 %v1261, 4294901760
  %5601 = vmatmul.mubr.f32.gmra.mxu0 %v5600
  %v5602 = vpop.f32.mrf.mxu0
  %v5603 = vadd.f32 %v5061, %v5602
  %v5604 = vpop.f32.mrf.mxu0
  %v5605 = vand.u32 %v1416, 4294901760
  %5606 = vmatprep.mubr.f32.mxu0 %v5605
  %v5607 = vand.u32 %v1263, 4294901760
  %5608 = vmatmul.mubr.f32.gmra.mxu0 %v5607
  %v5609 = vpop.f32.mrf.mxu0
  %v5610 = vadd.f32 %v5068, %v5609
  %v5611 = vpop.f32.mrf.mxu0
  %v5612 = vand.u32 %v1419, 4294901760
  %5613 = vmatprep.mubr.f32.mxu0 %v5612
  %v5614 = vand.u32 %v1265, 4294901760
  %5615 = vmatmul.mubr.f32.gmra.mxu0 %v5614
  %v5616 = vpop.f32.mrf.mxu0
  %v5617 = vadd.f32 %v5075, %v5616
  %v5618 = vpop.f32.mrf.mxu0
  %v5619 = vand.u32 %v1422, 4294901760
  %5620 = vmatprep.mubr.f32.mxu0 %v5619
  %v5621 = vand.u32 %v1267, 4294901760
  %5622 = vmatmul.mubr.f32.gmra.mxu0 %v5621
  %v5623 = vpop.f32.mrf.mxu0
  %v5624 = vadd.f32 %v5082, %v5623
  %v5625 = vpop.f32.mrf.mxu0
  %v5626 = vand.u32 %v1425, 4294901760
  %5627 = vmatprep.mubr.f32.mxu0 %v5626
  %v5628 = vand.u32 %v1269, 4294901760
  %5629 = vmatmul.mubr.f32.gmra.mxu0 %v5628
  %v5630 = vpop.f32.mrf.mxu0
  %v5631 = vadd.f32 %v5089, %v5630
  %v5632 = vpop.f32.mrf.mxu0
  %v5633 = vand.u32 %v1428, 4294901760
  %5634 = vmatprep.mubr.f32.mxu0 %v5633
  %v5635 = vand.u32 %v1271, 4294901760
  %5636 = vmatmul.mubr.f32.gmra.mxu0 %v5635
  %v5637 = vpop.f32.mrf.mxu0
  %v5638 = vadd.f32 %v5096, %v5637
  %v5639 = vpop.f32.mrf.mxu0
  %v5640 = vand.u32 %v1431, 4294901760
  %5641 = vmatprep.mubr.f32.mxu0 %v5640
  %v5642 = vand.u32 %v1273, 4294901760
  %5643 = vmatmul.mubr.f32.gmra.mxu0 %v5642
  %v5644 = vpop.f32.mrf.mxu0
  %v5645 = vadd.f32 %v5103, %v5644
  %v5646 = vpop.f32.mrf.mxu0
  %v5647 = vand.u32 %v1434, 4294901760
  %5648 = vmatprep.mubr.f32.mxu0 %v5647
  %v5649 = vand.u32 %v1275, 4294901760
  %5650 = vmatmul.mubr.f32.gmra.mxu0 %v5649
  %v5651 = vpop.f32.mrf.mxu0
  %v5652 = vadd.f32 %v5110, %v5651
  %v5653 = vpop.f32.mrf.mxu0
  %v5654 = vand.u32 %v1437, 4294901760
  %5655 = vmatprep.mubr.f32.mxu0 %v5654
  %v5656 = vand.u32 %v1277, 4294901760
  %5657 = vmatmul.mubr.f32.gmra.mxu0 %v5656
  %v5658 = vpop.f32.mrf.mxu0
  %v5659 = vadd.f32 %v5117, %v5658
  %v5660 = vpop.f32.mrf.mxu0
  %v5661 = vand.u32 %v1440, 4294901760
  %5662 = vmatprep.mubr.f32.mxu0 %v5661
  %v5663 = vand.u32 %v1279, 4294901760
  %5664 = vmatmul.mubr.f32.gmra.mxu0 %v5663
  %v5665 = vpop.f32.mrf.mxu0
  %v5666 = vadd.f32 %v5124, %v5665
  %v5667 = vpop.f32.mrf.mxu0
  %v5668 = vand.u32 %v1443, 4294901760
  %5669 = vmatprep.mubr.f32.mxu0 %v5668
  %v5670 = vand.u32 %v1281, 4294901760
  %5671 = vmatmul.mubr.f32.gmra.mxu0 %v5670
  %v5672 = vpop.f32.mrf.mxu0
  %v5673 = vadd.f32 %v5131, %v5672
  %v5674 = vpop.f32.mrf.mxu0
  %v5675 = vand.u32 %v1446, 4294901760
  %5676 = vmatprep.mubr.f32.mxu0 %v5675
  %v5677 = vand.u32 %v1283, 4294901760
  %5678 = vmatmul.mubr.f32.gmra.mxu0 %v5677
  %v5679 = vpop.f32.mrf.mxu0
  %v5680 = vadd.f32 %v5138, %v5679
  %v5681 = vpop.f32.mrf.mxu0
  %v5682 = vand.u32 %v1449, 4294901760
  %5683 = vmatprep.mubr.f32.mxu0 %v5682
  %v5684 = vand.u32 %v1285, 4294901760
  %5685 = vmatmul.mubr.f32.gmra.mxu0 %v5684
  %v5686 = vpop.f32.mrf.mxu0
  %v5687 = vadd.f32 %v5145, %v5686
  %v5688 = vpop.f32.mrf.mxu0
  %v5689 = vand.u32 %v1452, 4294901760
  %5690 = vmatprep.mubr.f32.mxu0 %v5689
  %v5691 = vand.u32 %v1287, 4294901760
  %5692 = vmatmul.mubr.f32.gmra.mxu0 %v5691
  %v5693 = vpop.f32.mrf.mxu0
  %v5694 = vadd.f32 %v5152, %v5693
  %v5695 = vpop.f32.mrf.mxu0
  %v5696 = vand.u32 %v1455, 4294901760
  %5697 = vmatprep.mubr.f32.mxu0 %v5696
  %v5698 = vand.u32 %v1289, 4294901760
  %5699 = vmatmul.mubr.f32.gmra.mxu0 %v5698
  %v5700 = vpop.f32.mrf.mxu0
  %v5701 = vadd.f32 %v5159, %v5700
  %v5702 = vpop.f32.mrf.mxu0
  %v5703 = vand.u32 %v1458, 4294901760
  %5704 = vmatprep.mubr.f32.mxu0 %v5703
  %v5705 = vand.u32 %v1291, 4294901760
  %5706 = vmatmul.mubr.f32.gmra.mxu0 %v5705
  %v5707 = vpop.f32.mrf.mxu0
  %v5708 = vadd.f32 %v5166, %v5707
  %v5709 = vpop.f32.mrf.mxu0
  %v5710 = vand.u32 %v1461, 4294901760
  %5711 = vmatprep.mubr.f32.mxu0 %v5710
  %v5712 = vand.u32 %v1293, 4294901760
  %5713 = vmatmul.mubr.f32.gmra.mxu0 %v5712
  %v5714 = vpop.f32.mrf.mxu0
  %v5715 = vadd.f32 %v5173, %v5714
  %v5716 = vpop.f32.mrf.mxu0
  %v5717 = vand.u32 %v1464, 4294901760
  %5718 = vmatprep.mubr.f32.mxu0 %v5717
  %v5719 = vand.u32 %v1295, 4294901760
  %5720 = vmatmul.mubr.f32.gmra.mxu0 %v5719
  %v5721 = vpop.f32.mrf.mxu0
  %v5722 = vadd.f32 %v5180, %v5721
  %v5723 = vpop.f32.mrf.mxu0
  %v5724 = vand.u32 %v1467, 4294901760
  %5725 = vmatprep.mubr.f32.mxu0 %v5724
  %v5726 = vand.u32 %v1297, 4294901760
  %5727 = vmatmul.mubr.f32.gmra.mxu0 %v5726
  %v5728 = vpop.f32.mrf.mxu0
  %v5729 = vadd.f32 %v5187, %v5728
  %v5730 = vpop.f32.mrf.mxu0
  %v5731 = vand.u32 %v1470, 4294901760
  %5732 = vmatprep.mubr.f32.mxu0 %v5731
  %v5733 = vand.u32 %v1299, 4294901760
  %5734 = vmatmul.mubr.f32.gmra.mxu0 %v5733
  %v5735 = vpop.f32.mrf.mxu0
  %v5736 = vadd.f32 %v5194, %v5735
  %v5737 = vpop.f32.mrf.mxu0
  %v5738 = vand.u32 %v1473, 4294901760
  %5739 = vmatprep.mubr.f32.mxu0 %v5738
  %v5740 = vand.u32 %v1301, 4294901760
  %5741 = vmatmul.mubr.f32.gmra.mxu0 %v5740
  %v5742 = vpop.f32.mrf.mxu0
  %v5743 = vadd.f32 %v5201, %v5742
  %v5744 = vpop.f32.mrf.mxu0
  %v5745 = vand.u32 %v1476, 4294901760
  %5746 = vmatprep.mubr.f32.mxu0 %v5745
  %v5747 = vand.u32 %v1303, 4294901760
  %5748 = vmatmul.mubr.f32.gmra.mxu0 %v5747
  %v5749 = vpop.f32.mrf.mxu0
  %v5750 = vadd.f32 %v5208, %v5749
  %v5751 = vpop.f32.mrf.mxu0
  %v5752 = vand.u32 %v1479, 4294901760
  %5753 = vmatprep.mubr.f32.mxu0 %v5752
  %v5754 = vand.u32 %v1305, 4294901760
  %5755 = vmatmul.mubr.f32.gmra.mxu0 %v5754
  %v5756 = vpop.f32.mrf.mxu0
  %v5757 = vadd.f32 %v5215, %v5756
  %v5758 = vpop.f32.mrf.mxu0
  %v5759 = vand.u32 %v1482, 4294901760
  %5760 = vmatprep.mubr.f32.mxu0 %v5759
  %v5761 = vand.u32 %v1307, 4294901760
  %5762 = vmatmul.mubr.f32.gmra.mxu0 %v5761
  %v5763 = vpop.f32.mrf.mxu0
  %v5764 = vadd.f32 %v5222, %v5763
  %v5765 = vpop.f32.mrf.mxu0
  %v5766 = vand.u32 %v1485, 4294901760
  %5767 = vmatprep.mubr.f32.mxu0 %v5766
  %v5768 = vand.u32 %v1309, 4294901760
  %5769 = vmatmul.mubr.f32.gmra.mxu0 %v5768
  %v5770 = vpop.f32.mrf.mxu0
  %v5771 = vadd.f32 %v5229, %v5770
  %v5772 = vpop.f32.mrf.mxu0
  %v5773 = vand.u32 %v1488, 4294901760
  %5774 = vmatprep.mubr.f32.mxu0 %v5773
  %v5775 = vand.u32 %v1311, 4294901760
  %5776 = vmatmul.mubr.f32.gmra.mxu0 %v5775
  %v5777 = vpop.f32.mrf.mxu0
  %v5778 = vadd.f32 %v5236, %v5777
  %v5779 = vpop.f32.mrf.mxu0
  %v5780 = vand.u32 %v1491, 4294901760
  %5781 = vmatprep.mubr.f32.mxu0 %v5780
  %v5782 = vand.u32 %v1313, 4294901760
  %5783 = vmatmul.mubr.f32.gmra.mxu0 %v5782
  %v5784 = vpop.f32.mrf.mxu0
  %v5785 = vadd.f32 %v5243, %v5784
  %v5786 = vpop.f32.mrf.mxu0
  %v5787 = vand.u32 %v1494, 4294901760
  %5788 = vmatprep.mubr.f32.mxu0 %v5787
  %v5789 = vand.u32 %v1315, 4294901760
  %5790 = vmatmul.mubr.f32.gmra.mxu0 %v5789
  %v5791 = vpop.f32.mrf.mxu0
  %v5792 = vadd.f32 %v5250, %v5791
  %v5793 = vpop.f32.mrf.mxu0
  %v5794 = vand.u32 %v1497, 4294901760
  %5795 = vmatprep.mubr.f32.mxu0 %v5794
  %v5796 = vand.u32 %v1317, 4294901760
  %5797 = vmatmul.mubr.f32.gmra.mxu0 %v5796
  %v5798 = vpop.f32.mrf.mxu0
  %v5799 = vadd.f32 %v5257, %v5798
  %v5800 = vpop.f32.mrf.mxu0
  %v5801 = vand.u32 %v1500, 4294901760
  %5802 = vmatprep.mubr.f32.mxu0 %v5801
  %v5803 = vand.u32 %v1319, 4294901760
  %5804 = vmatmul.mubr.f32.gmra.mxu0 %v5803
  %v5805 = vpop.f32.mrf.mxu0
  %v5806 = vadd.f32 %v5264, %v5805
  %v5807 = vpop.f32.mrf.mxu0
  %v5808 = vand.u32 %v1503, 4294901760
  %5809 = vmatprep.mubr.f32.mxu0 %v5808
  %v5810 = vand.u32 %v1321, 4294901760
  %5811 = vmatmul.mubr.f32.gmra.mxu0 %v5810
  %v5812 = vpop.f32.mrf.mxu0
  %v5813 = vadd.f32 %v5271, %v5812
  %v5814 = vpop.f32.mrf.mxu0
  %v5815 = vand.u32 %v1506, 4294901760
  %5816 = vmatprep.mubr.f32.mxu0 %v5815
  %v5817 = vand.u32 %v1323, 4294901760
  %5818 = vmatmul.mubr.f32.gmra.mxu0 %v5817
  %v5819 = vpop.f32.mrf.mxu0
  %v5820 = vadd.f32 %v5278, %v5819
  %v5821 = vpop.f32.mrf.mxu0
  %v5822 = vand.u32 %v1509, 4294901760
  %5823 = vmatprep.mubr.f32.mxu0 %v5822
  %v5824 = vand.u32 %v1325, 4294901760
  %5825 = vmatmul.mubr.f32.gmra.mxu0 %v5824
  %v5826 = vpop.f32.mrf.mxu0
  %v5827 = vadd.f32 %v5285, %v5826
  %v5828 = vpop.f32.mrf.mxu0
  %v5829 = vand.u32 %v1512, 4294901760
  %5830 = vmatprep.mubr.f32.mxu0 %v5829
  %v5831 = vand.u32 %v1327, 4294901760
  %5832 = vmatmul.mubr.f32.gmra.mxu0 %v5831
  %v5833 = vpop.f32.mrf.mxu0
  %v5834 = vadd.f32 %v5292, %v5833
  %v5835 = vpop.f32.mrf.mxu0
  %v5836 = vand.u32 %v1515, 4294901760
  %5837 = vmatprep.mubr.f32.mxu0 %v5836
  %v5838 = vand.u32 %v1329, 4294901760
  %5839 = vmatmul.mubr.f32.gmra.mxu0 %v5838
  %v5840 = vpop.f32.mrf.mxu0
  %v5841 = vadd.f32 %v5299, %v5840
  %v5842 = vpop.f32.mrf.mxu0
  %v5843 = vand.u32 %v1518, 4294901760
  %5844 = vmatprep.mubr.f32.mxu0 %v5843
  %v5845 = vand.u32 %v1331, 4294901760
  %5846 = vmatmul.mubr.f32.gmra.mxu0 %v5845
  %v5847 = vpop.f32.mrf.mxu0
  %v5848 = vadd.f32 %v5306, %v5847
  %v5849 = vpop.f32.mrf.mxu0
  %v5850 = vand.u32 %v1521, 4294901760
  %5851 = vmatprep.mubr.f32.mxu0 %v5850
  %v5852 = vand.u32 %v1333, 4294901760
  %5853 = vmatmul.mubr.f32.gmra.mxu0 %v5852
  %v5854 = vpop.f32.mrf.mxu0
  %v5855 = vadd.f32 %v5313, %v5854
  %v5856 = vpop.f32.mrf.mxu0
  %v5857 = vand.u32 %v1524, 4294901760
  %5858 = vmatprep.mubr.f32.mxu0 %v5857
  %v5859 = vand.u32 %v1335, 4294901760
  %5860 = vmatmul.mubr.f32.gmra.mxu0 %v5859
  %v5861 = vpop.f32.mrf.mxu0
  %v5862 = vadd.f32 %v5320, %v5861
  %v5863 = vpop.f32.mrf.mxu0
  %v5864 = vand.u32 %v1527, 4294901760
  %5865 = vmatprep.mubr.f32.mxu0 %v5864
  %v5866 = vand.u32 %v1337, 4294901760
  %5867 = vmatmul.mubr.f32.gmra.mxu0 %v5866
  %v5868 = vpop.f32.mrf.mxu0
  %v5869 = vadd.f32 %v5327, %v5868
  %v5870 = vpop.f32.mrf.mxu0
  %v5871 = vand.u32 %v1530, 4294901760
  %5872 = vmatprep.mubr.f32.mxu0 %v5871
  %v5873 = vand.u32 %v1339, 4294901760
  %5874 = vmatmul.mubr.f32.gmra.mxu0 %v5873
  %v5875 = vpop.f32.mrf.mxu0
  %v5876 = vadd.f32 %v5334, %v5875
  %v5877 = vpop.f32.mrf.mxu0
  %v5878 = vand.u32 %v1533, 4294901760
  %5879 = vmatprep.mubr.f32.mxu0 %v5878
  %v5880 = vand.u32 %v1341, 4294901760
  %5881 = vmatmul.mubr.f32.gmra.mxu0 %v5880
  %v5882 = vpop.f32.mrf.mxu0
  %v5883 = vadd.f32 %v5341, %v5882
  %v5884 = vpop.f32.mrf.mxu0
  %v5885 = vand.u32 %v1536, 4294901760
  %5886 = vmatprep.mubr.f32.mxu0 %v5885
  %v5887 = vand.u32 %v1343, 4294901760
  %5888 = vmatmul.mubr.f32.gmra.mxu0 %v5887
  %v5889 = vpop.f32.mrf.mxu0
  %v5890 = vadd.f32 %v5348, %v5889
  %v5891 = vpop.f32.mrf.mxu0
  %5892 = vdwg.mxu0
  %vm5893 = vcmask 261120
  %v5894 = vsel %vm5893, %v5449, 0.0
  %5895 = vadd.xlane.f32.xlu0 %v5894
  %v5896 = vpop.xlane.xlu0 %5895
  %v5897 = vsel %vm5893, %v5456, 0.0
  %5898 = vadd.xlane.f32.xlu0 %v5897
  %v5899 = vpop.xlane.xlu0 %5898
  %v5900 = vsel %vm5893, %v5463, 0.0
  %5901 = vadd.xlane.f32.xlu0 %v5900
  %v5902 = vpop.xlane.xlu0 %5901
  %v5903 = vsel %vm5893, %v5470, 0.0
  %5904 = vadd.xlane.f32.xlu0 %v5903
  %v5905 = vpop.xlane.xlu0 %5904
  %v5906 = vsel %vm5893, %v5477, 0.0
  %5907 = vadd.xlane.f32.xlu0 %v5906
  %v5908 = vpop.xlane.xlu0 %5907
  %v5909 = vsel %vm5893, %v5484, 0.0
  %5910 = vadd.xlane.f32.xlu0 %v5909
  %v5911 = vpop.xlane.xlu0 %5910
  %v5912 = vsel %vm5893, %v5491, 0.0
  %5913 = vadd.xlane.f32.xlu0 %v5912
  %v5914 = vpop.xlane.xlu0 %5913
  %v5915 = vsel %vm5893, %v5498, 0.0
  %5916 = vadd.xlane.f32.xlu0 %v5915
  %v5917 = vpop.xlane.xlu0 %5916
  %v5918 = vsel %vm5893, %v5505, 0.0
  %5919 = vadd.xlane.f32.xlu0 %v5918
  %v5920 = vpop.xlane.xlu0 %5919
  %v5921 = vsel %vm5893, %v5512, 0.0
  %5922 = vadd.xlane.f32.xlu0 %v5921
  %v5923 = vpop.xlane.xlu0 %5922
  %v5924 = vsel %vm5893, %v5519, 0.0
  %5925 = vadd.xlane.f32.xlu0 %v5924
  %v5926 = vpop.xlane.xlu0 %5925
  %v5927 = vsel %vm5893, %v5526, 0.0
  %5928 = vadd.xlane.f32.xlu0 %v5927
  %v5929 = vpop.xlane.xlu0 %5928
  %v5930 = vsel %vm5893, %v5533, 0.0
  %5931 = vadd.xlane.f32.xlu0 %v5930
  %v5932 = vpop.xlane.xlu0 %5931
  %v5933 = vsel %vm5893, %v5540, 0.0
  %5934 = vadd.xlane.f32.xlu0 %v5933
  %v5935 = vpop.xlane.xlu0 %5934
  %v5936 = vsel %vm5893, %v5547, 0.0
  %5937 = vadd.xlane.f32.xlu0 %v5936
  %v5938 = vpop.xlane.xlu0 %5937
  %v5939 = vsel %vm5893, %v5554, 0.0
  %5940 = vadd.xlane.f32.xlu0 %v5939
  %v5941 = vpop.xlane.xlu0 %5940
  %v5942 = vsel %vm5893, %v5561, 0.0
  %5943 = vadd.xlane.f32.xlu0 %v5942
  %v5944 = vpop.xlane.xlu0 %5943
  %v5945 = vsel %vm5893, %v5568, 0.0
  %5946 = vadd.xlane.f32.xlu0 %v5945
  %v5947 = vpop.xlane.xlu0 %5946
  %v5948 = vsel %vm5893, %v5575, 0.0
  %5949 = vadd.xlane.f32.xlu0 %v5948
  %v5950 = vpop.xlane.xlu0 %5949
  %v5951 = vsel %vm5893, %v5582, 0.0
  %5952 = vadd.xlane.f32.xlu0 %v5951
  %v5953 = vpop.xlane.xlu0 %5952
  %v5954 = vsel %vm5893, %v5589, 0.0
  %5955 = vadd.xlane.f32.xlu0 %v5954
  %v5956 = vpop.xlane.xlu0 %5955
  %v5957 = vsel %vm5893, %v5596, 0.0
  %5958 = vadd.xlane.f32.xlu0 %v5957
  %v5959 = vpop.xlane.xlu0 %5958
  %v5960 = vsel %vm5893, %v5603, 0.0
  %5961 = vadd.xlane.f32.xlu0 %v5960
  %v5962 = vpop.xlane.xlu0 %5961
  %v5963 = vsel %vm5893, %v5610, 0.0
  %5964 = vadd.xlane.f32.xlu0 %v5963
  %v5965 = vpop.xlane.xlu0 %5964
  %v5966 = vsel %vm5893, %v5617, 0.0
  %5967 = vadd.xlane.f32.xlu0 %v5966
  %v5968 = vpop.xlane.xlu0 %5967
  %v5969 = vsel %vm5893, %v5624, 0.0
  %5970 = vadd.xlane.f32.xlu0 %v5969
  %v5971 = vpop.xlane.xlu0 %5970
  %v5972 = vsel %vm5893, %v5631, 0.0
  %5973 = vadd.xlane.f32.xlu0 %v5972
  %v5974 = vpop.xlane.xlu0 %5973
  %v5975 = vsel %vm5893, %v5638, 0.0
  %5976 = vadd.xlane.f32.xlu0 %v5975
  %v5977 = vpop.xlane.xlu0 %5976
  %v5978 = vsel %vm5893, %v5645, 0.0
  %5979 = vadd.xlane.f32.xlu0 %v5978
  %v5980 = vpop.xlane.xlu0 %5979
  %v5981 = vsel %vm5893, %v5652, 0.0
  %5982 = vadd.xlane.f32.xlu0 %v5981
  %v5983 = vpop.xlane.xlu0 %5982
  %v5984 = vsel %vm5893, %v5659, 0.0
  %5985 = vadd.xlane.f32.xlu0 %v5984
  %v5986 = vpop.xlane.xlu0 %5985
  %v5987 = vsel %vm5893, %v5666, 0.0
  %5988 = vadd.xlane.f32.xlu0 %v5987
  %v5989 = vpop.xlane.xlu0 %5988
  %v5990 = vsel %vm5893, %v5673, 0.0
  %5991 = vadd.xlane.f32.xlu0 %v5990
  %v5992 = vpop.xlane.xlu0 %5991
  %v5993 = vsel %vm5893, %v5680, 0.0
  %5994 = vadd.xlane.f32.xlu0 %v5993
  %v5995 = vpop.xlane.xlu0 %5994
  %v5996 = vsel %vm5893, %v5687, 0.0
  %5997 = vadd.xlane.f32.xlu0 %v5996
  %v5998 = vpop.xlane.xlu0 %5997
  %v5999 = vsel %vm5893, %v5694, 0.0
  %6000 = vadd.xlane.f32.xlu0 %v5999
  %v6001 = vpop.xlane.xlu0 %6000
  %v6002 = vsel %vm5893, %v5701, 0.0
  %6003 = vadd.xlane.f32.xlu0 %v6002
  %v6004 = vpop.xlane.xlu0 %6003
  %v6005 = vsel %vm5893, %v5708, 0.0
  %6006 = vadd.xlane.f32.xlu0 %v6005
  %v6007 = vpop.xlane.xlu0 %6006
  %v6008 = vsel %vm5893, %v5715, 0.0
  %6009 = vadd.xlane.f32.xlu0 %v6008
  %v6010 = vpop.xlane.xlu0 %6009
  %v6011 = vsel %vm5893, %v5722, 0.0
  %6012 = vadd.xlane.f32.xlu0 %v6011
  %v6013 = vpop.xlane.xlu0 %6012
  %v6014 = vsel %vm5893, %v5729, 0.0
  %6015 = vadd.xlane.f32.xlu0 %v6014
  %v6016 = vpop.xlane.xlu0 %6015
  %v6017 = vsel %vm5893, %v5736, 0.0
  %6018 = vadd.xlane.f32.xlu0 %v6017
  %v6019 = vpop.xlane.xlu0 %6018
  %v6020 = vsel %vm5893, %v5743, 0.0
  %6021 = vadd.xlane.f32.xlu0 %v6020
  %v6022 = vpop.xlane.xlu0 %6021
  %v6023 = vsel %vm5893, %v5750, 0.0
  %6024 = vadd.xlane.f32.xlu0 %v6023
  %v6025 = vpop.xlane.xlu0 %6024
  %v6026 = vsel %vm5893, %v5757, 0.0
  %6027 = vadd.xlane.f32.xlu0 %v6026
  %v6028 = vpop.xlane.xlu0 %6027
  %v6029 = vsel %vm5893, %v5764, 0.0
  %6030 = vadd.xlane.f32.xlu0 %v6029
  %v6031 = vpop.xlane.xlu0 %6030
  %v6032 = vsel %vm5893, %v5771, 0.0
  %6033 = vadd.xlane.f32.xlu0 %v6032
  %v6034 = vpop.xlane.xlu0 %6033
  %v6035 = vsel %vm5893, %v5778, 0.0
  %6036 = vadd.xlane.f32.xlu0 %v6035
  %v6037 = vpop.xlane.xlu0 %6036
  %v6038 = vsel %vm5893, %v5785, 0.0
  %6039 = vadd.xlane.f32.xlu0 %v6038
  %v6040 = vpop.xlane.xlu0 %6039
  %v6041 = vsel %vm5893, %v5792, 0.0
  %6042 = vadd.xlane.f32.xlu0 %v6041
  %v6043 = vpop.xlane.xlu0 %6042
  %v6044 = vsel %vm5893, %v5799, 0.0
  %6045 = vadd.xlane.f32.xlu0 %v6044
  %v6046 = vpop.xlane.xlu0 %6045
  %v6047 = vsel %vm5893, %v5806, 0.0
  %6048 = vadd.xlane.f32.xlu0 %v6047
  %v6049 = vpop.xlane.xlu0 %6048
  %v6050 = vsel %vm5893, %v5813, 0.0
  %6051 = vadd.xlane.f32.xlu0 %v6050
  %v6052 = vpop.xlane.xlu0 %6051
  %v6053 = vsel %vm5893, %v5820, 0.0
  %6054 = vadd.xlane.f32.xlu0 %v6053
  %v6055 = vpop.xlane.xlu0 %6054
  %v6056 = vsel %vm5893, %v5827, 0.0
  %6057 = vadd.xlane.f32.xlu0 %v6056
  %v6058 = vpop.xlane.xlu0 %6057
  %v6059 = vsel %vm5893, %v5834, 0.0
  %6060 = vadd.xlane.f32.xlu0 %v6059
  %v6061 = vpop.xlane.xlu0 %6060
  %v6062 = vsel %vm5893, %v5841, 0.0
  %6063 = vadd.xlane.f32.xlu0 %v6062
  %v6064 = vpop.xlane.xlu0 %6063
  %v6065 = vsel %vm5893, %v5848, 0.0
  %6066 = vadd.xlane.f32.xlu0 %v6065
  %v6067 = vpop.xlane.xlu0 %6066
  %v6068 = vsel %vm5893, %v5855, 0.0
  %6069 = vadd.xlane.f32.xlu0 %v6068
  %v6070 = vpop.xlane.xlu0 %6069
  %v6071 = vsel %vm5893, %v5862, 0.0
  %6072 = vadd.xlane.f32.xlu0 %v6071
  %v6073 = vpop.xlane.xlu0 %6072
  %v6074 = vsel %vm5893, %v5869, 0.0
  %6075 = vadd.xlane.f32.xlu0 %v6074
  %v6076 = vpop.xlane.xlu0 %6075
  %v6077 = vsel %vm5893, %v5876, 0.0
  %6078 = vadd.xlane.f32.xlu0 %v6077
  %v6079 = vpop.xlane.xlu0 %6078
  %v6080 = vsel %vm5893, %v5883, 0.0
  %6081 = vadd.xlane.f32.xlu0 %v6080
  %v6082 = vpop.xlane.xlu0 %6081
  %v6083 = vsel %vm5893, %v5890, 0.0
  %6084 = vadd.xlane.f32.xlu0 %v6083
  %v6085 = vpop.xlane.xlu0 %6084
  %v6086 = vmul.f32 %v5896, 0.03125
  %v6087 = vmul.f32 %v5899, 0.03125
  %v6088 = vmul.f32 %v5902, 0.03125
  %v6089 = vmul.f32 %v5905, 0.03125
  %v6090 = vmul.f32 %v5908, 0.03125
  %v6091 = vmul.f32 %v5911, 0.03125
  %v6092 = vmul.f32 %v5914, 0.03125
  %v6093 = vmul.f32 %v5917, 0.03125
  %v6094 = vmul.f32 %v5920, 0.03125
  %v6095 = vmul.f32 %v5923, 0.03125
  %v6096 = vmul.f32 %v5926, 0.03125
  %v6097 = vmul.f32 %v5929, 0.03125
  %v6098 = vmul.f32 %v5932, 0.03125
  %v6099 = vmul.f32 %v5935, 0.03125
  %v6100 = vmul.f32 %v5938, 0.03125
  %v6101 = vmul.f32 %v5941, 0.03125
  %v6102 = vmul.f32 %v5944, 0.03125
  %v6103 = vmul.f32 %v5947, 0.03125
  %v6104 = vmul.f32 %v5950, 0.03125
  %v6105 = vmul.f32 %v5953, 0.03125
  %v6106 = vmul.f32 %v5956, 0.03125
  %v6107 = vmul.f32 %v5959, 0.03125
  %v6108 = vmul.f32 %v5962, 0.03125
  %v6109 = vmul.f32 %v5965, 0.03125
  %v6110 = vmul.f32 %v5968, 0.03125
  %v6111 = vmul.f32 %v5971, 0.03125
  %v6112 = vmul.f32 %v5974, 0.03125
  %v6113 = vmul.f32 %v5977, 0.03125
  %v6114 = vmul.f32 %v5980, 0.03125
  %v6115 = vmul.f32 %v5983, 0.03125
  %v6116 = vmul.f32 %v5986, 0.03125
  %v6117 = vmul.f32 %v5989, 0.03125
  %v6118 = vmul.f32 %v5992, 0.03125
  %v6119 = vmul.f32 %v5995, 0.03125
  %v6120 = vmul.f32 %v5998, 0.03125
  %v6121 = vmul.f32 %v6001, 0.03125
  %v6122 = vmul.f32 %v6004, 0.03125
  %v6123 = vmul.f32 %v6007, 0.03125
  %v6124 = vmul.f32 %v6010, 0.03125
  %v6125 = vmul.f32 %v6013, 0.03125
  %v6126 = vmul.f32 %v6016, 0.03125
  %v6127 = vmul.f32 %v6019, 0.03125
  %v6128 = vmul.f32 %v6022, 0.03125
  %v6129 = vmul.f32 %v6025, 0.03125
  %v6130 = vmul.f32 %v6028, 0.03125
  %v6131 = vmul.f32 %v6031, 0.03125
  %v6132 = vmul.f32 %v6034, 0.03125
  %v6133 = vmul.f32 %v6037, 0.03125
  %v6134 = vmul.f32 %v6040, 0.03125
  %v6135 = vmul.f32 %v6043, 0.03125
  %v6136 = vmul.f32 %v6046, 0.03125
  %v6137 = vmul.f32 %v6049, 0.03125
  %v6138 = vmul.f32 %v6052, 0.03125
  %v6139 = vmul.f32 %v6055, 0.03125
  %v6140 = vmul.f32 %v6058, 0.03125
  %v6141 = vmul.f32 %v6061, 0.03125
  %v6142 = vmul.f32 %v6064, 0.03125
  %v6143 = vmul.f32 %v6067, 0.03125
  %v6144 = vmul.f32 %v6070, 0.03125
  %v6145 = vmul.f32 %v6073, 0.03125
  %v6146 = vmul.f32 %v6076, 0.03125
  %v6147 = vmul.f32 %v6079, 0.03125
  %v6148 = vmul.f32 %v6082, 0.03125
  %v6149 = vmul.f32 %v6085, 0.03125
  %v6150 = vsub.f32 %v5449, %v6086
  %v6151 = vsub.f32 %v5456, %v6087
  %v6152 = vsub.f32 %v5463, %v6088
  %v6153 = vsub.f32 %v5470, %v6089
  %v6154 = vsub.f32 %v5477, %v6090
  %v6155 = vsub.f32 %v5484, %v6091
  %v6156 = vsub.f32 %v5491, %v6092
  %v6157 = vsub.f32 %v5498, %v6093
  %v6158 = vsub.f32 %v5505, %v6094
  %v6159 = vsub.f32 %v5512, %v6095
  %v6160 = vsub.f32 %v5519, %v6096
  %v6161 = vsub.f32 %v5526, %v6097
  %v6162 = vsub.f32 %v5533, %v6098
  %v6163 = vsub.f32 %v5540, %v6099
  %v6164 = vsub.f32 %v5547, %v6100
  %v6165 = vsub.f32 %v5554, %v6101
  %v6166 = vsub.f32 %v5561, %v6102
  %v6167 = vsub.f32 %v5568, %v6103
  %v6168 = vsub.f32 %v5575, %v6104
  %v6169 = vsub.f32 %v5582, %v6105
  %v6170 = vsub.f32 %v5589, %v6106
  %v6171 = vsub.f32 %v5596, %v6107
  %v6172 = vsub.f32 %v5603, %v6108
  %v6173 = vsub.f32 %v5610, %v6109
  %v6174 = vsub.f32 %v5617, %v6110
  %v6175 = vsub.f32 %v5624, %v6111
  %v6176 = vsub.f32 %v5631, %v6112
  %v6177 = vsub.f32 %v5638, %v6113
  %v6178 = vsub.f32 %v5645, %v6114
  %v6179 = vsub.f32 %v5652, %v6115
  %v6180 = vsub.f32 %v5659, %v6116
  %v6181 = vsub.f32 %v5666, %v6117
  %v6182 = vsub.f32 %v5673, %v6118
  %v6183 = vsub.f32 %v5680, %v6119
  %v6184 = vsub.f32 %v5687, %v6120
  %v6185 = vsub.f32 %v5694, %v6121
  %v6186 = vsub.f32 %v5701, %v6122
  %v6187 = vsub.f32 %v5708, %v6123
  %v6188 = vsub.f32 %v5715, %v6124
  %v6189 = vsub.f32 %v5722, %v6125
  %v6190 = vsub.f32 %v5729, %v6126
  %v6191 = vsub.f32 %v5736, %v6127
  %v6192 = vsub.f32 %v5743, %v6128
  %v6193 = vsub.f32 %v5750, %v6129
  %v6194 = vsub.f32 %v5757, %v6130
  %v6195 = vsub.f32 %v5764, %v6131
  %v6196 = vsub.f32 %v5771, %v6132
  %v6197 = vsub.f32 %v5778, %v6133
  %v6198 = vsub.f32 %v5785, %v6134
  %v6199 = vsub.f32 %v5792, %v6135
  %v6200 = vsub.f32 %v5799, %v6136
  %v6201 = vsub.f32 %v5806, %v6137
  %v6202 = vsub.f32 %v5813, %v6138
  %v6203 = vsub.f32 %v5820, %v6139
  %v6204 = vsub.f32 %v5827, %v6140
  %v6205 = vsub.f32 %v5834, %v6141
  %v6206 = vsub.f32 %v5841, %v6142
  %v6207 = vsub.f32 %v5848, %v6143
  %v6208 = vsub.f32 %v5855, %v6144
  %v6209 = vsub.f32 %v5862, %v6145
  %v6210 = vsub.f32 %v5869, %v6146
  %v6211 = vsub.f32 %v5876, %v6147
  %v6212 = vsub.f32 %v5883, %v6148
  %v6213 = vsub.f32 %v5890, %v6149
  %v6214 = vmul.f32 %v6150, %v6150
  %v6215 = vmul.f32 %v6151, %v6151
  %v6216 = vmul.f32 %v6152, %v6152
  %v6217 = vmul.f32 %v6153, %v6153
  %v6218 = vmul.f32 %v6154, %v6154
  %v6219 = vmul.f32 %v6155, %v6155
  %v6220 = vmul.f32 %v6156, %v6156
  %v6221 = vmul.f32 %v6157, %v6157
  %v6222 = vmul.f32 %v6158, %v6158
  %v6223 = vmul.f32 %v6159, %v6159
  %v6224 = vmul.f32 %v6160, %v6160
  %v6225 = vmul.f32 %v6161, %v6161
  %v6226 = vmul.f32 %v6162, %v6162
  %v6227 = vmul.f32 %v6163, %v6163
  %v6228 = vmul.f32 %v6164, %v6164
  %v6229 = vmul.f32 %v6165, %v6165
  %v6230 = vmul.f32 %v6166, %v6166
  %v6231 = vmul.f32 %v6167, %v6167
  %v6232 = vmul.f32 %v6168, %v6168
  %v6233 = vmul.f32 %v6169, %v6169
  %v6234 = vmul.f32 %v6170, %v6170
  %v6235 = vmul.f32 %v6171, %v6171
  %v6236 = vmul.f32 %v6172, %v6172
  %v6237 = vmul.f32 %v6173, %v6173
  %v6238 = vmul.f32 %v6174, %v6174
  %v6239 = vmul.f32 %v6175, %v6175
  %v6240 = vmul.f32 %v6176, %v6176
  %v6241 = vmul.f32 %v6177, %v6177
  %v6242 = vmul.f32 %v6178, %v6178
  %v6243 = vmul.f32 %v6179, %v6179
  %v6244 = vmul.f32 %v6180, %v6180
  %v6245 = vmul.f32 %v6181, %v6181
  %v6246 = vmul.f32 %v6182, %v6182
  %v6247 = vmul.f32 %v6183, %v6183
  %v6248 = vmul.f32 %v6184, %v6184
  %v6249 = vmul.f32 %v6185, %v6185
  %v6250 = vmul.f32 %v6186, %v6186
  %v6251 = vmul.f32 %v6187, %v6187
  %v6252 = vmul.f32 %v6188, %v6188
  %v6253 = vmul.f32 %v6189, %v6189
  %v6254 = vmul.f32 %v6190, %v6190
  %v6255 = vmul.f32 %v6191, %v6191
  %v6256 = vmul.f32 %v6192, %v6192
  %v6257 = vmul.f32 %v6193, %v6193
  %v6258 = vmul.f32 %v6194, %v6194
  %v6259 = vmul.f32 %v6195, %v6195
  %v6260 = vmul.f32 %v6196, %v6196
  %v6261 = vmul.f32 %v6197, %v6197
  %v6262 = vmul.f32 %v6198, %v6198
  %v6263 = vmul.f32 %v6199, %v6199
  %v6264 = vmul.f32 %v6200, %v6200
  %v6265 = vmul.f32 %v6201, %v6201
  %v6266 = vmul.f32 %v6202, %v6202
  %v6267 = vmul.f32 %v6203, %v6203
  %v6268 = vmul.f32 %v6204, %v6204
  %v6269 = vmul.f32 %v6205, %v6205
  %v6270 = vmul.f32 %v6206, %v6206
  %v6271 = vmul.f32 %v6207, %v6207
  %v6272 = vmul.f32 %v6208, %v6208
  %v6273 = vmul.f32 %v6209, %v6209
  %v6274 = vmul.f32 %v6210, %v6210
  %v6275 = vmul.f32 %v6211, %v6211
  %v6276 = vmul.f32 %v6212, %v6212
  %v6277 = vmul.f32 %v6213, %v6213
  %v6278 = vsel %vm5893, %v6214, 0.0
  %6279 = vadd.xlane.f32.xlu0 %v6278
  %v6280 = vpop.xlane.xlu0 %6279
  %v6281 = vsel %vm5893, %v6215, 0.0
  %6282 = vadd.xlane.f32.xlu0 %v6281
  %v6283 = vpop.xlane.xlu0 %6282
  %v6284 = vsel %vm5893, %v6216, 0.0
  %6285 = vadd.xlane.f32.xlu0 %v6284
  %v6286 = vpop.xlane.xlu0 %6285
  %v6287 = vsel %vm5893, %v6217, 0.0
  %6288 = vadd.xlane.f32.xlu0 %v6287
  %v6289 = vpop.xlane.xlu0 %6288
  %v6290 = vsel %vm5893, %v6218, 0.0
  %6291 = vadd.xlane.f32.xlu0 %v6290
  %v6292 = vpop.xlane.xlu0 %6291
  %v6293 = vsel %vm5893, %v6219, 0.0
  %6294 = vadd.xlane.f32.xlu0 %v6293
  %v6295 = vpop.xlane.xlu0 %6294
  %v6296 = vsel %vm5893, %v6220, 0.0
  %6297 = vadd.xlane.f32.xlu0 %v6296
  %v6298 = vpop.xlane.xlu0 %6297
  %v6299 = vsel %vm5893, %v6221, 0.0
  %6300 = vadd.xlane.f32.xlu0 %v6299
  %v6301 = vpop.xlane.xlu0 %6300
  %v6302 = vsel %vm5893, %v6222, 0.0
  %6303 = vadd.xlane.f32.xlu0 %v6302
  %v6304 = vpop.xlane.xlu0 %6303
  %v6305 = vsel %vm5893, %v6223, 0.0
  %6306 = vadd.xlane.f32.xlu0 %v6305
  %v6307 = vpop.xlane.xlu0 %6306
  %v6308 = vsel %vm5893, %v6224, 0.0
  %6309 = vadd.xlane.f32.xlu0 %v6308
  %v6310 = vpop.xlane.xlu0 %6309
  %v6311 = vsel %vm5893, %v6225, 0.0
  %6312 = vadd.xlane.f32.xlu0 %v6311
  %v6313 = vpop.xlane.xlu0 %6312
  %v6314 = vsel %vm5893, %v6226, 0.0
  %6315 = vadd.xlane.f32.xlu0 %v6314
  %v6316 = vpop.xlane.xlu0 %6315
  %v6317 = vsel %vm5893, %v6227, 0.0
  %6318 = vadd.xlane.f32.xlu0 %v6317
  %v6319 = vpop.xlane.xlu0 %6318
  %v6320 = vsel %vm5893, %v6228, 0.0
  %6321 = vadd.xlane.f32.xlu0 %v6320
  %v6322 = vpop.xlane.xlu0 %6321
  %v6323 = vsel %vm5893, %v6229, 0.0
  %6324 = vadd.xlane.f32.xlu0 %v6323
  %v6325 = vpop.xlane.xlu0 %6324
  %v6326 = vsel %vm5893, %v6230, 0.0
  %6327 = vadd.xlane.f32.xlu0 %v6326
  %v6328 = vpop.xlane.xlu0 %6327
  %v6329 = vsel %vm5893, %v6231, 0.0
  %6330 = vadd.xlane.f32.xlu0 %v6329
  %v6331 = vpop.xlane.xlu0 %6330
  %v6332 = vsel %vm5893, %v6232, 0.0
  %6333 = vadd.xlane.f32.xlu0 %v6332
  %v6334 = vpop.xlane.xlu0 %6333
  %v6335 = vsel %vm5893, %v6233, 0.0
  %6336 = vadd.xlane.f32.xlu0 %v6335
  %v6337 = vpop.xlane.xlu0 %6336
  %v6338 = vsel %vm5893, %v6234, 0.0
  %6339 = vadd.xlane.f32.xlu0 %v6338
  %v6340 = vpop.xlane.xlu0 %6339
  %v6341 = vsel %vm5893, %v6235, 0.0
  %6342 = vadd.xlane.f32.xlu0 %v6341
  %v6343 = vpop.xlane.xlu0 %6342
  %v6344 = vsel %vm5893, %v6236, 0.0
  %6345 = vadd.xlane.f32.xlu0 %v6344
  %v6346 = vpop.xlane.xlu0 %6345
  %v6347 = vsel %vm5893, %v6237, 0.0
  %6348 = vadd.xlane.f32.xlu0 %v6347
  %v6349 = vpop.xlane.xlu0 %6348
  %v6350 = vsel %vm5893, %v6238, 0.0
  %6351 = vadd.xlane.f32.xlu0 %v6350
  %v6352 = vpop.xlane.xlu0 %6351
  %v6353 = vsel %vm5893, %v6239, 0.0
  %6354 = vadd.xlane.f32.xlu0 %v6353
  %v6355 = vpop.xlane.xlu0 %6354
  %v6356 = vsel %vm5893, %v6240, 0.0
  %6357 = vadd.xlane.f32.xlu0 %v6356
  %v6358 = vpop.xlane.xlu0 %6357
  %v6359 = vsel %vm5893, %v6241, 0.0
  %6360 = vadd.xlane.f32.xlu0 %v6359
  %v6361 = vpop.xlane.xlu0 %6360
  %v6362 = vsel %vm5893, %v6242, 0.0
  %6363 = vadd.xlane.f32.xlu0 %v6362
  %v6364 = vpop.xlane.xlu0 %6363
  %v6365 = vsel %vm5893, %v6243, 0.0
  %6366 = vadd.xlane.f32.xlu0 %v6365
  %v6367 = vpop.xlane.xlu0 %6366
  %v6368 = vsel %vm5893, %v6244, 0.0
  %6369 = vadd.xlane.f32.xlu0 %v6368
  %v6370 = vpop.xlane.xlu0 %6369
  %v6371 = vsel %vm5893, %v6245, 0.0
  %6372 = vadd.xlane.f32.xlu0 %v6371
  %v6373 = vpop.xlane.xlu0 %6372
  %v6374 = vsel %vm5893, %v6246, 0.0
  %6375 = vadd.xlane.f32.xlu0 %v6374
  %v6376 = vpop.xlane.xlu0 %6375
  %v6377 = vsel %vm5893, %v6247, 0.0
  %6378 = vadd.xlane.f32.xlu0 %v6377
  %v6379 = vpop.xlane.xlu0 %6378
  %v6380 = vsel %vm5893, %v6248, 0.0
  %6381 = vadd.xlane.f32.xlu0 %v6380
  %v6382 = vpop.xlane.xlu0 %6381
  %v6383 = vsel %vm5893, %v6249, 0.0
  %6384 = vadd.xlane.f32.xlu0 %v6383
  %v6385 = vpop.xlane.xlu0 %6384
  %v6386 = vsel %vm5893, %v6250, 0.0
  %6387 = vadd.xlane.f32.xlu0 %v6386
  %v6388 = vpop.xlane.xlu0 %6387
  %v6389 = vsel %vm5893, %v6251, 0.0
  %6390 = vadd.xlane.f32.xlu0 %v6389
  %v6391 = vpop.xlane.xlu0 %6390
  %v6392 = vsel %vm5893, %v6252, 0.0
  %6393 = vadd.xlane.f32.xlu0 %v6392
  %v6394 = vpop.xlane.xlu0 %6393
  %v6395 = vsel %vm5893, %v6253, 0.0
  %6396 = vadd.xlane.f32.xlu0 %v6395
  %v6397 = vpop.xlane.xlu0 %6396
  %v6398 = vsel %vm5893, %v6254, 0.0
  %6399 = vadd.xlane.f32.xlu0 %v6398
  %v6400 = vpop.xlane.xlu0 %6399
  %v6401 = vsel %vm5893, %v6255, 0.0
  %6402 = vadd.xlane.f32.xlu0 %v6401
  %v6403 = vpop.xlane.xlu0 %6402
  %v6404 = vsel %vm5893, %v6256, 0.0
  %6405 = vadd.xlane.f32.xlu0 %v6404
  %v6406 = vpop.xlane.xlu0 %6405
  %v6407 = vsel %vm5893, %v6257, 0.0
  %6408 = vadd.xlane.f32.xlu0 %v6407
  %v6409 = vpop.xlane.xlu0 %6408
  %v6410 = vsel %vm5893, %v6258, 0.0
  %6411 = vadd.xlane.f32.xlu0 %v6410
  %v6412 = vpop.xlane.xlu0 %6411
  %v6413 = vsel %vm5893, %v6259, 0.0
  %6414 = vadd.xlane.f32.xlu0 %v6413
  %v6415 = vpop.xlane.xlu0 %6414
  %v6416 = vsel %vm5893, %v6260, 0.0
  %6417 = vadd.xlane.f32.xlu0 %v6416
  %v6418 = vpop.xlane.xlu0 %6417
  %v6419 = vsel %vm5893, %v6261, 0.0
  %6420 = vadd.xlane.f32.xlu0 %v6419
  %v6421 = vpop.xlane.xlu0 %6420
  %v6422 = vsel %vm5893, %v6262, 0.0
  %6423 = vadd.xlane.f32.xlu0 %v6422
  %v6424 = vpop.xlane.xlu0 %6423
  %v6425 = vsel %vm5893, %v6263, 0.0
  %6426 = vadd.xlane.f32.xlu0 %v6425
  %v6427 = vpop.xlane.xlu0 %6426
  %v6428 = vsel %vm5893, %v6264, 0.0
  %6429 = vadd.xlane.f32.xlu0 %v6428
  %v6430 = vpop.xlane.xlu0 %6429
  %v6431 = vsel %vm5893, %v6265, 0.0
  %6432 = vadd.xlane.f32.xlu0 %v6431
  %v6433 = vpop.xlane.xlu0 %6432
  %v6434 = vsel %vm5893, %v6266, 0.0
  %6435 = vadd.xlane.f32.xlu0 %v6434
  %v6436 = vpop.xlane.xlu0 %6435
  %v6437 = vsel %vm5893, %v6267, 0.0
  %6438 = vadd.xlane.f32.xlu0 %v6437
  %v6439 = vpop.xlane.xlu0 %6438
  %v6440 = vsel %vm5893, %v6268, 0.0
  %6441 = vadd.xlane.f32.xlu0 %v6440
  %v6442 = vpop.xlane.xlu0 %6441
  %v6443 = vsel %vm5893, %v6269, 0.0
  %6444 = vadd.xlane.f32.xlu0 %v6443
  %v6445 = vpop.xlane.xlu0 %6444
  %v6446 = vsel %vm5893, %v6270, 0.0
  %6447 = vadd.xlane.f32.xlu0 %v6446
  %v6448 = vpop.xlane.xlu0 %6447
  %v6449 = vsel %vm5893, %v6271, 0.0
  %6450 = vadd.xlane.f32.xlu0 %v6449
  %v6451 = vpop.xlane.xlu0 %6450
  %v6452 = vsel %vm5893, %v6272, 0.0
  %6453 = vadd.xlane.f32.xlu0 %v6452
  %v6454 = vpop.xlane.xlu0 %6453
  %v6455 = vsel %vm5893, %v6273, 0.0
  %6456 = vadd.xlane.f32.xlu0 %v6455
  %v6457 = vpop.xlane.xlu0 %6456
  %v6458 = vsel %vm5893, %v6274, 0.0
  %6459 = vadd.xlane.f32.xlu0 %v6458
  %v6460 = vpop.xlane.xlu0 %6459
  %v6461 = vsel %vm5893, %v6275, 0.0
  %6462 = vadd.xlane.f32.xlu0 %v6461
  %v6463 = vpop.xlane.xlu0 %6462
  %v6464 = vsel %vm5893, %v6276, 0.0
  %6465 = vadd.xlane.f32.xlu0 %v6464
  %v6466 = vpop.xlane.xlu0 %6465
  %v6467 = vsel %vm5893, %v6277, 0.0
  %6468 = vadd.xlane.f32.xlu0 %v6467
  %v6469 = vpop.xlane.xlu0 %6468
  %v6470 = vmul.f32 %v6280, 0.03125
  %v6471 = vmul.f32 %v6283, 0.03125
  %v6472 = vmul.f32 %v6286, 0.03125
  %v6473 = vmul.f32 %v6289, 0.03125
  %v6474 = vmul.f32 %v6292, 0.03125
  %v6475 = vmul.f32 %v6295, 0.03125
  %v6476 = vmul.f32 %v6298, 0.03125
  %v6477 = vmul.f32 %v6301, 0.03125
  %v6478 = vmul.f32 %v6304, 0.03125
  %v6479 = vmul.f32 %v6307, 0.03125
  %v6480 = vmul.f32 %v6310, 0.03125
  %v6481 = vmul.f32 %v6313, 0.03125
  %v6482 = vmul.f32 %v6316, 0.03125
  %v6483 = vmul.f32 %v6319, 0.03125
  %v6484 = vmul.f32 %v6322, 0.03125
  %v6485 = vmul.f32 %v6325, 0.03125
  %v6486 = vmul.f32 %v6328, 0.03125
  %v6487 = vmul.f32 %v6331, 0.03125
  %v6488 = vmul.f32 %v6334, 0.03125
  %v6489 = vmul.f32 %v6337, 0.03125
  %v6490 = vmul.f32 %v6340, 0.03125
  %v6491 = vmul.f32 %v6343, 0.03125
  %v6492 = vmul.f32 %v6346, 0.03125
  %v6493 = vmul.f32 %v6349, 0.03125
  %v6494 = vmul.f32 %v6352, 0.03125
  %v6495 = vmul.f32 %v6355, 0.03125
  %v6496 = vmul.f32 %v6358, 0.03125
  %v6497 = vmul.f32 %v6361, 0.03125
  %v6498 = vmul.f32 %v6364, 0.03125
  %v6499 = vmul.f32 %v6367, 0.03125
  %v6500 = vmul.f32 %v6370, 0.03125
  %v6501 = vmul.f32 %v6373, 0.03125
  %v6502 = vmul.f32 %v6376, 0.03125
  %v6503 = vmul.f32 %v6379, 0.03125
  %v6504 = vmul.f32 %v6382, 0.03125
  %v6505 = vmul.f32 %v6385, 0.03125
  %v6506 = vmul.f32 %v6388, 0.03125
  %v6507 = vmul.f32 %v6391, 0.03125
  %v6508 = vmul.f32 %v6394, 0.03125
  %v6509 = vmul.f32 %v6397, 0.03125
  %v6510 = vmul.f32 %v6400, 0.03125
  %v6511 = vmul.f32 %v6403, 0.03125
  %v6512 = vmul.f32 %v6406, 0.03125
  %v6513 = vmul.f32 %v6409, 0.03125
  %v6514 = vmul.f32 %v6412, 0.03125
  %v6515 = vmul.f32 %v6415, 0.03125
  %v6516 = vmul.f32 %v6418, 0.03125
  %v6517 = vmul.f32 %v6421, 0.03125
  %v6518 = vmul.f32 %v6424, 0.03125
  %v6519 = vmul.f32 %v6427, 0.03125
  %v6520 = vmul.f32 %v6430, 0.03125
  %v6521 = vmul.f32 %v6433, 0.03125
  %v6522 = vmul.f32 %v6436, 0.03125
  %v6523 = vmul.f32 %v6439, 0.03125
  %v6524 = vmul.f32 %v6442, 0.03125
  %v6525 = vmul.f32 %v6445, 0.03125
  %v6526 = vmul.f32 %v6448, 0.03125
  %v6527 = vmul.f32 %v6451, 0.03125
  %v6528 = vmul.f32 %v6454, 0.03125
  %v6529 = vmul.f32 %v6457, 0.03125
  %v6530 = vmul.f32 %v6460, 0.03125
  %v6531 = vmul.f32 %v6463, 0.03125
  %v6532 = vmul.f32 %v6466, 0.03125
  %v6533 = vmul.f32 %v6469, 0.03125
  %v6534 = vadd.f32 %v6470, 1e-12
  %v6535 = vadd.f32 %v6471, 1e-12
  %v6536 = vadd.f32 %v6472, 1e-12
  %v6537 = vadd.f32 %v6473, 1e-12
  %v6538 = vadd.f32 %v6474, 1e-12
  %v6539 = vadd.f32 %v6475, 1e-12
  %v6540 = vadd.f32 %v6476, 1e-12
  %v6541 = vadd.f32 %v6477, 1e-12
  %v6542 = vadd.f32 %v6478, 1e-12
  %v6543 = vadd.f32 %v6479, 1e-12
  %v6544 = vadd.f32 %v6480, 1e-12
  %v6545 = vadd.f32 %v6481, 1e-12
  %v6546 = vadd.f32 %v6482, 1e-12
  %v6547 = vadd.f32 %v6483, 1e-12
  %v6548 = vadd.f32 %v6484, 1e-12
  %v6549 = vadd.f32 %v6485, 1e-12
  %v6550 = vadd.f32 %v6486, 1e-12
  %v6551 = vadd.f32 %v6487, 1e-12
  %v6552 = vadd.f32 %v6488, 1e-12
  %v6553 = vadd.f32 %v6489, 1e-12
  %v6554 = vadd.f32 %v6490, 1e-12
  %v6555 = vadd.f32 %v6491, 1e-12
  %v6556 = vadd.f32 %v6492, 1e-12
  %v6557 = vadd.f32 %v6493, 1e-12
  %v6558 = vadd.f32 %v6494, 1e-12
  %v6559 = vadd.f32 %v6495, 1e-12
  %v6560 = vadd.f32 %v6496, 1e-12
  %v6561 = vadd.f32 %v6497, 1e-12
  %v6562 = vadd.f32 %v6498, 1e-12
  %v6563 = vadd.f32 %v6499, 1e-12
  %v6564 = vadd.f32 %v6500, 1e-12
  %v6565 = vadd.f32 %v6501, 1e-12
  %v6566 = vadd.f32 %v6502, 1e-12
  %v6567 = vadd.f32 %v6503, 1e-12
  %v6568 = vadd.f32 %v6504, 1e-12
  %v6569 = vadd.f32 %v6505, 1e-12
  %v6570 = vadd.f32 %v6506, 1e-12
  %v6571 = vadd.f32 %v6507, 1e-12
  %v6572 = vadd.f32 %v6508, 1e-12
  %v6573 = vadd.f32 %v6509, 1e-12
  %v6574 = vadd.f32 %v6510, 1e-12
  %v6575 = vadd.f32 %v6511, 1e-12
  %v6576 = vadd.f32 %v6512, 1e-12
  %v6577 = vadd.f32 %v6513, 1e-12
  %v6578 = vadd.f32 %v6514, 1e-12
  %v6579 = vadd.f32 %v6515, 1e-12
  %v6580 = vadd.f32 %v6516, 1e-12
  %v6581 = vadd.f32 %v6517, 1e-12
  %v6582 = vadd.f32 %v6518, 1e-12
  %v6583 = vadd.f32 %v6519, 1e-12
  %v6584 = vadd.f32 %v6520, 1e-12
  %v6585 = vadd.f32 %v6521, 1e-12
  %v6586 = vadd.f32 %v6522, 1e-12
  %v6587 = vadd.f32 %v6523, 1e-12
  %v6588 = vadd.f32 %v6524, 1e-12
  %v6589 = vadd.f32 %v6525, 1e-12
  %v6590 = vadd.f32 %v6526, 1e-12
  %v6591 = vadd.f32 %v6527, 1e-12
  %v6592 = vadd.f32 %v6528, 1e-12
  %v6593 = vadd.f32 %v6529, 1e-12
  %v6594 = vadd.f32 %v6530, 1e-12
  %v6595 = vadd.f32 %v6531, 1e-12
  %v6596 = vadd.f32 %v6532, 1e-12
  %v6597 = vadd.f32 %v6533, 1e-12
  %v6598 = vrsqrt.pop %v6534
  %v6599 = vrsqrt.pop %v6535
  %v6600 = vrsqrt.pop %v6536
  %v6601 = vrsqrt.pop %v6537
  %v6602 = vrsqrt.pop %v6538
  %v6603 = vrsqrt.pop %v6539
  %v6604 = vrsqrt.pop %v6540
  %v6605 = vrsqrt.pop %v6541
  %v6606 = vrsqrt.pop %v6542
  %v6607 = vrsqrt.pop %v6543
  %v6608 = vrsqrt.pop %v6544
  %v6609 = vrsqrt.pop %v6545
  %v6610 = vrsqrt.pop %v6546
  %v6611 = vrsqrt.pop %v6547
  %v6612 = vrsqrt.pop %v6548
  %v6613 = vrsqrt.pop %v6549
  %v6614 = vrsqrt.pop %v6550
  %v6615 = vrsqrt.pop %v6551
  %v6616 = vrsqrt.pop %v6552
  %v6617 = vrsqrt.pop %v6553
  %v6618 = vrsqrt.pop %v6554
  %v6619 = vrsqrt.pop %v6555
  %v6620 = vrsqrt.pop %v6556
  %v6621 = vrsqrt.pop %v6557
  %v6622 = vrsqrt.pop %v6558
  %v6623 = vrsqrt.pop %v6559
  %v6624 = vrsqrt.pop %v6560
  %v6625 = vrsqrt.pop %v6561
  %v6626 = vrsqrt.pop %v6562
  %v6627 = vrsqrt.pop %v6563
  %v6628 = vrsqrt.pop %v6564
  %v6629 = vrsqrt.pop %v6565
  %v6630 = vrsqrt.pop %v6566
  %v6631 = vrsqrt.pop %v6567
  %v6632 = vrsqrt.pop %v6568
  %v6633 = vrsqrt.pop %v6569
  %v6634 = vrsqrt.pop %v6570
  %v6635 = vrsqrt.pop %v6571
  %v6636 = vrsqrt.pop %v6572
  %v6637 = vrsqrt.pop %v6573
  %v6638 = vrsqrt.pop %v6574
  %v6639 = vrsqrt.pop %v6575
  %v6640 = vrsqrt.pop %v6576
  %v6641 = vrsqrt.pop %v6577
  %v6642 = vrsqrt.pop %v6578
  %v6643 = vrsqrt.pop %v6579
  %v6644 = vrsqrt.pop %v6580
  %v6645 = vrsqrt.pop %v6581
  %v6646 = vrsqrt.pop %v6582
  %v6647 = vrsqrt.pop %v6583
  %v6648 = vrsqrt.pop %v6584
  %v6649 = vrsqrt.pop %v6585
  %v6650 = vrsqrt.pop %v6586
  %v6651 = vrsqrt.pop %v6587
  %v6652 = vrsqrt.pop %v6588
  %v6653 = vrsqrt.pop %v6589
  %v6654 = vrsqrt.pop %v6590
  %v6655 = vrsqrt.pop %v6591
  %v6656 = vrsqrt.pop %v6592
  %v6657 = vrsqrt.pop %v6593
  %v6658 = vrsqrt.pop %v6594
  %v6659 = vrsqrt.pop %v6595
  %v6660 = vrsqrt.pop %v6596
  %v6661 = vrsqrt.pop %v6597
  %v6662 = vmul.f32 %v6150, %v6598
  %v6663 = vmul.f32 %v6151, %v6599
  %v6664 = vmul.f32 %v6152, %v6600
  %v6665 = vmul.f32 %v6153, %v6601
  %v6666 = vmul.f32 %v6154, %v6602
  %v6667 = vmul.f32 %v6155, %v6603
  %v6668 = vmul.f32 %v6156, %v6604
  %v6669 = vmul.f32 %v6157, %v6605
  %v6670 = vmul.f32 %v6158, %v6606
  %v6671 = vmul.f32 %v6159, %v6607
  %v6672 = vmul.f32 %v6160, %v6608
  %v6673 = vmul.f32 %v6161, %v6609
  %v6674 = vmul.f32 %v6162, %v6610
  %v6675 = vmul.f32 %v6163, %v6611
  %v6676 = vmul.f32 %v6164, %v6612
  %v6677 = vmul.f32 %v6165, %v6613
  %v6678 = vmul.f32 %v6166, %v6614
  %v6679 = vmul.f32 %v6167, %v6615
  %v6680 = vmul.f32 %v6168, %v6616
  %v6681 = vmul.f32 %v6169, %v6617
  %v6682 = vmul.f32 %v6170, %v6618
  %v6683 = vmul.f32 %v6171, %v6619
  %v6684 = vmul.f32 %v6172, %v6620
  %v6685 = vmul.f32 %v6173, %v6621
  %v6686 = vmul.f32 %v6174, %v6622
  %v6687 = vmul.f32 %v6175, %v6623
  %v6688 = vmul.f32 %v6176, %v6624
  %v6689 = vmul.f32 %v6177, %v6625
  %v6690 = vmul.f32 %v6178, %v6626
  %v6691 = vmul.f32 %v6179, %v6627
  %v6692 = vmul.f32 %v6180, %v6628
  %v6693 = vmul.f32 %v6181, %v6629
  %v6694 = vmul.f32 %v6182, %v6630
  %v6695 = vmul.f32 %v6183, %v6631
  %v6696 = vmul.f32 %v6184, %v6632
  %v6697 = vmul.f32 %v6185, %v6633
  %v6698 = vmul.f32 %v6186, %v6634
  %v6699 = vmul.f32 %v6187, %v6635
  %v6700 = vmul.f32 %v6188, %v6636
  %v6701 = vmul.f32 %v6189, %v6637
  %v6702 = vmul.f32 %v6190, %v6638
  %v6703 = vmul.f32 %v6191, %v6639
  %v6704 = vmul.f32 %v6192, %v6640
  %v6705 = vmul.f32 %v6193, %v6641
  %v6706 = vmul.f32 %v6194, %v6642
  %v6707 = vmul.f32 %v6195, %v6643
  %v6708 = vmul.f32 %v6196, %v6644
  %v6709 = vmul.f32 %v6197, %v6645
  %v6710 = vmul.f32 %v6198, %v6646
  %v6711 = vmul.f32 %v6199, %v6647
  %v6712 = vmul.f32 %v6200, %v6648
  %v6713 = vmul.f32 %v6201, %v6649
  %v6714 = vmul.f32 %v6202, %v6650
  %v6715 = vmul.f32 %v6203, %v6651
  %v6716 = vmul.f32 %v6204, %v6652
  %v6717 = vmul.f32 %v6205, %v6653
  %v6718 = vmul.f32 %v6206, %v6654
  %v6719 = vmul.f32 %v6207, %v6655
  %v6720 = vmul.f32 %v6208, %v6656
  %v6721 = vmul.f32 %v6209, %v6657
  %v6722 = vmul.f32 %v6210, %v6658
  %v6723 = vmul.f32 %v6211, %v6659
  %v6724 = vmul.f32 %v6212, %v6660
  %v6725 = vmul.f32 %v6213, %v6661
  %v6726 = vld [vmem:[%s5] sm:$0x1]
  %v6728 = vlaneseq
  %v6729 = vshrl.u32 %v6728, 7
  %v6730 = vsub.s32 0, %v6729
  %v6731 = vrot.slane %v6726, %v6730
  %v6733 = vmul.f32 %v6662, %v6731
  %v6734 = vmul.f32 %v6663, %v6731
  %v6735 = vmul.f32 %v6664, %v6731
  %v6736 = vmul.f32 %v6665, %v6731
  %v6737 = vmul.f32 %v6666, %v6731
  %v6738 = vmul.f32 %v6667, %v6731
  %v6739 = vmul.f32 %v6668, %v6731
  %v6740 = vmul.f32 %v6669, %v6731
  %v6741 = vmul.f32 %v6670, %v6731
  %v6742 = vmul.f32 %v6671, %v6731
  %v6743 = vmul.f32 %v6672, %v6731
  %v6744 = vmul.f32 %v6673, %v6731
  %v6745 = vmul.f32 %v6674, %v6731
  %v6746 = vmul.f32 %v6675, %v6731
  %v6747 = vmul.f32 %v6676, %v6731
  %v6748 = vmul.f32 %v6677, %v6731
  %v6749 = vmul.f32 %v6678, %v6731
  %v6750 = vmul.f32 %v6679, %v6731
  %v6751 = vmul.f32 %v6680, %v6731
  %v6752 = vmul.f32 %v6681, %v6731
  %v6753 = vmul.f32 %v6682, %v6731
  %v6754 = vmul.f32 %v6683, %v6731
  %v6755 = vmul.f32 %v6684, %v6731
  %v6756 = vmul.f32 %v6685, %v6731
  %v6757 = vmul.f32 %v6686, %v6731
  %v6758 = vmul.f32 %v6687, %v6731
  %v6759 = vmul.f32 %v6688, %v6731
  %v6760 = vmul.f32 %v6689, %v6731
  %v6761 = vmul.f32 %v6690, %v6731
  %v6762 = vmul.f32 %v6691, %v6731
  %v6763 = vmul.f32 %v6692, %v6731
  %v6764 = vmul.f32 %v6693, %v6731
  %v6765 = vmul.f32 %v6694, %v6731
  %v6766 = vmul.f32 %v6695, %v6731
  %v6767 = vmul.f32 %v6696, %v6731
  %v6768 = vmul.f32 %v6697, %v6731
  %v6769 = vmul.f32 %v6698, %v6731
  %v6770 = vmul.f32 %v6699, %v6731
  %v6771 = vmul.f32 %v6700, %v6731
  %v6772 = vmul.f32 %v6701, %v6731
  %v6773 = vmul.f32 %v6702, %v6731
  %v6774 = vmul.f32 %v6703, %v6731
  %v6775 = vmul.f32 %v6704, %v6731
  %v6776 = vmul.f32 %v6705, %v6731
  %v6777 = vmul.f32 %v6706, %v6731
  %v6778 = vmul.f32 %v6707, %v6731
  %v6779 = vmul.f32 %v6708, %v6731
  %v6780 = vmul.f32 %v6709, %v6731
  %v6781 = vmul.f32 %v6710, %v6731
  %v6782 = vmul.f32 %v6711, %v6731
  %v6783 = vmul.f32 %v6712, %v6731
  %v6784 = vmul.f32 %v6713, %v6731
  %v6785 = vmul.f32 %v6714, %v6731
  %v6786 = vmul.f32 %v6715, %v6731
  %v6787 = vmul.f32 %v6716, %v6731
  %v6788 = vmul.f32 %v6717, %v6731
  %v6789 = vmul.f32 %v6718, %v6731
  %v6790 = vmul.f32 %v6719, %v6731
  %v6791 = vmul.f32 %v6720, %v6731
  %v6792 = vmul.f32 %v6721, %v6731
  %v6793 = vmul.f32 %v6722, %v6731
  %v6794 = vmul.f32 %v6723, %v6731
  %v6795 = vmul.f32 %v6724, %v6731
  %v6796 = vmul.f32 %v6725, %v6731
  %v6797 = vld [vmem:[%s6] sm:$0x1]
  %v6799 = vlaneseq
  %v6800 = vshrl.u32 %v6799, 7
  %v6801 = vsub.s32 0, %v6800
  %v6802 = vrot.slane %v6797, %v6801
  %v6804 = vadd.f32 %v6733, %v6802
  %v6805 = vadd.f32 %v6734, %v6802
  %v6806 = vadd.f32 %v6735, %v6802
  %v6807 = vadd.f32 %v6736, %v6802
  %v6808 = vadd.f32 %v6737, %v6802
  %v6809 = vadd.f32 %v6738, %v6802
  %v6810 = vadd.f32 %v6739, %v6802
  %v6811 = vadd.f32 %v6740, %v6802
  %v6812 = vadd.f32 %v6741, %v6802
  %v6813 = vadd.f32 %v6742, %v6802
  %v6814 = vadd.f32 %v6743, %v6802
  %v6815 = vadd.f32 %v6744, %v6802
  %v6816 = vadd.f32 %v6745, %v6802
  %v6817 = vadd.f32 %v6746, %v6802
  %v6818 = vadd.f32 %v6747, %v6802
  %v6819 = vadd.f32 %v6748, %v6802
  %v6820 = vadd.f32 %v6749, %v6802
  %v6821 = vadd.f32 %v6750, %v6802
  %v6822 = vadd.f32 %v6751, %v6802
  %v6823 = vadd.f32 %v6752, %v6802
  %v6824 = vadd.f32 %v6753, %v6802
  %v6825 = vadd.f32 %v6754, %v6802
  %v6826 = vadd.f32 %v6755, %v6802
  %v6827 = vadd.f32 %v6756, %v6802
  %v6828 = vadd.f32 %v6757, %v6802
  %v6829 = vadd.f32 %v6758, %v6802
  %v6830 = vadd.f32 %v6759, %v6802
  %v6831 = vadd.f32 %v6760, %v6802
  %v6832 = vadd.f32 %v6761, %v6802
  %v6833 = vadd.f32 %v6762, %v6802
  %v6834 = vadd.f32 %v6763, %v6802
  %v6835 = vadd.f32 %v6764, %v6802
  %v6836 = vadd.f32 %v6765, %v6802
  %v6837 = vadd.f32 %v6766, %v6802
  %v6838 = vadd.f32 %v6767, %v6802
  %v6839 = vadd.f32 %v6768, %v6802
  %v6840 = vadd.f32 %v6769, %v6802
  %v6841 = vadd.f32 %v6770, %v6802
  %v6842 = vadd.f32 %v6771, %v6802
  %v6843 = vadd.f32 %v6772, %v6802
  %v6844 = vadd.f32 %v6773, %v6802
  %v6845 = vadd.f32 %v6774, %v6802
  %v6846 = vadd.f32 %v6775, %v6802
  %v6847 = vadd.f32 %v6776, %v6802
  %v6848 = vadd.f32 %v6777, %v6802
  %v6849 = vadd.f32 %v6778, %v6802
  %v6850 = vadd.f32 %v6779, %v6802
  %v6851 = vadd.f32 %v6780, %v6802
  %v6852 = vadd.f32 %v6781, %v6802
  %v6853 = vadd.f32 %v6782, %v6802
  %v6854 = vadd.f32 %v6783, %v6802
  %v6855 = vadd.f32 %v6784, %v6802
  %v6856 = vadd.f32 %v6785, %v6802
  %v6857 = vadd.f32 %v6786, %v6802
  %v6858 = vadd.f32 %v6787, %v6802
  %v6859 = vadd.f32 %v6788, %v6802
  %v6860 = vadd.f32 %v6789, %v6802
  %v6861 = vadd.f32 %v6790, %v6802
  %v6862 = vadd.f32 %v6791, %v6802
  %v6863 = vadd.f32 %v6792, %v6802
  %v6864 = vadd.f32 %v6793, %v6802
  %v6865 = vadd.f32 %v6794, %v6802
  %v6866 = vadd.f32 %v6795, %v6802
  %v6867 = vadd.f32 %v6796, %v6802
  %6868 = vst.msk [vmem:[%s7] sm:$0xff] %vm5893, %v6804
  %6869 = vst.msk [vmem:[%s7 + $0x8] sm:$0xff] %vm5893, %v6805
  %6870 = vst.msk [vmem:[%s7 + $0x10] sm:$0xff] %vm5893, %v6806
  %6871 = vst.msk [vmem:[%s7 + $0x18] sm:$0xff] %vm5893, %v6807
  %6872 = vst.msk [vmem:[%s7 + $0x20] sm:$0xff] %vm5893, %v6808
  %6873 = vst.msk [vmem:[%s7 + $0x28] sm:$0xff] %vm5893, %v6809
  %6874 = vst.msk [vmem:[%s7 + $0x30] sm:$0xff] %vm5893, %v6810
  %6875 = vst.msk [vmem:[%s7 + $0x38] sm:$0xff] %vm5893, %v6811
  %6876 = vst.msk [vmem:[%s7 + $0x40] sm:$0xff] %vm5893, %v6812
  %6877 = vst.msk [vmem:[%s7 + $0x48] sm:$0xff] %vm5893, %v6813
  %6878 = vst.msk [vmem:[%s7 + $0x50] sm:$0xff] %vm5893, %v6814
  %6879 = vst.msk [vmem:[%s7 + $0x58] sm:$0xff] %vm5893, %v6815
  %6880 = vst.msk [vmem:[%s7 + $0x60] sm:$0xff] %vm5893, %v6816
  %6881 = vst.msk [vmem:[%s7 + $0x68] sm:$0xff] %vm5893, %v6817
  %6882 = vst.msk [vmem:[%s7 + $0x70] sm:$0xff] %vm5893, %v6818
  %6883 = vst.msk [vmem:[%s7 + $0x78] sm:$0xff] %vm5893, %v6819
  %6884 = vst.msk [vmem:[%s7 + $0x80] sm:$0xff] %vm5893, %v6820
  %6885 = vst.msk [vmem:[%s7 + $0x88] sm:$0xff] %vm5893, %v6821
  %6886 = vst.msk [vmem:[%s7 + $0x90] sm:$0xff] %vm5893, %v6822
  %6887 = vst.msk [vmem:[%s7 + $0x98] sm:$0xff] %vm5893, %v6823
  %6888 = vst.msk [vmem:[%s7 + $0xa0] sm:$0xff] %vm5893, %v6824
  %6889 = vst.msk [vmem:[%s7 + $0xa8] sm:$0xff] %vm5893, %v6825
  %6890 = vst.msk [vmem:[%s7 + $0xb0] sm:$0xff] %vm5893, %v6826
  %6891 = vst.msk [vmem:[%s7 + $0xb8] sm:$0xff] %vm5893, %v6827
  %6892 = vst.msk [vmem:[%s7 + $0xc0] sm:$0xff] %vm5893, %v6828
  %6893 = vst.msk [vmem:[%s7 + $0xc8] sm:$0xff] %vm5893, %v6829
  %6894 = vst.msk [vmem:[%s7 + $0xd0] sm:$0xff] %vm5893, %v6830
  %6895 = vst.msk [vmem:[%s7 + $0xd8] sm:$0xff] %vm5893, %v6831
  %6896 = vst.msk [vmem:[%s7 + $0xe0] sm:$0xff] %vm5893, %v6832
  %6897 = vst.msk [vmem:[%s7 + $0xe8] sm:$0xff] %vm5893, %v6833
  %6898 = vst.msk [vmem:[%s7 + $0xf0] sm:$0xff] %vm5893, %v6834
  %6899 = vst.msk [vmem:[%s7 + $0xf8] sm:$0xff] %vm5893, %v6835
  %6900 = vst.msk [vmem:[%s7 + $0x100] sm:$0xff] %vm5893, %v6836
  %6901 = vst.msk [vmem:[%s7 + $0x108] sm:$0xff] %vm5893, %v6837
  %6902 = vst.msk [vmem:[%s7 + $0x110] sm:$0xff] %vm5893, %v6838
  %6903 = vst.msk [vmem:[%s7 + $0x118] sm:$0xff] %vm5893, %v6839
  %6904 = vst.msk [vmem:[%s7 + $0x120] sm:$0xff] %vm5893, %v6840
  %6905 = vst.msk [vmem:[%s7 + $0x128] sm:$0xff] %vm5893, %v6841
  %6906 = vst.msk [vmem:[%s7 + $0x130] sm:$0xff] %vm5893, %v6842
  %6907 = vst.msk [vmem:[%s7 + $0x138] sm:$0xff] %vm5893, %v6843
  %6908 = vst.msk [vmem:[%s7 + $0x140] sm:$0xff] %vm5893, %v6844
  %6909 = vst.msk [vmem:[%s7 + $0x148] sm:$0xff] %vm5893, %v6845
  %6910 = vst.msk [vmem:[%s7 + $0x150] sm:$0xff] %vm5893, %v6846
  %6911 = vst.msk [vmem:[%s7 + $0x158] sm:$0xff] %vm5893, %v6847
  %6912 = vst.msk [vmem:[%s7 + $0x160] sm:$0xff] %vm5893, %v6848
  %6913 = vst.msk [vmem:[%s7 + $0x168] sm:$0xff] %vm5893, %v6849
  %6914 = vst.msk [vmem:[%s7 + $0x170] sm:$0xff] %vm5893, %v6850
  %6915 = vst.msk [vmem:[%s7 + $0x178] sm:$0xff] %vm5893, %v6851
  %6916 = vst.msk [vmem:[%s7 + $0x180] sm:$0xff] %vm5893, %v6852
  %6917 = vst.msk [vmem:[%s7 + $0x188] sm:$0xff] %vm5893, %v6853
  %6918 = vst.msk [vmem:[%s7 + $0x190] sm:$0xff] %vm5893, %v6854
  %6919 = vst.msk [vmem:[%s7 + $0x198] sm:$0xff] %vm5893, %v6855
  %6920 = vst.msk [vmem:[%s7 + $0x1a0] sm:$0xff] %vm5893, %v6856
  %6921 = vst.msk [vmem:[%s7 + $0x1a8] sm:$0xff] %vm5893, %v6857
  %6922 = vst.msk [vmem:[%s7 + $0x1b0] sm:$0xff] %vm5893, %v6858
  %6923 = vst.msk [vmem:[%s7 + $0x1b8] sm:$0xff] %vm5893, %v6859
  %6924 = vst.msk [vmem:[%s7 + $0x1c0] sm:$0xff] %vm5893, %v6860
  %6925 = vst.msk [vmem:[%s7 + $0x1c8] sm:$0xff] %vm5893, %v6861
  %6926 = vst.msk [vmem:[%s7 + $0x1d0] sm:$0xff] %vm5893, %v6862
  %6927 = vst.msk [vmem:[%s7 + $0x1d8] sm:$0xff] %vm5893, %v6863
  %6928 = vst.msk [vmem:[%s7 + $0x1e0] sm:$0xff] %vm5893, %v6864
  %6929 = vst.msk [vmem:[%s7 + $0x1e8] sm:$0xff] %vm5893, %v6865
  %6930 = vst.msk [vmem:[%s7 + $0x1f0] sm:$0xff] %vm5893, %v6866
  %6931 = vst.msk [vmem:[%s7 + $0x1f8] sm:$0xff] %vm5893, %v6867
  %6932 = vset.pattern.permute.xlu0 0
  %6933 = vperm.xlu0 %6932, %v156
  %v6934 = vpop.permute.xlu0 %6933
  %6935 = vset.pattern.permute.xlu0 0
  %6936 = vperm.xlu0 %6935, %v157
  %v6937 = vpop.permute.xlu0 %6936
  %6938 = vset.pattern.permute.xlu0 0
  %6939 = vperm.xlu0 %6938, %v158
  %v6940 = vpop.permute.xlu0 %6939
  %6941 = vset.pattern.permute.xlu0 0
  %6942 = vperm.xlu0 %6941, %v159
  %v6943 = vpop.permute.xlu0 %6942
  %6944 = vset.pattern.permute.xlu0 0
  %6945 = vperm.xlu0 %6944, %v160
  %v6946 = vpop.permute.xlu0 %6945
  %6947 = vset.pattern.permute.xlu0 0
  %6948 = vperm.xlu0 %6947, %v161
  %v6949 = vpop.permute.xlu0 %6948
  %6950 = vset.pattern.permute.xlu0 0
  %6951 = vperm.xlu0 %6950, %v162
  %v6952 = vpop.permute.xlu0 %6951
  %6953 = vset.pattern.permute.xlu0 0
  %6954 = vperm.xlu0 %6953, %v163
  %v6955 = vpop.permute.xlu0 %6954
  %6956 = vset.pattern.permute.xlu0 0
  %6957 = vperm.xlu0 %6956, %v164
  %v6958 = vpop.permute.xlu0 %6957
  %6959 = vset.pattern.permute.xlu0 0
  %6960 = vperm.xlu0 %6959, %v165
  %v6961 = vpop.permute.xlu0 %6960
  %6962 = vset.pattern.permute.xlu0 0
  %6963 = vperm.xlu0 %6962, %v166
  %v6964 = vpop.permute.xlu0 %6963
  %6965 = vset.pattern.permute.xlu0 0
  %6966 = vperm.xlu0 %6965, %v167
  %v6967 = vpop.permute.xlu0 %6966
  %6968 = vset.pattern.permute.xlu0 0
  %6969 = vperm.xlu0 %6968, %v168
  %v6970 = vpop.permute.xlu0 %6969
  %6971 = vset.pattern.permute.xlu0 0
  %6972 = vperm.xlu0 %6971, %v169
  %v6973 = vpop.permute.xlu0 %6972
  %6974 = vset.pattern.permute.xlu0 0
  %6975 = vperm.xlu0 %6974, %v170
  %v6976 = vpop.permute.xlu0 %6975
  %6977 = vset.pattern.permute.xlu0 0
  %6978 = vperm.xlu0 %6977, %v171
  %v6979 = vpop.permute.xlu0 %6978
  %6980 = vset.pattern.permute.xlu0 0
  %6981 = vperm.xlu0 %6980, %v172
  %v6982 = vpop.permute.xlu0 %6981
  %6983 = vset.pattern.permute.xlu0 0
  %6984 = vperm.xlu0 %6983, %v173
  %v6985 = vpop.permute.xlu0 %6984
  %6986 = vset.pattern.permute.xlu0 0
  %6987 = vperm.xlu0 %6986, %v174
  %v6988 = vpop.permute.xlu0 %6987
  %6989 = vset.pattern.permute.xlu0 0
  %6990 = vperm.xlu0 %6989, %v175
  %v6991 = vpop.permute.xlu0 %6990
  %6992 = vset.pattern.permute.xlu0 0
  %6993 = vperm.xlu0 %6992, %v176
  %v6994 = vpop.permute.xlu0 %6993
  %6995 = vset.pattern.permute.xlu0 0
  %6996 = vperm.xlu0 %6995, %v177
  %v6997 = vpop.permute.xlu0 %6996
  %6998 = vset.pattern.permute.xlu0 0
  %6999 = vperm.xlu0 %6998, %v178
  %v7000 = vpop.permute.xlu0 %6999
  %7001 = vset.pattern.permute.xlu0 0
  %7002 = vperm.xlu0 %7001, %v179
  %v7003 = vpop.permute.xlu0 %7002
  %7004 = vset.pattern.permute.xlu0 0
  %7005 = vperm.xlu0 %7004, %v180
  %v7006 = vpop.permute.xlu0 %7005
  %7007 = vset.pattern.permute.xlu0 0
  %7008 = vperm.xlu0 %7007, %v181
  %v7009 = vpop.permute.xlu0 %7008
  %7010 = vset.pattern.permute.xlu0 0
  %7011 = vperm.xlu0 %7010, %v182
  %v7012 = vpop.permute.xlu0 %7011
  %7013 = vset.pattern.permute.xlu0 0
  %7014 = vperm.xlu0 %7013, %v183
  %v7015 = vpop.permute.xlu0 %7014
  %7016 = vset.pattern.permute.xlu0 0
  %7017 = vperm.xlu0 %7016, %v184
  %v7018 = vpop.permute.xlu0 %7017
  %7019 = vset.pattern.permute.xlu0 0
  %7020 = vperm.xlu0 %7019, %v185
  %v7021 = vpop.permute.xlu0 %7020
  %7022 = vset.pattern.permute.xlu0 0
  %7023 = vperm.xlu0 %7022, %v186
  %v7024 = vpop.permute.xlu0 %7023
  %7025 = vset.pattern.permute.xlu0 0
  %7026 = vperm.xlu0 %7025, %v187
  %v7027 = vpop.permute.xlu0 %7026
  %7028 = vset.pattern.permute.xlu0 0
  %7029 = vperm.xlu0 %7028, %v188
  %v7030 = vpop.permute.xlu0 %7029
  %7031 = vset.pattern.permute.xlu0 0
  %7032 = vperm.xlu0 %7031, %v189
  %v7033 = vpop.permute.xlu0 %7032
  %7034 = vset.pattern.permute.xlu0 0
  %7035 = vperm.xlu0 %7034, %v190
  %v7036 = vpop.permute.xlu0 %7035
  %7037 = vset.pattern.permute.xlu0 0
  %7038 = vperm.xlu0 %7037, %v191
  %v7039 = vpop.permute.xlu0 %7038
  %7040 = vset.pattern.permute.xlu0 0
  %7041 = vperm.xlu0 %7040, %v192
  %v7042 = vpop.permute.xlu0 %7041
  %7043 = vset.pattern.permute.xlu0 0
  %7044 = vperm.xlu0 %7043, %v193
  %v7045 = vpop.permute.xlu0 %7044
  %7046 = vset.pattern.permute.xlu0 0
  %7047 = vperm.xlu0 %7046, %v194
  %v7048 = vpop.permute.xlu0 %7047
  %7049 = vset.pattern.permute.xlu0 0
  %7050 = vperm.xlu0 %7049, %v195
  %v7051 = vpop.permute.xlu0 %7050
  %7052 = vset.pattern.permute.xlu0 0
  %7053 = vperm.xlu0 %7052, %v196
  %v7054 = vpop.permute.xlu0 %7053
  %7055 = vset.pattern.permute.xlu0 0
  %7056 = vperm.xlu0 %7055, %v197
  %v7057 = vpop.permute.xlu0 %7056
  %7058 = vset.pattern.permute.xlu0 0
  %7059 = vperm.xlu0 %7058, %v198
  %v7060 = vpop.permute.xlu0 %7059
  %7061 = vset.pattern.permute.xlu0 0
  %7062 = vperm.xlu0 %7061, %v199
  %v7063 = vpop.permute.xlu0 %7062
  %7064 = vset.pattern.permute.xlu0 0
  %7065 = vperm.xlu0 %7064, %v200
  %v7066 = vpop.permute.xlu0 %7065
  %7067 = vset.pattern.permute.xlu0 0
  %7068 = vperm.xlu0 %7067, %v201
  %v7069 = vpop.permute.xlu0 %7068
  %7070 = vset.pattern.permute.xlu0 0
  %7071 = vperm.xlu0 %7070, %v202
  %v7072 = vpop.permute.xlu0 %7071
  %7073 = vset.pattern.permute.xlu0 0
  %7074 = vperm.xlu0 %7073, %v203
  %v7075 = vpop.permute.xlu0 %7074
  %7076 = vset.pattern.permute.xlu0 0
  %7077 = vperm.xlu0 %7076, %v204
  %v7078 = vpop.permute.xlu0 %7077
  %7079 = vset.pattern.permute.xlu0 0
  %7080 = vperm.xlu0 %7079, %v205
  %v7081 = vpop.permute.xlu0 %7080
  %7082 = vset.pattern.permute.xlu0 0
  %7083 = vperm.xlu0 %7082, %v206
  %v7084 = vpop.permute.xlu0 %7083
  %7085 = vset.pattern.permute.xlu0 0
  %7086 = vperm.xlu0 %7085, %v207
  %v7087 = vpop.permute.xlu0 %7086
  %7088 = vset.pattern.permute.xlu0 0
  %7089 = vperm.xlu0 %7088, %v208
  %v7090 = vpop.permute.xlu0 %7089
  %7091 = vset.pattern.permute.xlu0 0
  %7092 = vperm.xlu0 %7091, %v209
  %v7093 = vpop.permute.xlu0 %7092
  %7094 = vset.pattern.permute.xlu0 0
  %7095 = vperm.xlu0 %7094, %v210
  %v7096 = vpop.permute.xlu0 %7095
  %7097 = vset.pattern.permute.xlu0 0
  %7098 = vperm.xlu0 %7097, %v211
  %v7099 = vpop.permute.xlu0 %7098
  %7100 = vset.pattern.permute.xlu0 0
  %7101 = vperm.xlu0 %7100, %v212
  %v7102 = vpop.permute.xlu0 %7101
  %7103 = vset.pattern.permute.xlu0 0
  %7104 = vperm.xlu0 %7103, %v213
  %v7105 = vpop.permute.xlu0 %7104
  %7106 = vset.pattern.permute.xlu0 0
  %7107 = vperm.xlu0 %7106, %v214
  %v7108 = vpop.permute.xlu0 %7107
  %7109 = vset.pattern.permute.xlu0 0
  %7110 = vperm.xlu0 %7109, %v215
  %v7111 = vpop.permute.xlu0 %7110
  %7112 = vset.pattern.permute.xlu0 0
  %7113 = vperm.xlu0 %7112, %v216
  %v7114 = vpop.permute.xlu0 %7113
  %7115 = vset.pattern.permute.xlu0 0
  %7116 = vperm.xlu0 %7115, %v217
  %v7117 = vpop.permute.xlu0 %7116
  %7118 = vset.pattern.permute.xlu0 0
  %7119 = vperm.xlu0 %7118, %v218
  %v7120 = vpop.permute.xlu0 %7119
  %7121 = vset.pattern.permute.xlu0 0
  %7122 = vperm.xlu0 %7121, %v219
  %v7123 = vpop.permute.xlu0 %7122
  %vm7124 = vcmp.eq.s32.totalorder %v6934, %v255
  %vm7125 = vcmp.eq.s32.totalorder %v6937, %v255
  %vm7126 = vcmp.eq.s32.totalorder %v6940, %v255
  %vm7127 = vcmp.eq.s32.totalorder %v6943, %v255
  %vm7128 = vcmp.eq.s32.totalorder %v6946, %v255
  %vm7129 = vcmp.eq.s32.totalorder %v6949, %v255
  %vm7130 = vcmp.eq.s32.totalorder %v6952, %v255
  %vm7131 = vcmp.eq.s32.totalorder %v6955, %v255
  %vm7132 = vcmp.eq.s32.totalorder %v6958, %v255
  %vm7133 = vcmp.eq.s32.totalorder %v6961, %v255
  %vm7134 = vcmp.eq.s32.totalorder %v6964, %v255
  %vm7135 = vcmp.eq.s32.totalorder %v6967, %v255
  %vm7136 = vcmp.eq.s32.totalorder %v6970, %v255
  %vm7137 = vcmp.eq.s32.totalorder %v6973, %v255
  %vm7138 = vcmp.eq.s32.totalorder %v6976, %v255
  %vm7139 = vcmp.eq.s32.totalorder %v6979, %v255
  %vm7140 = vcmp.eq.s32.totalorder %v6982, %v255
  %vm7141 = vcmp.eq.s32.totalorder %v6985, %v255
  %vm7142 = vcmp.eq.s32.totalorder %v6988, %v255
  %vm7143 = vcmp.eq.s32.totalorder %v6991, %v255
  %vm7144 = vcmp.eq.s32.totalorder %v6994, %v255
  %vm7145 = vcmp.eq.s32.totalorder %v6997, %v255
  %vm7146 = vcmp.eq.s32.totalorder %v7000, %v255
  %vm7147 = vcmp.eq.s32.totalorder %v7003, %v255
  %vm7148 = vcmp.eq.s32.totalorder %v7006, %v255
  %vm7149 = vcmp.eq.s32.totalorder %v7009, %v255
  %vm7150 = vcmp.eq.s32.totalorder %v7012, %v255
  %vm7151 = vcmp.eq.s32.totalorder %v7015, %v255
  %vm7152 = vcmp.eq.s32.totalorder %v7018, %v255
  %vm7153 = vcmp.eq.s32.totalorder %v7021, %v255
  %vm7154 = vcmp.eq.s32.totalorder %v7024, %v255
  %vm7155 = vcmp.eq.s32.totalorder %v7027, %v255
  %vm7156 = vcmp.eq.s32.totalorder %v7030, %v255
  %vm7157 = vcmp.eq.s32.totalorder %v7033, %v255
  %vm7158 = vcmp.eq.s32.totalorder %v7036, %v255
  %vm7159 = vcmp.eq.s32.totalorder %v7039, %v255
  %vm7160 = vcmp.eq.s32.totalorder %v7042, %v255
  %vm7161 = vcmp.eq.s32.totalorder %v7045, %v255
  %vm7162 = vcmp.eq.s32.totalorder %v7048, %v255
  %vm7163 = vcmp.eq.s32.totalorder %v7051, %v255
  %vm7164 = vcmp.eq.s32.totalorder %v7054, %v255
  %vm7165 = vcmp.eq.s32.totalorder %v7057, %v255
  %vm7166 = vcmp.eq.s32.totalorder %v7060, %v255
  %vm7167 = vcmp.eq.s32.totalorder %v7063, %v255
  %vm7168 = vcmp.eq.s32.totalorder %v7066, %v255
  %vm7169 = vcmp.eq.s32.totalorder %v7069, %v255
  %vm7170 = vcmp.eq.s32.totalorder %v7072, %v255
  %vm7171 = vcmp.eq.s32.totalorder %v7075, %v255
  %vm7172 = vcmp.eq.s32.totalorder %v7078, %v255
  %vm7173 = vcmp.eq.s32.totalorder %v7081, %v255
  %vm7174 = vcmp.eq.s32.totalorder %v7084, %v255
  %vm7175 = vcmp.eq.s32.totalorder %v7087, %v255
  %vm7176 = vcmp.eq.s32.totalorder %v7090, %v255
  %vm7177 = vcmp.eq.s32.totalorder %v7093, %v255
  %vm7178 = vcmp.eq.s32.totalorder %v7096, %v255
  %vm7179 = vcmp.eq.s32.totalorder %v7099, %v255
  %vm7180 = vcmp.eq.s32.totalorder %v7102, %v255
  %vm7181 = vcmp.eq.s32.totalorder %v7105, %v255
  %vm7182 = vcmp.eq.s32.totalorder %v7108, %v255
  %vm7183 = vcmp.eq.s32.totalorder %v7111, %v255
  %vm7184 = vcmp.eq.s32.totalorder %v7114, %v255
  %vm7185 = vcmp.eq.s32.totalorder %v7117, %v255
  %vm7186 = vcmp.eq.s32.totalorder %v7120, %v255
  %vm7187 = vcmp.eq.s32.totalorder %v7123, %v255
  %v7188 = vsel %vm7124, 1, 0
  %v7189 = vsel %vm7125, 1, 0
  %v7190 = vsel %vm7126, 1, 0
  %v7191 = vsel %vm7127, 1, 0
  %v7192 = vsel %vm7128, 1, 0
  %v7193 = vsel %vm7129, 1, 0
  %v7194 = vsel %vm7130, 1, 0
  %v7195 = vsel %vm7131, 1, 0
  %v7196 = vsel %vm7132, 1, 0
  %v7197 = vsel %vm7133, 1, 0
  %v7198 = vsel %vm7134, 1, 0
  %v7199 = vsel %vm7135, 1, 0
  %v7200 = vsel %vm7136, 1, 0
  %v7201 = vsel %vm7137, 1, 0
  %v7202 = vsel %vm7138, 1, 0
  %v7203 = vsel %vm7139, 1, 0
  %v7204 = vsel %vm7140, 1, 0
  %v7205 = vsel %vm7141, 1, 0
  %v7206 = vsel %vm7142, 1, 0
  %v7207 = vsel %vm7143, 1, 0
  %v7208 = vsel %vm7144, 1, 0
  %v7209 = vsel %vm7145, 1, 0
  %v7210 = vsel %vm7146, 1, 0
  %v7211 = vsel %vm7147, 1, 0
  %v7212 = vsel %vm7148, 1, 0
  %v7213 = vsel %vm7149, 1, 0
  %v7214 = vsel %vm7150, 1, 0
  %v7215 = vsel %vm7151, 1, 0
  %v7216 = vsel %vm7152, 1, 0
  %v7217 = vsel %vm7153, 1, 0
  %v7218 = vsel %vm7154, 1, 0
  %v7219 = vsel %vm7155, 1, 0
  %v7220 = vsel %vm7156, 1, 0
  %v7221 = vsel %vm7157, 1, 0
  %v7222 = vsel %vm7158, 1, 0
  %v7223 = vsel %vm7159, 1, 0
  %v7224 = vsel %vm7160, 1, 0
  %v7225 = vsel %vm7161, 1, 0
  %v7226 = vsel %vm7162, 1, 0
  %v7227 = vsel %vm7163, 1, 0
  %v7228 = vsel %vm7164, 1, 0
  %v7229 = vsel %vm7165, 1, 0
  %v7230 = vsel %vm7166, 1, 0
  %v7231 = vsel %vm7167, 1, 0
  %v7232 = vsel %vm7168, 1, 0
  %v7233 = vsel %vm7169, 1, 0
  %v7234 = vsel %vm7170, 1, 0
  %v7235 = vsel %vm7171, 1, 0
  %v7236 = vsel %vm7172, 1, 0
  %v7237 = vsel %vm7173, 1, 0
  %v7238 = vsel %vm7174, 1, 0
  %v7239 = vsel %vm7175, 1, 0
  %v7240 = vsel %vm7176, 1, 0
  %v7241 = vsel %vm7177, 1, 0
  %v7242 = vsel %vm7178, 1, 0
  %v7243 = vsel %vm7179, 1, 0
  %v7244 = vsel %vm7180, 1, 0
  %v7245 = vsel %vm7181, 1, 0
  %v7246 = vsel %vm7182, 1, 0
  %v7247 = vsel %vm7183, 1, 0
  %v7248 = vsel %vm7184, 1, 0
  %v7249 = vsel %vm7185, 1, 0
  %v7250 = vsel %vm7186, 1, 0
  %v7251 = vsel %vm7187, 1, 0
  %v7252 = vcvt.s32.f32 %v7188
  %v7253 = vcvt.s32.f32 %v7189
  %v7254 = vcvt.s32.f32 %v7190
  %v7255 = vcvt.s32.f32 %v7191
  %v7256 = vcvt.s32.f32 %v7192
  %v7257 = vcvt.s32.f32 %v7193
  %v7258 = vcvt.s32.f32 %v7194
  %v7259 = vcvt.s32.f32 %v7195
  %v7260 = vcvt.s32.f32 %v7196
  %v7261 = vcvt.s32.f32 %v7197
  %v7262 = vcvt.s32.f32 %v7198
  %v7263 = vcvt.s32.f32 %v7199
  %v7264 = vcvt.s32.f32 %v7200
  %v7265 = vcvt.s32.f32 %v7201
  %v7266 = vcvt.s32.f32 %v7202
  %v7267 = vcvt.s32.f32 %v7203
  %v7268 = vcvt.s32.f32 %v7204
  %v7269 = vcvt.s32.f32 %v7205
  %v7270 = vcvt.s32.f32 %v7206
  %v7271 = vcvt.s32.f32 %v7207
  %v7272 = vcvt.s32.f32 %v7208
  %v7273 = vcvt.s32.f32 %v7209
  %v7274 = vcvt.s32.f32 %v7210
  %v7275 = vcvt.s32.f32 %v7211
  %v7276 = vcvt.s32.f32 %v7212
  %v7277 = vcvt.s32.f32 %v7213
  %v7278 = vcvt.s32.f32 %v7214
  %v7279 = vcvt.s32.f32 %v7215
  %v7280 = vcvt.s32.f32 %v7216
  %v7281 = vcvt.s32.f32 %v7217
  %v7282 = vcvt.s32.f32 %v7218
  %v7283 = vcvt.s32.f32 %v7219
  %v7284 = vcvt.s32.f32 %v7220
  %v7285 = vcvt.s32.f32 %v7221
  %v7286 = vcvt.s32.f32 %v7222
  %v7287 = vcvt.s32.f32 %v7223
  %v7288 = vcvt.s32.f32 %v7224
  %v7289 = vcvt.s32.f32 %v7225
  %v7290 = vcvt.s32.f32 %v7226
  %v7291 = vcvt.s32.f32 %v7227
  %v7292 = vcvt.s32.f32 %v7228
  %v7293 = vcvt.s32.f32 %v7229
  %v7294 = vcvt.s32.f32 %v7230
  %v7295 = vcvt.s32.f32 %v7231
  %v7296 = vcvt.s32.f32 %v7232
  %v7297 = vcvt.s32.f32 %v7233
  %v7298 = vcvt.s32.f32 %v7234
  %v7299 = vcvt.s32.f32 %v7235
  %v7300 = vcvt.s32.f32 %v7236
  %v7301 = vcvt.s32.f32 %v7237
  %v7302 = vcvt.s32.f32 %v7238
  %v7303 = vcvt.s32.f32 %v7239
  %v7304 = vcvt.s32.f32 %v7240
  %v7305 = vcvt.s32.f32 %v7241
  %v7306 = vcvt.s32.f32 %v7242
  %v7307 = vcvt.s32.f32 %v7243
  %v7308 = vcvt.s32.f32 %v7244
  %v7309 = vcvt.s32.f32 %v7245
  %v7310 = vcvt.s32.f32 %v7246
  %v7311 = vcvt.s32.f32 %v7247
  %v7312 = vcvt.s32.f32 %v7248
  %v7313 = vcvt.s32.f32 %v7249
  %v7314 = vcvt.s32.f32 %v7250
  %v7315 = vcvt.s32.f32 %v7251
  %vm7316 = vcmask 326656
  %v7318 = vsel %vm7316, %v7252, 0
  %v7321 = vsel %vm7316, %v7253, 0
  %v7324 = vsel %vm7316, %v7254, 0
  %v7327 = vsel %vm7316, %v7255, 0
  %v7330 = vsel %vm7316, %v7256, 0
  %v7333 = vsel %vm7316, %v7257, 0
  %v7336 = vsel %vm7316, %v7258, 0
  %v7339 = vsel %vm7316, %v7259, 0
  %v7342 = vsel %vm7316, %v7260, 0
  %v7345 = vsel %vm7316, %v7261, 0
  %v7348 = vsel %vm7316, %v7262, 0
  %v7351 = vsel %vm7316, %v7263, 0
  %v7354 = vsel %vm7316, %v7264, 0
  %v7357 = vsel %vm7316, %v7265, 0
  %v7360 = vsel %vm7316, %v7266, 0
  %v7363 = vsel %vm7316, %v7267, 0
  %v7366 = vsel %vm7316, %v7268, 0
  %v7369 = vsel %vm7316, %v7269, 0
  %v7372 = vsel %vm7316, %v7270, 0
  %v7375 = vsel %vm7316, %v7271, 0
  %v7378 = vsel %vm7316, %v7272, 0
  %v7381 = vsel %vm7316, %v7273, 0
  %v7384 = vsel %vm7316, %v7274, 0
  %v7387 = vsel %vm7316, %v7275, 0
  %v7390 = vsel %vm7316, %v7276, 0
  %v7393 = vsel %vm7316, %v7277, 0
  %v7396 = vsel %vm7316, %v7278, 0
  %v7399 = vsel %vm7316, %v7279, 0
  %v7402 = vsel %vm7316, %v7280, 0
  %v7405 = vsel %vm7316, %v7281, 0
  %v7408 = vsel %vm7316, %v7282, 0
  %v7411 = vsel %vm7316, %v7283, 0
  %v7414 = vsel %vm7316, %v7284, 0
  %v7417 = vsel %vm7316, %v7285, 0
  %v7420 = vsel %vm7316, %v7286, 0
  %v7423 = vsel %vm7316, %v7287, 0
  %v7426 = vsel %vm7316, %v7288, 0
  %v7429 = vsel %vm7316, %v7289, 0
  %v7432 = vsel %vm7316, %v7290, 0
  %v7435 = vsel %vm7316, %v7291, 0
  %v7438 = vsel %vm7316, %v7292, 0
  %v7441 = vsel %vm7316, %v7293, 0
  %v7444 = vsel %vm7316, %v7294, 0
  %v7447 = vsel %vm7316, %v7295, 0
  %v7450 = vsel %vm7316, %v7296, 0
  %v7453 = vsel %vm7316, %v7297, 0
  %v7456 = vsel %vm7316, %v7298, 0
  %v7459 = vsel %vm7316, %v7299, 0
  %v7462 = vsel %vm7316, %v7300, 0
  %v7465 = vsel %vm7316, %v7301, 0
  %v7468 = vsel %vm7316, %v7302, 0
  %v7471 = vsel %vm7316, %v7303, 0
  %v7474 = vsel %vm7316, %v7304, 0
  %v7477 = vsel %vm7316, %v7305, 0
  %v7480 = vsel %vm7316, %v7306, 0
  %v7483 = vsel %vm7316, %v7307, 0
  %v7486 = vsel %vm7316, %v7308, 0
  %v7489 = vsel %vm7316, %v7309, 0
  %v7492 = vsel %vm7316, %v7310, 0
  %v7495 = vsel %vm7316, %v7311, 0
  %v7498 = vsel %vm7316, %v7312, 0
  %v7501 = vsel %vm7316, %v7313, 0
  %v7504 = vsel %vm7316, %v7314, 0
  %v7507 = vsel %vm7316, %v7315, 0
  %7509 = vmatprep.subr.mxu0 0.0
  %7510 = vmatpush1.msra.mxu0 0.0
  %7511 = vmatprep.subr.mxu0 0.0
  %7512 = vmatpush1.msra.mxu0 0.0
  %7513 = vmatprep.subr.mxu0 0.0
  %7514 = vmatpush1.msra.mxu0 0.0
  %7515 = vmatprep.subr.mxu0 0.0
  %7516 = vmatpush1.msra.mxu0 0.0
  %7517 = vmatprep.subr.mxu0 0.0
  %7518 = vmatpush1.msra.mxu0 0.0
  %7519 = vmatprep.subr.mxu0 0.0
  %7520 = vmatpush1.msra.mxu0 0.0
  %7521 = vmatprep.subr.mxu0 0.0
  %7522 = vmatpush1.msra.mxu0 0.0
  %7523 = vmatprep.subr.mxu0 0.0
  %7524 = vmatpush1.msra.mxu0 0.0
  %7525 = vmatprep.subr.mxu0 0.0
  %7526 = vmatpush1.msra.mxu0 0.0
  %7527 = vmatprep.subr.mxu0 0.0
  %7528 = vmatpush1.msra.mxu0 0.0
  %7529 = vmatprep.subr.mxu0 0.0
  %7530 = vmatpush1.msra.mxu0 0.0
  %7531 = vmatprep.subr.mxu0 0.0
  %v7532 = vand.u32 %v253, 4294901760
  %7533 = vmatpush1.msra.mxu0 %v7532
  %7534 = vmatprep.subr.mxu0 0.0
  %v7535 = vand.u32 %v252, 4294901760
  %7536 = vmatpush1.msra.mxu0 %v7535
  %7537 = vmatprep.subr.mxu0 0.0
  %v7538 = vand.u32 %v251, 4294901760
  %7539 = vmatpush1.msra.mxu0 %v7538
  %7540 = vmatprep.subr.mxu0 0.0
  %v7541 = vand.u32 %v250, 4294901760
  %7542 = vmatpush1.msra.mxu0 %v7541
  %7543 = vmatprep.subr.mxu0 0.0
  %v7544 = vand.u32 %v249, 4294901760
  %7545 = vmatpush1.msra.mxu0 %v7544
  %7546 = vmatprep.subr.mxu0 0.0
  %7547 = vmatpush2.msra.mxu0 0.0
  %7548 = vmatprep.subr.mxu0 0.0
  %7549 = vmatpush2.msra.mxu0 0.0
  %7550 = vmatprep.subr.mxu0 0.0
  %7551 = vmatpush2.msra.mxu0 0.0
  %7552 = vmatprep.subr.mxu0 0.0
  %7553 = vmatpush2.msra.mxu0 0.0
  %7554 = vmatprep.subr.mxu0 0.0
  %7555 = vmatpush2.msra.mxu0 0.0
  %7556 = vmatprep.subr.mxu0 0.0
  %7557 = vmatpush2.msra.mxu0 0.0
  %7558 = vmatprep.subr.mxu0 0.0
  %7559 = vmatpush2.msra.mxu0 0.0
  %7560 = vmatprep.subr.mxu0 0.0
  %7561 = vmatpush2.msra.mxu0 0.0
  %7562 = vmatprep.subr.mxu0 0.0
  %7563 = vmatpush2.msra.mxu0 0.0
  %7564 = vmatprep.subr.mxu0 0.0
  %7565 = vmatpush2.msra.mxu0 0.0
  %7566 = vmatprep.subr.mxu0 0.0
  %7567 = vmatpush2.msra.mxu0 0.0
  %7568 = vmatprep.subr.mxu0 0.0
  %7569 = vmatpush2.msra.mxu0 0.0
  %7570 = vmatprep.subr.mxu0 0.0
  %7571 = vmatpush2.msra.mxu0 0.0
  %7572 = vmatprep.subr.mxu0 0.0
  %7573 = vmatpush2.msra.mxu0 0.0
  %7574 = vmatprep.subr.mxu0 0.0
  %7575 = vmatpush2.msra.mxu0 0.0
  %7576 = vmatprep.subr.mxu0 0.0
  %7577 = vmatpush2.msra.mxu0 0.0
  %7578 = vmatprep.mubr.f32.mxu0 0.0
  %v7579 = vand.u32 %v7318, 4294901760
  %v7580 = vsub.f32 %v7318, %v7579
  %v7581 = vand.u32 %v7580, 4294901760
  %v7582 = vsub.f32 %v7580, %v7581
  %v7583 = vand.u32 %v7582, 4294901760
  %7584 = vmatmul.mubr.f32.gmra.mxu0 %v7583
  %v7585 = vpop.f32.mrf.mxu0
  %v7586 = vadd.f32 0.0, %v7585
  %v7587 = vpop.f32.mrf.mxu0
  %7588 = vmatprep.mubr.f32.mxu0 0.0
  %v7589 = vand.u32 %v7321, 4294901760
  %v7590 = vsub.f32 %v7321, %v7589
  %v7591 = vand.u32 %v7590, 4294901760
  %v7592 = vsub.f32 %v7590, %v7591
  %v7593 = vand.u32 %v7592, 4294901760
  %7594 = vmatmul.mubr.f32.gmra.mxu0 %v7593
  %v7595 = vpop.f32.mrf.mxu0
  %v7596 = vadd.f32 0.0, %v7595
  %v7597 = vpop.f32.mrf.mxu0
  %7598 = vmatprep.mubr.f32.mxu0 0.0
  %v7599 = vand.u32 %v7324, 4294901760
  %v7600 = vsub.f32 %v7324, %v7599
  %v7601 = vand.u32 %v7600, 4294901760
  %v7602 = vsub.f32 %v7600, %v7601
  %v7603 = vand.u32 %v7602, 4294901760
  %7604 = vmatmul.mubr.f32.gmra.mxu0 %v7603
  %v7605 = vpop.f32.mrf.mxu0
  %v7606 = vadd.f32 0.0, %v7605
  %v7607 = vpop.f32.mrf.mxu0
  %7608 = vmatprep.mubr.f32.mxu0 0.0
  %v7609 = vand.u32 %v7327, 4294901760
  %v7610 = vsub.f32 %v7327, %v7609
  %v7611 = vand.u32 %v7610, 4294901760
  %v7612 = vsub.f32 %v7610, %v7611
  %v7613 = vand.u32 %v7612, 4294901760
  %7614 = vmatmul.mubr.f32.gmra.mxu0 %v7613
  %v7615 = vpop.f32.mrf.mxu0
  %v7616 = vadd.f32 0.0, %v7615
  %v7617 = vpop.f32.mrf.mxu0
  %7618 = vmatprep.mubr.f32.mxu0 0.0
  %v7619 = vand.u32 %v7330, 4294901760
  %v7620 = vsub.f32 %v7330, %v7619
  %v7621 = vand.u32 %v7620, 4294901760
  %v7622 = vsub.f32 %v7620, %v7621
  %v7623 = vand.u32 %v7622, 4294901760
  %7624 = vmatmul.mubr.f32.gmra.mxu0 %v7623
  %v7625 = vpop.f32.mrf.mxu0
  %v7626 = vadd.f32 0.0, %v7625
  %v7627 = vpop.f32.mrf.mxu0
  %7628 = vmatprep.mubr.f32.mxu0 0.0
  %v7629 = vand.u32 %v7333, 4294901760
  %v7630 = vsub.f32 %v7333, %v7629
  %v7631 = vand.u32 %v7630, 4294901760
  %v7632 = vsub.f32 %v7630, %v7631
  %v7633 = vand.u32 %v7632, 4294901760
  %7634 = vmatmul.mubr.f32.gmra.mxu0 %v7633
  %v7635 = vpop.f32.mrf.mxu0
  %v7636 = vadd.f32 0.0, %v7635
  %v7637 = vpop.f32.mrf.mxu0
  %7638 = vmatprep.mubr.f32.mxu0 0.0
  %v7639 = vand.u32 %v7336, 4294901760
  %v7640 = vsub.f32 %v7336, %v7639
  %v7641 = vand.u32 %v7640, 4294901760
  %v7642 = vsub.f32 %v7640, %v7641
  %v7643 = vand.u32 %v7642, 4294901760
  %7644 = vmatmul.mubr.f32.gmra.mxu0 %v7643
  %v7645 = vpop.f32.mrf.mxu0
  %v7646 = vadd.f32 0.0, %v7645
  %v7647 = vpop.f32.mrf.mxu0
  %7648 = vmatprep.mubr.f32.mxu0 0.0
  %v7649 = vand.u32 %v7339, 4294901760
  %v7650 = vsub.f32 %v7339, %v7649
  %v7651 = vand.u32 %v7650, 4294901760
  %v7652 = vsub.f32 %v7650, %v7651
  %v7653 = vand.u32 %v7652, 4294901760
  %7654 = vmatmul.mubr.f32.gmra.mxu0 %v7653
  %v7655 = vpop.f32.mrf.mxu0
  %v7656 = vadd.f32 0.0, %v7655
  %v7657 = vpop.f32.mrf.mxu0
  %7658 = vmatprep.mubr.f32.mxu0 0.0
  %v7659 = vand.u32 %v7342, 4294901760
  %v7660 = vsub.f32 %v7342, %v7659
  %v7661 = vand.u32 %v7660, 4294901760
  %v7662 = vsub.f32 %v7660, %v7661
  %v7663 = vand.u32 %v7662, 4294901760
  %7664 = vmatmul.mubr.f32.gmra.mxu0 %v7663
  %v7665 = vpop.f32.mrf.mxu0
  %v7666 = vadd.f32 0.0, %v7665
  %v7667 = vpop.f32.mrf.mxu0
  %7668 = vmatprep.mubr.f32.mxu0 0.0
  %v7669 = vand.u32 %v7345, 4294901760
  %v7670 = vsub.f32 %v7345, %v7669
  %v7671 = vand.u32 %v7670, 4294901760
  %v7672 = vsub.f32 %v7670, %v7671
  %v7673 = vand.u32 %v7672, 4294901760
  %7674 = vmatmul.mubr.f32.gmra.mxu0 %v7673
  %v7675 = vpop.f32.mrf.mxu0
  %v7676 = vadd.f32 0.0, %v7675
  %v7677 = vpop.f32.mrf.mxu0
  %7678 = vmatprep.mubr.f32.mxu0 0.0
  %v7679 = vand.u32 %v7348, 4294901760
  %v7680 = vsub.f32 %v7348, %v7679
  %v7681 = vand.u32 %v7680, 4294901760
  %v7682 = vsub.f32 %v7680, %v7681
  %v7683 = vand.u32 %v7682, 4294901760
  %7684 = vmatmul.mubr.f32.gmra.mxu0 %v7683
  %v7685 = vpop.f32.mrf.mxu0
  %v7686 = vadd.f32 0.0, %v7685
  %v7687 = vpop.f32.mrf.mxu0
  %7688 = vmatprep.mubr.f32.mxu0 0.0
  %v7689 = vand.u32 %v7351, 4294901760
  %v7690 = vsub.f32 %v7351, %v7689
  %v7691 = vand.u32 %v7690, 4294901760
  %v7692 = vsub.f32 %v7690, %v7691
  %v7693 = vand.u32 %v7692, 4294901760
  %7694 = vmatmul.mubr.f32.gmra.mxu0 %v7693
  %v7695 = vpop.f32.mrf.mxu0
  %v7696 = vadd.f32 0.0, %v7695
  %v7697 = vpop.f32.mrf.mxu0
  %7698 = vmatprep.mubr.f32.mxu0 0.0
  %v7699 = vand.u32 %v7354, 4294901760
  %v7700 = vsub.f32 %v7354, %v7699
  %v7701 = vand.u32 %v7700, 4294901760
  %v7702 = vsub.f32 %v7700, %v7701
  %v7703 = vand.u32 %v7702, 4294901760
  %7704 = vmatmul.mubr.f32.gmra.mxu0 %v7703
  %v7705 = vpop.f32.mrf.mxu0
  %v7706 = vadd.f32 0.0, %v7705
  %v7707 = vpop.f32.mrf.mxu0
  %7708 = vmatprep.mubr.f32.mxu0 0.0
  %v7709 = vand.u32 %v7357, 4294901760
  %v7710 = vsub.f32 %v7357, %v7709
  %v7711 = vand.u32 %v7710, 4294901760
  %v7712 = vsub.f32 %v7710, %v7711
  %v7713 = vand.u32 %v7712, 4294901760
  %7714 = vmatmul.mubr.f32.gmra.mxu0 %v7713
  %v7715 = vpop.f32.mrf.mxu0
  %v7716 = vadd.f32 0.0, %v7715
  %v7717 = vpop.f32.mrf.mxu0
  %7718 = vmatprep.mubr.f32.mxu0 0.0
  %v7719 = vand.u32 %v7360, 4294901760
  %v7720 = vsub.f32 %v7360, %v7719
  %v7721 = vand.u32 %v7720, 4294901760
  %v7722 = vsub.f32 %v7720, %v7721
  %v7723 = vand.u32 %v7722, 4294901760
  %7724 = vmatmul.mubr.f32.gmra.mxu0 %v7723
  %v7725 = vpop.f32.mrf.mxu0
  %v7726 = vadd.f32 0.0, %v7725
  %v7727 = vpop.f32.mrf.mxu0
  %7728 = vmatprep.mubr.f32.mxu0 0.0
  %v7729 = vand.u32 %v7363, 4294901760
  %v7730 = vsub.f32 %v7363, %v7729
  %v7731 = vand.u32 %v7730, 4294901760
  %v7732 = vsub.f32 %v7730, %v7731
  %v7733 = vand.u32 %v7732, 4294901760
  %7734 = vmatmul.mubr.f32.gmra.mxu0 %v7733
  %v7735 = vpop.f32.mrf.mxu0
  %v7736 = vadd.f32 0.0, %v7735
  %v7737 = vpop.f32.mrf.mxu0
  %7738 = vmatprep.mubr.f32.mxu0 0.0
  %v7739 = vand.u32 %v7366, 4294901760
  %v7740 = vsub.f32 %v7366, %v7739
  %v7741 = vand.u32 %v7740, 4294901760
  %v7742 = vsub.f32 %v7740, %v7741
  %v7743 = vand.u32 %v7742, 4294901760
  %7744 = vmatmul.mubr.f32.gmra.mxu0 %v7743
  %v7745 = vpop.f32.mrf.mxu0
  %v7746 = vadd.f32 0.0, %v7745
  %v7747 = vpop.f32.mrf.mxu0
  %7748 = vmatprep.mubr.f32.mxu0 0.0
  %v7749 = vand.u32 %v7369, 4294901760
  %v7750 = vsub.f32 %v7369, %v7749
  %v7751 = vand.u32 %v7750, 4294901760
  %v7752 = vsub.f32 %v7750, %v7751
  %v7753 = vand.u32 %v7752, 4294901760
  %7754 = vmatmul.mubr.f32.gmra.mxu0 %v7753
  %v7755 = vpop.f32.mrf.mxu0
  %v7756 = vadd.f32 0.0, %v7755
  %v7757 = vpop.f32.mrf.mxu0
  %7758 = vmatprep.mubr.f32.mxu0 0.0
  %v7759 = vand.u32 %v7372, 4294901760
  %v7760 = vsub.f32 %v7372, %v7759
  %v7761 = vand.u32 %v7760, 4294901760
  %v7762 = vsub.f32 %v7760, %v7761
  %v7763 = vand.u32 %v7762, 4294901760
  %7764 = vmatmul.mubr.f32.gmra.mxu0 %v7763
  %v7765 = vpop.f32.mrf.mxu0
  %v7766 = vadd.f32 0.0, %v7765
  %v7767 = vpop.f32.mrf.mxu0
  %7768 = vmatprep.mubr.f32.mxu0 0.0
  %v7769 = vand.u32 %v7375, 4294901760
  %v7770 = vsub.f32 %v7375, %v7769
  %v7771 = vand.u32 %v7770, 4294901760
  %v7772 = vsub.f32 %v7770, %v7771
  %v7773 = vand.u32 %v7772, 4294901760
  %7774 = vmatmul.mubr.f32.gmra.mxu0 %v7773
  %v7775 = vpop.f32.mrf.mxu0
  %v7776 = vadd.f32 0.0, %v7775
  %v7777 = vpop.f32.mrf.mxu0
  %7778 = vmatprep.mubr.f32.mxu0 0.0
  %v7779 = vand.u32 %v7378, 4294901760
  %v7780 = vsub.f32 %v7378, %v7779
  %v7781 = vand.u32 %v7780, 4294901760
  %v7782 = vsub.f32 %v7780, %v7781
  %v7783 = vand.u32 %v7782, 4294901760
  %7784 = vmatmul.mubr.f32.gmra.mxu0 %v7783
  %v7785 = vpop.f32.mrf.mxu0
  %v7786 = vadd.f32 0.0, %v7785
  %v7787 = vpop.f32.mrf.mxu0
  %7788 = vmatprep.mubr.f32.mxu0 0.0
  %v7789 = vand.u32 %v7381, 4294901760
  %v7790 = vsub.f32 %v7381, %v7789
  %v7791 = vand.u32 %v7790, 4294901760
  %v7792 = vsub.f32 %v7790, %v7791
  %v7793 = vand.u32 %v7792, 4294901760
  %7794 = vmatmul.mubr.f32.gmra.mxu0 %v7793
  %v7795 = vpop.f32.mrf.mxu0
  %v7796 = vadd.f32 0.0, %v7795
  %v7797 = vpop.f32.mrf.mxu0
  %7798 = vmatprep.mubr.f32.mxu0 0.0
  %v7799 = vand.u32 %v7384, 4294901760
  %v7800 = vsub.f32 %v7384, %v7799
  %v7801 = vand.u32 %v7800, 4294901760
  %v7802 = vsub.f32 %v7800, %v7801
  %v7803 = vand.u32 %v7802, 4294901760
  %7804 = vmatmul.mubr.f32.gmra.mxu0 %v7803
  %v7805 = vpop.f32.mrf.mxu0
  %v7806 = vadd.f32 0.0, %v7805
  %v7807 = vpop.f32.mrf.mxu0
  %7808 = vmatprep.mubr.f32.mxu0 0.0
  %v7809 = vand.u32 %v7387, 4294901760
  %v7810 = vsub.f32 %v7387, %v7809
  %v7811 = vand.u32 %v7810, 4294901760
  %v7812 = vsub.f32 %v7810, %v7811
  %v7813 = vand.u32 %v7812, 4294901760
  %7814 = vmatmul.mubr.f32.gmra.mxu0 %v7813
  %v7815 = vpop.f32.mrf.mxu0
  %v7816 = vadd.f32 0.0, %v7815
  %v7817 = vpop.f32.mrf.mxu0
  %7818 = vmatprep.mubr.f32.mxu0 0.0
  %v7819 = vand.u32 %v7390, 4294901760
  %v7820 = vsub.f32 %v7390, %v7819
  %v7821 = vand.u32 %v7820, 4294901760
  %v7822 = vsub.f32 %v7820, %v7821
  %v7823 = vand.u32 %v7822, 4294901760
  %7824 = vmatmul.mubr.f32.gmra.mxu0 %v7823
  %v7825 = vpop.f32.mrf.mxu0
  %v7826 = vadd.f32 0.0, %v7825
  %v7827 = vpop.f32.mrf.mxu0
  %7828 = vmatprep.mubr.f32.mxu0 0.0
  %v7829 = vand.u32 %v7393, 4294901760
  %v7830 = vsub.f32 %v7393, %v7829
  %v7831 = vand.u32 %v7830, 4294901760
  %v7832 = vsub.f32 %v7830, %v7831
  %v7833 = vand.u32 %v7832, 4294901760
  %7834 = vmatmul.mubr.f32.gmra.mxu0 %v7833
  %v7835 = vpop.f32.mrf.mxu0
  %v7836 = vadd.f32 0.0, %v7835
  %v7837 = vpop.f32.mrf.mxu0
  %7838 = vmatprep.mubr.f32.mxu0 0.0
  %v7839 = vand.u32 %v7396, 4294901760
  %v7840 = vsub.f32 %v7396, %v7839
  %v7841 = vand.u32 %v7840, 4294901760
  %v7842 = vsub.f32 %v7840, %v7841
  %v7843 = vand.u32 %v7842, 4294901760
  %7844 = vmatmul.mubr.f32.gmra.mxu0 %v7843
  %v7845 = vpop.f32.mrf.mxu0
  %v7846 = vadd.f32 0.0, %v7845
  %v7847 = vpop.f32.mrf.mxu0
  %7848 = vmatprep.mubr.f32.mxu0 0.0
  %v7849 = vand.u32 %v7399, 4294901760
  %v7850 = vsub.f32 %v7399, %v7849
  %v7851 = vand.u32 %v7850, 4294901760
  %v7852 = vsub.f32 %v7850, %v7851
  %v7853 = vand.u32 %v7852, 4294901760
  %7854 = vmatmul.mubr.f32.gmra.mxu0 %v7853
  %v7855 = vpop.f32.mrf.mxu0
  %v7856 = vadd.f32 0.0, %v7855
  %v7857 = vpop.f32.mrf.mxu0
  %7858 = vmatprep.mubr.f32.mxu0 0.0
  %v7859 = vand.u32 %v7402, 4294901760
  %v7860 = vsub.f32 %v7402, %v7859
  %v7861 = vand.u32 %v7860, 4294901760
  %v7862 = vsub.f32 %v7860, %v7861
  %v7863 = vand.u32 %v7862, 4294901760
  %7864 = vmatmul.mubr.f32.gmra.mxu0 %v7863
  %v7865 = vpop.f32.mrf.mxu0
  %v7866 = vadd.f32 0.0, %v7865
  %v7867 = vpop.f32.mrf.mxu0
  %7868 = vmatprep.mubr.f32.mxu0 0.0
  %v7869 = vand.u32 %v7405, 4294901760
  %v7870 = vsub.f32 %v7405, %v7869
  %v7871 = vand.u32 %v7870, 4294901760
  %v7872 = vsub.f32 %v7870, %v7871
  %v7873 = vand.u32 %v7872, 4294901760
  %7874 = vmatmul.mubr.f32.gmra.mxu0 %v7873
  %v7875 = vpop.f32.mrf.mxu0
  %v7876 = vadd.f32 0.0, %v7875
  %v7877 = vpop.f32.mrf.mxu0
  %7878 = vmatprep.mubr.f32.mxu0 0.0
  %v7879 = vand.u32 %v7408, 4294901760
  %v7880 = vsub.f32 %v7408, %v7879
  %v7881 = vand.u32 %v7880, 4294901760
  %v7882 = vsub.f32 %v7880, %v7881
  %v7883 = vand.u32 %v7882, 4294901760
  %7884 = vmatmul.mubr.f32.gmra.mxu0 %v7883
  %v7885 = vpop.f32.mrf.mxu0
  %v7886 = vadd.f32 0.0, %v7885
  %v7887 = vpop.f32.mrf.mxu0
  %7888 = vmatprep.mubr.f32.mxu0 0.0
  %v7889 = vand.u32 %v7411, 4294901760
  %v7890 = vsub.f32 %v7411, %v7889
  %v7891 = vand.u32 %v7890, 4294901760
  %v7892 = vsub.f32 %v7890, %v7891
  %v7893 = vand.u32 %v7892, 4294901760
  %7894 = vmatmul.mubr.f32.gmra.mxu0 %v7893
  %v7895 = vpop.f32.mrf.mxu0
  %v7896 = vadd.f32 0.0, %v7895
  %v7897 = vpop.f32.mrf.mxu0
  %7898 = vmatprep.mubr.f32.mxu0 0.0
  %v7899 = vand.u32 %v7414, 4294901760
  %v7900 = vsub.f32 %v7414, %v7899
  %v7901 = vand.u32 %v7900, 4294901760
  %v7902 = vsub.f32 %v7900, %v7901
  %v7903 = vand.u32 %v7902, 4294901760
  %7904 = vmatmul.mubr.f32.gmra.mxu0 %v7903
  %v7905 = vpop.f32.mrf.mxu0
  %v7906 = vadd.f32 0.0, %v7905
  %v7907 = vpop.f32.mrf.mxu0
  %7908 = vmatprep.mubr.f32.mxu0 0.0
  %v7909 = vand.u32 %v7417, 4294901760
  %v7910 = vsub.f32 %v7417, %v7909
  %v7911 = vand.u32 %v7910, 4294901760
  %v7912 = vsub.f32 %v7910, %v7911
  %v7913 = vand.u32 %v7912, 4294901760
  %7914 = vmatmul.mubr.f32.gmra.mxu0 %v7913
  %v7915 = vpop.f32.mrf.mxu0
  %v7916 = vadd.f32 0.0, %v7915
  %v7917 = vpop.f32.mrf.mxu0
  %7918 = vmatprep.mubr.f32.mxu0 0.0
  %v7919 = vand.u32 %v7420, 4294901760
  %v7920 = vsub.f32 %v7420, %v7919
  %v7921 = vand.u32 %v7920, 4294901760
  %v7922 = vsub.f32 %v7920, %v7921
  %v7923 = vand.u32 %v7922, 4294901760
  %7924 = vmatmul.mubr.f32.gmra.mxu0 %v7923
  %v7925 = vpop.f32.mrf.mxu0
  %v7926 = vadd.f32 0.0, %v7925
  %v7927 = vpop.f32.mrf.mxu0
  %7928 = vmatprep.mubr.f32.mxu0 0.0
  %v7929 = vand.u32 %v7423, 4294901760
  %v7930 = vsub.f32 %v7423, %v7929
  %v7931 = vand.u32 %v7930, 4294901760
  %v7932 = vsub.f32 %v7930, %v7931
  %v7933 = vand.u32 %v7932, 4294901760
  %7934 = vmatmul.mubr.f32.gmra.mxu0 %v7933
  %v7935 = vpop.f32.mrf.mxu0
  %v7936 = vadd.f32 0.0, %v7935
  %v7937 = vpop.f32.mrf.mxu0
  %7938 = vmatprep.mubr.f32.mxu0 0.0
  %v7939 = vand.u32 %v7426, 4294901760
  %v7940 = vsub.f32 %v7426, %v7939
  %v7941 = vand.u32 %v7940, 4294901760
  %v7942 = vsub.f32 %v7940, %v7941
  %v7943 = vand.u32 %v7942, 4294901760
  %7944 = vmatmul.mubr.f32.gmra.mxu0 %v7943
  %v7945 = vpop.f32.mrf.mxu0
  %v7946 = vadd.f32 0.0, %v7945
  %v7947 = vpop.f32.mrf.mxu0
  %7948 = vmatprep.mubr.f32.mxu0 0.0
  %v7949 = vand.u32 %v7429, 4294901760
  %v7950 = vsub.f32 %v7429, %v7949
  %v7951 = vand.u32 %v7950, 4294901760
  %v7952 = vsub.f32 %v7950, %v7951
  %v7953 = vand.u32 %v7952, 4294901760
  %7954 = vmatmul.mubr.f32.gmra.mxu0 %v7953
  %v7955 = vpop.f32.mrf.mxu0
  %v7956 = vadd.f32 0.0, %v7955
  %v7957 = vpop.f32.mrf.mxu0
  %7958 = vmatprep.mubr.f32.mxu0 0.0
  %v7959 = vand.u32 %v7432, 4294901760
  %v7960 = vsub.f32 %v7432, %v7959
  %v7961 = vand.u32 %v7960, 4294901760
  %v7962 = vsub.f32 %v7960, %v7961
  %v7963 = vand.u32 %v7962, 4294901760
  %7964 = vmatmul.mubr.f32.gmra.mxu0 %v7963
  %v7965 = vpop.f32.mrf.mxu0
  %v7966 = vadd.f32 0.0, %v7965
  %v7967 = vpop.f32.mrf.mxu0
  %7968 = vmatprep.mubr.f32.mxu0 0.0
  %v7969 = vand.u32 %v7435, 4294901760
  %v7970 = vsub.f32 %v7435, %v7969
  %v7971 = vand.u32 %v7970, 4294901760
  %v7972 = vsub.f32 %v7970, %v7971
  %v7973 = vand.u32 %v7972, 4294901760
  %7974 = vmatmul.mubr.f32.gmra.mxu0 %v7973
  %v7975 = vpop.f32.mrf.mxu0
  %v7976 = vadd.f32 0.0, %v7975
  %v7977 = vpop.f32.mrf.mxu0
  %7978 = vmatprep.mubr.f32.mxu0 0.0
  %v7979 = vand.u32 %v7438, 4294901760
  %v7980 = vsub.f32 %v7438, %v7979
  %v7981 = vand.u32 %v7980, 4294901760
  %v7982 = vsub.f32 %v7980, %v7981
  %v7983 = vand.u32 %v7982, 4294901760
  %7984 = vmatmul.mubr.f32.gmra.mxu0 %v7983
  %v7985 = vpop.f32.mrf.mxu0
  %v7986 = vadd.f32 0.0, %v7985
  %v7987 = vpop.f32.mrf.mxu0
  %7988 = vmatprep.mubr.f32.mxu0 0.0
  %v7989 = vand.u32 %v7441, 4294901760
  %v7990 = vsub.f32 %v7441, %v7989
  %v7991 = vand.u32 %v7990, 4294901760
  %v7992 = vsub.f32 %v7990, %v7991
  %v7993 = vand.u32 %v7992, 4294901760
  %7994 = vmatmul.mubr.f32.gmra.mxu0 %v7993
  %v7995 = vpop.f32.mrf.mxu0
  %v7996 = vadd.f32 0.0, %v7995
  %v7997 = vpop.f32.mrf.mxu0
  %7998 = vmatprep.mubr.f32.mxu0 0.0
  %v7999 = vand.u32 %v7444, 4294901760
  %v8000 = vsub.f32 %v7444, %v7999
  %v8001 = vand.u32 %v8000, 4294901760
  %v8002 = vsub.f32 %v8000, %v8001
  %v8003 = vand.u32 %v8002, 4294901760
  %8004 = vmatmul.mubr.f32.gmra.mxu0 %v8003
  %v8005 = vpop.f32.mrf.mxu0
  %v8006 = vadd.f32 0.0, %v8005
  %v8007 = vpop.f32.mrf.mxu0
  %8008 = vmatprep.mubr.f32.mxu0 0.0
  %v8009 = vand.u32 %v7447, 4294901760
  %v8010 = vsub.f32 %v7447, %v8009
  %v8011 = vand.u32 %v8010, 4294901760
  %v8012 = vsub.f32 %v8010, %v8011
  %v8013 = vand.u32 %v8012, 4294901760
  %8014 = vmatmul.mubr.f32.gmra.mxu0 %v8013
  %v8015 = vpop.f32.mrf.mxu0
  %v8016 = vadd.f32 0.0, %v8015
  %v8017 = vpop.f32.mrf.mxu0
  %8018 = vmatprep.mubr.f32.mxu0 0.0
  %v8019 = vand.u32 %v7450, 4294901760
  %v8020 = vsub.f32 %v7450, %v8019
  %v8021 = vand.u32 %v8020, 4294901760
  %v8022 = vsub.f32 %v8020, %v8021
  %v8023 = vand.u32 %v8022, 4294901760
  %8024 = vmatmul.mubr.f32.gmra.mxu0 %v8023
  %v8025 = vpop.f32.mrf.mxu0
  %v8026 = vadd.f32 0.0, %v8025
  %v8027 = vpop.f32.mrf.mxu0
  %8028 = vmatprep.mubr.f32.mxu0 0.0
  %v8029 = vand.u32 %v7453, 4294901760
  %v8030 = vsub.f32 %v7453, %v8029
  %v8031 = vand.u32 %v8030, 4294901760
  %v8032 = vsub.f32 %v8030, %v8031
  %v8033 = vand.u32 %v8032, 4294901760
  %8034 = vmatmul.mubr.f32.gmra.mxu0 %v8033
  %v8035 = vpop.f32.mrf.mxu0
  %v8036 = vadd.f32 0.0, %v8035
  %v8037 = vpop.f32.mrf.mxu0
  %8038 = vmatprep.mubr.f32.mxu0 0.0
  %v8039 = vand.u32 %v7456, 4294901760
  %v8040 = vsub.f32 %v7456, %v8039
  %v8041 = vand.u32 %v8040, 4294901760
  %v8042 = vsub.f32 %v8040, %v8041
  %v8043 = vand.u32 %v8042, 4294901760
  %8044 = vmatmul.mubr.f32.gmra.mxu0 %v8043
  %v8045 = vpop.f32.mrf.mxu0
  %v8046 = vadd.f32 0.0, %v8045
  %v8047 = vpop.f32.mrf.mxu0
  %8048 = vmatprep.mubr.f32.mxu0 0.0
  %v8049 = vand.u32 %v7459, 4294901760
  %v8050 = vsub.f32 %v7459, %v8049
  %v8051 = vand.u32 %v8050, 4294901760
  %v8052 = vsub.f32 %v8050, %v8051
  %v8053 = vand.u32 %v8052, 4294901760
  %8054 = vmatmul.mubr.f32.gmra.mxu0 %v8053
  %v8055 = vpop.f32.mrf.mxu0
  %v8056 = vadd.f32 0.0, %v8055
  %v8057 = vpop.f32.mrf.mxu0
  %8058 = vmatprep.mubr.f32.mxu0 0.0
  %v8059 = vand.u32 %v7462, 4294901760
  %v8060 = vsub.f32 %v7462, %v8059
  %v8061 = vand.u32 %v8060, 4294901760
  %v8062 = vsub.f32 %v8060, %v8061
  %v8063 = vand.u32 %v8062, 4294901760
  %8064 = vmatmul.mubr.f32.gmra.mxu0 %v8063
  %v8065 = vpop.f32.mrf.mxu0
  %v8066 = vadd.f32 0.0, %v8065
  %v8067 = vpop.f32.mrf.mxu0
  %8068 = vmatprep.mubr.f32.mxu0 0.0
  %v8069 = vand.u32 %v7465, 4294901760
  %v8070 = vsub.f32 %v7465, %v8069
  %v8071 = vand.u32 %v8070, 4294901760
  %v8072 = vsub.f32 %v8070, %v8071
  %v8073 = vand.u32 %v8072, 4294901760
  %8074 = vmatmul.mubr.f32.gmra.mxu0 %v8073
  %v8075 = vpop.f32.mrf.mxu0
  %v8076 = vadd.f32 0.0, %v8075
  %v8077 = vpop.f32.mrf.mxu0
  %8078 = vmatprep.mubr.f32.mxu0 0.0
  %v8079 = vand.u32 %v7468, 4294901760
  %v8080 = vsub.f32 %v7468, %v8079
  %v8081 = vand.u32 %v8080, 4294901760
  %v8082 = vsub.f32 %v8080, %v8081
  %v8083 = vand.u32 %v8082, 4294901760
  %8084 = vmatmul.mubr.f32.gmra.mxu0 %v8083
  %v8085 = vpop.f32.mrf.mxu0
  %v8086 = vadd.f32 0.0, %v8085
  %v8087 = vpop.f32.mrf.mxu0
  %8088 = vmatprep.mubr.f32.mxu0 0.0
  %v8089 = vand.u32 %v7471, 4294901760
  %v8090 = vsub.f32 %v7471, %v8089
  %v8091 = vand.u32 %v8090, 4294901760
  %v8092 = vsub.f32 %v8090, %v8091
  %v8093 = vand.u32 %v8092, 4294901760
  %8094 = vmatmul.mubr.f32.gmra.mxu0 %v8093
  %v8095 = vpop.f32.mrf.mxu0
  %v8096 = vadd.f32 0.0, %v8095
  %v8097 = vpop.f32.mrf.mxu0
  %8098 = vmatprep.mubr.f32.mxu0 0.0
  %v8099 = vand.u32 %v7474, 4294901760
  %v8100 = vsub.f32 %v7474, %v8099
  %v8101 = vand.u32 %v8100, 4294901760
  %v8102 = vsub.f32 %v8100, %v8101
  %v8103 = vand.u32 %v8102, 4294901760
  %8104 = vmatmul.mubr.f32.gmra.mxu0 %v8103
  %v8105 = vpop.f32.mrf.mxu0
  %v8106 = vadd.f32 0.0, %v8105
  %v8107 = vpop.f32.mrf.mxu0
  %8108 = vmatprep.mubr.f32.mxu0 0.0
  %v8109 = vand.u32 %v7477, 4294901760
  %v8110 = vsub.f32 %v7477, %v8109
  %v8111 = vand.u32 %v8110, 4294901760
  %v8112 = vsub.f32 %v8110, %v8111
  %v8113 = vand.u32 %v8112, 4294901760
  %8114 = vmatmul.mubr.f32.gmra.mxu0 %v8113
  %v8115 = vpop.f32.mrf.mxu0
  %v8116 = vadd.f32 0.0, %v8115
  %v8117 = vpop.f32.mrf.mxu0
  %8118 = vmatprep.mubr.f32.mxu0 0.0
  %v8119 = vand.u32 %v7480, 4294901760
  %v8120 = vsub.f32 %v7480, %v8119
  %v8121 = vand.u32 %v8120, 4294901760
  %v8122 = vsub.f32 %v8120, %v8121
  %v8123 = vand.u32 %v8122, 4294901760
  %8124 = vmatmul.mubr.f32.gmra.mxu0 %v8123
  %v8125 = vpop.f32.mrf.mxu0
  %v8126 = vadd.f32 0.0, %v8125
  %v8127 = vpop.f32.mrf.mxu0
  %8128 = vmatprep.mubr.f32.mxu0 0.0
  %v8129 = vand.u32 %v7483, 4294901760
  %v8130 = vsub.f32 %v7483, %v8129
  %v8131 = vand.u32 %v8130, 4294901760
  %v8132 = vsub.f32 %v8130, %v8131
  %v8133 = vand.u32 %v8132, 4294901760
  %8134 = vmatmul.mubr.f32.gmra.mxu0 %v8133
  %v8135 = vpop.f32.mrf.mxu0
  %v8136 = vadd.f32 0.0, %v8135
  %v8137 = vpop.f32.mrf.mxu0
  %8138 = vmatprep.mubr.f32.mxu0 0.0
  %v8139 = vand.u32 %v7486, 4294901760
  %v8140 = vsub.f32 %v7486, %v8139
  %v8141 = vand.u32 %v8140, 4294901760
  %v8142 = vsub.f32 %v8140, %v8141
  %v8143 = vand.u32 %v8142, 4294901760
  %8144 = vmatmul.mubr.f32.gmra.mxu0 %v8143
  %v8145 = vpop.f32.mrf.mxu0
  %v8146 = vadd.f32 0.0, %v8145
  %v8147 = vpop.f32.mrf.mxu0
  %8148 = vmatprep.mubr.f32.mxu0 0.0
  %v8149 = vand.u32 %v7489, 4294901760
  %v8150 = vsub.f32 %v7489, %v8149
  %v8151 = vand.u32 %v8150, 4294901760
  %v8152 = vsub.f32 %v8150, %v8151
  %v8153 = vand.u32 %v8152, 4294901760
  %8154 = vmatmul.mubr.f32.gmra.mxu0 %v8153
  %v8155 = vpop.f32.mrf.mxu0
  %v8156 = vadd.f32 0.0, %v8155
  %v8157 = vpop.f32.mrf.mxu0
  %8158 = vmatprep.mubr.f32.mxu0 0.0
  %v8159 = vand.u32 %v7492, 4294901760
  %v8160 = vsub.f32 %v7492, %v8159
  %v8161 = vand.u32 %v8160, 4294901760
  %v8162 = vsub.f32 %v8160, %v8161
  %v8163 = vand.u32 %v8162, 4294901760
  %8164 = vmatmul.mubr.f32.gmra.mxu0 %v8163
  %v8165 = vpop.f32.mrf.mxu0
  %v8166 = vadd.f32 0.0, %v8165
  %v8167 = vpop.f32.mrf.mxu0
  %8168 = vmatprep.mubr.f32.mxu0 0.0
  %v8169 = vand.u32 %v7495, 4294901760
  %v8170 = vsub.f32 %v7495, %v8169
  %v8171 = vand.u32 %v8170, 4294901760
  %v8172 = vsub.f32 %v8170, %v8171
  %v8173 = vand.u32 %v8172, 4294901760
  %8174 = vmatmul.mubr.f32.gmra.mxu0 %v8173
  %v8175 = vpop.f32.mrf.mxu0
  %v8176 = vadd.f32 0.0, %v8175
  %v8177 = vpop.f32.mrf.mxu0
  %8178 = vmatprep.mubr.f32.mxu0 0.0
  %v8179 = vand.u32 %v7498, 4294901760
  %v8180 = vsub.f32 %v7498, %v8179
  %v8181 = vand.u32 %v8180, 4294901760
  %v8182 = vsub.f32 %v8180, %v8181
  %v8183 = vand.u32 %v8182, 4294901760
  %8184 = vmatmul.mubr.f32.gmra.mxu0 %v8183
  %v8185 = vpop.f32.mrf.mxu0
  %v8186 = vadd.f32 0.0, %v8185
  %v8187 = vpop.f32.mrf.mxu0
  %8188 = vmatprep.mubr.f32.mxu0 0.0
  %v8189 = vand.u32 %v7501, 4294901760
  %v8190 = vsub.f32 %v7501, %v8189
  %v8191 = vand.u32 %v8190, 4294901760
  %v8192 = vsub.f32 %v8190, %v8191
  %v8193 = vand.u32 %v8192, 4294901760
  %8194 = vmatmul.mubr.f32.gmra.mxu0 %v8193
  %v8195 = vpop.f32.mrf.mxu0
  %v8196 = vadd.f32 0.0, %v8195
  %v8197 = vpop.f32.mrf.mxu0
  %8198 = vmatprep.mubr.f32.mxu0 0.0
  %v8199 = vand.u32 %v7504, 4294901760
  %v8200 = vsub.f32 %v7504, %v8199
  %v8201 = vand.u32 %v8200, 4294901760
  %v8202 = vsub.f32 %v8200, %v8201
  %v8203 = vand.u32 %v8202, 4294901760
  %8204 = vmatmul.mubr.f32.gmra.mxu0 %v8203
  %v8205 = vpop.f32.mrf.mxu0
  %v8206 = vadd.f32 0.0, %v8205
  %v8207 = vpop.f32.mrf.mxu0
  %8208 = vmatprep.mubr.f32.mxu0 0.0
  %v8209 = vand.u32 %v7507, 4294901760
  %v8210 = vsub.f32 %v7507, %v8209
  %v8211 = vand.u32 %v8210, 4294901760
  %v8212 = vsub.f32 %v8210, %v8211
  %v8213 = vand.u32 %v8212, 4294901760
  %8214 = vmatmul.mubr.f32.gmra.mxu0 %v8213
  %v8215 = vpop.f32.mrf.mxu0
  %v8216 = vadd.f32 0.0, %v8215
  %v8217 = vpop.f32.mrf.mxu0
  %8218 = vdwg.mxu0
  %8219 = vmatprep.subr.mxu0 0.0
  %8220 = vmatpush1.msra.mxu0 0.0
  %8221 = vmatprep.subr.mxu0 0.0
  %8222 = vmatpush1.msra.mxu0 0.0
  %8223 = vmatprep.subr.mxu0 0.0
  %8224 = vmatpush1.msra.mxu0 0.0
  %8225 = vmatprep.subr.mxu0 0.0
  %8226 = vmatpush1.msra.mxu0 0.0
  %8227 = vmatprep.subr.mxu0 0.0
  %8228 = vmatpush1.msra.mxu0 0.0
  %8229 = vmatprep.subr.mxu0 0.0
  %8230 = vmatpush1.msra.mxu0 0.0
  %8231 = vmatprep.subr.mxu0 0.0
  %8232 = vmatpush1.msra.mxu0 0.0
  %8233 = vmatprep.subr.mxu0 0.0
  %8234 = vmatpush1.msra.mxu0 0.0
  %8235 = vmatprep.subr.mxu0 0.0
  %8236 = vmatpush1.msra.mxu0 0.0
  %8237 = vmatprep.subr.mxu0 0.0
  %8238 = vmatpush1.msra.mxu0 0.0
  %8239 = vmatprep.subr.mxu0 0.0
  %8240 = vmatpush1.msra.mxu0 0.0
  %8241 = vmatprep.subr.mxu0 0.0
  %v8242 = vand.u32 %v253, 4294901760
  %v8243 = vsub.f32 %v253, %v8242
  %v8244 = vand.u32 %v8243, 4294901760
  %v8245 = vsub.f32 %v8243, %v8244
  %v8246 = vand.u32 %v8245, 4294901760
  %8247 = vmatpush1.msra.mxu0 %v8246
  %8248 = vmatprep.subr.mxu0 0.0
  %v8249 = vand.u32 %v252, 4294901760
  %v8250 = vsub.f32 %v252, %v8249
  %v8251 = vand.u32 %v8250, 4294901760
  %v8252 = vsub.f32 %v8250, %v8251
  %v8253 = vand.u32 %v8252, 4294901760
  %8254 = vmatpush1.msra.mxu0 %v8253
  %8255 = vmatprep.subr.mxu0 0.0
  %v8256 = vand.u32 %v251, 4294901760
  %v8257 = vsub.f32 %v251, %v8256
  %v8258 = vand.u32 %v8257, 4294901760
  %v8259 = vsub.f32 %v8257, %v8258
  %v8260 = vand.u32 %v8259, 4294901760
  %8261 = vmatpush1.msra.mxu0 %v8260
  %8262 = vmatprep.subr.mxu0 0.0
  %v8263 = vand.u32 %v250, 4294901760
  %v8264 = vsub.f32 %v250, %v8263
  %v8265 = vand.u32 %v8264, 4294901760
  %v8266 = vsub.f32 %v8264, %v8265
  %v8267 = vand.u32 %v8266, 4294901760
  %8268 = vmatpush1.msra.mxu0 %v8267
  %8269 = vmatprep.subr.mxu0 0.0
  %v8270 = vand.u32 %v249, 4294901760
  %v8271 = vsub.f32 %v249, %v8270
  %v8272 = vand.u32 %v8271, 4294901760
  %v8273 = vsub.f32 %v8271, %v8272
  %v8274 = vand.u32 %v8273, 4294901760
  %8275 = vmatpush1.msra.mxu0 %v8274
  %8276 = vmatprep.subr.mxu0 0.0
  %8277 = vmatpush2.msra.mxu0 0.0
  %8278 = vmatprep.subr.mxu0 0.0
  %8279 = vmatpush2.msra.mxu0 0.0
  %8280 = vmatprep.subr.mxu0 0.0
  %8281 = vmatpush2.msra.mxu0 0.0
  %8282 = vmatprep.subr.mxu0 0.0
  %8283 = vmatpush2.msra.mxu0 0.0
  %8284 = vmatprep.subr.mxu0 0.0
  %8285 = vmatpush2.msra.mxu0 0.0
  %8286 = vmatprep.subr.mxu0 0.0
  %8287 = vmatpush2.msra.mxu0 0.0
  %8288 = vmatprep.subr.mxu0 0.0
  %8289 = vmatpush2.msra.mxu0 0.0
  %8290 = vmatprep.subr.mxu0 0.0
  %8291 = vmatpush2.msra.mxu0 0.0
  %8292 = vmatprep.subr.mxu0 0.0
  %8293 = vmatpush2.msra.mxu0 0.0
  %8294 = vmatprep.subr.mxu0 0.0
  %8295 = vmatpush2.msra.mxu0 0.0
  %8296 = vmatprep.subr.mxu0 0.0
  %8297 = vmatpush2.msra.mxu0 0.0
  %8298 = vmatprep.subr.mxu0 0.0
  %8299 = vmatpush2.msra.mxu0 0.0
  %8300 = vmatprep.subr.mxu0 0.0
  %8301 = vmatpush2.msra.mxu0 0.0
  %8302 = vmatprep.subr.mxu0 0.0
  %8303 = vmatpush2.msra.mxu0 0.0
  %8304 = vmatprep.subr.mxu0 0.0
  %8305 = vmatpush2.msra.mxu0 0.0
  %8306 = vmatprep.subr.mxu0 0.0
  %8307 = vmatpush2.msra.mxu0 0.0
  %8308 = vmatprep.mubr.f32.mxu0 0.0
  %v8309 = vand.u32 %v7318, 4294901760
  %8310 = vmatmul.mubr.f32.gmra.mxu0 %v8309
  %v8311 = vpop.f32.mrf.mxu0
  %v8312 = vadd.f32 %v7586, %v8311
  %v8313 = vpop.f32.mrf.mxu0
  %8314 = vmatprep.mubr.f32.mxu0 0.0
  %v8315 = vand.u32 %v7321, 4294901760
  %8316 = vmatmul.mubr.f32.gmra.mxu0 %v8315
  %v8317 = vpop.f32.mrf.mxu0
  %v8318 = vadd.f32 %v7596, %v8317
  %v8319 = vpop.f32.mrf.mxu0
  %8320 = vmatprep.mubr.f32.mxu0 0.0
  %v8321 = vand.u32 %v7324, 4294901760
  %8322 = vmatmul.mubr.f32.gmra.mxu0 %v8321
  %v8323 = vpop.f32.mrf.mxu0
  %v8324 = vadd.f32 %v7606, %v8323
  %v8325 = vpop.f32.mrf.mxu0
  %8326 = vmatprep.mubr.f32.mxu0 0.0
  %v8327 = vand.u32 %v7327, 4294901760
  %8328 = vmatmul.mubr.f32.gmra.mxu0 %v8327
  %v8329 = vpop.f32.mrf.mxu0
  %v8330 = vadd.f32 %v7616, %v8329
  %v8331 = vpop.f32.mrf.mxu0
  %8332 = vmatprep.mubr.f32.mxu0 0.0
  %v8333 = vand.u32 %v7330, 4294901760
  %8334 = vmatmul.mubr.f32.gmra.mxu0 %v8333
  %v8335 = vpop.f32.mrf.mxu0
  %v8336 = vadd.f32 %v7626, %v8335
  %v8337 = vpop.f32.mrf.mxu0
  %8338 = vmatprep.mubr.f32.mxu0 0.0
  %v8339 = vand.u32 %v7333, 4294901760
  %8340 = vmatmul.mubr.f32.gmra.mxu0 %v8339
  %v8341 = vpop.f32.mrf.mxu0
  %v8342 = vadd.f32 %v7636, %v8341
  %v8343 = vpop.f32.mrf.mxu0
  %8344 = vmatprep.mubr.f32.mxu0 0.0
  %v8345 = vand.u32 %v7336, 4294901760
  %8346 = vmatmul.mubr.f32.gmra.mxu0 %v8345
  %v8347 = vpop.f32.mrf.mxu0
  %v8348 = vadd.f32 %v7646, %v8347
  %v8349 = vpop.f32.mrf.mxu0
  %8350 = vmatprep.mubr.f32.mxu0 0.0
  %v8351 = vand.u32 %v7339, 4294901760
  %8352 = vmatmul.mubr.f32.gmra.mxu0 %v8351
  %v8353 = vpop.f32.mrf.mxu0
  %v8354 = vadd.f32 %v7656, %v8353
  %v8355 = vpop.f32.mrf.mxu0
  %8356 = vmatprep.mubr.f32.mxu0 0.0
  %v8357 = vand.u32 %v7342, 4294901760
  %8358 = vmatmul.mubr.f32.gmra.mxu0 %v8357
  %v8359 = vpop.f32.mrf.mxu0
  %v8360 = vadd.f32 %v7666, %v8359
  %v8361 = vpop.f32.mrf.mxu0
  %8362 = vmatprep.mubr.f32.mxu0 0.0
  %v8363 = vand.u32 %v7345, 4294901760
  %8364 = vmatmul.mubr.f32.gmra.mxu0 %v8363
  %v8365 = vpop.f32.mrf.mxu0
  %v8366 = vadd.f32 %v7676, %v8365
  %v8367 = vpop.f32.mrf.mxu0
  %8368 = vmatprep.mubr.f32.mxu0 0.0
  %v8369 = vand.u32 %v7348, 4294901760
  %8370 = vmatmul.mubr.f32.gmra.mxu0 %v8369
  %v8371 = vpop.f32.mrf.mxu0
  %v8372 = vadd.f32 %v7686, %v8371
  %v8373 = vpop.f32.mrf.mxu0
  %8374 = vmatprep.mubr.f32.mxu0 0.0
  %v8375 = vand.u32 %v7351, 4294901760
  %8376 = vmatmul.mubr.f32.gmra.mxu0 %v8375
  %v8377 = vpop.f32.mrf.mxu0
  %v8378 = vadd.f32 %v7696, %v8377
  %v8379 = vpop.f32.mrf.mxu0
  %8380 = vmatprep.mubr.f32.mxu0 0.0
  %v8381 = vand.u32 %v7354, 4294901760
  %8382 = vmatmul.mubr.f32.gmra.mxu0 %v8381
  %v8383 = vpop.f32.mrf.mxu0
  %v8384 = vadd.f32 %v7706, %v8383
  %v8385 = vpop.f32.mrf.mxu0
  %8386 = vmatprep.mubr.f32.mxu0 0.0
  %v8387 = vand.u32 %v7357, 4294901760
  %8388 = vmatmul.mubr.f32.gmra.mxu0 %v8387
  %v8389 = vpop.f32.mrf.mxu0
  %v8390 = vadd.f32 %v7716, %v8389
  %v8391 = vpop.f32.mrf.mxu0
  %8392 = vmatprep.mubr.f32.mxu0 0.0
  %v8393 = vand.u32 %v7360, 4294901760
  %8394 = vmatmul.mubr.f32.gmra.mxu0 %v8393
  %v8395 = vpop.f32.mrf.mxu0
  %v8396 = vadd.f32 %v7726, %v8395
  %v8397 = vpop.f32.mrf.mxu0
  %8398 = vmatprep.mubr.f32.mxu0 0.0
  %v8399 = vand.u32 %v7363, 4294901760
  %8400 = vmatmul.mubr.f32.gmra.mxu0 %v8399
  %v8401 = vpop.f32.mrf.mxu0
  %v8402 = vadd.f32 %v7736, %v8401
  %v8403 = vpop.f32.mrf.mxu0
  %8404 = vmatprep.mubr.f32.mxu0 0.0
  %v8405 = vand.u32 %v7366, 4294901760
  %8406 = vmatmul.mubr.f32.gmra.mxu0 %v8405
  %v8407 = vpop.f32.mrf.mxu0
  %v8408 = vadd.f32 %v7746, %v8407
  %v8409 = vpop.f32.mrf.mxu0
  %8410 = vmatprep.mubr.f32.mxu0 0.0
  %v8411 = vand.u32 %v7369, 4294901760
  %8412 = vmatmul.mubr.f32.gmra.mxu0 %v8411
  %v8413 = vpop.f32.mrf.mxu0
  %v8414 = vadd.f32 %v7756, %v8413
  %v8415 = vpop.f32.mrf.mxu0
  %8416 = vmatprep.mubr.f32.mxu0 0.0
  %v8417 = vand.u32 %v7372, 4294901760
  %8418 = vmatmul.mubr.f32.gmra.mxu0 %v8417
  %v8419 = vpop.f32.mrf.mxu0
  %v8420 = vadd.f32 %v7766, %v8419
  %v8421 = vpop.f32.mrf.mxu0
  %8422 = vmatprep.mubr.f32.mxu0 0.0
  %v8423 = vand.u32 %v7375, 4294901760
  %8424 = vmatmul.mubr.f32.gmra.mxu0 %v8423
  %v8425 = vpop.f32.mrf.mxu0
  %v8426 = vadd.f32 %v7776, %v8425
  %v8427 = vpop.f32.mrf.mxu0
  %8428 = vmatprep.mubr.f32.mxu0 0.0
  %v8429 = vand.u32 %v7378, 4294901760
  %8430 = vmatmul.mubr.f32.gmra.mxu0 %v8429
  %v8431 = vpop.f32.mrf.mxu0
  %v8432 = vadd.f32 %v7786, %v8431
  %v8433 = vpop.f32.mrf.mxu0
  %8434 = vmatprep.mubr.f32.mxu0 0.0
  %v8435 = vand.u32 %v7381, 4294901760
  %8436 = vmatmul.mubr.f32.gmra.mxu0 %v8435
  %v8437 = vpop.f32.mrf.mxu0
  %v8438 = vadd.f32 %v7796, %v8437
  %v8439 = vpop.f32.mrf.mxu0
  %8440 = vmatprep.mubr.f32.mxu0 0.0
  %v8441 = vand.u32 %v7384, 4294901760
  %8442 = vmatmul.mubr.f32.gmra.mxu0 %v8441
  %v8443 = vpop.f32.mrf.mxu0
  %v8444 = vadd.f32 %v7806, %v8443
  %v8445 = vpop.f32.mrf.mxu0
  %8446 = vmatprep.mubr.f32.mxu0 0.0
  %v8447 = vand.u32 %v7387, 4294901760
  %8448 = vmatmul.mubr.f32.gmra.mxu0 %v8447
  %v8449 = vpop.f32.mrf.mxu0
  %v8450 = vadd.f32 %v7816, %v8449
  %v8451 = vpop.f32.mrf.mxu0
  %8452 = vmatprep.mubr.f32.mxu0 0.0
  %v8453 = vand.u32 %v7390, 4294901760
  %8454 = vmatmul.mubr.f32.gmra.mxu0 %v8453
  %v8455 = vpop.f32.mrf.mxu0
  %v8456 = vadd.f32 %v7826, %v8455
  %v8457 = vpop.f32.mrf.mxu0
  %8458 = vmatprep.mubr.f32.mxu0 0.0
  %v8459 = vand.u32 %v7393, 4294901760
  %8460 = vmatmul.mubr.f32.gmra.mxu0 %v8459
  %v8461 = vpop.f32.mrf.mxu0
  %v8462 = vadd.f32 %v7836, %v8461
  %v8463 = vpop.f32.mrf.mxu0
  %8464 = vmatprep.mubr.f32.mxu0 0.0
  %v8465 = vand.u32 %v7396, 4294901760
  %8466 = vmatmul.mubr.f32.gmra.mxu0 %v8465
  %v8467 = vpop.f32.mrf.mxu0
  %v8468 = vadd.f32 %v7846, %v8467
  %v8469 = vpop.f32.mrf.mxu0
  %8470 = vmatprep.mubr.f32.mxu0 0.0
  %v8471 = vand.u32 %v7399, 4294901760
  %8472 = vmatmul.mubr.f32.gmra.mxu0 %v8471
  %v8473 = vpop.f32.mrf.mxu0
  %v8474 = vadd.f32 %v7856, %v8473
  %v8475 = vpop.f32.mrf.mxu0
  %8476 = vmatprep.mubr.f32.mxu0 0.0
  %v8477 = vand.u32 %v7402, 4294901760
  %8478 = vmatmul.mubr.f32.gmra.mxu0 %v8477
  %v8479 = vpop.f32.mrf.mxu0
  %v8480 = vadd.f32 %v7866, %v8479
  %v8481 = vpop.f32.mrf.mxu0
  %8482 = vmatprep.mubr.f32.mxu0 0.0
  %v8483 = vand.u32 %v7405, 4294901760
  %8484 = vmatmul.mubr.f32.gmra.mxu0 %v8483
  %v8485 = vpop.f32.mrf.mxu0
  %v8486 = vadd.f32 %v7876, %v8485
  %v8487 = vpop.f32.mrf.mxu0
  %8488 = vmatprep.mubr.f32.mxu0 0.0
  %v8489 = vand.u32 %v7408, 4294901760
  %8490 = vmatmul.mubr.f32.gmra.mxu0 %v8489
  %v8491 = vpop.f32.mrf.mxu0
  %v8492 = vadd.f32 %v7886, %v8491
  %v8493 = vpop.f32.mrf.mxu0
  %8494 = vmatprep.mubr.f32.mxu0 0.0
  %v8495 = vand.u32 %v7411, 4294901760
  %8496 = vmatmul.mubr.f32.gmra.mxu0 %v8495
  %v8497 = vpop.f32.mrf.mxu0
  %v8498 = vadd.f32 %v7896, %v8497
  %v8499 = vpop.f32.mrf.mxu0
  %8500 = vmatprep.mubr.f32.mxu0 0.0
  %v8501 = vand.u32 %v7414, 4294901760
  %8502 = vmatmul.mubr.f32.gmra.mxu0 %v8501
  %v8503 = vpop.f32.mrf.mxu0
  %v8504 = vadd.f32 %v7906, %v8503
  %v8505 = vpop.f32.mrf.mxu0
  %8506 = vmatprep.mubr.f32.mxu0 0.0
  %v8507 = vand.u32 %v7417, 4294901760
  %8508 = vmatmul.mubr.f32.gmra.mxu0 %v8507
  %v8509 = vpop.f32.mrf.mxu0
  %v8510 = vadd.f32 %v7916, %v8509
  %v8511 = vpop.f32.mrf.mxu0
  %8512 = vmatprep.mubr.f32.mxu0 0.0
  %v8513 = vand.u32 %v7420, 4294901760
  %8514 = vmatmul.mubr.f32.gmra.mxu0 %v8513
  %v8515 = vpop.f32.mrf.mxu0
  %v8516 = vadd.f32 %v7926, %v8515
  %v8517 = vpop.f32.mrf.mxu0
  %8518 = vmatprep.mubr.f32.mxu0 0.0
  %v8519 = vand.u32 %v7423, 4294901760
  %8520 = vmatmul.mubr.f32.gmra.mxu0 %v8519
  %v8521 = vpop.f32.mrf.mxu0
  %v8522 = vadd.f32 %v7936, %v8521
  %v8523 = vpop.f32.mrf.mxu0
  %8524 = vmatprep.mubr.f32.mxu0 0.0
  %v8525 = vand.u32 %v7426, 4294901760
  %8526 = vmatmul.mubr.f32.gmra.mxu0 %v8525
  %v8527 = vpop.f32.mrf.mxu0
  %v8528 = vadd.f32 %v7946, %v8527
  %v8529 = vpop.f32.mrf.mxu0
  %8530 = vmatprep.mubr.f32.mxu0 0.0
  %v8531 = vand.u32 %v7429, 4294901760
  %8532 = vmatmul.mubr.f32.gmra.mxu0 %v8531
  %v8533 = vpop.f32.mrf.mxu0
  %v8534 = vadd.f32 %v7956, %v8533
  %v8535 = vpop.f32.mrf.mxu0
  %8536 = vmatprep.mubr.f32.mxu0 0.0
  %v8537 = vand.u32 %v7432, 4294901760
  %8538 = vmatmul.mubr.f32.gmra.mxu0 %v8537
  %v8539 = vpop.f32.mrf.mxu0
  %v8540 = vadd.f32 %v7966, %v8539
  %v8541 = vpop.f32.mrf.mxu0
  %8542 = vmatprep.mubr.f32.mxu0 0.0
  %v8543 = vand.u32 %v7435, 4294901760
  %8544 = vmatmul.mubr.f32.gmra.mxu0 %v8543
  %v8545 = vpop.f32.mrf.mxu0
  %v8546 = vadd.f32 %v7976, %v8545
  %v8547 = vpop.f32.mrf.mxu0
  %8548 = vmatprep.mubr.f32.mxu0 0.0
  %v8549 = vand.u32 %v7438, 4294901760
  %8550 = vmatmul.mubr.f32.gmra.mxu0 %v8549
  %v8551 = vpop.f32.mrf.mxu0
  %v8552 = vadd.f32 %v7986, %v8551
  %v8553 = vpop.f32.mrf.mxu0
  %8554 = vmatprep.mubr.f32.mxu0 0.0
  %v8555 = vand.u32 %v7441, 4294901760
  %8556 = vmatmul.mubr.f32.gmra.mxu0 %v8555
  %v8557 = vpop.f32.mrf.mxu0
  %v8558 = vadd.f32 %v7996, %v8557
  %v8559 = vpop.f32.mrf.mxu0
  %8560 = vmatprep.mubr.f32.mxu0 0.0
  %v8561 = vand.u32 %v7444, 4294901760
  %8562 = vmatmul.mubr.f32.gmra.mxu0 %v8561
  %v8563 = vpop.f32.mrf.mxu0
  %v8564 = vadd.f32 %v8006, %v8563
  %v8565 = vpop.f32.mrf.mxu0
  %8566 = vmatprep.mubr.f32.mxu0 0.0
  %v8567 = vand.u32 %v7447, 4294901760
  %8568 = vmatmul.mubr.f32.gmra.mxu0 %v8567
  %v8569 = vpop.f32.mrf.mxu0
  %v8570 = vadd.f32 %v8016, %v8569
  %v8571 = vpop.f32.mrf.mxu0
  %8572 = vmatprep.mubr.f32.mxu0 0.0
  %v8573 = vand.u32 %v7450, 4294901760
  %8574 = vmatmul.mubr.f32.gmra.mxu0 %v8573
  %v8575 = vpop.f32.mrf.mxu0
  %v8576 = vadd.f32 %v8026, %v8575
  %v8577 = vpop.f32.mrf.mxu0
  %8578 = vmatprep.mubr.f32.mxu0 0.0
  %v8579 = vand.u32 %v7453, 4294901760
  %8580 = vmatmul.mubr.f32.gmra.mxu0 %v8579
  %v8581 = vpop.f32.mrf.mxu0
  %v8582 = vadd.f32 %v8036, %v8581
  %v8583 = vpop.f32.mrf.mxu0
  %8584 = vmatprep.mubr.f32.mxu0 0.0
  %v8585 = vand.u32 %v7456, 4294901760
  %8586 = vmatmul.mubr.f32.gmra.mxu0 %v8585
  %v8587 = vpop.f32.mrf.mxu0
  %v8588 = vadd.f32 %v8046, %v8587
  %v8589 = vpop.f32.mrf.mxu0
  %8590 = vmatprep.mubr.f32.mxu0 0.0
  %v8591 = vand.u32 %v7459, 4294901760
  %8592 = vmatmul.mubr.f32.gmra.mxu0 %v8591
  %v8593 = vpop.f32.mrf.mxu0
  %v8594 = vadd.f32 %v8056, %v8593
  %v8595 = vpop.f32.mrf.mxu0
  %8596 = vmatprep.mubr.f32.mxu0 0.0
  %v8597 = vand.u32 %v7462, 4294901760
  %8598 = vmatmul.mubr.f32.gmra.mxu0 %v8597
  %v8599 = vpop.f32.mrf.mxu0
  %v8600 = vadd.f32 %v8066, %v8599
  %v8601 = vpop.f32.mrf.mxu0
  %8602 = vmatprep.mubr.f32.mxu0 0.0
  %v8603 = vand.u32 %v7465, 4294901760
  %8604 = vmatmul.mubr.f32.gmra.mxu0 %v8603
  %v8605 = vpop.f32.mrf.mxu0
  %v8606 = vadd.f32 %v8076, %v8605
  %v8607 = vpop.f32.mrf.mxu0
  %8608 = vmatprep.mubr.f32.mxu0 0.0
  %v8609 = vand.u32 %v7468, 4294901760
  %8610 = vmatmul.mubr.f32.gmra.mxu0 %v8609
  %v8611 = vpop.f32.mrf.mxu0
  %v8612 = vadd.f32 %v8086, %v8611
  %v8613 = vpop.f32.mrf.mxu0
  %8614 = vmatprep.mubr.f32.mxu0 0.0
  %v8615 = vand.u32 %v7471, 4294901760
  %8616 = vmatmul.mubr.f32.gmra.mxu0 %v8615
  %v8617 = vpop.f32.mrf.mxu0
  %v8618 = vadd.f32 %v8096, %v8617
  %v8619 = vpop.f32.mrf.mxu0
  %8620 = vmatprep.mubr.f32.mxu0 0.0
  %v8621 = vand.u32 %v7474, 4294901760
  %8622 = vmatmul.mubr.f32.gmra.mxu0 %v8621
  %v8623 = vpop.f32.mrf.mxu0
  %v8624 = vadd.f32 %v8106, %v8623
  %v8625 = vpop.f32.mrf.mxu0
  %8626 = vmatprep.mubr.f32.mxu0 0.0
  %v8627 = vand.u32 %v7477, 4294901760
  %8628 = vmatmul.mubr.f32.gmra.mxu0 %v8627
  %v8629 = vpop.f32.mrf.mxu0
  %v8630 = vadd.f32 %v8116, %v8629
  %v8631 = vpop.f32.mrf.mxu0
  %8632 = vmatprep.mubr.f32.mxu0 0.0
  %v8633 = vand.u32 %v7480, 4294901760
  %8634 = vmatmul.mubr.f32.gmra.mxu0 %v8633
  %v8635 = vpop.f32.mrf.mxu0
  %v8636 = vadd.f32 %v8126, %v8635
  %v8637 = vpop.f32.mrf.mxu0
  %8638 = vmatprep.mubr.f32.mxu0 0.0
  %v8639 = vand.u32 %v7483, 4294901760
  %8640 = vmatmul.mubr.f32.gmra.mxu0 %v8639
  %v8641 = vpop.f32.mrf.mxu0
  %v8642 = vadd.f32 %v8136, %v8641
  %v8643 = vpop.f32.mrf.mxu0
  %8644 = vmatprep.mubr.f32.mxu0 0.0
  %v8645 = vand.u32 %v7486, 4294901760
  %8646 = vmatmul.mubr.f32.gmra.mxu0 %v8645
  %v8647 = vpop.f32.mrf.mxu0
  %v8648 = vadd.f32 %v8146, %v8647
  %v8649 = vpop.f32.mrf.mxu0
  %8650 = vmatprep.mubr.f32.mxu0 0.0
  %v8651 = vand.u32 %v7489, 4294901760
  %8652 = vmatmul.mubr.f32.gmra.mxu0 %v8651
  %v8653 = vpop.f32.mrf.mxu0
  %v8654 = vadd.f32 %v8156, %v8653
  %v8655 = vpop.f32.mrf.mxu0
  %8656 = vmatprep.mubr.f32.mxu0 0.0
  %v8657 = vand.u32 %v7492, 4294901760
  %8658 = vmatmul.mubr.f32.gmra.mxu0 %v8657
  %v8659 = vpop.f32.mrf.mxu0
  %v8660 = vadd.f32 %v8166, %v8659
  %v8661 = vpop.f32.mrf.mxu0
  %8662 = vmatprep.mubr.f32.mxu0 0.0
  %v8663 = vand.u32 %v7495, 4294901760
  %8664 = vmatmul.mubr.f32.gmra.mxu0 %v8663
  %v8665 = vpop.f32.mrf.mxu0
  %v8666 = vadd.f32 %v8176, %v8665
  %v8667 = vpop.f32.mrf.mxu0
  %8668 = vmatprep.mubr.f32.mxu0 0.0
  %v8669 = vand.u32 %v7498, 4294901760
  %8670 = vmatmul.mubr.f32.gmra.mxu0 %v8669
  %v8671 = vpop.f32.mrf.mxu0
  %v8672 = vadd.f32 %v8186, %v8671
  %v8673 = vpop.f32.mrf.mxu0
  %8674 = vmatprep.mubr.f32.mxu0 0.0
  %v8675 = vand.u32 %v7501, 4294901760
  %8676 = vmatmul.mubr.f32.gmra.mxu0 %v8675
  %v8677 = vpop.f32.mrf.mxu0
  %v8678 = vadd.f32 %v8196, %v8677
  %v8679 = vpop.f32.mrf.mxu0
  %8680 = vmatprep.mubr.f32.mxu0 0.0
  %v8681 = vand.u32 %v7504, 4294901760
  %8682 = vmatmul.mubr.f32.gmra.mxu0 %v8681
  %v8683 = vpop.f32.mrf.mxu0
  %v8684 = vadd.f32 %v8206, %v8683
  %v8685 = vpop.f32.mrf.mxu0
  %8686 = vmatprep.mubr.f32.mxu0 0.0
  %v8687 = vand.u32 %v7507, 4294901760
  %8688 = vmatmul.mubr.f32.gmra.mxu0 %v8687
  %v8689 = vpop.f32.mrf.mxu0
  %v8690 = vadd.f32 %v8216, %v8689
  %v8691 = vpop.f32.mrf.mxu0
  %8692 = vdwg.mxu0
  %8693 = vmatprep.subr.mxu0 0.0
  %8694 = vmatpush1.msra.mxu0 0.0
  %8695 = vmatprep.subr.mxu0 0.0
  %8696 = vmatpush1.msra.mxu0 0.0
  %8697 = vmatprep.subr.mxu0 0.0
  %8698 = vmatpush1.msra.mxu0 0.0
  %8699 = vmatprep.subr.mxu0 0.0
  %8700 = vmatpush1.msra.mxu0 0.0
  %8701 = vmatprep.subr.mxu0 0.0
  %8702 = vmatpush1.msra.mxu0 0.0
  %8703 = vmatprep.subr.mxu0 0.0
  %8704 = vmatpush1.msra.mxu0 0.0
  %8705 = vmatprep.subr.mxu0 0.0
  %8706 = vmatpush1.msra.mxu0 0.0
  %8707 = vmatprep.subr.mxu0 0.0
  %8708 = vmatpush1.msra.mxu0 0.0
  %8709 = vmatprep.subr.mxu0 0.0
  %8710 = vmatpush1.msra.mxu0 0.0
  %8711 = vmatprep.subr.mxu0 0.0
  %8712 = vmatpush1.msra.mxu0 0.0
  %8713 = vmatprep.subr.mxu0 0.0
  %8714 = vmatpush1.msra.mxu0 0.0
  %8715 = vmatprep.subr.mxu0 0.0
  %v8716 = vand.u32 %v253, 4294901760
  %v8717 = vsub.f32 %v253, %v8716
  %8718 = vmatpush1.msra.mxu0 %v8717
  %8719 = vmatprep.subr.mxu0 0.0
  %v8720 = vand.u32 %v252, 4294901760
  %v8721 = vsub.f32 %v252, %v8720
  %8722 = vmatpush1.msra.mxu0 %v8721
  %8723 = vmatprep.subr.mxu0 0.0
  %v8724 = vand.u32 %v251, 4294901760
  %v8725 = vsub.f32 %v251, %v8724
  %8726 = vmatpush1.msra.mxu0 %v8725
  %8727 = vmatprep.subr.mxu0 0.0
  %v8728 = vand.u32 %v250, 4294901760
  %v8729 = vsub.f32 %v250, %v8728
  %8730 = vmatpush1.msra.mxu0 %v8729
  %8731 = vmatprep.subr.mxu0 0.0
  %v8732 = vand.u32 %v249, 4294901760
  %v8733 = vsub.f32 %v249, %v8732
  %8734 = vmatpush1.msra.mxu0 %v8733
  %8735 = vmatprep.subr.mxu0 0.0
  %8736 = vmatpush2.msra.mxu0 0.0
  %8737 = vmatprep.subr.mxu0 0.0
  %8738 = vmatpush2.msra.mxu0 0.0
  %8739 = vmatprep.subr.mxu0 0.0
  %8740 = vmatpush2.msra.mxu0 0.0
  %8741 = vmatprep.subr.mxu0 0.0
  %8742 = vmatpush2.msra.mxu0 0.0
  %8743 = vmatprep.subr.mxu0 0.0
  %8744 = vmatpush2.msra.mxu0 0.0
  %8745 = vmatprep.subr.mxu0 0.0
  %8746 = vmatpush2.msra.mxu0 0.0
  %8747 = vmatprep.subr.mxu0 0.0
  %8748 = vmatpush2.msra.mxu0 0.0
  %8749 = vmatprep.subr.mxu0 0.0
  %8750 = vmatpush2.msra.mxu0 0.0
  %8751 = vmatprep.subr.mxu0 0.0
  %8752 = vmatpush2.msra.mxu0 0.0
  %8753 = vmatprep.subr.mxu0 0.0
  %8754 = vmatpush2.msra.mxu0 0.0
  %8755 = vmatprep.subr.mxu0 0.0
  %8756 = vmatpush2.msra.mxu0 0.0
  %8757 = vmatprep.subr.mxu0 0.0
  %8758 = vmatpush2.msra.mxu0 0.0
  %8759 = vmatprep.subr.mxu0 0.0
  %8760 = vmatpush2.msra.mxu0 0.0
  %8761 = vmatprep.subr.mxu0 0.0
  %8762 = vmatpush2.msra.mxu0 0.0
  %8763 = vmatprep.subr.mxu0 0.0
  %8764 = vmatpush2.msra.mxu0 0.0
  %8765 = vmatprep.subr.mxu0 0.0
  %8766 = vmatpush2.msra.mxu0 0.0
  %8767 = vmatprep.mubr.f32.mxu0 0.0
  %v8768 = vand.u32 %v7318, 4294901760
  %v8769 = vsub.f32 %v7318, %v8768
  %8770 = vmatmul.mubr.f32.gmra.mxu0 %v8769
  %v8771 = vpop.f32.mrf.mxu0
  %v8772 = vadd.f32 %v8312, %v8771
  %v8773 = vpop.f32.mrf.mxu0
  %8774 = vmatprep.mubr.f32.mxu0 0.0
  %v8775 = vand.u32 %v7321, 4294901760
  %v8776 = vsub.f32 %v7321, %v8775
  %8777 = vmatmul.mubr.f32.gmra.mxu0 %v8776
  %v8778 = vpop.f32.mrf.mxu0
  %v8779 = vadd.f32 %v8318, %v8778
  %v8780 = vpop.f32.mrf.mxu0
  %8781 = vmatprep.mubr.f32.mxu0 0.0
  %v8782 = vand.u32 %v7324, 4294901760
  %v8783 = vsub.f32 %v7324, %v8782
  %8784 = vmatmul.mubr.f32.gmra.mxu0 %v8783
  %v8785 = vpop.f32.mrf.mxu0
  %v8786 = vadd.f32 %v8324, %v8785
  %v8787 = vpop.f32.mrf.mxu0
  %8788 = vmatprep.mubr.f32.mxu0 0.0
  %v8789 = vand.u32 %v7327, 4294901760
  %v8790 = vsub.f32 %v7327, %v8789
  %8791 = vmatmul.mubr.f32.gmra.mxu0 %v8790
  %v8792 = vpop.f32.mrf.mxu0
  %v8793 = vadd.f32 %v8330, %v8792
  %v8794 = vpop.f32.mrf.mxu0
  %8795 = vmatprep.mubr.f32.mxu0 0.0
  %v8796 = vand.u32 %v7330, 4294901760
  %v8797 = vsub.f32 %v7330, %v8796
  %8798 = vmatmul.mubr.f32.gmra.mxu0 %v8797
  %v8799 = vpop.f32.mrf.mxu0
  %v8800 = vadd.f32 %v8336, %v8799
  %v8801 = vpop.f32.mrf.mxu0
  %8802 = vmatprep.mubr.f32.mxu0 0.0
  %v8803 = vand.u32 %v7333, 4294901760
  %v8804 = vsub.f32 %v7333, %v8803
  %8805 = vmatmul.mubr.f32.gmra.mxu0 %v8804
  %v8806 = vpop.f32.mrf.mxu0
  %v8807 = vadd.f32 %v8342, %v8806
  %v8808 = vpop.f32.mrf.mxu0
  %8809 = vmatprep.mubr.f32.mxu0 0.0
  %v8810 = vand.u32 %v7336, 4294901760
  %v8811 = vsub.f32 %v7336, %v8810
  %8812 = vmatmul.mubr.f32.gmra.mxu0 %v8811
  %v8813 = vpop.f32.mrf.mxu0
  %v8814 = vadd.f32 %v8348, %v8813
  %v8815 = vpop.f32.mrf.mxu0
  %8816 = vmatprep.mubr.f32.mxu0 0.0
  %v8817 = vand.u32 %v7339, 4294901760
  %v8818 = vsub.f32 %v7339, %v8817
  %8819 = vmatmul.mubr.f32.gmra.mxu0 %v8818
  %v8820 = vpop.f32.mrf.mxu0
  %v8821 = vadd.f32 %v8354, %v8820
  %v8822 = vpop.f32.mrf.mxu0
  %8823 = vmatprep.mubr.f32.mxu0 0.0
  %v8824 = vand.u32 %v7342, 4294901760
  %v8825 = vsub.f32 %v7342, %v8824
  %8826 = vmatmul.mubr.f32.gmra.mxu0 %v8825
  %v8827 = vpop.f32.mrf.mxu0
  %v8828 = vadd.f32 %v8360, %v8827
  %v8829 = vpop.f32.mrf.mxu0
  %8830 = vmatprep.mubr.f32.mxu0 0.0
  %v8831 = vand.u32 %v7345, 4294901760
  %v8832 = vsub.f32 %v7345, %v8831
  %8833 = vmatmul.mubr.f32.gmra.mxu0 %v8832
  %v8834 = vpop.f32.mrf.mxu0
  %v8835 = vadd.f32 %v8366, %v8834
  %v8836 = vpop.f32.mrf.mxu0
  %8837 = vmatprep.mubr.f32.mxu0 0.0
  %v8838 = vand.u32 %v7348, 4294901760
  %v8839 = vsub.f32 %v7348, %v8838
  %8840 = vmatmul.mubr.f32.gmra.mxu0 %v8839
  %v8841 = vpop.f32.mrf.mxu0
  %v8842 = vadd.f32 %v8372, %v8841
  %v8843 = vpop.f32.mrf.mxu0
  %8844 = vmatprep.mubr.f32.mxu0 0.0
  %v8845 = vand.u32 %v7351, 4294901760
  %v8846 = vsub.f32 %v7351, %v8845
  %8847 = vmatmul.mubr.f32.gmra.mxu0 %v8846
  %v8848 = vpop.f32.mrf.mxu0
  %v8849 = vadd.f32 %v8378, %v8848
  %v8850 = vpop.f32.mrf.mxu0
  %8851 = vmatprep.mubr.f32.mxu0 0.0
  %v8852 = vand.u32 %v7354, 4294901760
  %v8853 = vsub.f32 %v7354, %v8852
  %8854 = vmatmul.mubr.f32.gmra.mxu0 %v8853
  %v8855 = vpop.f32.mrf.mxu0
  %v8856 = vadd.f32 %v8384, %v8855
  %v8857 = vpop.f32.mrf.mxu0
  %8858 = vmatprep.mubr.f32.mxu0 0.0
  %v8859 = vand.u32 %v7357, 4294901760
  %v8860 = vsub.f32 %v7357, %v8859
  %8861 = vmatmul.mubr.f32.gmra.mxu0 %v8860
  %v8862 = vpop.f32.mrf.mxu0
  %v8863 = vadd.f32 %v8390, %v8862
  %v8864 = vpop.f32.mrf.mxu0
  %8865 = vmatprep.mubr.f32.mxu0 0.0
  %v8866 = vand.u32 %v7360, 4294901760
  %v8867 = vsub.f32 %v7360, %v8866
  %8868 = vmatmul.mubr.f32.gmra.mxu0 %v8867
  %v8869 = vpop.f32.mrf.mxu0
  %v8870 = vadd.f32 %v8396, %v8869
  %v8871 = vpop.f32.mrf.mxu0
  %8872 = vmatprep.mubr.f32.mxu0 0.0
  %v8873 = vand.u32 %v7363, 4294901760
  %v8874 = vsub.f32 %v7363, %v8873
  %8875 = vmatmul.mubr.f32.gmra.mxu0 %v8874
  %v8876 = vpop.f32.mrf.mxu0
  %v8877 = vadd.f32 %v8402, %v8876
  %v8878 = vpop.f32.mrf.mxu0
  %8879 = vmatprep.mubr.f32.mxu0 0.0
  %v8880 = vand.u32 %v7366, 4294901760
  %v8881 = vsub.f32 %v7366, %v8880
  %8882 = vmatmul.mubr.f32.gmra.mxu0 %v8881
  %v8883 = vpop.f32.mrf.mxu0
  %v8884 = vadd.f32 %v8408, %v8883
  %v8885 = vpop.f32.mrf.mxu0
  %8886 = vmatprep.mubr.f32.mxu0 0.0
  %v8887 = vand.u32 %v7369, 4294901760
  %v8888 = vsub.f32 %v7369, %v8887
  %8889 = vmatmul.mubr.f32.gmra.mxu0 %v8888
  %v8890 = vpop.f32.mrf.mxu0
  %v8891 = vadd.f32 %v8414, %v8890
  %v8892 = vpop.f32.mrf.mxu0
  %8893 = vmatprep.mubr.f32.mxu0 0.0
  %v8894 = vand.u32 %v7372, 4294901760
  %v8895 = vsub.f32 %v7372, %v8894
  %8896 = vmatmul.mubr.f32.gmra.mxu0 %v8895
  %v8897 = vpop.f32.mrf.mxu0
  %v8898 = vadd.f32 %v8420, %v8897
  %v8899 = vpop.f32.mrf.mxu0
  %8900 = vmatprep.mubr.f32.mxu0 0.0
  %v8901 = vand.u32 %v7375, 4294901760
  %v8902 = vsub.f32 %v7375, %v8901
  %8903 = vmatmul.mubr.f32.gmra.mxu0 %v8902
  %v8904 = vpop.f32.mrf.mxu0
  %v8905 = vadd.f32 %v8426, %v8904
  %v8906 = vpop.f32.mrf.mxu0
  %8907 = vmatprep.mubr.f32.mxu0 0.0
  %v8908 = vand.u32 %v7378, 4294901760
  %v8909 = vsub.f32 %v7378, %v8908
  %8910 = vmatmul.mubr.f32.gmra.mxu0 %v8909
  %v8911 = vpop.f32.mrf.mxu0
  %v8912 = vadd.f32 %v8432, %v8911
  %v8913 = vpop.f32.mrf.mxu0
  %8914 = vmatprep.mubr.f32.mxu0 0.0
  %v8915 = vand.u32 %v7381, 4294901760
  %v8916 = vsub.f32 %v7381, %v8915
  %8917 = vmatmul.mubr.f32.gmra.mxu0 %v8916
  %v8918 = vpop.f32.mrf.mxu0
  %v8919 = vadd.f32 %v8438, %v8918
  %v8920 = vpop.f32.mrf.mxu0
  %8921 = vmatprep.mubr.f32.mxu0 0.0
  %v8922 = vand.u32 %v7384, 4294901760
  %v8923 = vsub.f32 %v7384, %v8922
  %8924 = vmatmul.mubr.f32.gmra.mxu0 %v8923
  %v8925 = vpop.f32.mrf.mxu0
  %v8926 = vadd.f32 %v8444, %v8925
  %v8927 = vpop.f32.mrf.mxu0
  %8928 = vmatprep.mubr.f32.mxu0 0.0
  %v8929 = vand.u32 %v7387, 4294901760
  %v8930 = vsub.f32 %v7387, %v8929
  %8931 = vmatmul.mubr.f32.gmra.mxu0 %v8930
  %v8932 = vpop.f32.mrf.mxu0
  %v8933 = vadd.f32 %v8450, %v8932
  %v8934 = vpop.f32.mrf.mxu0
  %8935 = vmatprep.mubr.f32.mxu0 0.0
  %v8936 = vand.u32 %v7390, 4294901760
  %v8937 = vsub.f32 %v7390, %v8936
  %8938 = vmatmul.mubr.f32.gmra.mxu0 %v8937
  %v8939 = vpop.f32.mrf.mxu0
  %v8940 = vadd.f32 %v8456, %v8939
  %v8941 = vpop.f32.mrf.mxu0
  %8942 = vmatprep.mubr.f32.mxu0 0.0
  %v8943 = vand.u32 %v7393, 4294901760
  %v8944 = vsub.f32 %v7393, %v8943
  %8945 = vmatmul.mubr.f32.gmra.mxu0 %v8944
  %v8946 = vpop.f32.mrf.mxu0
  %v8947 = vadd.f32 %v8462, %v8946
  %v8948 = vpop.f32.mrf.mxu0
  %8949 = vmatprep.mubr.f32.mxu0 0.0
  %v8950 = vand.u32 %v7396, 4294901760
  %v8951 = vsub.f32 %v7396, %v8950
  %8952 = vmatmul.mubr.f32.gmra.mxu0 %v8951
  %v8953 = vpop.f32.mrf.mxu0
  %v8954 = vadd.f32 %v8468, %v8953
  %v8955 = vpop.f32.mrf.mxu0
  %8956 = vmatprep.mubr.f32.mxu0 0.0
  %v8957 = vand.u32 %v7399, 4294901760
  %v8958 = vsub.f32 %v7399, %v8957
  %8959 = vmatmul.mubr.f32.gmra.mxu0 %v8958
  %v8960 = vpop.f32.mrf.mxu0
  %v8961 = vadd.f32 %v8474, %v8960
  %v8962 = vpop.f32.mrf.mxu0
  %8963 = vmatprep.mubr.f32.mxu0 0.0
  %v8964 = vand.u32 %v7402, 4294901760
  %v8965 = vsub.f32 %v7402, %v8964
  %8966 = vmatmul.mubr.f32.gmra.mxu0 %v8965
  %v8967 = vpop.f32.mrf.mxu0
  %v8968 = vadd.f32 %v8480, %v8967
  %v8969 = vpop.f32.mrf.mxu0
  %8970 = vmatprep.mubr.f32.mxu0 0.0
  %v8971 = vand.u32 %v7405, 4294901760
  %v8972 = vsub.f32 %v7405, %v8971
  %8973 = vmatmul.mubr.f32.gmra.mxu0 %v8972
  %v8974 = vpop.f32.mrf.mxu0
  %v8975 = vadd.f32 %v8486, %v8974
  %v8976 = vpop.f32.mrf.mxu0
  %8977 = vmatprep.mubr.f32.mxu0 0.0
  %v8978 = vand.u32 %v7408, 4294901760
  %v8979 = vsub.f32 %v7408, %v8978
  %8980 = vmatmul.mubr.f32.gmra.mxu0 %v8979
  %v8981 = vpop.f32.mrf.mxu0
  %v8982 = vadd.f32 %v8492, %v8981
  %v8983 = vpop.f32.mrf.mxu0
  %8984 = vmatprep.mubr.f32.mxu0 0.0
  %v8985 = vand.u32 %v7411, 4294901760
  %v8986 = vsub.f32 %v7411, %v8985
  %8987 = vmatmul.mubr.f32.gmra.mxu0 %v8986
  %v8988 = vpop.f32.mrf.mxu0
  %v8989 = vadd.f32 %v8498, %v8988
  %v8990 = vpop.f32.mrf.mxu0
  %8991 = vmatprep.mubr.f32.mxu0 0.0
  %v8992 = vand.u32 %v7414, 4294901760
  %v8993 = vsub.f32 %v7414, %v8992
  %8994 = vmatmul.mubr.f32.gmra.mxu0 %v8993
  %v8995 = vpop.f32.mrf.mxu0
  %v8996 = vadd.f32 %v8504, %v8995
  %v8997 = vpop.f32.mrf.mxu0
  %8998 = vmatprep.mubr.f32.mxu0 0.0
  %v8999 = vand.u32 %v7417, 4294901760
  %v9000 = vsub.f32 %v7417, %v8999
  %9001 = vmatmul.mubr.f32.gmra.mxu0 %v9000
  %v9002 = vpop.f32.mrf.mxu0
  %v9003 = vadd.f32 %v8510, %v9002
  %v9004 = vpop.f32.mrf.mxu0
  %9005 = vmatprep.mubr.f32.mxu0 0.0
  %v9006 = vand.u32 %v7420, 4294901760
  %v9007 = vsub.f32 %v7420, %v9006
  %9008 = vmatmul.mubr.f32.gmra.mxu0 %v9007
  %v9009 = vpop.f32.mrf.mxu0
  %v9010 = vadd.f32 %v8516, %v9009
  %v9011 = vpop.f32.mrf.mxu0
  %9012 = vmatprep.mubr.f32.mxu0 0.0
  %v9013 = vand.u32 %v7423, 4294901760
  %v9014 = vsub.f32 %v7423, %v9013
  %9015 = vmatmul.mubr.f32.gmra.mxu0 %v9014
  %v9016 = vpop.f32.mrf.mxu0
  %v9017 = vadd.f32 %v8522, %v9016
  %v9018 = vpop.f32.mrf.mxu0
  %9019 = vmatprep.mubr.f32.mxu0 0.0
  %v9020 = vand.u32 %v7426, 4294901760
  %v9021 = vsub.f32 %v7426, %v9020
  %9022 = vmatmul.mubr.f32.gmra.mxu0 %v9021
  %v9023 = vpop.f32.mrf.mxu0
  %v9024 = vadd.f32 %v8528, %v9023
  %v9025 = vpop.f32.mrf.mxu0
  %9026 = vmatprep.mubr.f32.mxu0 0.0
  %v9027 = vand.u32 %v7429, 4294901760
  %v9028 = vsub.f32 %v7429, %v9027
  %9029 = vmatmul.mubr.f32.gmra.mxu0 %v9028
  %v9030 = vpop.f32.mrf.mxu0
  %v9031 = vadd.f32 %v8534, %v9030
  %v9032 = vpop.f32.mrf.mxu0
  %9033 = vmatprep.mubr.f32.mxu0 0.0
  %v9034 = vand.u32 %v7432, 4294901760
  %v9035 = vsub.f32 %v7432, %v9034
  %9036 = vmatmul.mubr.f32.gmra.mxu0 %v9035
  %v9037 = vpop.f32.mrf.mxu0
  %v9038 = vadd.f32 %v8540, %v9037
  %v9039 = vpop.f32.mrf.mxu0
  %9040 = vmatprep.mubr.f32.mxu0 0.0
  %v9041 = vand.u32 %v7435, 4294901760
  %v9042 = vsub.f32 %v7435, %v9041
  %9043 = vmatmul.mubr.f32.gmra.mxu0 %v9042
  %v9044 = vpop.f32.mrf.mxu0
  %v9045 = vadd.f32 %v8546, %v9044
  %v9046 = vpop.f32.mrf.mxu0
  %9047 = vmatprep.mubr.f32.mxu0 0.0
  %v9048 = vand.u32 %v7438, 4294901760
  %v9049 = vsub.f32 %v7438, %v9048
  %9050 = vmatmul.mubr.f32.gmra.mxu0 %v9049
  %v9051 = vpop.f32.mrf.mxu0
  %v9052 = vadd.f32 %v8552, %v9051
  %v9053 = vpop.f32.mrf.mxu0
  %9054 = vmatprep.mubr.f32.mxu0 0.0
  %v9055 = vand.u32 %v7441, 4294901760
  %v9056 = vsub.f32 %v7441, %v9055
  %9057 = vmatmul.mubr.f32.gmra.mxu0 %v9056
  %v9058 = vpop.f32.mrf.mxu0
  %v9059 = vadd.f32 %v8558, %v9058
  %v9060 = vpop.f32.mrf.mxu0
  %9061 = vmatprep.mubr.f32.mxu0 0.0
  %v9062 = vand.u32 %v7444, 4294901760
  %v9063 = vsub.f32 %v7444, %v9062
  %9064 = vmatmul.mubr.f32.gmra.mxu0 %v9063
  %v9065 = vpop.f32.mrf.mxu0
  %v9066 = vadd.f32 %v8564, %v9065
  %v9067 = vpop.f32.mrf.mxu0
  %9068 = vmatprep.mubr.f32.mxu0 0.0
  %v9069 = vand.u32 %v7447, 4294901760
  %v9070 = vsub.f32 %v7447, %v9069
  %9071 = vmatmul.mubr.f32.gmra.mxu0 %v9070
  %v9072 = vpop.f32.mrf.mxu0
  %v9073 = vadd.f32 %v8570, %v9072
  %v9074 = vpop.f32.mrf.mxu0
  %9075 = vmatprep.mubr.f32.mxu0 0.0
  %v9076 = vand.u32 %v7450, 4294901760
  %v9077 = vsub.f32 %v7450, %v9076
  %9078 = vmatmul.mubr.f32.gmra.mxu0 %v9077
  %v9079 = vpop.f32.mrf.mxu0
  %v9080 = vadd.f32 %v8576, %v9079
  %v9081 = vpop.f32.mrf.mxu0
  %9082 = vmatprep.mubr.f32.mxu0 0.0
  %v9083 = vand.u32 %v7453, 4294901760
  %v9084 = vsub.f32 %v7453, %v9083
  %9085 = vmatmul.mubr.f32.gmra.mxu0 %v9084
  %v9086 = vpop.f32.mrf.mxu0
  %v9087 = vadd.f32 %v8582, %v9086
  %v9088 = vpop.f32.mrf.mxu0
  %9089 = vmatprep.mubr.f32.mxu0 0.0
  %v9090 = vand.u32 %v7456, 4294901760
  %v9091 = vsub.f32 %v7456, %v9090
  %9092 = vmatmul.mubr.f32.gmra.mxu0 %v9091
  %v9093 = vpop.f32.mrf.mxu0
  %v9094 = vadd.f32 %v8588, %v9093
  %v9095 = vpop.f32.mrf.mxu0
  %9096 = vmatprep.mubr.f32.mxu0 0.0
  %v9097 = vand.u32 %v7459, 4294901760
  %v9098 = vsub.f32 %v7459, %v9097
  %9099 = vmatmul.mubr.f32.gmra.mxu0 %v9098
  %v9100 = vpop.f32.mrf.mxu0
  %v9101 = vadd.f32 %v8594, %v9100
  %v9102 = vpop.f32.mrf.mxu0
  %9103 = vmatprep.mubr.f32.mxu0 0.0
  %v9104 = vand.u32 %v7462, 4294901760
  %v9105 = vsub.f32 %v7462, %v9104
  %9106 = vmatmul.mubr.f32.gmra.mxu0 %v9105
  %v9107 = vpop.f32.mrf.mxu0
  %v9108 = vadd.f32 %v8600, %v9107
  %v9109 = vpop.f32.mrf.mxu0
  %9110 = vmatprep.mubr.f32.mxu0 0.0
  %v9111 = vand.u32 %v7465, 4294901760
  %v9112 = vsub.f32 %v7465, %v9111
  %9113 = vmatmul.mubr.f32.gmra.mxu0 %v9112
  %v9114 = vpop.f32.mrf.mxu0
  %v9115 = vadd.f32 %v8606, %v9114
  %v9116 = vpop.f32.mrf.mxu0
  %9117 = vmatprep.mubr.f32.mxu0 0.0
  %v9118 = vand.u32 %v7468, 4294901760
  %v9119 = vsub.f32 %v7468, %v9118
  %9120 = vmatmul.mubr.f32.gmra.mxu0 %v9119
  %v9121 = vpop.f32.mrf.mxu0
  %v9122 = vadd.f32 %v8612, %v9121
  %v9123 = vpop.f32.mrf.mxu0
  %9124 = vmatprep.mubr.f32.mxu0 0.0
  %v9125 = vand.u32 %v7471, 4294901760
  %v9126 = vsub.f32 %v7471, %v9125
  %9127 = vmatmul.mubr.f32.gmra.mxu0 %v9126
  %v9128 = vpop.f32.mrf.mxu0
  %v9129 = vadd.f32 %v8618, %v9128
  %v9130 = vpop.f32.mrf.mxu0
  %9131 = vmatprep.mubr.f32.mxu0 0.0
  %v9132 = vand.u32 %v7474, 4294901760
  %v9133 = vsub.f32 %v7474, %v9132
  %9134 = vmatmul.mubr.f32.gmra.mxu0 %v9133
  %v9135 = vpop.f32.mrf.mxu0
  %v9136 = vadd.f32 %v8624, %v9135
  %v9137 = vpop.f32.mrf.mxu0
  %9138 = vmatprep.mubr.f32.mxu0 0.0
  %v9139 = vand.u32 %v7477, 4294901760
  %v9140 = vsub.f32 %v7477, %v9139
  %9141 = vmatmul.mubr.f32.gmra.mxu0 %v9140
  %v9142 = vpop.f32.mrf.mxu0
  %v9143 = vadd.f32 %v8630, %v9142
  %v9144 = vpop.f32.mrf.mxu0
  %9145 = vmatprep.mubr.f32.mxu0 0.0
  %v9146 = vand.u32 %v7480, 4294901760
  %v9147 = vsub.f32 %v7480, %v9146
  %9148 = vmatmul.mubr.f32.gmra.mxu0 %v9147
  %v9149 = vpop.f32.mrf.mxu0
  %v9150 = vadd.f32 %v8636, %v9149
  %v9151 = vpop.f32.mrf.mxu0
  %9152 = vmatprep.mubr.f32.mxu0 0.0
  %v9153 = vand.u32 %v7483, 4294901760
  %v9154 = vsub.f32 %v7483, %v9153
  %9155 = vmatmul.mubr.f32.gmra.mxu0 %v9154
  %v9156 = vpop.f32.mrf.mxu0
  %v9157 = vadd.f32 %v8642, %v9156
  %v9158 = vpop.f32.mrf.mxu0
  %9159 = vmatprep.mubr.f32.mxu0 0.0
  %v9160 = vand.u32 %v7486, 4294901760
  %v9161 = vsub.f32 %v7486, %v9160
  %9162 = vmatmul.mubr.f32.gmra.mxu0 %v9161
  %v9163 = vpop.f32.mrf.mxu0
  %v9164 = vadd.f32 %v8648, %v9163
  %v9165 = vpop.f32.mrf.mxu0
  %9166 = vmatprep.mubr.f32.mxu0 0.0
  %v9167 = vand.u32 %v7489, 4294901760
  %v9168 = vsub.f32 %v7489, %v9167
  %9169 = vmatmul.mubr.f32.gmra.mxu0 %v9168
  %v9170 = vpop.f32.mrf.mxu0
  %v9171 = vadd.f32 %v8654, %v9170
  %v9172 = vpop.f32.mrf.mxu0
  %9173 = vmatprep.mubr.f32.mxu0 0.0
  %v9174 = vand.u32 %v7492, 4294901760
  %v9175 = vsub.f32 %v7492, %v9174
  %9176 = vmatmul.mubr.f32.gmra.mxu0 %v9175
  %v9177 = vpop.f32.mrf.mxu0
  %v9178 = vadd.f32 %v8660, %v9177
  %v9179 = vpop.f32.mrf.mxu0
  %9180 = vmatprep.mubr.f32.mxu0 0.0
  %v9181 = vand.u32 %v7495, 4294901760
  %v9182 = vsub.f32 %v7495, %v9181
  %9183 = vmatmul.mubr.f32.gmra.mxu0 %v9182
  %v9184 = vpop.f32.mrf.mxu0
  %v9185 = vadd.f32 %v8666, %v9184
  %v9186 = vpop.f32.mrf.mxu0
  %9187 = vmatprep.mubr.f32.mxu0 0.0
  %v9188 = vand.u32 %v7498, 4294901760
  %v9189 = vsub.f32 %v7498, %v9188
  %9190 = vmatmul.mubr.f32.gmra.mxu0 %v9189
  %v9191 = vpop.f32.mrf.mxu0
  %v9192 = vadd.f32 %v8672, %v9191
  %v9193 = vpop.f32.mrf.mxu0
  %9194 = vmatprep.mubr.f32.mxu0 0.0
  %v9195 = vand.u32 %v7501, 4294901760
  %v9196 = vsub.f32 %v7501, %v9195
  %9197 = vmatmul.mubr.f32.gmra.mxu0 %v9196
  %v9198 = vpop.f32.mrf.mxu0
  %v9199 = vadd.f32 %v8678, %v9198
  %v9200 = vpop.f32.mrf.mxu0
  %9201 = vmatprep.mubr.f32.mxu0 0.0
  %v9202 = vand.u32 %v7504, 4294901760
  %v9203 = vsub.f32 %v7504, %v9202
  %9204 = vmatmul.mubr.f32.gmra.mxu0 %v9203
  %v9205 = vpop.f32.mrf.mxu0
  %v9206 = vadd.f32 %v8684, %v9205
  %v9207 = vpop.f32.mrf.mxu0
  %9208 = vmatprep.mubr.f32.mxu0 0.0
  %v9209 = vand.u32 %v7507, 4294901760
  %v9210 = vsub.f32 %v7507, %v9209
  %9211 = vmatmul.mubr.f32.gmra.mxu0 %v9210
  %v9212 = vpop.f32.mrf.mxu0
  %v9213 = vadd.f32 %v8690, %v9212
  %v9214 = vpop.f32.mrf.mxu0
  %9215 = vdwg.mxu0
  %9216 = vmatprep.subr.mxu0 0.0
  %9217 = vmatpush1.msra.mxu0 0.0
  %9218 = vmatprep.subr.mxu0 0.0
  %9219 = vmatpush1.msra.mxu0 0.0
  %9220 = vmatprep.subr.mxu0 0.0
  %9221 = vmatpush1.msra.mxu0 0.0
  %9222 = vmatprep.subr.mxu0 0.0
  %9223 = vmatpush1.msra.mxu0 0.0
  %9224 = vmatprep.subr.mxu0 0.0
  %9225 = vmatpush1.msra.mxu0 0.0
  %9226 = vmatprep.subr.mxu0 0.0
  %9227 = vmatpush1.msra.mxu0 0.0
  %9228 = vmatprep.subr.mxu0 0.0
  %9229 = vmatpush1.msra.mxu0 0.0
  %9230 = vmatprep.subr.mxu0 0.0
  %9231 = vmatpush1.msra.mxu0 0.0
  %9232 = vmatprep.subr.mxu0 0.0
  %9233 = vmatpush1.msra.mxu0 0.0
  %9234 = vmatprep.subr.mxu0 0.0
  %9235 = vmatpush1.msra.mxu0 0.0
  %9236 = vmatprep.subr.mxu0 0.0
  %9237 = vmatpush1.msra.mxu0 0.0
  %9238 = vmatprep.subr.mxu0 0.0
  %v9239 = vand.u32 %v253, 4294901760
  %9240 = vmatpush1.msra.mxu0 %v9239
  %9241 = vmatprep.subr.mxu0 0.0
  %v9242 = vand.u32 %v252, 4294901760
  %9243 = vmatpush1.msra.mxu0 %v9242
  %9244 = vmatprep.subr.mxu0 0.0
  %v9245 = vand.u32 %v251, 4294901760
  %9246 = vmatpush1.msra.mxu0 %v9245
  %9247 = vmatprep.subr.mxu0 0.0
  %v9248 = vand.u32 %v250, 4294901760
  %9249 = vmatpush1.msra.mxu0 %v9248
  %9250 = vmatprep.subr.mxu0 0.0
  %v9251 = vand.u32 %v249, 4294901760
  %9252 = vmatpush1.msra.mxu0 %v9251
  %9253 = vmatprep.subr.mxu0 0.0
  %9254 = vmatpush2.msra.mxu0 0.0
  %9255 = vmatprep.subr.mxu0 0.0
  %9256 = vmatpush2.msra.mxu0 0.0
  %9257 = vmatprep.subr.mxu0 0.0
  %9258 = vmatpush2.msra.mxu0 0.0
  %9259 = vmatprep.subr.mxu0 0.0
  %9260 = vmatpush2.msra.mxu0 0.0
  %9261 = vmatprep.subr.mxu0 0.0
  %9262 = vmatpush2.msra.mxu0 0.0
  %9263 = vmatprep.subr.mxu0 0.0
  %9264 = vmatpush2.msra.mxu0 0.0
  %9265 = vmatprep.subr.mxu0 0.0
  %9266 = vmatpush2.msra.mxu0 0.0
  %9267 = vmatprep.subr.mxu0 0.0
  %9268 = vmatpush2.msra.mxu0 0.0
  %9269 = vmatprep.subr.mxu0 0.0
  %9270 = vmatpush2.msra.mxu0 0.0
  %9271 = vmatprep.subr.mxu0 0.0
  %9272 = vmatpush2.msra.mxu0 0.0
  %9273 = vmatprep.subr.mxu0 0.0
  %9274 = vmatpush2.msra.mxu0 0.0
  %9275 = vmatprep.subr.mxu0 0.0
  %9276 = vmatpush2.msra.mxu0 0.0
  %9277 = vmatprep.subr.mxu0 0.0
  %9278 = vmatpush2.msra.mxu0 0.0
  %9279 = vmatprep.subr.mxu0 0.0
  %9280 = vmatpush2.msra.mxu0 0.0
  %9281 = vmatprep.subr.mxu0 0.0
  %9282 = vmatpush2.msra.mxu0 0.0
  %9283 = vmatprep.subr.mxu0 0.0
  %9284 = vmatpush2.msra.mxu0 0.0
  %9285 = vmatprep.mubr.f32.mxu0 0.0
  %v9286 = vand.u32 %v7318, 4294901760
  %v9287 = vsub.f32 %v7318, %v9286
  %v9288 = vand.u32 %v9287, 4294901760
  %9289 = vmatmul.mubr.f32.gmra.mxu0 %v9288
  %v9290 = vpop.f32.mrf.mxu0
  %v9291 = vadd.f32 %v8772, %v9290
  %v9292 = vpop.f32.mrf.mxu0
  %9293 = vmatprep.mubr.f32.mxu0 0.0
  %v9294 = vand.u32 %v7321, 4294901760
  %v9295 = vsub.f32 %v7321, %v9294
  %v9296 = vand.u32 %v9295, 4294901760
  %9297 = vmatmul.mubr.f32.gmra.mxu0 %v9296
  %v9298 = vpop.f32.mrf.mxu0
  %v9299 = vadd.f32 %v8779, %v9298
  %v9300 = vpop.f32.mrf.mxu0
  %9301 = vmatprep.mubr.f32.mxu0 0.0
  %v9302 = vand.u32 %v7324, 4294901760
  %v9303 = vsub.f32 %v7324, %v9302
  %v9304 = vand.u32 %v9303, 4294901760
  %9305 = vmatmul.mubr.f32.gmra.mxu0 %v9304
  %v9306 = vpop.f32.mrf.mxu0
  %v9307 = vadd.f32 %v8786, %v9306
  %v9308 = vpop.f32.mrf.mxu0
  %9309 = vmatprep.mubr.f32.mxu0 0.0
  %v9310 = vand.u32 %v7327, 4294901760
  %v9311 = vsub.f32 %v7327, %v9310
  %v9312 = vand.u32 %v9311, 4294901760
  %9313 = vmatmul.mubr.f32.gmra.mxu0 %v9312
  %v9314 = vpop.f32.mrf.mxu0
  %v9315 = vadd.f32 %v8793, %v9314
  %v9316 = vpop.f32.mrf.mxu0
  %9317 = vmatprep.mubr.f32.mxu0 0.0
  %v9318 = vand.u32 %v7330, 4294901760
  %v9319 = vsub.f32 %v7330, %v9318
  %v9320 = vand.u32 %v9319, 4294901760
  %9321 = vmatmul.mubr.f32.gmra.mxu0 %v9320
  %v9322 = vpop.f32.mrf.mxu0
  %v9323 = vadd.f32 %v8800, %v9322
  %v9324 = vpop.f32.mrf.mxu0
  %9325 = vmatprep.mubr.f32.mxu0 0.0
  %v9326 = vand.u32 %v7333, 4294901760
  %v9327 = vsub.f32 %v7333, %v9326
  %v9328 = vand.u32 %v9327, 4294901760
  %9329 = vmatmul.mubr.f32.gmra.mxu0 %v9328
  %v9330 = vpop.f32.mrf.mxu0
  %v9331 = vadd.f32 %v8807, %v9330
  %v9332 = vpop.f32.mrf.mxu0
  %9333 = vmatprep.mubr.f32.mxu0 0.0
  %v9334 = vand.u32 %v7336, 4294901760
  %v9335 = vsub.f32 %v7336, %v9334
  %v9336 = vand.u32 %v9335, 4294901760
  %9337 = vmatmul.mubr.f32.gmra.mxu0 %v9336
  %v9338 = vpop.f32.mrf.mxu0
  %v9339 = vadd.f32 %v8814, %v9338
  %v9340 = vpop.f32.mrf.mxu0
  %9341 = vmatprep.mubr.f32.mxu0 0.0
  %v9342 = vand.u32 %v7339, 4294901760
  %v9343 = vsub.f32 %v7339, %v9342
  %v9344 = vand.u32 %v9343, 4294901760
  %9345 = vmatmul.mubr.f32.gmra.mxu0 %v9344
  %v9346 = vpop.f32.mrf.mxu0
  %v9347 = vadd.f32 %v8821, %v9346
  %v9348 = vpop.f32.mrf.mxu0
  %9349 = vmatprep.mubr.f32.mxu0 0.0
  %v9350 = vand.u32 %v7342, 4294901760
  %v9351 = vsub.f32 %v7342, %v9350
  %v9352 = vand.u32 %v9351, 4294901760
  %9353 = vmatmul.mubr.f32.gmra.mxu0 %v9352
  %v9354 = vpop.f32.mrf.mxu0
  %v9355 = vadd.f32 %v8828, %v9354
  %v9356 = vpop.f32.mrf.mxu0
  %9357 = vmatprep.mubr.f32.mxu0 0.0
  %v9358 = vand.u32 %v7345, 4294901760
  %v9359 = vsub.f32 %v7345, %v9358
  %v9360 = vand.u32 %v9359, 4294901760
  %9361 = vmatmul.mubr.f32.gmra.mxu0 %v9360
  %v9362 = vpop.f32.mrf.mxu0
  %v9363 = vadd.f32 %v8835, %v9362
  %v9364 = vpop.f32.mrf.mxu0
  %9365 = vmatprep.mubr.f32.mxu0 0.0
  %v9366 = vand.u32 %v7348, 4294901760
  %v9367 = vsub.f32 %v7348, %v9366
  %v9368 = vand.u32 %v9367, 4294901760
  %9369 = vmatmul.mubr.f32.gmra.mxu0 %v9368
  %v9370 = vpop.f32.mrf.mxu0
  %v9371 = vadd.f32 %v8842, %v9370
  %v9372 = vpop.f32.mrf.mxu0
  %9373 = vmatprep.mubr.f32.mxu0 0.0
  %v9374 = vand.u32 %v7351, 4294901760
  %v9375 = vsub.f32 %v7351, %v9374
  %v9376 = vand.u32 %v9375, 4294901760
  %9377 = vmatmul.mubr.f32.gmra.mxu0 %v9376
  %v9378 = vpop.f32.mrf.mxu0
  %v9379 = vadd.f32 %v8849, %v9378
  %v9380 = vpop.f32.mrf.mxu0
  %9381 = vmatprep.mubr.f32.mxu0 0.0
  %v9382 = vand.u32 %v7354, 4294901760
  %v9383 = vsub.f32 %v7354, %v9382
  %v9384 = vand.u32 %v9383, 4294901760
  %9385 = vmatmul.mubr.f32.gmra.mxu0 %v9384
  %v9386 = vpop.f32.mrf.mxu0
  %v9387 = vadd.f32 %v8856, %v9386
  %v9388 = vpop.f32.mrf.mxu0
  %9389 = vmatprep.mubr.f32.mxu0 0.0
  %v9390 = vand.u32 %v7357, 4294901760
  %v9391 = vsub.f32 %v7357, %v9390
  %v9392 = vand.u32 %v9391, 4294901760
  %9393 = vmatmul.mubr.f32.gmra.mxu0 %v9392
  %v9394 = vpop.f32.mrf.mxu0
  %v9395 = vadd.f32 %v8863, %v9394
  %v9396 = vpop.f32.mrf.mxu0
  %9397 = vmatprep.mubr.f32.mxu0 0.0
  %v9398 = vand.u32 %v7360, 4294901760
  %v9399 = vsub.f32 %v7360, %v9398
  %v9400 = vand.u32 %v9399, 4294901760
  %9401 = vmatmul.mubr.f32.gmra.mxu0 %v9400
  %v9402 = vpop.f32.mrf.mxu0
  %v9403 = vadd.f32 %v8870, %v9402
  %v9404 = vpop.f32.mrf.mxu0
  %9405 = vmatprep.mubr.f32.mxu0 0.0
  %v9406 = vand.u32 %v7363, 4294901760
  %v9407 = vsub.f32 %v7363, %v9406
  %v9408 = vand.u32 %v9407, 4294901760
  %9409 = vmatmul.mubr.f32.gmra.mxu0 %v9408
  %v9410 = vpop.f32.mrf.mxu0
  %v9411 = vadd.f32 %v8877, %v9410
  %v9412 = vpop.f32.mrf.mxu0
  %9413 = vmatprep.mubr.f32.mxu0 0.0
  %v9414 = vand.u32 %v7366, 4294901760
  %v9415 = vsub.f32 %v7366, %v9414
  %v9416 = vand.u32 %v9415, 4294901760
  %9417 = vmatmul.mubr.f32.gmra.mxu0 %v9416
  %v9418 = vpop.f32.mrf.mxu0
  %v9419 = vadd.f32 %v8884, %v9418
  %v9420 = vpop.f32.mrf.mxu0
  %9421 = vmatprep.mubr.f32.mxu0 0.0
  %v9422 = vand.u32 %v7369, 4294901760
  %v9423 = vsub.f32 %v7369, %v9422
  %v9424 = vand.u32 %v9423, 4294901760
  %9425 = vmatmul.mubr.f32.gmra.mxu0 %v9424
  %v9426 = vpop.f32.mrf.mxu0
  %v9427 = vadd.f32 %v8891, %v9426
  %v9428 = vpop.f32.mrf.mxu0
  %9429 = vmatprep.mubr.f32.mxu0 0.0
  %v9430 = vand.u32 %v7372, 4294901760
  %v9431 = vsub.f32 %v7372, %v9430
  %v9432 = vand.u32 %v9431, 4294901760
  %9433 = vmatmul.mubr.f32.gmra.mxu0 %v9432
  %v9434 = vpop.f32.mrf.mxu0
  %v9435 = vadd.f32 %v8898, %v9434
  %v9436 = vpop.f32.mrf.mxu0
  %9437 = vmatprep.mubr.f32.mxu0 0.0
  %v9438 = vand.u32 %v7375, 4294901760
  %v9439 = vsub.f32 %v7375, %v9438
  %v9440 = vand.u32 %v9439, 4294901760
  %9441 = vmatmul.mubr.f32.gmra.mxu0 %v9440
  %v9442 = vpop.f32.mrf.mxu0
  %v9443 = vadd.f32 %v8905, %v9442
  %v9444 = vpop.f32.mrf.mxu0
  %9445 = vmatprep.mubr.f32.mxu0 0.0
  %v9446 = vand.u32 %v7378, 4294901760
  %v9447 = vsub.f32 %v7378, %v9446
  %v9448 = vand.u32 %v9447, 4294901760
  %9449 = vmatmul.mubr.f32.gmra.mxu0 %v9448
  %v9450 = vpop.f32.mrf.mxu0
  %v9451 = vadd.f32 %v8912, %v9450
  %v9452 = vpop.f32.mrf.mxu0
  %9453 = vmatprep.mubr.f32.mxu0 0.0
  %v9454 = vand.u32 %v7381, 4294901760
  %v9455 = vsub.f32 %v7381, %v9454
  %v9456 = vand.u32 %v9455, 4294901760
  %9457 = vmatmul.mubr.f32.gmra.mxu0 %v9456
  %v9458 = vpop.f32.mrf.mxu0
  %v9459 = vadd.f32 %v8919, %v9458
  %v9460 = vpop.f32.mrf.mxu0
  %9461 = vmatprep.mubr.f32.mxu0 0.0
  %v9462 = vand.u32 %v7384, 4294901760
  %v9463 = vsub.f32 %v7384, %v9462
  %v9464 = vand.u32 %v9463, 4294901760
  %9465 = vmatmul.mubr.f32.gmra.mxu0 %v9464
  %v9466 = vpop.f32.mrf.mxu0
  %v9467 = vadd.f32 %v8926, %v9466
  %v9468 = vpop.f32.mrf.mxu0
  %9469 = vmatprep.mubr.f32.mxu0 0.0
  %v9470 = vand.u32 %v7387, 4294901760
  %v9471 = vsub.f32 %v7387, %v9470
  %v9472 = vand.u32 %v9471, 4294901760
  %9473 = vmatmul.mubr.f32.gmra.mxu0 %v9472
  %v9474 = vpop.f32.mrf.mxu0
  %v9475 = vadd.f32 %v8933, %v9474
  %v9476 = vpop.f32.mrf.mxu0
  %9477 = vmatprep.mubr.f32.mxu0 0.0
  %v9478 = vand.u32 %v7390, 4294901760
  %v9479 = vsub.f32 %v7390, %v9478
  %v9480 = vand.u32 %v9479, 4294901760
  %9481 = vmatmul.mubr.f32.gmra.mxu0 %v9480
  %v9482 = vpop.f32.mrf.mxu0
  %v9483 = vadd.f32 %v8940, %v9482
  %v9484 = vpop.f32.mrf.mxu0
  %9485 = vmatprep.mubr.f32.mxu0 0.0
  %v9486 = vand.u32 %v7393, 4294901760
  %v9487 = vsub.f32 %v7393, %v9486
  %v9488 = vand.u32 %v9487, 4294901760
  %9489 = vmatmul.mubr.f32.gmra.mxu0 %v9488
  %v9490 = vpop.f32.mrf.mxu0
  %v9491 = vadd.f32 %v8947, %v9490
  %v9492 = vpop.f32.mrf.mxu0
  %9493 = vmatprep.mubr.f32.mxu0 0.0
  %v9494 = vand.u32 %v7396, 4294901760
  %v9495 = vsub.f32 %v7396, %v9494
  %v9496 = vand.u32 %v9495, 4294901760
  %9497 = vmatmul.mubr.f32.gmra.mxu0 %v9496
  %v9498 = vpop.f32.mrf.mxu0
  %v9499 = vadd.f32 %v8954, %v9498
  %v9500 = vpop.f32.mrf.mxu0
  %9501 = vmatprep.mubr.f32.mxu0 0.0
  %v9502 = vand.u32 %v7399, 4294901760
  %v9503 = vsub.f32 %v7399, %v9502
  %v9504 = vand.u32 %v9503, 4294901760
  %9505 = vmatmul.mubr.f32.gmra.mxu0 %v9504
  %v9506 = vpop.f32.mrf.mxu0
  %v9507 = vadd.f32 %v8961, %v9506
  %v9508 = vpop.f32.mrf.mxu0
  %9509 = vmatprep.mubr.f32.mxu0 0.0
  %v9510 = vand.u32 %v7402, 4294901760
  %v9511 = vsub.f32 %v7402, %v9510
  %v9512 = vand.u32 %v9511, 4294901760
  %9513 = vmatmul.mubr.f32.gmra.mxu0 %v9512
  %v9514 = vpop.f32.mrf.mxu0
  %v9515 = vadd.f32 %v8968, %v9514
  %v9516 = vpop.f32.mrf.mxu0
  %9517 = vmatprep.mubr.f32.mxu0 0.0
  %v9518 = vand.u32 %v7405, 4294901760
  %v9519 = vsub.f32 %v7405, %v9518
  %v9520 = vand.u32 %v9519, 4294901760
  %9521 = vmatmul.mubr.f32.gmra.mxu0 %v9520
  %v9522 = vpop.f32.mrf.mxu0
  %v9523 = vadd.f32 %v8975, %v9522
  %v9524 = vpop.f32.mrf.mxu0
  %9525 = vmatprep.mubr.f32.mxu0 0.0
  %v9526 = vand.u32 %v7408, 4294901760
  %v9527 = vsub.f32 %v7408, %v9526
  %v9528 = vand.u32 %v9527, 4294901760
  %9529 = vmatmul.mubr.f32.gmra.mxu0 %v9528
  %v9530 = vpop.f32.mrf.mxu0
  %v9531 = vadd.f32 %v8982, %v9530
  %v9532 = vpop.f32.mrf.mxu0
  %9533 = vmatprep.mubr.f32.mxu0 0.0
  %v9534 = vand.u32 %v7411, 4294901760
  %v9535 = vsub.f32 %v7411, %v9534
  %v9536 = vand.u32 %v9535, 4294901760
  %9537 = vmatmul.mubr.f32.gmra.mxu0 %v9536
  %v9538 = vpop.f32.mrf.mxu0
  %v9539 = vadd.f32 %v8989, %v9538
  %v9540 = vpop.f32.mrf.mxu0
  %9541 = vmatprep.mubr.f32.mxu0 0.0
  %v9542 = vand.u32 %v7414, 4294901760
  %v9543 = vsub.f32 %v7414, %v9542
  %v9544 = vand.u32 %v9543, 4294901760
  %9545 = vmatmul.mubr.f32.gmra.mxu0 %v9544
  %v9546 = vpop.f32.mrf.mxu0
  %v9547 = vadd.f32 %v8996, %v9546
  %v9548 = vpop.f32.mrf.mxu0
  %9549 = vmatprep.mubr.f32.mxu0 0.0
  %v9550 = vand.u32 %v7417, 4294901760
  %v9551 = vsub.f32 %v7417, %v9550
  %v9552 = vand.u32 %v9551, 4294901760
  %9553 = vmatmul.mubr.f32.gmra.mxu0 %v9552
  %v9554 = vpop.f32.mrf.mxu0
  %v9555 = vadd.f32 %v9003, %v9554
  %v9556 = vpop.f32.mrf.mxu0
  %9557 = vmatprep.mubr.f32.mxu0 0.0
  %v9558 = vand.u32 %v7420, 4294901760
  %v9559 = vsub.f32 %v7420, %v9558
  %v9560 = vand.u32 %v9559, 4294901760
  %9561 = vmatmul.mubr.f32.gmra.mxu0 %v9560
  %v9562 = vpop.f32.mrf.mxu0
  %v9563 = vadd.f32 %v9010, %v9562
  %v9564 = vpop.f32.mrf.mxu0
  %9565 = vmatprep.mubr.f32.mxu0 0.0
  %v9566 = vand.u32 %v7423, 4294901760
  %v9567 = vsub.f32 %v7423, %v9566
  %v9568 = vand.u32 %v9567, 4294901760
  %9569 = vmatmul.mubr.f32.gmra.mxu0 %v9568
  %v9570 = vpop.f32.mrf.mxu0
  %v9571 = vadd.f32 %v9017, %v9570
  %v9572 = vpop.f32.mrf.mxu0
  %9573 = vmatprep.mubr.f32.mxu0 0.0
  %v9574 = vand.u32 %v7426, 4294901760
  %v9575 = vsub.f32 %v7426, %v9574
  %v9576 = vand.u32 %v9575, 4294901760
  %9577 = vmatmul.mubr.f32.gmra.mxu0 %v9576
  %v9578 = vpop.f32.mrf.mxu0
  %v9579 = vadd.f32 %v9024, %v9578
  %v9580 = vpop.f32.mrf.mxu0
  %9581 = vmatprep.mubr.f32.mxu0 0.0
  %v9582 = vand.u32 %v7429, 4294901760
  %v9583 = vsub.f32 %v7429, %v9582
  %v9584 = vand.u32 %v9583, 4294901760
  %9585 = vmatmul.mubr.f32.gmra.mxu0 %v9584
  %v9586 = vpop.f32.mrf.mxu0
  %v9587 = vadd.f32 %v9031, %v9586
  %v9588 = vpop.f32.mrf.mxu0
  %9589 = vmatprep.mubr.f32.mxu0 0.0
  %v9590 = vand.u32 %v7432, 4294901760
  %v9591 = vsub.f32 %v7432, %v9590
  %v9592 = vand.u32 %v9591, 4294901760
  %9593 = vmatmul.mubr.f32.gmra.mxu0 %v9592
  %v9594 = vpop.f32.mrf.mxu0
  %v9595 = vadd.f32 %v9038, %v9594
  %v9596 = vpop.f32.mrf.mxu0
  %9597 = vmatprep.mubr.f32.mxu0 0.0
  %v9598 = vand.u32 %v7435, 4294901760
  %v9599 = vsub.f32 %v7435, %v9598
  %v9600 = vand.u32 %v9599, 4294901760
  %9601 = vmatmul.mubr.f32.gmra.mxu0 %v9600
  %v9602 = vpop.f32.mrf.mxu0
  %v9603 = vadd.f32 %v9045, %v9602
  %v9604 = vpop.f32.mrf.mxu0
  %9605 = vmatprep.mubr.f32.mxu0 0.0
  %v9606 = vand.u32 %v7438, 4294901760
  %v9607 = vsub.f32 %v7438, %v9606
  %v9608 = vand.u32 %v9607, 4294901760
  %9609 = vmatmul.mubr.f32.gmra.mxu0 %v9608
  %v9610 = vpop.f32.mrf.mxu0
  %v9611 = vadd.f32 %v9052, %v9610
  %v9612 = vpop.f32.mrf.mxu0
  %9613 = vmatprep.mubr.f32.mxu0 0.0
  %v9614 = vand.u32 %v7441, 4294901760
  %v9615 = vsub.f32 %v7441, %v9614
  %v9616 = vand.u32 %v9615, 4294901760
  %9617 = vmatmul.mubr.f32.gmra.mxu0 %v9616
  %v9618 = vpop.f32.mrf.mxu0
  %v9619 = vadd.f32 %v9059, %v9618
  %v9620 = vpop.f32.mrf.mxu0
  %9621 = vmatprep.mubr.f32.mxu0 0.0
  %v9622 = vand.u32 %v7444, 4294901760
  %v9623 = vsub.f32 %v7444, %v9622
  %v9624 = vand.u32 %v9623, 4294901760
  %9625 = vmatmul.mubr.f32.gmra.mxu0 %v9624
  %v9626 = vpop.f32.mrf.mxu0
  %v9627 = vadd.f32 %v9066, %v9626
  %v9628 = vpop.f32.mrf.mxu0
  %9629 = vmatprep.mubr.f32.mxu0 0.0
  %v9630 = vand.u32 %v7447, 4294901760
  %v9631 = vsub.f32 %v7447, %v9630
  %v9632 = vand.u32 %v9631, 4294901760
  %9633 = vmatmul.mubr.f32.gmra.mxu0 %v9632
  %v9634 = vpop.f32.mrf.mxu0
  %v9635 = vadd.f32 %v9073, %v9634
  %v9636 = vpop.f32.mrf.mxu0
  %9637 = vmatprep.mubr.f32.mxu0 0.0
  %v9638 = vand.u32 %v7450, 4294901760
  %v9639 = vsub.f32 %v7450, %v9638
  %v9640 = vand.u32 %v9639, 4294901760
  %9641 = vmatmul.mubr.f32.gmra.mxu0 %v9640
  %v9642 = vpop.f32.mrf.mxu0
  %v9643 = vadd.f32 %v9080, %v9642
  %v9644 = vpop.f32.mrf.mxu0
  %9645 = vmatprep.mubr.f32.mxu0 0.0
  %v9646 = vand.u32 %v7453, 4294901760
  %v9647 = vsub.f32 %v7453, %v9646
  %v9648 = vand.u32 %v9647, 4294901760
  %9649 = vmatmul.mubr.f32.gmra.mxu0 %v9648
  %v9650 = vpop.f32.mrf.mxu0
  %v9651 = vadd.f32 %v9087, %v9650
  %v9652 = vpop.f32.mrf.mxu0
  %9653 = vmatprep.mubr.f32.mxu0 0.0
  %v9654 = vand.u32 %v7456, 4294901760
  %v9655 = vsub.f32 %v7456, %v9654
  %v9656 = vand.u32 %v9655, 4294901760
  %9657 = vmatmul.mubr.f32.gmra.mxu0 %v9656
  %v9658 = vpop.f32.mrf.mxu0
  %v9659 = vadd.f32 %v9094, %v9658
  %v9660 = vpop.f32.mrf.mxu0
  %9661 = vmatprep.mubr.f32.mxu0 0.0
  %v9662 = vand.u32 %v7459, 4294901760
  %v9663 = vsub.f32 %v7459, %v9662
  %v9664 = vand.u32 %v9663, 4294901760
  %9665 = vmatmul.mubr.f32.gmra.mxu0 %v9664
  %v9666 = vpop.f32.mrf.mxu0
  %v9667 = vadd.f32 %v9101, %v9666
  %v9668 = vpop.f32.mrf.mxu0
  %9669 = vmatprep.mubr.f32.mxu0 0.0
  %v9670 = vand.u32 %v7462, 4294901760
  %v9671 = vsub.f32 %v7462, %v9670
  %v9672 = vand.u32 %v9671, 4294901760
  %9673 = vmatmul.mubr.f32.gmra.mxu0 %v9672
  %v9674 = vpop.f32.mrf.mxu0
  %v9675 = vadd.f32 %v9108, %v9674
  %v9676 = vpop.f32.mrf.mxu0
  %9677 = vmatprep.mubr.f32.mxu0 0.0
  %v9678 = vand.u32 %v7465, 4294901760
  %v9679 = vsub.f32 %v7465, %v9678
  %v9680 = vand.u32 %v9679, 4294901760
  %9681 = vmatmul.mubr.f32.gmra.mxu0 %v9680
  %v9682 = vpop.f32.mrf.mxu0
  %v9683 = vadd.f32 %v9115, %v9682
  %v9684 = vpop.f32.mrf.mxu0
  %9685 = vmatprep.mubr.f32.mxu0 0.0
  %v9686 = vand.u32 %v7468, 4294901760
  %v9687 = vsub.f32 %v7468, %v9686
  %v9688 = vand.u32 %v9687, 4294901760
  %9689 = vmatmul.mubr.f32.gmra.mxu0 %v9688
  %v9690 = vpop.f32.mrf.mxu0
  %v9691 = vadd.f32 %v9122, %v9690
  %v9692 = vpop.f32.mrf.mxu0
  %9693 = vmatprep.mubr.f32.mxu0 0.0
  %v9694 = vand.u32 %v7471, 4294901760
  %v9695 = vsub.f32 %v7471, %v9694
  %v9696 = vand.u32 %v9695, 4294901760
  %9697 = vmatmul.mubr.f32.gmra.mxu0 %v9696
  %v9698 = vpop.f32.mrf.mxu0
  %v9699 = vadd.f32 %v9129, %v9698
  %v9700 = vpop.f32.mrf.mxu0
  %9701 = vmatprep.mubr.f32.mxu0 0.0
  %v9702 = vand.u32 %v7474, 4294901760
  %v9703 = vsub.f32 %v7474, %v9702
  %v9704 = vand.u32 %v9703, 4294901760
  %9705 = vmatmul.mubr.f32.gmra.mxu0 %v9704
  %v9706 = vpop.f32.mrf.mxu0
  %v9707 = vadd.f32 %v9136, %v9706
  %v9708 = vpop.f32.mrf.mxu0
  %9709 = vmatprep.mubr.f32.mxu0 0.0
  %v9710 = vand.u32 %v7477, 4294901760
  %v9711 = vsub.f32 %v7477, %v9710
  %v9712 = vand.u32 %v9711, 4294901760
  %9713 = vmatmul.mubr.f32.gmra.mxu0 %v9712
  %v9714 = vpop.f32.mrf.mxu0
  %v9715 = vadd.f32 %v9143, %v9714
  %v9716 = vpop.f32.mrf.mxu0
  %9717 = vmatprep.mubr.f32.mxu0 0.0
  %v9718 = vand.u32 %v7480, 4294901760
  %v9719 = vsub.f32 %v7480, %v9718
  %v9720 = vand.u32 %v9719, 4294901760
  %9721 = vmatmul.mubr.f32.gmra.mxu0 %v9720
  %v9722 = vpop.f32.mrf.mxu0
  %v9723 = vadd.f32 %v9150, %v9722
  %v9724 = vpop.f32.mrf.mxu0
  %9725 = vmatprep.mubr.f32.mxu0 0.0
  %v9726 = vand.u32 %v7483, 4294901760
  %v9727 = vsub.f32 %v7483, %v9726
  %v9728 = vand.u32 %v9727, 4294901760
  %9729 = vmatmul.mubr.f32.gmra.mxu0 %v9728
  %v9730 = vpop.f32.mrf.mxu0
  %v9731 = vadd.f32 %v9157, %v9730
  %v9732 = vpop.f32.mrf.mxu0
  %9733 = vmatprep.mubr.f32.mxu0 0.0
  %v9734 = vand.u32 %v7486, 4294901760
  %v9735 = vsub.f32 %v7486, %v9734
  %v9736 = vand.u32 %v9735, 4294901760
  %9737 = vmatmul.mubr.f32.gmra.mxu0 %v9736
  %v9738 = vpop.f32.mrf.mxu0
  %v9739 = vadd.f32 %v9164, %v9738
  %v9740 = vpop.f32.mrf.mxu0
  %9741 = vmatprep.mubr.f32.mxu0 0.0
  %v9742 = vand.u32 %v7489, 4294901760
  %v9743 = vsub.f32 %v7489, %v9742
  %v9744 = vand.u32 %v9743, 4294901760
  %9745 = vmatmul.mubr.f32.gmra.mxu0 %v9744
  %v9746 = vpop.f32.mrf.mxu0
  %v9747 = vadd.f32 %v9171, %v9746
  %v9748 = vpop.f32.mrf.mxu0
  %9749 = vmatprep.mubr.f32.mxu0 0.0
  %v9750 = vand.u32 %v7492, 4294901760
  %v9751 = vsub.f32 %v7492, %v9750
  %v9752 = vand.u32 %v9751, 4294901760
  %9753 = vmatmul.mubr.f32.gmra.mxu0 %v9752
  %v9754 = vpop.f32.mrf.mxu0
  %v9755 = vadd.f32 %v9178, %v9754
  %v9756 = vpop.f32.mrf.mxu0
  %9757 = vmatprep.mubr.f32.mxu0 0.0
  %v9758 = vand.u32 %v7495, 4294901760
  %v9759 = vsub.f32 %v7495, %v9758
  %v9760 = vand.u32 %v9759, 4294901760
  %9761 = vmatmul.mubr.f32.gmra.mxu0 %v9760
  %v9762 = vpop.f32.mrf.mxu0
  %v9763 = vadd.f32 %v9185, %v9762
  %v9764 = vpop.f32.mrf.mxu0
  %9765 = vmatprep.mubr.f32.mxu0 0.0
  %v9766 = vand.u32 %v7498, 4294901760
  %v9767 = vsub.f32 %v7498, %v9766
  %v9768 = vand.u32 %v9767, 4294901760
  %9769 = vmatmul.mubr.f32.gmra.mxu0 %v9768
  %v9770 = vpop.f32.mrf.mxu0
  %v9771 = vadd.f32 %v9192, %v9770
  %v9772 = vpop.f32.mrf.mxu0
  %9773 = vmatprep.mubr.f32.mxu0 0.0
  %v9774 = vand.u32 %v7501, 4294901760
  %v9775 = vsub.f32 %v7501, %v9774
  %v9776 = vand.u32 %v9775, 4294901760
  %9777 = vmatmul.mubr.f32.gmra.mxu0 %v9776
  %v9778 = vpop.f32.mrf.mxu0
  %v9779 = vadd.f32 %v9199, %v9778
  %v9780 = vpop.f32.mrf.mxu0
  %9781 = vmatprep.mubr.f32.mxu0 0.0
  %v9782 = vand.u32 %v7504, 4294901760
  %v9783 = vsub.f32 %v7504, %v9782
  %v9784 = vand.u32 %v9783, 4294901760
  %9785 = vmatmul.mubr.f32.gmra.mxu0 %v9784
  %v9786 = vpop.f32.mrf.mxu0
  %v9787 = vadd.f32 %v9206, %v9786
  %v9788 = vpop.f32.mrf.mxu0
  %9789 = vmatprep.mubr.f32.mxu0 0.0
  %v9790 = vand.u32 %v7507, 4294901760
  %v9791 = vsub.f32 %v7507, %v9790
  %v9792 = vand.u32 %v9791, 4294901760
  %9793 = vmatmul.mubr.f32.gmra.mxu0 %v9792
  %v9794 = vpop.f32.mrf.mxu0
  %v9795 = vadd.f32 %v9213, %v9794
  %v9796 = vpop.f32.mrf.mxu0
  %9797 = vdwg.mxu0
  %9798 = vmatprep.subr.mxu0 0.0
  %9799 = vmatpush1.msra.mxu0 0.0
  %9800 = vmatprep.subr.mxu0 0.0
  %9801 = vmatpush1.msra.mxu0 0.0
  %9802 = vmatprep.subr.mxu0 0.0
  %9803 = vmatpush1.msra.mxu0 0.0
  %9804 = vmatprep.subr.mxu0 0.0
  %9805 = vmatpush1.msra.mxu0 0.0
  %9806 = vmatprep.subr.mxu0 0.0
  %9807 = vmatpush1.msra.mxu0 0.0
  %9808 = vmatprep.subr.mxu0 0.0
  %9809 = vmatpush1.msra.mxu0 0.0
  %9810 = vmatprep.subr.mxu0 0.0
  %9811 = vmatpush1.msra.mxu0 0.0
  %9812 = vmatprep.subr.mxu0 0.0
  %9813 = vmatpush1.msra.mxu0 0.0
  %9814 = vmatprep.subr.mxu0 0.0
  %9815 = vmatpush1.msra.mxu0 0.0
  %9816 = vmatprep.subr.mxu0 0.0
  %9817 = vmatpush1.msra.mxu0 0.0
  %9818 = vmatprep.subr.mxu0 0.0
  %9819 = vmatpush1.msra.mxu0 0.0
  %9820 = vmatprep.subr.mxu0 0.0
  %v9821 = vand.u32 %v253, 4294901760
  %v9822 = vsub.f32 %v253, %v9821
  %v9823 = vand.u32 %v9822, 4294901760
  %9824 = vmatpush1.msra.mxu0 %v9823
  %9825 = vmatprep.subr.mxu0 0.0
  %v9826 = vand.u32 %v252, 4294901760
  %v9827 = vsub.f32 %v252, %v9826
  %v9828 = vand.u32 %v9827, 4294901760
  %9829 = vmatpush1.msra.mxu0 %v9828
  %9830 = vmatprep.subr.mxu0 0.0
  %v9831 = vand.u32 %v251, 4294901760
  %v9832 = vsub.f32 %v251, %v9831
  %v9833 = vand.u32 %v9832, 4294901760
  %9834 = vmatpush1.msra.mxu0 %v9833
  %9835 = vmatprep.subr.mxu0 0.0
  %v9836 = vand.u32 %v250, 4294901760
  %v9837 = vsub.f32 %v250, %v9836
  %v9838 = vand.u32 %v9837, 4294901760
  %9839 = vmatpush1.msra.mxu0 %v9838
  %9840 = vmatprep.subr.mxu0 0.0
  %v9841 = vand.u32 %v249, 4294901760
  %v9842 = vsub.f32 %v249, %v9841
  %v9843 = vand.u32 %v9842, 4294901760
  %9844 = vmatpush1.msra.mxu0 %v9843
  %9845 = vmatprep.subr.mxu0 0.0
  %9846 = vmatpush2.msra.mxu0 0.0
  %9847 = vmatprep.subr.mxu0 0.0
  %9848 = vmatpush2.msra.mxu0 0.0
  %9849 = vmatprep.subr.mxu0 0.0
  %9850 = vmatpush2.msra.mxu0 0.0
  %9851 = vmatprep.subr.mxu0 0.0
  %9852 = vmatpush2.msra.mxu0 0.0
  %9853 = vmatprep.subr.mxu0 0.0
  %9854 = vmatpush2.msra.mxu0 0.0
  %9855 = vmatprep.subr.mxu0 0.0
  %9856 = vmatpush2.msra.mxu0 0.0
  %9857 = vmatprep.subr.mxu0 0.0
  %9858 = vmatpush2.msra.mxu0 0.0
  %9859 = vmatprep.subr.mxu0 0.0
  %9860 = vmatpush2.msra.mxu0 0.0
  %9861 = vmatprep.subr.mxu0 0.0
  %9862 = vmatpush2.msra.mxu0 0.0
  %9863 = vmatprep.subr.mxu0 0.0
  %9864 = vmatpush2.msra.mxu0 0.0
  %9865 = vmatprep.subr.mxu0 0.0
  %9866 = vmatpush2.msra.mxu0 0.0
  %9867 = vmatprep.subr.mxu0 0.0
  %9868 = vmatpush2.msra.mxu0 0.0
  %9869 = vmatprep.subr.mxu0 0.0
  %9870 = vmatpush2.msra.mxu0 0.0
  %9871 = vmatprep.subr.mxu0 0.0
  %9872 = vmatpush2.msra.mxu0 0.0
  %9873 = vmatprep.subr.mxu0 0.0
  %9874 = vmatpush2.msra.mxu0 0.0
  %9875 = vmatprep.subr.mxu0 0.0
  %9876 = vmatpush2.msra.mxu0 0.0
  %9877 = vmatprep.mubr.f32.mxu0 0.0
  %v9878 = vand.u32 %v7318, 4294901760
  %9879 = vmatmul.mubr.f32.gmra.mxu0 %v9878
  %v9880 = vpop.f32.mrf.mxu0
  %v9881 = vadd.f32 %v9291, %v9880
  %v9882 = vpop.f32.mrf.mxu0
  %9883 = vmatprep.mubr.f32.mxu0 0.0
  %v9884 = vand.u32 %v7321, 4294901760
  %9885 = vmatmul.mubr.f32.gmra.mxu0 %v9884
  %v9886 = vpop.f32.mrf.mxu0
  %v9887 = vadd.f32 %v9299, %v9886
  %v9888 = vpop.f32.mrf.mxu0
  %9889 = vmatprep.mubr.f32.mxu0 0.0
  %v9890 = vand.u32 %v7324, 4294901760
  %9891 = vmatmul.mubr.f32.gmra.mxu0 %v9890
  %v9892 = vpop.f32.mrf.mxu0
  %v9893 = vadd.f32 %v9307, %v9892
  %v9894 = vpop.f32.mrf.mxu0
  %9895 = vmatprep.mubr.f32.mxu0 0.0
  %v9896 = vand.u32 %v7327, 4294901760
  %9897 = vmatmul.mubr.f32.gmra.mxu0 %v9896
  %v9898 = vpop.f32.mrf.mxu0
  %v9899 = vadd.f32 %v9315, %v9898
  %v9900 = vpop.f32.mrf.mxu0
  %9901 = vmatprep.mubr.f32.mxu0 0.0
  %v9902 = vand.u32 %v7330, 4294901760
  %9903 = vmatmul.mubr.f32.gmra.mxu0 %v9902
  %v9904 = vpop.f32.mrf.mxu0
  %v9905 = vadd.f32 %v9323, %v9904
  %v9906 = vpop.f32.mrf.mxu0
  %9907 = vmatprep.mubr.f32.mxu0 0.0
  %v9908 = vand.u32 %v7333, 4294901760
  %9909 = vmatmul.mubr.f32.gmra.mxu0 %v9908
  %v9910 = vpop.f32.mrf.mxu0
  %v9911 = vadd.f32 %v9331, %v9910
  %v9912 = vpop.f32.mrf.mxu0
  %9913 = vmatprep.mubr.f32.mxu0 0.0
  %v9914 = vand.u32 %v7336, 4294901760
  %9915 = vmatmul.mubr.f32.gmra.mxu0 %v9914
  %v9916 = vpop.f32.mrf.mxu0
  %v9917 = vadd.f32 %v9339, %v9916
  %v9918 = vpop.f32.mrf.mxu0
  %9919 = vmatprep.mubr.f32.mxu0 0.0
  %v9920 = vand.u32 %v7339, 4294901760
  %9921 = vmatmul.mubr.f32.gmra.mxu0 %v9920
  %v9922 = vpop.f32.mrf.mxu0
  %v9923 = vadd.f32 %v9347, %v9922
  %v9924 = vpop.f32.mrf.mxu0
  %9925 = vmatprep.mubr.f32.mxu0 0.0
  %v9926 = vand.u32 %v7342, 4294901760
  %9927 = vmatmul.mubr.f32.gmra.mxu0 %v9926
  %v9928 = vpop.f32.mrf.mxu0
  %v9929 = vadd.f32 %v9355, %v9928
  %v9930 = vpop.f32.mrf.mxu0
  %9931 = vmatprep.mubr.f32.mxu0 0.0
  %v9932 = vand.u32 %v7345, 4294901760
  %9933 = vmatmul.mubr.f32.gmra.mxu0 %v9932
  %v9934 = vpop.f32.mrf.mxu0
  %v9935 = vadd.f32 %v9363, %v9934
  %v9936 = vpop.f32.mrf.mxu0
  %9937 = vmatprep.mubr.f32.mxu0 0.0
  %v9938 = vand.u32 %v7348, 4294901760
  %9939 = vmatmul.mubr.f32.gmra.mxu0 %v9938
  %v9940 = vpop.f32.mrf.mxu0
  %v9941 = vadd.f32 %v9371, %v9940
  %v9942 = vpop.f32.mrf.mxu0
  %9943 = vmatprep.mubr.f32.mxu0 0.0
  %v9944 = vand.u32 %v7351, 4294901760
  %9945 = vmatmul.mubr.f32.gmra.mxu0 %v9944
  %v9946 = vpop.f32.mrf.mxu0
  %v9947 = vadd.f32 %v9379, %v9946
  %v9948 = vpop.f32.mrf.mxu0
  %9949 = vmatprep.mubr.f32.mxu0 0.0
  %v9950 = vand.u32 %v7354, 4294901760
  %9951 = vmatmul.mubr.f32.gmra.mxu0 %v9950
  %v9952 = vpop.f32.mrf.mxu0
  %v9953 = vadd.f32 %v9387, %v9952
  %v9954 = vpop.f32.mrf.mxu0
  %9955 = vmatprep.mubr.f32.mxu0 0.0
  %v9956 = vand.u32 %v7357, 4294901760
  %9957 = vmatmul.mubr.f32.gmra.mxu0 %v9956
  %v9958 = vpop.f32.mrf.mxu0
  %v9959 = vadd.f32 %v9395, %v9958
  %v9960 = vpop.f32.mrf.mxu0
  %9961 = vmatprep.mubr.f32.mxu0 0.0
  %v9962 = vand.u32 %v7360, 4294901760
  %9963 = vmatmul.mubr.f32.gmra.mxu0 %v9962
  %v9964 = vpop.f32.mrf.mxu0
  %v9965 = vadd.f32 %v9403, %v9964
  %v9966 = vpop.f32.mrf.mxu0
  %9967 = vmatprep.mubr.f32.mxu0 0.0
  %v9968 = vand.u32 %v7363, 4294901760
  %9969 = vmatmul.mubr.f32.gmra.mxu0 %v9968
  %v9970 = vpop.f32.mrf.mxu0
  %v9971 = vadd.f32 %v9411, %v9970
  %v9972 = vpop.f32.mrf.mxu0
  %9973 = vmatprep.mubr.f32.mxu0 0.0
  %v9974 = vand.u32 %v7366, 4294901760
  %9975 = vmatmul.mubr.f32.gmra.mxu0 %v9974
  %v9976 = vpop.f32.mrf.mxu0
  %v9977 = vadd.f32 %v9419, %v9976
  %v9978 = vpop.f32.mrf.mxu0
  %9979 = vmatprep.mubr.f32.mxu0 0.0
  %v9980 = vand.u32 %v7369, 4294901760
  %9981 = vmatmul.mubr.f32.gmra.mxu0 %v9980
  %v9982 = vpop.f32.mrf.mxu0
  %v9983 = vadd.f32 %v9427, %v9982
  %v9984 = vpop.f32.mrf.mxu0
  %9985 = vmatprep.mubr.f32.mxu0 0.0
  %v9986 = vand.u32 %v7372, 4294901760
  %9987 = vmatmul.mubr.f32.gmra.mxu0 %v9986
  %v9988 = vpop.f32.mrf.mxu0
  %v9989 = vadd.f32 %v9435, %v9988
  %v9990 = vpop.f32.mrf.mxu0
  %9991 = vmatprep.mubr.f32.mxu0 0.0
  %v9992 = vand.u32 %v7375, 4294901760
  %9993 = vmatmul.mubr.f32.gmra.mxu0 %v9992
  %v9994 = vpop.f32.mrf.mxu0
  %v9995 = vadd.f32 %v9443, %v9994
  %v9996 = vpop.f32.mrf.mxu0
  %9997 = vmatprep.mubr.f32.mxu0 0.0
  %v9998 = vand.u32 %v7378, 4294901760
  %9999 = vmatmul.mubr.f32.gmra.mxu0 %v9998
  %v10000 = vpop.f32.mrf.mxu0
  %v10001 = vadd.f32 %v9451, %v10000
  %v10002 = vpop.f32.mrf.mxu0
  %10003 = vmatprep.mubr.f32.mxu0 0.0
  %v10004 = vand.u32 %v7381, 4294901760
  %10005 = vmatmul.mubr.f32.gmra.mxu0 %v10004
  %v10006 = vpop.f32.mrf.mxu0
  %v10007 = vadd.f32 %v9459, %v10006
  %v10008 = vpop.f32.mrf.mxu0
  %10009 = vmatprep.mubr.f32.mxu0 0.0
  %v10010 = vand.u32 %v7384, 4294901760
  %10011 = vmatmul.mubr.f32.gmra.mxu0 %v10010
  %v10012 = vpop.f32.mrf.mxu0
  %v10013 = vadd.f32 %v9467, %v10012
  %v10014 = vpop.f32.mrf.mxu0
  %10015 = vmatprep.mubr.f32.mxu0 0.0
  %v10016 = vand.u32 %v7387, 4294901760
  %10017 = vmatmul.mubr.f32.gmra.mxu0 %v10016
  %v10018 = vpop.f32.mrf.mxu0
  %v10019 = vadd.f32 %v9475, %v10018
  %v10020 = vpop.f32.mrf.mxu0
  %10021 = vmatprep.mubr.f32.mxu0 0.0
  %v10022 = vand.u32 %v7390, 4294901760
  %10023 = vmatmul.mubr.f32.gmra.mxu0 %v10022
  %v10024 = vpop.f32.mrf.mxu0
  %v10025 = vadd.f32 %v9483, %v10024
  %v10026 = vpop.f32.mrf.mxu0
  %10027 = vmatprep.mubr.f32.mxu0 0.0
  %v10028 = vand.u32 %v7393, 4294901760
  %10029 = vmatmul.mubr.f32.gmra.mxu0 %v10028
  %v10030 = vpop.f32.mrf.mxu0
  %v10031 = vadd.f32 %v9491, %v10030
  %v10032 = vpop.f32.mrf.mxu0
  %10033 = vmatprep.mubr.f32.mxu0 0.0
  %v10034 = vand.u32 %v7396, 4294901760
  %10035 = vmatmul.mubr.f32.gmra.mxu0 %v10034
  %v10036 = vpop.f32.mrf.mxu0
  %v10037 = vadd.f32 %v9499, %v10036
  %v10038 = vpop.f32.mrf.mxu0
  %10039 = vmatprep.mubr.f32.mxu0 0.0
  %v10040 = vand.u32 %v7399, 4294901760
  %10041 = vmatmul.mubr.f32.gmra.mxu0 %v10040
  %v10042 = vpop.f32.mrf.mxu0
  %v10043 = vadd.f32 %v9507, %v10042
  %v10044 = vpop.f32.mrf.mxu0
  %10045 = vmatprep.mubr.f32.mxu0 0.0
  %v10046 = vand.u32 %v7402, 4294901760
  %10047 = vmatmul.mubr.f32.gmra.mxu0 %v10046
  %v10048 = vpop.f32.mrf.mxu0
  %v10049 = vadd.f32 %v9515, %v10048
  %v10050 = vpop.f32.mrf.mxu0
  %10051 = vmatprep.mubr.f32.mxu0 0.0
  %v10052 = vand.u32 %v7405, 4294901760
  %10053 = vmatmul.mubr.f32.gmra.mxu0 %v10052
  %v10054 = vpop.f32.mrf.mxu0
  %v10055 = vadd.f32 %v9523, %v10054
  %v10056 = vpop.f32.mrf.mxu0
  %10057 = vmatprep.mubr.f32.mxu0 0.0
  %v10058 = vand.u32 %v7408, 4294901760
  %10059 = vmatmul.mubr.f32.gmra.mxu0 %v10058
  %v10060 = vpop.f32.mrf.mxu0
  %v10061 = vadd.f32 %v9531, %v10060
  %v10062 = vpop.f32.mrf.mxu0
  %10063 = vmatprep.mubr.f32.mxu0 0.0
  %v10064 = vand.u32 %v7411, 4294901760
  %10065 = vmatmul.mubr.f32.gmra.mxu0 %v10064
  %v10066 = vpop.f32.mrf.mxu0
  %v10067 = vadd.f32 %v9539, %v10066
  %v10068 = vpop.f32.mrf.mxu0
  %10069 = vmatprep.mubr.f32.mxu0 0.0
  %v10070 = vand.u32 %v7414, 4294901760
  %10071 = vmatmul.mubr.f32.gmra.mxu0 %v10070
  %v10072 = vpop.f32.mrf.mxu0
  %v10073 = vadd.f32 %v9547, %v10072
  %v10074 = vpop.f32.mrf.mxu0
  %10075 = vmatprep.mubr.f32.mxu0 0.0
  %v10076 = vand.u32 %v7417, 4294901760
  %10077 = vmatmul.mubr.f32.gmra.mxu0 %v10076
  %v10078 = vpop.f32.mrf.mxu0
  %v10079 = vadd.f32 %v9555, %v10078
  %v10080 = vpop.f32.mrf.mxu0
  %10081 = vmatprep.mubr.f32.mxu0 0.0
  %v10082 = vand.u32 %v7420, 4294901760
  %10083 = vmatmul.mubr.f32.gmra.mxu0 %v10082
  %v10084 = vpop.f32.mrf.mxu0
  %v10085 = vadd.f32 %v9563, %v10084
  %v10086 = vpop.f32.mrf.mxu0
  %10087 = vmatprep.mubr.f32.mxu0 0.0
  %v10088 = vand.u32 %v7423, 4294901760
  %10089 = vmatmul.mubr.f32.gmra.mxu0 %v10088
  %v10090 = vpop.f32.mrf.mxu0
  %v10091 = vadd.f32 %v9571, %v10090
  %v10092 = vpop.f32.mrf.mxu0
  %10093 = vmatprep.mubr.f32.mxu0 0.0
  %v10094 = vand.u32 %v7426, 4294901760
  %10095 = vmatmul.mubr.f32.gmra.mxu0 %v10094
  %v10096 = vpop.f32.mrf.mxu0
  %v10097 = vadd.f32 %v9579, %v10096
  %v10098 = vpop.f32.mrf.mxu0
  %10099 = vmatprep.mubr.f32.mxu0 0.0
  %v10100 = vand.u32 %v7429, 4294901760
  %10101 = vmatmul.mubr.f32.gmra.mxu0 %v10100
  %v10102 = vpop.f32.mrf.mxu0
  %v10103 = vadd.f32 %v9587, %v10102
  %v10104 = vpop.f32.mrf.mxu0
  %10105 = vmatprep.mubr.f32.mxu0 0.0
  %v10106 = vand.u32 %v7432, 4294901760
  %10107 = vmatmul.mubr.f32.gmra.mxu0 %v10106
  %v10108 = vpop.f32.mrf.mxu0
  %v10109 = vadd.f32 %v9595, %v10108
  %v10110 = vpop.f32.mrf.mxu0
  %10111 = vmatprep.mubr.f32.mxu0 0.0
  %v10112 = vand.u32 %v7435, 4294901760
  %10113 = vmatmul.mubr.f32.gmra.mxu0 %v10112
  %v10114 = vpop.f32.mrf.mxu0
  %v10115 = vadd.f32 %v9603, %v10114
  %v10116 = vpop.f32.mrf.mxu0
  %10117 = vmatprep.mubr.f32.mxu0 0.0
  %v10118 = vand.u32 %v7438, 4294901760
  %10119 = vmatmul.mubr.f32.gmra.mxu0 %v10118
  %v10120 = vpop.f32.mrf.mxu0
  %v10121 = vadd.f32 %v9611, %v10120
  %v10122 = vpop.f32.mrf.mxu0
  %10123 = vmatprep.mubr.f32.mxu0 0.0
  %v10124 = vand.u32 %v7441, 4294901760
  %10125 = vmatmul.mubr.f32.gmra.mxu0 %v10124
  %v10126 = vpop.f32.mrf.mxu0
  %v10127 = vadd.f32 %v9619, %v10126
  %v10128 = vpop.f32.mrf.mxu0
  %10129 = vmatprep.mubr.f32.mxu0 0.0
  %v10130 = vand.u32 %v7444, 4294901760
  %10131 = vmatmul.mubr.f32.gmra.mxu0 %v10130
  %v10132 = vpop.f32.mrf.mxu0
  %v10133 = vadd.f32 %v9627, %v10132
  %v10134 = vpop.f32.mrf.mxu0
  %10135 = vmatprep.mubr.f32.mxu0 0.0
  %v10136 = vand.u32 %v7447, 4294901760
  %10137 = vmatmul.mubr.f32.gmra.mxu0 %v10136
  %v10138 = vpop.f32.mrf.mxu0
  %v10139 = vadd.f32 %v9635, %v10138
  %v10140 = vpop.f32.mrf.mxu0
  %10141 = vmatprep.mubr.f32.mxu0 0.0
  %v10142 = vand.u32 %v7450, 4294901760
  %10143 = vmatmul.mubr.f32.gmra.mxu0 %v10142
  %v10144 = vpop.f32.mrf.mxu0
  %v10145 = vadd.f32 %v9643, %v10144
  %v10146 = vpop.f32.mrf.mxu0
  %10147 = vmatprep.mubr.f32.mxu0 0.0
  %v10148 = vand.u32 %v7453, 4294901760
  %10149 = vmatmul.mubr.f32.gmra.mxu0 %v10148
  %v10150 = vpop.f32.mrf.mxu0
  %v10151 = vadd.f32 %v9651, %v10150
  %v10152 = vpop.f32.mrf.mxu0
  %10153 = vmatprep.mubr.f32.mxu0 0.0
  %v10154 = vand.u32 %v7456, 4294901760
  %10155 = vmatmul.mubr.f32.gmra.mxu0 %v10154
  %v10156 = vpop.f32.mrf.mxu0
  %v10157 = vadd.f32 %v9659, %v10156
  %v10158 = vpop.f32.mrf.mxu0
  %10159 = vmatprep.mubr.f32.mxu0 0.0
  %v10160 = vand.u32 %v7459, 4294901760
  %10161 = vmatmul.mubr.f32.gmra.mxu0 %v10160
  %v10162 = vpop.f32.mrf.mxu0
  %v10163 = vadd.f32 %v9667, %v10162
  %v10164 = vpop.f32.mrf.mxu0
  %10165 = vmatprep.mubr.f32.mxu0 0.0
  %v10166 = vand.u32 %v7462, 4294901760
  %10167 = vmatmul.mubr.f32.gmra.mxu0 %v10166
  %v10168 = vpop.f32.mrf.mxu0
  %v10169 = vadd.f32 %v9675, %v10168
  %v10170 = vpop.f32.mrf.mxu0
  %10171 = vmatprep.mubr.f32.mxu0 0.0
  %v10172 = vand.u32 %v7465, 4294901760
  %10173 = vmatmul.mubr.f32.gmra.mxu0 %v10172
  %v10174 = vpop.f32.mrf.mxu0
  %v10175 = vadd.f32 %v9683, %v10174
  %v10176 = vpop.f32.mrf.mxu0
  %10177 = vmatprep.mubr.f32.mxu0 0.0
  %v10178 = vand.u32 %v7468, 4294901760
  %10179 = vmatmul.mubr.f32.gmra.mxu0 %v10178
  %v10180 = vpop.f32.mrf.mxu0
  %v10181 = vadd.f32 %v9691, %v10180
  %v10182 = vpop.f32.mrf.mxu0
  %10183 = vmatprep.mubr.f32.mxu0 0.0
  %v10184 = vand.u32 %v7471, 4294901760
  %10185 = vmatmul.mubr.f32.gmra.mxu0 %v10184
  %v10186 = vpop.f32.mrf.mxu0
  %v10187 = vadd.f32 %v9699, %v10186
  %v10188 = vpop.f32.mrf.mxu0
  %10189 = vmatprep.mubr.f32.mxu0 0.0
  %v10190 = vand.u32 %v7474, 4294901760
  %10191 = vmatmul.mubr.f32.gmra.mxu0 %v10190
  %v10192 = vpop.f32.mrf.mxu0
  %v10193 = vadd.f32 %v9707, %v10192
  %v10194 = vpop.f32.mrf.mxu0
  %10195 = vmatprep.mubr.f32.mxu0 0.0
  %v10196 = vand.u32 %v7477, 4294901760
  %10197 = vmatmul.mubr.f32.gmra.mxu0 %v10196
  %v10198 = vpop.f32.mrf.mxu0
  %v10199 = vadd.f32 %v9715, %v10198
  %v10200 = vpop.f32.mrf.mxu0
  %10201 = vmatprep.mubr.f32.mxu0 0.0
  %v10202 = vand.u32 %v7480, 4294901760
  %10203 = vmatmul.mubr.f32.gmra.mxu0 %v10202
  %v10204 = vpop.f32.mrf.mxu0
  %v10205 = vadd.f32 %v9723, %v10204
  %v10206 = vpop.f32.mrf.mxu0
  %10207 = vmatprep.mubr.f32.mxu0 0.0
  %v10208 = vand.u32 %v7483, 4294901760
  %10209 = vmatmul.mubr.f32.gmra.mxu0 %v10208
  %v10210 = vpop.f32.mrf.mxu0
  %v10211 = vadd.f32 %v9731, %v10210
  %v10212 = vpop.f32.mrf.mxu0
  %10213 = vmatprep.mubr.f32.mxu0 0.0
  %v10214 = vand.u32 %v7486, 4294901760
  %10215 = vmatmul.mubr.f32.gmra.mxu0 %v10214
  %v10216 = vpop.f32.mrf.mxu0
  %v10217 = vadd.f32 %v9739, %v10216
  %v10218 = vpop.f32.mrf.mxu0
  %10219 = vmatprep.mubr.f32.mxu0 0.0
  %v10220 = vand.u32 %v7489, 4294901760
  %10221 = vmatmul.mubr.f32.gmra.mxu0 %v10220
  %v10222 = vpop.f32.mrf.mxu0
  %v10223 = vadd.f32 %v9747, %v10222
  %v10224 = vpop.f32.mrf.mxu0
  %10225 = vmatprep.mubr.f32.mxu0 0.0
  %v10226 = vand.u32 %v7492, 4294901760
  %10227 = vmatmul.mubr.f32.gmra.mxu0 %v10226
  %v10228 = vpop.f32.mrf.mxu0
  %v10229 = vadd.f32 %v9755, %v10228
  %v10230 = vpop.f32.mrf.mxu0
  %10231 = vmatprep.mubr.f32.mxu0 0.0
  %v10232 = vand.u32 %v7495, 4294901760
  %10233 = vmatmul.mubr.f32.gmra.mxu0 %v10232
  %v10234 = vpop.f32.mrf.mxu0
  %v10235 = vadd.f32 %v9763, %v10234
  %v10236 = vpop.f32.mrf.mxu0
  %10237 = vmatprep.mubr.f32.mxu0 0.0
  %v10238 = vand.u32 %v7498, 4294901760
  %10239 = vmatmul.mubr.f32.gmra.mxu0 %v10238
  %v10240 = vpop.f32.mrf.mxu0
  %v10241 = vadd.f32 %v9771, %v10240
  %v10242 = vpop.f32.mrf.mxu0
  %10243 = vmatprep.mubr.f32.mxu0 0.0
  %v10244 = vand.u32 %v7501, 4294901760
  %10245 = vmatmul.mubr.f32.gmra.mxu0 %v10244
  %v10246 = vpop.f32.mrf.mxu0
  %v10247 = vadd.f32 %v9779, %v10246
  %v10248 = vpop.f32.mrf.mxu0
  %10249 = vmatprep.mubr.f32.mxu0 0.0
  %v10250 = vand.u32 %v7504, 4294901760
  %10251 = vmatmul.mubr.f32.gmra.mxu0 %v10250
  %v10252 = vpop.f32.mrf.mxu0
  %v10253 = vadd.f32 %v9787, %v10252
  %v10254 = vpop.f32.mrf.mxu0
  %10255 = vmatprep.mubr.f32.mxu0 0.0
  %v10256 = vand.u32 %v7507, 4294901760
  %10257 = vmatmul.mubr.f32.gmra.mxu0 %v10256
  %v10258 = vpop.f32.mrf.mxu0
  %v10259 = vadd.f32 %v9795, %v10258
  %v10260 = vpop.f32.mrf.mxu0
  %10261 = vdwg.mxu0
  %10262 = vmatprep.subr.mxu0 0.0
  %10263 = vmatpush1.msra.mxu0 0.0
  %10264 = vmatprep.subr.mxu0 0.0
  %10265 = vmatpush1.msra.mxu0 0.0
  %10266 = vmatprep.subr.mxu0 0.0
  %10267 = vmatpush1.msra.mxu0 0.0
  %10268 = vmatprep.subr.mxu0 0.0
  %10269 = vmatpush1.msra.mxu0 0.0
  %10270 = vmatprep.subr.mxu0 0.0
  %10271 = vmatpush1.msra.mxu0 0.0
  %10272 = vmatprep.subr.mxu0 0.0
  %10273 = vmatpush1.msra.mxu0 0.0
  %10274 = vmatprep.subr.mxu0 0.0
  %10275 = vmatpush1.msra.mxu0 0.0
  %10276 = vmatprep.subr.mxu0 0.0
  %10277 = vmatpush1.msra.mxu0 0.0
  %10278 = vmatprep.subr.mxu0 0.0
  %10279 = vmatpush1.msra.mxu0 0.0
  %10280 = vmatprep.subr.mxu0 0.0
  %10281 = vmatpush1.msra.mxu0 0.0
  %10282 = vmatprep.subr.mxu0 0.0
  %10283 = vmatpush1.msra.mxu0 0.0
  %10284 = vmatprep.subr.mxu0 0.0
  %v10285 = vand.u32 %v253, 4294901760
  %10286 = vmatpush1.msra.mxu0 %v10285
  %10287 = vmatprep.subr.mxu0 0.0
  %v10288 = vand.u32 %v252, 4294901760
  %10289 = vmatpush1.msra.mxu0 %v10288
  %10290 = vmatprep.subr.mxu0 0.0
  %v10291 = vand.u32 %v251, 4294901760
  %10292 = vmatpush1.msra.mxu0 %v10291
  %10293 = vmatprep.subr.mxu0 0.0
  %v10294 = vand.u32 %v250, 4294901760
  %10295 = vmatpush1.msra.mxu0 %v10294
  %10296 = vmatprep.subr.mxu0 0.0
  %v10297 = vand.u32 %v249, 4294901760
  %10298 = vmatpush1.msra.mxu0 %v10297
  %10299 = vmatprep.subr.mxu0 0.0
  %10300 = vmatpush2.msra.mxu0 0.0
  %10301 = vmatprep.subr.mxu0 0.0
  %10302 = vmatpush2.msra.mxu0 0.0
  %10303 = vmatprep.subr.mxu0 0.0
  %10304 = vmatpush2.msra.mxu0 0.0
  %10305 = vmatprep.subr.mxu0 0.0
  %10306 = vmatpush2.msra.mxu0 0.0
  %10307 = vmatprep.subr.mxu0 0.0
  %10308 = vmatpush2.msra.mxu0 0.0
  %10309 = vmatprep.subr.mxu0 0.0
  %10310 = vmatpush2.msra.mxu0 0.0
  %10311 = vmatprep.subr.mxu0 0.0
  %10312 = vmatpush2.msra.mxu0 0.0
  %10313 = vmatprep.subr.mxu0 0.0
  %10314 = vmatpush2.msra.mxu0 0.0
  %10315 = vmatprep.subr.mxu0 0.0
  %10316 = vmatpush2.msra.mxu0 0.0
  %10317 = vmatprep.subr.mxu0 0.0
  %10318 = vmatpush2.msra.mxu0 0.0
  %10319 = vmatprep.subr.mxu0 0.0
  %10320 = vmatpush2.msra.mxu0 0.0
  %10321 = vmatprep.subr.mxu0 0.0
  %10322 = vmatpush2.msra.mxu0 0.0
  %10323 = vmatprep.subr.mxu0 0.0
  %10324 = vmatpush2.msra.mxu0 0.0
  %10325 = vmatprep.subr.mxu0 0.0
  %10326 = vmatpush2.msra.mxu0 0.0
  %10327 = vmatprep.subr.mxu0 0.0
  %10328 = vmatpush2.msra.mxu0 0.0
  %10329 = vmatprep.subr.mxu0 0.0
  %10330 = vmatpush2.msra.mxu0 0.0
  %10331 = vmatprep.mubr.f32.mxu0 0.0
  %v10332 = vand.u32 %v7318, 4294901760
  %10333 = vmatmul.mubr.f32.gmra.mxu0 %v10332
  %v10334 = vpop.f32.mrf.mxu0
  %v10335 = vadd.f32 %v9881, %v10334
  %v10336 = vpop.f32.mrf.mxu0
  %10337 = vmatprep.mubr.f32.mxu0 0.0
  %v10338 = vand.u32 %v7321, 4294901760
  %10339 = vmatmul.mubr.f32.gmra.mxu0 %v10338
  %v10340 = vpop.f32.mrf.mxu0
  %v10341 = vadd.f32 %v9887, %v10340
  %v10342 = vpop.f32.mrf.mxu0
  %10343 = vmatprep.mubr.f32.mxu0 0.0
  %v10344 = vand.u32 %v7324, 4294901760
  %10345 = vmatmul.mubr.f32.gmra.mxu0 %v10344
  %v10346 = vpop.f32.mrf.mxu0
  %v10347 = vadd.f32 %v9893, %v10346
  %v10348 = vpop.f32.mrf.mxu0
  %10349 = vmatprep.mubr.f32.mxu0 0.0
  %v10350 = vand.u32 %v7327, 4294901760
  %10351 = vmatmul.mubr.f32.gmra.mxu0 %v10350
  %v10352 = vpop.f32.mrf.mxu0
  %v10353 = vadd.f32 %v9899, %v10352
  %v10354 = vpop.f32.mrf.mxu0
  %10355 = vmatprep.mubr.f32.mxu0 0.0
  %v10356 = vand.u32 %v7330, 4294901760
  %10357 = vmatmul.mubr.f32.gmra.mxu0 %v10356
  %v10358 = vpop.f32.mrf.mxu0
  %v10359 = vadd.f32 %v9905, %v10358
  %v10360 = vpop.f32.mrf.mxu0
  %10361 = vmatprep.mubr.f32.mxu0 0.0
  %v10362 = vand.u32 %v7333, 4294901760
  %10363 = vmatmul.mubr.f32.gmra.mxu0 %v10362
  %v10364 = vpop.f32.mrf.mxu0
  %v10365 = vadd.f32 %v9911, %v10364
  %v10366 = vpop.f32.mrf.mxu0
  %10367 = vmatprep.mubr.f32.mxu0 0.0
  %v10368 = vand.u32 %v7336, 4294901760
  %10369 = vmatmul.mubr.f32.gmra.mxu0 %v10368
  %v10370 = vpop.f32.mrf.mxu0
  %v10371 = vadd.f32 %v9917, %v10370
  %v10372 = vpop.f32.mrf.mxu0
  %10373 = vmatprep.mubr.f32.mxu0 0.0
  %v10374 = vand.u32 %v7339, 4294901760
  %10375 = vmatmul.mubr.f32.gmra.mxu0 %v10374
  %v10376 = vpop.f32.mrf.mxu0
  %v10377 = vadd.f32 %v9923, %v10376
  %v10378 = vpop.f32.mrf.mxu0
  %10379 = vmatprep.mubr.f32.mxu0 0.0
  %v10380 = vand.u32 %v7342, 4294901760
  %10381 = vmatmul.mubr.f32.gmra.mxu0 %v10380
  %v10382 = vpop.f32.mrf.mxu0
  %v10383 = vadd.f32 %v9929, %v10382
  %v10384 = vpop.f32.mrf.mxu0
  %10385 = vmatprep.mubr.f32.mxu0 0.0
  %v10386 = vand.u32 %v7345, 4294901760
  %10387 = vmatmul.mubr.f32.gmra.mxu0 %v10386
  %v10388 = vpop.f32.mrf.mxu0
  %v10389 = vadd.f32 %v9935, %v10388
  %v10390 = vpop.f32.mrf.mxu0
  %10391 = vmatprep.mubr.f32.mxu0 0.0
  %v10392 = vand.u32 %v7348, 4294901760
  %10393 = vmatmul.mubr.f32.gmra.mxu0 %v10392
  %v10394 = vpop.f32.mrf.mxu0
  %v10395 = vadd.f32 %v9941, %v10394
  %v10396 = vpop.f32.mrf.mxu0
  %10397 = vmatprep.mubr.f32.mxu0 0.0
  %v10398 = vand.u32 %v7351, 4294901760
  %10399 = vmatmul.mubr.f32.gmra.mxu0 %v10398
  %v10400 = vpop.f32.mrf.mxu0
  %v10401 = vadd.f32 %v9947, %v10400
  %v10402 = vpop.f32.mrf.mxu0
  %10403 = vmatprep.mubr.f32.mxu0 0.0
  %v10404 = vand.u32 %v7354, 4294901760
  %10405 = vmatmul.mubr.f32.gmra.mxu0 %v10404
  %v10406 = vpop.f32.mrf.mxu0
  %v10407 = vadd.f32 %v9953, %v10406
  %v10408 = vpop.f32.mrf.mxu0
  %10409 = vmatprep.mubr.f32.mxu0 0.0
  %v10410 = vand.u32 %v7357, 4294901760
  %10411 = vmatmul.mubr.f32.gmra.mxu0 %v10410
  %v10412 = vpop.f32.mrf.mxu0
  %v10413 = vadd.f32 %v9959, %v10412
  %v10414 = vpop.f32.mrf.mxu0
  %10415 = vmatprep.mubr.f32.mxu0 0.0
  %v10416 = vand.u32 %v7360, 4294901760
  %10417 = vmatmul.mubr.f32.gmra.mxu0 %v10416
  %v10418 = vpop.f32.mrf.mxu0
  %v10419 = vadd.f32 %v9965, %v10418
  %v10420 = vpop.f32.mrf.mxu0
  %10421 = vmatprep.mubr.f32.mxu0 0.0
  %v10422 = vand.u32 %v7363, 4294901760
  %10423 = vmatmul.mubr.f32.gmra.mxu0 %v10422
  %v10424 = vpop.f32.mrf.mxu0
  %v10425 = vadd.f32 %v9971, %v10424
  %v10426 = vpop.f32.mrf.mxu0
  %10427 = vmatprep.mubr.f32.mxu0 0.0
  %v10428 = vand.u32 %v7366, 4294901760
  %10429 = vmatmul.mubr.f32.gmra.mxu0 %v10428
  %v10430 = vpop.f32.mrf.mxu0
  %v10431 = vadd.f32 %v9977, %v10430
  %v10432 = vpop.f32.mrf.mxu0
  %10433 = vmatprep.mubr.f32.mxu0 0.0
  %v10434 = vand.u32 %v7369, 4294901760
  %10435 = vmatmul.mubr.f32.gmra.mxu0 %v10434
  %v10436 = vpop.f32.mrf.mxu0
  %v10437 = vadd.f32 %v9983, %v10436
  %v10438 = vpop.f32.mrf.mxu0
  %10439 = vmatprep.mubr.f32.mxu0 0.0
  %v10440 = vand.u32 %v7372, 4294901760
  %10441 = vmatmul.mubr.f32.gmra.mxu0 %v10440
  %v10442 = vpop.f32.mrf.mxu0
  %v10443 = vadd.f32 %v9989, %v10442
  %v10444 = vpop.f32.mrf.mxu0
  %10445 = vmatprep.mubr.f32.mxu0 0.0
  %v10446 = vand.u32 %v7375, 4294901760
  %10447 = vmatmul.mubr.f32.gmra.mxu0 %v10446
  %v10448 = vpop.f32.mrf.mxu0
  %v10449 = vadd.f32 %v9995, %v10448
  %v10450 = vpop.f32.mrf.mxu0
  %10451 = vmatprep.mubr.f32.mxu0 0.0
  %v10452 = vand.u32 %v7378, 4294901760
  %10453 = vmatmul.mubr.f32.gmra.mxu0 %v10452
  %v10454 = vpop.f32.mrf.mxu0
  %v10455 = vadd.f32 %v10001, %v10454
  %v10456 = vpop.f32.mrf.mxu0
  %10457 = vmatprep.mubr.f32.mxu0 0.0
  %v10458 = vand.u32 %v7381, 4294901760
  %10459 = vmatmul.mubr.f32.gmra.mxu0 %v10458
  %v10460 = vpop.f32.mrf.mxu0
  %v10461 = vadd.f32 %v10007, %v10460
  %v10462 = vpop.f32.mrf.mxu0
  %10463 = vmatprep.mubr.f32.mxu0 0.0
  %v10464 = vand.u32 %v7384, 4294901760
  %10465 = vmatmul.mubr.f32.gmra.mxu0 %v10464
  %v10466 = vpop.f32.mrf.mxu0
  %v10467 = vadd.f32 %v10013, %v10466
  %v10468 = vpop.f32.mrf.mxu0
  %10469 = vmatprep.mubr.f32.mxu0 0.0
  %v10470 = vand.u32 %v7387, 4294901760
  %10471 = vmatmul.mubr.f32.gmra.mxu0 %v10470
  %v10472 = vpop.f32.mrf.mxu0
  %v10473 = vadd.f32 %v10019, %v10472
  %v10474 = vpop.f32.mrf.mxu0
  %10475 = vmatprep.mubr.f32.mxu0 0.0
  %v10476 = vand.u32 %v7390, 4294901760
  %10477 = vmatmul.mubr.f32.gmra.mxu0 %v10476
  %v10478 = vpop.f32.mrf.mxu0
  %v10479 = vadd.f32 %v10025, %v10478
  %v10480 = vpop.f32.mrf.mxu0
  %10481 = vmatprep.mubr.f32.mxu0 0.0
  %v10482 = vand.u32 %v7393, 4294901760
  %10483 = vmatmul.mubr.f32.gmra.mxu0 %v10482
  %v10484 = vpop.f32.mrf.mxu0
  %v10485 = vadd.f32 %v10031, %v10484
  %v10486 = vpop.f32.mrf.mxu0
  %10487 = vmatprep.mubr.f32.mxu0 0.0
  %v10488 = vand.u32 %v7396, 4294901760
  %10489 = vmatmul.mubr.f32.gmra.mxu0 %v10488
  %v10490 = vpop.f32.mrf.mxu0
  %v10491 = vadd.f32 %v10037, %v10490
  %v10492 = vpop.f32.mrf.mxu0
  %10493 = vmatprep.mubr.f32.mxu0 0.0
  %v10494 = vand.u32 %v7399, 4294901760
  %10495 = vmatmul.mubr.f32.gmra.mxu0 %v10494
  %v10496 = vpop.f32.mrf.mxu0
  %v10497 = vadd.f32 %v10043, %v10496
  %v10498 = vpop.f32.mrf.mxu0
  %10499 = vmatprep.mubr.f32.mxu0 0.0
  %v10500 = vand.u32 %v7402, 4294901760
  %10501 = vmatmul.mubr.f32.gmra.mxu0 %v10500
  %v10502 = vpop.f32.mrf.mxu0
  %v10503 = vadd.f32 %v10049, %v10502
  %v10504 = vpop.f32.mrf.mxu0
  %10505 = vmatprep.mubr.f32.mxu0 0.0
  %v10506 = vand.u32 %v7405, 4294901760
  %10507 = vmatmul.mubr.f32.gmra.mxu0 %v10506
  %v10508 = vpop.f32.mrf.mxu0
  %v10509 = vadd.f32 %v10055, %v10508
  %v10510 = vpop.f32.mrf.mxu0
  %10511 = vmatprep.mubr.f32.mxu0 0.0
  %v10512 = vand.u32 %v7408, 4294901760
  %10513 = vmatmul.mubr.f32.gmra.mxu0 %v10512
  %v10514 = vpop.f32.mrf.mxu0
  %v10515 = vadd.f32 %v10061, %v10514
  %v10516 = vpop.f32.mrf.mxu0
  %10517 = vmatprep.mubr.f32.mxu0 0.0
  %v10518 = vand.u32 %v7411, 4294901760
  %10519 = vmatmul.mubr.f32.gmra.mxu0 %v10518
  %v10520 = vpop.f32.mrf.mxu0
  %v10521 = vadd.f32 %v10067, %v10520
  %v10522 = vpop.f32.mrf.mxu0
  %10523 = vmatprep.mubr.f32.mxu0 0.0
  %v10524 = vand.u32 %v7414, 4294901760
  %10525 = vmatmul.mubr.f32.gmra.mxu0 %v10524
  %v10526 = vpop.f32.mrf.mxu0
  %v10527 = vadd.f32 %v10073, %v10526
  %v10528 = vpop.f32.mrf.mxu0
  %10529 = vmatprep.mubr.f32.mxu0 0.0
  %v10530 = vand.u32 %v7417, 4294901760
  %10531 = vmatmul.mubr.f32.gmra.mxu0 %v10530
  %v10532 = vpop.f32.mrf.mxu0
  %v10533 = vadd.f32 %v10079, %v10532
  %v10534 = vpop.f32.mrf.mxu0
  %10535 = vmatprep.mubr.f32.mxu0 0.0
  %v10536 = vand.u32 %v7420, 4294901760
  %10537 = vmatmul.mubr.f32.gmra.mxu0 %v10536
  %v10538 = vpop.f32.mrf.mxu0
  %v10539 = vadd.f32 %v10085, %v10538
  %v10540 = vpop.f32.mrf.mxu0
  %10541 = vmatprep.mubr.f32.mxu0 0.0
  %v10542 = vand.u32 %v7423, 4294901760
  %10543 = vmatmul.mubr.f32.gmra.mxu0 %v10542
  %v10544 = vpop.f32.mrf.mxu0
  %v10545 = vadd.f32 %v10091, %v10544
  %v10546 = vpop.f32.mrf.mxu0
  %10547 = vmatprep.mubr.f32.mxu0 0.0
  %v10548 = vand.u32 %v7426, 4294901760
  %10549 = vmatmul.mubr.f32.gmra.mxu0 %v10548
  %v10550 = vpop.f32.mrf.mxu0
  %v10551 = vadd.f32 %v10097, %v10550
  %v10552 = vpop.f32.mrf.mxu0
  %10553 = vmatprep.mubr.f32.mxu0 0.0
  %v10554 = vand.u32 %v7429, 4294901760
  %10555 = vmatmul.mubr.f32.gmra.mxu0 %v10554
  %v10556 = vpop.f32.mrf.mxu0
  %v10557 = vadd.f32 %v10103, %v10556
  %v10558 = vpop.f32.mrf.mxu0
  %10559 = vmatprep.mubr.f32.mxu0 0.0
  %v10560 = vand.u32 %v7432, 4294901760
  %10561 = vmatmul.mubr.f32.gmra.mxu0 %v10560
  %v10562 = vpop.f32.mrf.mxu0
  %v10563 = vadd.f32 %v10109, %v10562
  %v10564 = vpop.f32.mrf.mxu0
  %10565 = vmatprep.mubr.f32.mxu0 0.0
  %v10566 = vand.u32 %v7435, 4294901760
  %10567 = vmatmul.mubr.f32.gmra.mxu0 %v10566
  %v10568 = vpop.f32.mrf.mxu0
  %v10569 = vadd.f32 %v10115, %v10568
  %v10570 = vpop.f32.mrf.mxu0
  %10571 = vmatprep.mubr.f32.mxu0 0.0
  %v10572 = vand.u32 %v7438, 4294901760
  %10573 = vmatmul.mubr.f32.gmra.mxu0 %v10572
  %v10574 = vpop.f32.mrf.mxu0
  %v10575 = vadd.f32 %v10121, %v10574
  %v10576 = vpop.f32.mrf.mxu0
  %10577 = vmatprep.mubr.f32.mxu0 0.0
  %v10578 = vand.u32 %v7441, 4294901760
  %10579 = vmatmul.mubr.f32.gmra.mxu0 %v10578
  %v10580 = vpop.f32.mrf.mxu0
  %v10581 = vadd.f32 %v10127, %v10580
  %v10582 = vpop.f32.mrf.mxu0
  %10583 = vmatprep.mubr.f32.mxu0 0.0
  %v10584 = vand.u32 %v7444, 4294901760
  %10585 = vmatmul.mubr.f32.gmra.mxu0 %v10584
  %v10586 = vpop.f32.mrf.mxu0
  %v10587 = vadd.f32 %v10133, %v10586
  %v10588 = vpop.f32.mrf.mxu0
  %10589 = vmatprep.mubr.f32.mxu0 0.0
  %v10590 = vand.u32 %v7447, 4294901760
  %10591 = vmatmul.mubr.f32.gmra.mxu0 %v10590
  %v10592 = vpop.f32.mrf.mxu0
  %v10593 = vadd.f32 %v10139, %v10592
  %v10594 = vpop.f32.mrf.mxu0
  %10595 = vmatprep.mubr.f32.mxu0 0.0
  %v10596 = vand.u32 %v7450, 4294901760
  %10597 = vmatmul.mubr.f32.gmra.mxu0 %v10596
  %v10598 = vpop.f32.mrf.mxu0
  %v10599 = vadd.f32 %v10145, %v10598
  %v10600 = vpop.f32.mrf.mxu0
  %10601 = vmatprep.mubr.f32.mxu0 0.0
  %v10602 = vand.u32 %v7453, 4294901760
  %10603 = vmatmul.mubr.f32.gmra.mxu0 %v10602
  %v10604 = vpop.f32.mrf.mxu0
  %v10605 = vadd.f32 %v10151, %v10604
  %v10606 = vpop.f32.mrf.mxu0
  %10607 = vmatprep.mubr.f32.mxu0 0.0
  %v10608 = vand.u32 %v7456, 4294901760
  %10609 = vmatmul.mubr.f32.gmra.mxu0 %v10608
  %v10610 = vpop.f32.mrf.mxu0
  %v10611 = vadd.f32 %v10157, %v10610
  %v10612 = vpop.f32.mrf.mxu0
  %10613 = vmatprep.mubr.f32.mxu0 0.0
  %v10614 = vand.u32 %v7459, 4294901760
  %10615 = vmatmul.mubr.f32.gmra.mxu0 %v10614
  %v10616 = vpop.f32.mrf.mxu0
  %v10617 = vadd.f32 %v10163, %v10616
  %v10618 = vpop.f32.mrf.mxu0
  %10619 = vmatprep.mubr.f32.mxu0 0.0
  %v10620 = vand.u32 %v7462, 4294901760
  %10621 = vmatmul.mubr.f32.gmra.mxu0 %v10620
  %v10622 = vpop.f32.mrf.mxu0
  %v10623 = vadd.f32 %v10169, %v10622
  %v10624 = vpop.f32.mrf.mxu0
  %10625 = vmatprep.mubr.f32.mxu0 0.0
  %v10626 = vand.u32 %v7465, 4294901760
  %10627 = vmatmul.mubr.f32.gmra.mxu0 %v10626
  %v10628 = vpop.f32.mrf.mxu0
  %v10629 = vadd.f32 %v10175, %v10628
  %v10630 = vpop.f32.mrf.mxu0
  %10631 = vmatprep.mubr.f32.mxu0 0.0
  %v10632 = vand.u32 %v7468, 4294901760
  %10633 = vmatmul.mubr.f32.gmra.mxu0 %v10632
  %v10634 = vpop.f32.mrf.mxu0
  %v10635 = vadd.f32 %v10181, %v10634
  %v10636 = vpop.f32.mrf.mxu0
  %10637 = vmatprep.mubr.f32.mxu0 0.0
  %v10638 = vand.u32 %v7471, 4294901760
  %10639 = vmatmul.mubr.f32.gmra.mxu0 %v10638
  %v10640 = vpop.f32.mrf.mxu0
  %v10641 = vadd.f32 %v10187, %v10640
  %v10642 = vpop.f32.mrf.mxu0
  %10643 = vmatprep.mubr.f32.mxu0 0.0
  %v10644 = vand.u32 %v7474, 4294901760
  %10645 = vmatmul.mubr.f32.gmra.mxu0 %v10644
  %v10646 = vpop.f32.mrf.mxu0
  %v10647 = vadd.f32 %v10193, %v10646
  %v10648 = vpop.f32.mrf.mxu0
  %10649 = vmatprep.mubr.f32.mxu0 0.0
  %v10650 = vand.u32 %v7477, 4294901760
  %10651 = vmatmul.mubr.f32.gmra.mxu0 %v10650
  %v10652 = vpop.f32.mrf.mxu0
  %v10653 = vadd.f32 %v10199, %v10652
  %v10654 = vpop.f32.mrf.mxu0
  %10655 = vmatprep.mubr.f32.mxu0 0.0
  %v10656 = vand.u32 %v7480, 4294901760
  %10657 = vmatmul.mubr.f32.gmra.mxu0 %v10656
  %v10658 = vpop.f32.mrf.mxu0
  %v10659 = vadd.f32 %v10205, %v10658
  %v10660 = vpop.f32.mrf.mxu0
  %10661 = vmatprep.mubr.f32.mxu0 0.0
  %v10662 = vand.u32 %v7483, 4294901760
  %10663 = vmatmul.mubr.f32.gmra.mxu0 %v10662
  %v10664 = vpop.f32.mrf.mxu0
  %v10665 = vadd.f32 %v10211, %v10664
  %v10666 = vpop.f32.mrf.mxu0
  %10667 = vmatprep.mubr.f32.mxu0 0.0
  %v10668 = vand.u32 %v7486, 4294901760
  %10669 = vmatmul.mubr.f32.gmra.mxu0 %v10668
  %v10670 = vpop.f32.mrf.mxu0
  %v10671 = vadd.f32 %v10217, %v10670
  %v10672 = vpop.f32.mrf.mxu0
  %10673 = vmatprep.mubr.f32.mxu0 0.0
  %v10674 = vand.u32 %v7489, 4294901760
  %10675 = vmatmul.mubr.f32.gmra.mxu0 %v10674
  %v10676 = vpop.f32.mrf.mxu0
  %v10677 = vadd.f32 %v10223, %v10676
  %v10678 = vpop.f32.mrf.mxu0
  %10679 = vmatprep.mubr.f32.mxu0 0.0
  %v10680 = vand.u32 %v7492, 4294901760
  %10681 = vmatmul.mubr.f32.gmra.mxu0 %v10680
  %v10682 = vpop.f32.mrf.mxu0
  %v10683 = vadd.f32 %v10229, %v10682
  %v10684 = vpop.f32.mrf.mxu0
  %10685 = vmatprep.mubr.f32.mxu0 0.0
  %v10686 = vand.u32 %v7495, 4294901760
  %10687 = vmatmul.mubr.f32.gmra.mxu0 %v10686
  %v10688 = vpop.f32.mrf.mxu0
  %v10689 = vadd.f32 %v10235, %v10688
  %v10690 = vpop.f32.mrf.mxu0
  %10691 = vmatprep.mubr.f32.mxu0 0.0
  %v10692 = vand.u32 %v7498, 4294901760
  %10693 = vmatmul.mubr.f32.gmra.mxu0 %v10692
  %v10694 = vpop.f32.mrf.mxu0
  %v10695 = vadd.f32 %v10241, %v10694
  %v10696 = vpop.f32.mrf.mxu0
  %10697 = vmatprep.mubr.f32.mxu0 0.0
  %v10698 = vand.u32 %v7501, 4294901760
  %10699 = vmatmul.mubr.f32.gmra.mxu0 %v10698
  %v10700 = vpop.f32.mrf.mxu0
  %v10701 = vadd.f32 %v10247, %v10700
  %v10702 = vpop.f32.mrf.mxu0
  %10703 = vmatprep.mubr.f32.mxu0 0.0
  %v10704 = vand.u32 %v7504, 4294901760
  %10705 = vmatmul.mubr.f32.gmra.mxu0 %v10704
  %v10706 = vpop.f32.mrf.mxu0
  %v10707 = vadd.f32 %v10253, %v10706
  %v10708 = vpop.f32.mrf.mxu0
  %10709 = vmatprep.mubr.f32.mxu0 0.0
  %v10710 = vand.u32 %v7507, 4294901760
  %10711 = vmatmul.mubr.f32.gmra.mxu0 %v10710
  %v10712 = vpop.f32.mrf.mxu0
  %v10713 = vadd.f32 %v10259, %v10712
  %v10714 = vpop.f32.mrf.mxu0
  %10715 = vdwg.mxu0
  %10716 = vst.msk [vmem:[%s8] sm:$0xff] %vm5893, %v10335
  %10717 = vst.msk [vmem:[%s8 + $0x8] sm:$0xff] %vm5893, %v10341
  %10718 = vst.msk [vmem:[%s8 + $0x10] sm:$0xff] %vm5893, %v10347
  %10719 = vst.msk [vmem:[%s8 + $0x18] sm:$0xff] %vm5893, %v10353
  %10720 = vst.msk [vmem:[%s8 + $0x20] sm:$0xff] %vm5893, %v10359
  %10721 = vst.msk [vmem:[%s8 + $0x28] sm:$0xff] %vm5893, %v10365
  %10722 = vst.msk [vmem:[%s8 + $0x30] sm:$0xff] %vm5893, %v10371
  %10723 = vst.msk [vmem:[%s8 + $0x38] sm:$0xff] %vm5893, %v10377
  %10724 = vst.msk [vmem:[%s8 + $0x40] sm:$0xff] %vm5893, %v10383
  %10725 = vst.msk [vmem:[%s8 + $0x48] sm:$0xff] %vm5893, %v10389
  %10726 = vst.msk [vmem:[%s8 + $0x50] sm:$0xff] %vm5893, %v10395
  %10727 = vst.msk [vmem:[%s8 + $0x58] sm:$0xff] %vm5893, %v10401
  %10728 = vst.msk [vmem:[%s8 + $0x60] sm:$0xff] %vm5893, %v10407
  %10729 = vst.msk [vmem:[%s8 + $0x68] sm:$0xff] %vm5893, %v10413
  %10730 = vst.msk [vmem:[%s8 + $0x70] sm:$0xff] %vm5893, %v10419
  %10731 = vst.msk [vmem:[%s8 + $0x78] sm:$0xff] %vm5893, %v10425
  %10732 = vst.msk [vmem:[%s8 + $0x80] sm:$0xff] %vm5893, %v10431
  %10733 = vst.msk [vmem:[%s8 + $0x88] sm:$0xff] %vm5893, %v10437
  %10734 = vst.msk [vmem:[%s8 + $0x90] sm:$0xff] %vm5893, %v10443
  %10735 = vst.msk [vmem:[%s8 + $0x98] sm:$0xff] %vm5893, %v10449
  %10736 = vst.msk [vmem:[%s8 + $0xa0] sm:$0xff] %vm5893, %v10455
  %10737 = vst.msk [vmem:[%s8 + $0xa8] sm:$0xff] %vm5893, %v10461
  %10738 = vst.msk [vmem:[%s8 + $0xb0] sm:$0xff] %vm5893, %v10467
  %10739 = vst.msk [vmem:[%s8 + $0xb8] sm:$0xff] %vm5893, %v10473
  %10740 = vst.msk [vmem:[%s8 + $0xc0] sm:$0xff] %vm5893, %v10479
  %10741 = vst.msk [vmem:[%s8 + $0xc8] sm:$0xff] %vm5893, %v10485
  %10742 = vst.msk [vmem:[%s8 + $0xd0] sm:$0xff] %vm5893, %v10491
  %10743 = vst.msk [vmem:[%s8 + $0xd8] sm:$0xff] %vm5893, %v10497
  %10744 = vst.msk [vmem:[%s8 + $0xe0] sm:$0xff] %vm5893, %v10503
  %10745 = vst.msk [vmem:[%s8 + $0xe8] sm:$0xff] %vm5893, %v10509
  %10746 = vst.msk [vmem:[%s8 + $0xf0] sm:$0xff] %vm5893, %v10515
  %10747 = vst.msk [vmem:[%s8 + $0xf8] sm:$0xff] %vm5893, %v10521
  %10748 = vst.msk [vmem:[%s8 + $0x100] sm:$0xff] %vm5893, %v10527
  %10749 = vst.msk [vmem:[%s8 + $0x108] sm:$0xff] %vm5893, %v10533
  %10750 = vst.msk [vmem:[%s8 + $0x110] sm:$0xff] %vm5893, %v10539
  %10751 = vst.msk [vmem:[%s8 + $0x118] sm:$0xff] %vm5893, %v10545
  %10752 = vst.msk [vmem:[%s8 + $0x120] sm:$0xff] %vm5893, %v10551
  %10753 = vst.msk [vmem:[%s8 + $0x128] sm:$0xff] %vm5893, %v10557
  %10754 = vst.msk [vmem:[%s8 + $0x130] sm:$0xff] %vm5893, %v10563
  %10755 = vst.msk [vmem:[%s8 + $0x138] sm:$0xff] %vm5893, %v10569
  %10756 = vst.msk [vmem:[%s8 + $0x140] sm:$0xff] %vm5893, %v10575
  %10757 = vst.msk [vmem:[%s8 + $0x148] sm:$0xff] %vm5893, %v10581
  %10758 = vst.msk [vmem:[%s8 + $0x150] sm:$0xff] %vm5893, %v10587
  %10759 = vst.msk [vmem:[%s8 + $0x158] sm:$0xff] %vm5893, %v10593
  %10760 = vst.msk [vmem:[%s8 + $0x160] sm:$0xff] %vm5893, %v10599
  %10761 = vst.msk [vmem:[%s8 + $0x168] sm:$0xff] %vm5893, %v10605
  %10762 = vst.msk [vmem:[%s8 + $0x170] sm:$0xff] %vm5893, %v10611
  %10763 = vst.msk [vmem:[%s8 + $0x178] sm:$0xff] %vm5893, %v10617
  %10764 = vst.msk [vmem:[%s8 + $0x180] sm:$0xff] %vm5893, %v10623
  %10765 = vst.msk [vmem:[%s8 + $0x188] sm:$0xff] %vm5893, %v10629
  %10766 = vst.msk [vmem:[%s8 + $0x190] sm:$0xff] %vm5893, %v10635
  %10767 = vst.msk [vmem:[%s8 + $0x198] sm:$0xff] %vm5893, %v10641
  %10768 = vst.msk [vmem:[%s8 + $0x1a0] sm:$0xff] %vm5893, %v10647
  %10769 = vst.msk [vmem:[%s8 + $0x1a8] sm:$0xff] %vm5893, %v10653
  %10770 = vst.msk [vmem:[%s8 + $0x1b0] sm:$0xff] %vm5893, %v10659
  %10771 = vst.msk [vmem:[%s8 + $0x1b8] sm:$0xff] %vm5893, %v10665
  %10772 = vst.msk [vmem:[%s8 + $0x1c0] sm:$0xff] %vm5893, %v10671
  %10773 = vst.msk [vmem:[%s8 + $0x1c8] sm:$0xff] %vm5893, %v10677
  %10774 = vst.msk [vmem:[%s8 + $0x1d0] sm:$0xff] %vm5893, %v10683
  %10775 = vst.msk [vmem:[%s8 + $0x1d8] sm:$0xff] %vm5893, %v10689
  %10776 = vst.msk [vmem:[%s8 + $0x1e0] sm:$0xff] %vm5893, %v10695
  %10777 = vst.msk [vmem:[%s8 + $0x1e8] sm:$0xff] %vm5893, %v10701
  %10778 = vst.msk [vmem:[%s8 + $0x1f0] sm:$0xff] %vm5893, %v10707
  %10779 = vst.msk [vmem:[%s8 + $0x1f8] sm:$0xff] %vm5893, %v10713
  // Predicated region
  $region30: #{tpu_custom_call.1} parent=0 // pred_check
    _
  $region31: #{tpu_custom_call.1} parent=0 // pred_check_branch
    %10781 = sbr.rel (0) target = $region33
  $region32: #{tpu_custom_call.1} parent=0 // pred_region
    _
  $region33: #{tpu_custom_call.1} parent=0 // pred_fallthru
    _
  // Predicated region
  $region34: #{tpu_custom_call.1} parent=0 // pred_check
    _
  $region35: #{tpu_custom_call.1} parent=0 // pred_check_branch
    %10783 = sbr.rel (0) target = $region37
  $region36: #{tpu_custom_call.1} parent=0 // pred_region
    _
  $region37: #{tpu_custom_call.1} parent=0 // pred_fallthru
    _
  // Predicated region
  $region38: #{tpu_custom_call.1} parent=0 // pred_check
    _
  $region39: #{tpu_custom_call.1} parent=0 // pred_check_branch
    %10785 = sbr.rel (0) target = $region41
  $region40: #{tpu_custom_call.1} parent=0 // pred_region
    _
  $region41: #{tpu_custom_call.1} parent=0 // pred_fallthru
    _
  // Predicated region
  $region42: #{tpu_custom_call.1} parent=0 // pred_check
    _
  $region43: #{tpu_custom_call.1} parent=0 // pred_check_branch
    %10787 = sbr.rel (0) target = $region45
  $region44: #{tpu_custom_call.1} parent=0 // pred_region
    _
  $region45: #{tpu_custom_call.1} parent=0 // pred_fallthru
    _

</llo_original>
